<compile_context>
chip_gen: v7x
topology: tpu7x:2x2x1
jax: 0.10.0
libtpu: 0.0.40
codegen_flags: <defaults>
</compile_context>

<pallas_src>
import functools

import jax
import jax.numpy as jnp
from jax.experimental import pallas as pl
from jax.experimental.pallas import tpu as pltpu


_ACT_BYTES_PER_BLOCK = 1 << 20          # ~1 MiB of main-block activation per grid step
_VMEM_LIMIT_BYTES = 48 * 1024 * 1024    # < v7x's 64 MiB physical VMEM; safe on v5e/v6e
_HALO_ROWS = 8                          # halo block rows (>= kh-1, sublane aligned)


def _round_up(x, m):
    return ((x + m - 1) // m) * m


# ---------------------------------------------------------------------------
# The single fused Pallas kernel
# ---------------------------------------------------------------------------
def _tap_conv_kernel(xc_ref, xh_ref, w_ref, b_ref, o_ref, lhs_ref, acc_ref, *,
                     th, wk, kh, kw, cin, activation, pool):
    """Direct conv over a (kh, kw) tap window + bias + activation [+ 2x2 max-pool].

    xc_ref : (1, th, wp, cin)       main row block of the zero-padded input
    xh_ref : (1, 8, wp, cin)        halo rows just below the main block
    w_ref  : (kh, kw*cin, cout)     dx-folded weights (K order: dx-major, ci-minor)
    b_ref  : (1, cout)              f32 bias
    o_ref  : (1, 1, m_out, cout)    flat (row-major spatial, channel) output block
    lhs_ref: (th+kh-1, wk, kw*cin)  bf16 scratch: dx-folded input window
    acc_ref: (th*wk, cout)          f32 scratch accumulator
    """
    cout = o_ref.shape[-1]
    kwc = kw * cin
    khm1 = kh - 1

    # Build the dx-folded window once per step (K-fold: kw taps -> matmul K dim).
    # Rows 0..th-1 come from the main block, rows th..th+kh-2 from the halo block.
    for dx in range(kw):
        lhs_ref[0:th, :, dx * cin:(dx + 1) * cin] = xc_ref[0, :, dx:dx + wk, :]
        lhs_ref[th:th + khm1, :, dx * cin:(dx + 1) * cin] = xh_ref[0, 0:khm1, dx:dx + wk, :]

    # kh MXU dots with K = kw*cin, accumulated through an f32 VMEM scratch.
    for dy in range(kh):
        lhs = lhs_ref[dy:dy + th, :, :].reshape(th * wk, kwc)
        part = jnp.dot(lhs, w_ref[dy], preferred_element_type=jnp.float32)
        if dy == 0:
            acc_ref[...] = part
        else:
            acc_ref[...] += part

    acc = acc_ref[...] + b_ref[...]
    if activation == "relu":
        acc = jnp.maximum(acc, 0.0)
    elif activation == "sigmoid":
        acc = 1.0 / (1.0 + jnp.exp(-acc))

    if pool:
        # Vertical 2:1 (row pairs): tile-aligned leading-dim reshape (wk is a mult of 8).
        hw = (th // 2) * wk
        half = (th // 2) * (wk // 2)
        a = acc.reshape(th // 2, 2, wk, cout)
        acc_ref[0:hw, :] = jnp.maximum(a[:, 0], a[:, 1]).reshape(hw, cout)
        # Horizontal 2:1 (column pairs == adjacent flat rows): strided VMEM reads.
        lo = acc_ref[pl.ds(0, half, stride=2), :]
        hi = acc_ref[pl.ds(1, half, stride=2), :]
        o_ref[0, 0] = jnp.maximum(lo, hi).astype(o_ref.dtype)
    else:
        o_ref[0, 0] = acc.astype(o_ref.dtype)


# ---------------------------------------------------------------------------
# Host wrapper (BlockSpecs / grid / padding; indexing glue only)
# ---------------------------------------------------------------------------
def tap_conv(x, w_fold, bias, *, kh, kw, pad_top, pad_left, activation,
             pool=False, out_dtype=jnp.bfloat16):
    """Fused direct conv over a (kh, kw) tap window on an NHWC input.

    The (per-phase) output spatial size equals the input spatial size; with
    pool=True it is (H//2, W//2).
    """
    N, H, W, cin = x.shape
    kh_w, kwc, cout = w_fold.shape
    assert kh_w == kh and kwc == kw * cin

    ho, wo = H, W
    wk = max(8, _round_up(wo, 8))              # lane/sublane friendly compute width
    wp = _round_up(wk + kw - 1, 8)             # padded input width

    # Row tile from a VMEM budget (multiple of 8 rows, never larger than the image).
    row_bytes = wp * cin * 2
    th = max(8, (_ACT_BYTES_PER_BLOCK // row_bytes) // 8 * 8)
    th = min(th, _round_up(ho, 8))
    if N == 1 and ho >= 16:
        # Keep >= 2 row blocks so both v7x TensorCores get work for 1-image calls.
        th = min(th, _round_up((ho + 1) // 2, 8))
    nb = pl.cdiv(ho, th)
    hp = nb * th + _HALO_ROWS

    # TODO(synk): handle the +/-1 border padding in-kernel (pl.when-guarded edge taps)
    # instead of re-padding the whole activation in HBM each layer.
    xp = jnp.pad(x.astype(jnp.bfloat16),
                 ((0, 0),
                  (pad_top, hp - H - pad_top),
                  (pad_left, wp - W - pad_left),
                  (0, 0)))
    wf = w_fold.astype(jnp.bfloat16)           # bf16 MXU operands
    bf = bias.reshape(1, cout).astype(jnp.float32)

    th_out = th // 2 if pool else th
    wk_out = wk // 2 if pool else wk
    m_out = th_out * wk_out

    kernel = functools.partial(_tap_conv_kernel, th=th, wk=wk, kh=kh, kw=kw,
                               cin=cin, activation=activation, pool=pool)

    out = pl.pallas_call(
        kernel,
        out_shape=jax.ShapeDtypeStruct((N, nb, m_out, cout), out_dtype),
        grid=(N, nb),
        in_specs=[
            # main row block
            pl.BlockSpec((1, th, wp, cin), lambda n, i: (n, i, 0, 0)),
            # 8-row halo just below the main block (same array, tiny block)
            pl.BlockSpec((1, _HALO_ROWS, wp, cin),
                         lambda n, i: (n, (i + 1) * (th // _HALO_ROWS), 0, 0)),
            pl.BlockSpec((kh, kwc, cout), lambda n, i: (0, 0, 0)),
            pl.BlockSpec((1, cout), lambda n, i: (0, 0)),
        ],
        out_specs=pl.BlockSpec((1, 1, m_out, cout), lambda n, i: (n, i, 0, 0)),
        scratch_shapes=[
            pltpu.VMEM((th + kh - 1, wk, kwc), jnp.bfloat16),
            pltpu.VMEM((th * wk, cout), jnp.float32),
        ],
        compiler_params=pltpu.CompilerParams(
            dimension_semantics=("parallel", "parallel"),
            vmem_limit_bytes=_VMEM_LIMIT_BYTES),
    )(xp, xp, wf, bf)

    ho_t = ho // 2 if pool else ho
    wo_t = wo // 2 if pool else wo
    out = out.reshape(N, nb, th_out, wk_out, cout).reshape(N, nb * th_out, wk_out, cout)
    return out[:, :ho_t, :wo_t, :]             # drop the padded tail


# ---------------------------------------------------------------------------
# Layers
# ---------------------------------------------------------------------------
def conv3x3_relu_pool(x, w, b):
    """Conv2d(k=3, s=1, p=1) + ReLU + MaxPool2d(2, 2), fused in one kernel."""
    kh, kw, cin, cout = w.shape
    cpad = _round_up(cin, 8)                   # keep lane offsets 8-aligned (layer 1: 3->8)
    if cpad != cin:
        x = jnp.pad(x, ((0, 0), (0, 0), (0, 0), (0, cpad - cin)))
        w = jnp.pad(w, ((0, 0), (0, 0), (0, cpad - cin), (0, 0)))
    wf = w.reshape(kh, kw * cpad, cout)        # K order: (dx, ci)
    return tap_conv(x, wf, b, kh=3, kw=3, pad_top=1, pad_left=1,
                    activation="relu", pool=True, out_dtype=jnp.bfloat16)


# (output parity, input tap offset) -> contributing kernel index for s=2, p=1, op=1.
_KMAP_S2 = {(0, 0): 1, (1, 0): 2, (1, 1): 0}


def _fold_transpose_s2_weights(w_t, b):
    """Pack ConvTranspose2d(k=3, s=2, p=1, op=1) as a 2x2-tap conv with 4*Cout fused
    output channels (one Cout block per sub-pixel phase) on the UN-dilated input."""
    cin, cout = w_t.shape[0], w_t.shape[1]
    zeros = jnp.zeros((cin, cout), w_t.dtype)

    def tap(ty, tx):
        cols = []
        for py in (0, 1):
            for px in (0, 1):
                ky = _KMAP_S2.get((py, ty))
                kx = _KMAP_S2.get((px, tx))
                cols.append(zeros if (ky is None or kx is None) else w_t[:, :, ky, kx])
        return jnp.concatenate(cols, axis=1)               # (cin, 4*cout)

    # Fold the tx taps into the matmul K dimension: (2, 2*cin, 4*cout).
    wf = jnp.stack(
        [jnp.concatenate([tap(ty, 0), tap(ty, 1)], axis=0) for ty in (0, 1)], axis=0)
    return wf, jnp.tile(b, 4)


def conv_transpose3x3_s2_relu(x, w_t, b):
    """ConvTranspose2d(k=3, s=2, p=1, op=1) + ReLU, all 4 sub-pixel phases fused."""
    N, H, W, _ = x.shape
    cout = w_t.shape[1]
    wf, b4 = _fold_transpose_s2_weights(w_t, b)
    y = tap_conv(x, wf, b4, kh=2, kw=2, pad_top=0, pad_left=0,
                 activation="relu", pool=False, out_dtype=jnp.bfloat16)
    # (N, H, W, 4*Cout) -> interleave the (py, px) phases -> (N, 2H, 2W, Cout)
    y = y.reshape(N, H, W, 2, 2, cout).transpose(0, 1, 3, 2, 4, 5)
    return y.reshape(N, 2 * H, 2 * W, cout)


def conv_transpose3x3_s1_sigmoid(x, w_t, b):
    """ConvTranspose2d(16->1, k=3, s=1, p=1) + sigmoid; Cout padded only to 8 lanes."""
    cin, cout = w_t.shape[0], w_t.shape[1]
    cpad = 8
    # ConvTranspose(s=1, p=1) == 3x3 cross-correlation with flipped, channel-swapped kernel.
    wf = jnp.stack(
        [jnp.concatenate([w_t[:, :, 2 - dy, 2 - dx] for dx in range(3)], axis=0)
         for dy in range(3)], axis=0)                      # (3, 3*cin, cout)
    wf = jnp.pad(wf, ((0, 0), (0, 0), (0, cpad - cout)))
    bp = jnp.pad(b, (0, cpad - cout))
    y = tap_conv(x, wf, bp, kh=3, kw=3, pad_top=1, pad_left=1,
                 activation="sigmoid", pool=False, out_dtype=jnp.float32)
    return y[..., :cout]


# ---------------------------------------------------------------------------
# Full forward pass (matches EdgeDetectionEncoder.forward)
# ---------------------------------------------------------------------------
def edge_detection_encoder(x_nchw, params):
    x = jnp.transpose(x_nchw, (0, 2, 3, 1)).astype(jnp.bfloat16)   # NCHW -> NHWC

    x = conv3x3_relu_pool(x, params["w1"], params["b1"])
    x = conv3x3_relu_pool(x, params["w2"], params["b2"])
    encoded = conv3x3_relu_pool(x, params["w3"], params["b3"])     # (N, H/8, W/8, 64)

    y = conv_transpose3x3_s2_relu(encoded, params["wt1"], params["bt1"])
    y = conv_transpose3x3_s2_relu(y, params["wt2"], params["bt2"])
    edge_map = conv_transpose3x3_s1_sigmoid(y, params["wt3"], params["bt3"])

    # Return NCHW float32 like the PyTorch module.
    return (jnp.transpose(encoded.astype(jnp.float32), (0, 3, 1, 2)),
            jnp.transpose(edge_map.astype(jnp.float32), (0, 3, 1, 2)))


# ---------------------------------------------------------------------------
# Pure-JAX f32 reference (for numerical parity testing)
# ---------------------------------------------------------------------------
def _reference_forward(x_nchw, params):
    dn = ("NHWC", "HWIO", "NHWC")
    x = jnp.transpose(x_nchw, (0, 2, 3, 1)).astype(jnp.float32)

    def conv_relu_pool(x, w, b):
        y = jax.lax.conv_general_dilated(x, w.astype(jnp.float32), (1, 1),
                                         ((1, 1), (1, 1)), dimension_numbers=dn)
        y = jnp.maximum(y + b, 0.0)
        return jax.lax.reduce_window(y, -jnp.inf, jax.lax.max,
                                     (1, 2, 2, 1), (1, 2, 2, 1), "VALID")

    def conv_t(x, w_t, b, stride):
        # PyTorch ConvTranspose2d == dilate-by-stride + pad (k-1-p, k-1-p+op) + flipped conv.
        w = jnp.transpose(w_t[:, :, ::-1, ::-1], (2, 3, 0, 1)).astype(jnp.float32)
        pad = ((1, 2), (1, 2)) if stride == 2 else ((1, 1), (1, 1))
        y = jax.lax.conv_general_dilated(x, w, (1, 1), pad,
                                         lhs_dilation=(stride, stride),
                                         dimension_numbers=dn)
        return y + b

    x = conv_relu_pool(x, params["w1"], params["b1"])
    x = conv_relu_pool(x, params["w2"], params["b2"])
    enc = conv_relu_pool(x, params["w3"], params["b3"])
    y = jnp.maximum(conv_t(enc, params["wt1"], params["bt1"], 2), 0.0)
    y = jnp.maximum(conv_t(y, params["wt2"], params["bt2"], 2), 0.0)
    edge = jax.nn.sigmoid(conv_t(y, params["wt3"], params["bt3"], 1))
    return (jnp.transpose(enc, (0, 3, 1, 2)), jnp.transpose(edge, (0, 3, 1, 2)))


def init_params(key):
    ks = jax.random.split(key, 12)

    def nrm(k, shape, scale=0.1):
        return (scale * jax.random.normal(k, shape)).astype(jnp.float32)

    return {
        # Conv2d weights stored as (kH, kW, Cin, Cout); same math as PyTorch Conv2d.
        "w1": nrm(ks[0], (3, 3, 3, 16)),   "b1": nrm(ks[1], (16,)),
        "w2": nrm(ks[2], (3, 3, 16, 32)),  "b2": nrm(ks[3], (32,)),
        "w3": nrm(ks[4], (3, 3, 32, 64)),  "b3": nrm(ks[5], (64,)),
        # ConvTranspose2d weights stored as (Cin, Cout, kH, kW), like PyTorch.
        "wt1": nrm(ks[6], (64, 32, 3, 3)), "bt1": nrm(ks[7], (32,)),
        "wt2": nrm(ks[8], (32, 16, 3, 3)), "bt2": nrm(ks[9], (16,)),
        "wt3": nrm(ks[10], (16, 1, 3, 3)), "bt3": nrm(ks[11], (1,)),
    }


if __name__ == "__main__":
    key = jax.random.PRNGKey(0)
    kx, kp = jax.random.split(key)
    x = jax.random.normal(kx, (2, 3, 16, 16), jnp.float32)   # NCHW like PyTorch
    params = init_params(kp)

    fwd = jax.jit(edge_detection_encoder)
    encoded, edge_map = fwd(x, params)
    jax.block_until_ready((encoded, edge_map))

    assert encoded.shape == (2, 64, 2, 2), encoded.shape
    assert edge_map.shape == (2, 1, 8, 8), edge_map.shape
    assert bool(jnp.all(jnp.isfinite(encoded)))
    assert bool(jnp.all(jnp.isfinite(edge_map)))
    assert bool(jnp.all(edge_map >= 0.0)) and bool(jnp.all(edge_map <= 1.0))

    # Numerical parity vs. the pure-JAX f32 reference (bf16-appropriate tolerances).
    enc_ref, edge_ref = _reference_forward(x, params)
    enc_err = float(jnp.max(jnp.abs(encoded - enc_ref)))
    edge_err = float(jnp.max(jnp.abs(edge_map - edge_ref)))
    assert enc_err < 1e-1, f"encoded max abs error {enc_err}"
    assert edge_err < 5e-2, f"edge_map max abs error {edge_err}"

    print("KERNEL_OK")
</pallas_src>

<mosaic_0001>
module attributes {stable_mosaic.version = 11 : i64} {
  func.func @_tap_conv_kernel(%arg0: i32, %arg1: i32, %arg2: memref<1x16x24x8xbf16, #tpu.memory_space<vmem>>, %arg3: memref<1x8x24x8xbf16, #tpu.memory_space<vmem>>, %arg4: memref<3x24x16xbf16, #tpu.memory_space<vmem>>, %arg5: memref<1x16xf32, #tpu.memory_space<vmem>>, %arg6: memref<1x1x64x16xbf16, #tpu.memory_space<vmem>>, %arg7: memref<18x16x24xbf16, #tpu.memory_space<vmem>>, %arg8: memref<256x16xf32, #tpu.memory_space<vmem>>) attributes {dimension_semantics = [#tpu.dimension_semantics<parallel>, #tpu.dimension_semantics<parallel>], iteration_bounds = array<i64: 2, 1>, scalar_prefetch = 0 : i64, scratch_operands = 2 : i64, tpu.core_type = #tpu.core_type<tc>, window_params = [{transform_indices = @transform_0, window_bounds = array<i64: 1, 16, 24, 8>}, {transform_indices = @transform_1, window_bounds = array<i64: 1, 8, 24, 8>}, {pipeline_mode = #tpu.pipeline_mode<synchronous>, transform_indices = @transform_2, window_bounds = array<i64: 3, 24, 16>}, {pipeline_mode = #tpu.pipeline_mode<synchronous>, transform_indices = @transform_3, window_bounds = array<i64: 1, 16>}, {transform_indices = @transform_4, window_bounds = array<i64: 1, 1, 64, 16>}]} {
    %c0 = arith.constant 0 : index
    %c0_0 = arith.constant 0 : index
    %c0_1 = arith.constant 0 : index
    %c0_2 = arith.constant 0 : index
    %0 = vector.load %arg2[%c0, %c0_0, %c0_1, %c0_2] : memref<1x16x24x8xbf16, #tpu.memory_space<vmem>>, vector<1x16x16x8xbf16>
    %1 = vector.shape_cast %0 : vector<1x16x16x8xbf16> to vector<16x16x8xbf16>
    %c0_3 = arith.constant 0 : index
    %c0_4 = arith.constant 0 : index
    %c0_5 = arith.constant 0 : index
    %2 = vector.load %arg7[%c0_3, %c0_4, %c0_5] : memref<18x16x24xbf16, #tpu.memory_space<vmem>>, vector<16x16x8xbf16>
    tpu.vector_store %arg7[%c0_3, %c0_4, %c0_5], %1 {strides = array<i32>} : memref<18x16x24xbf16, #tpu.memory_space<vmem>>, vector<16x16x8xbf16>,
    %c0_6 = arith.constant 0 : index
    %c0_7 = arith.constant 0 : index
    %c0_8 = arith.constant 0 : index
    %c0_9 = arith.constant 0 : index
    %3 = vector.load %arg3[%c0_6, %c0_7, %c0_8, %c0_9] : memref<1x8x24x8xbf16, #tpu.memory_space<vmem>>, vector<1x2x16x8xbf16>
    %4 = vector.shape_cast %3 : vector<1x2x16x8xbf16> to vector<2x16x8xbf16>
    %c16 = arith.constant 16 : index
    %c0_10 = arith.constant 0 : index
    %c0_11 = arith.constant 0 : index
    %5 = vector.load %arg7[%c16, %c0_10, %c0_11] : memref<18x16x24xbf16, #tpu.memory_space<vmem>>, vector<2x16x8xbf16>
    tpu.vector_store %arg7[%c16, %c0_10, %c0_11], %4 {strides = array<i32>} : memref<18x16x24xbf16, #tpu.memory_space<vmem>>, vector<2x16x8xbf16>,
    %c0_12 = arith.constant 0 : index
    %c0_13 = arith.constant 0 : index
    %c1 = arith.constant 1 : index
    %c0_14 = arith.constant 0 : index
    %6 = vector.load %arg2[%c0_12, %c0_13, %c1, %c0_14] : memref<1x16x24x8xbf16, #tpu.memory_space<vmem>>, vector<1x16x16x8xbf16>
    %7 = vector.shape_cast %6 : vector<1x16x16x8xbf16> to vector<16x16x8xbf16>
    %c0_15 = arith.constant 0 : index
    %c0_16 = arith.constant 0 : index
    %c8 = arith.constant 8 : index
    %8 = vector.load %arg7[%c0_15, %c0_16, %c8] : memref<18x16x24xbf16, #tpu.memory_space<vmem>>, vector<16x16x8xbf16>
    tpu.vector_store %arg7[%c0_15, %c0_16, %c8], %7 {strides = array<i32>} : memref<18x16x24xbf16, #tpu.memory_space<vmem>>, vector<16x16x8xbf16>,
    %c0_17 = arith.constant 0 : index
    %c0_18 = arith.constant 0 : index
    %c1_19 = arith.constant 1 : index
    %c0_20 = arith.constant 0 : index
    %9 = vector.load %arg3[%c0_17, %c0_18, %c1_19, %c0_20] : memref<1x8x24x8xbf16, #tpu.memory_space<vmem>>, vector<1x2x16x8xbf16>
    %10 = vector.shape_cast %9 : vector<1x2x16x8xbf16> to vector<2x16x8xbf16>
    %c16_21 = arith.constant 16 : index
    %c0_22 = arith.constant 0 : index
    %c8_23 = arith.constant 8 : index
    %11 = vector.load %arg7[%c16_21, %c0_22, %c8_23] : memref<18x16x24xbf16, #tpu.memory_space<vmem>>, vector<2x16x8xbf16>
    tpu.vector_store %arg7[%c16_21, %c0_22, %c8_23], %10 {strides = array<i32>} : memref<18x16x24xbf16, #tpu.memory_space<vmem>>, vector<2x16x8xbf16>,
    %c0_24 = arith.constant 0 : index
    %c0_25 = arith.constant 0 : index
    %c2 = arith.constant 2 : index
    %c0_26 = arith.constant 0 : index
    %12 = vector.load %arg2[%c0_24, %c0_25, %c2, %c0_26] : memref<1x16x24x8xbf16, #tpu.memory_space<vmem>>, vector<1x16x16x8xbf16>
    %13 = vector.shape_cast %12 : vector<1x16x16x8xbf16> to vector<16x16x8xbf16>
    %c0_27 = arith.constant 0 : index
    %c0_28 = arith.constant 0 : index
    %c16_29 = arith.constant 16 : index
    %14 = vector.load %arg7[%c0_27, %c0_28, %c16_29] : memref<18x16x24xbf16, #tpu.memory_space<vmem>>, vector<16x16x8xbf16>
    tpu.vector_store %arg7[%c0_27, %c0_28, %c16_29], %13 {strides = array<i32>} : memref<18x16x24xbf16, #tpu.memory_space<vmem>>, vector<16x16x8xbf16>,
    %c0_30 = arith.constant 0 : index
    %c0_31 = arith.constant 0 : index
    %c2_32 = arith.constant 2 : index
    %c0_33 = arith.constant 0 : index
    %15 = vector.load %arg3[%c0_30, %c0_31, %c2_32, %c0_33] : memref<1x8x24x8xbf16, #tpu.memory_space<vmem>>, vector<1x2x16x8xbf16>
    %16 = vector.shape_cast %15 : vector<1x2x16x8xbf16> to vector<2x16x8xbf16>
    %c16_34 = arith.constant 16 : index
    %c0_35 = arith.constant 0 : index
    %c16_36 = arith.constant 16 : index
    %17 = vector.load %arg7[%c16_34, %c0_35, %c16_36] : memref<18x16x24xbf16, #tpu.memory_space<vmem>>, vector<2x16x8xbf16>
    tpu.vector_store %arg7[%c16_34, %c0_35, %c16_36], %16 {strides = array<i32>} : memref<18x16x24xbf16, #tpu.memory_space<vmem>>, vector<2x16x8xbf16>,
    %c0_37 = arith.constant 0 : index
    %c0_38 = arith.constant 0 : index
    %c0_39 = arith.constant 0 : index
    %18 = vector.load %arg7[%c0_37, %c0_38, %c0_39] : memref<18x16x24xbf16, #tpu.memory_space<vmem>>, vector<16x16x24xbf16>
    %19 = vector.shape_cast %18 : vector<16x16x24xbf16> to vector<256x24xbf16>
    %c0_40 = arith.constant 0 : index
    %c0_41 = arith.constant 0 : index
    %c0_42 = arith.constant 0 : index
    %20 = vector.load %arg4[%c0_40, %c0_41, %c0_42] : memref<3x24x16xbf16, #tpu.memory_space<vmem>>, vector<1x24x16xbf16>
    %21 = vector.shape_cast %20 : vector<1x24x16xbf16> to vector<24x16xbf16>
    %cst = arith.constant dense<0.000000e+00> : vector<256x16xf32>
    %22 = tpu.matmul %19, %21, %cst {dimension_numbers = #tpu.dot_dimension_numbers<[1], [0], [0], [1], [0, 0, 1, 1], [], []>} : vector<256x24xbf16>, vector<24x16xbf16>, vector<256x16xf32> -> vector<256x16xf32>
    %c0_43 = arith.constant 0 : index
    %c0_44 = arith.constant 0 : index
    %23 = vector.load %arg8[%c0_43, %c0_44] : memref<256x16xf32, #tpu.memory_space<vmem>>, vector<256x16xf32>
    tpu.vector_store %arg8[%c0_43, %c0_44], %22 {strides = array<i32>} : memref<256x16xf32, #tpu.memory_space<vmem>>, vector<256x16xf32>,
    %c1_45 = arith.constant 1 : index
    %c0_46 = arith.constant 0 : index
    %c0_47 = arith.constant 0 : index
    %24 = vector.load %arg7[%c1_45, %c0_46, %c0_47] : memref<18x16x24xbf16, #tpu.memory_space<vmem>>, vector<16x16x24xbf16>
    %25 = vector.shape_cast %24 : vector<16x16x24xbf16> to vector<256x24xbf16>
    %c1_48 = arith.constant 1 : index
    %c0_49 = arith.constant 0 : index
    %c0_50 = arith.constant 0 : index
    %26 = vector.load %arg4[%c1_48, %c0_49, %c0_50] : memref<3x24x16xbf16, #tpu.memory_space<vmem>>, vector<1x24x16xbf16>
    %27 = vector.shape_cast %26 : vector<1x24x16xbf16> to vector<24x16xbf16>
    %cst_51 = arith.constant dense<0.000000e+00> : vector<256x16xf32>
    %28 = tpu.matmul %25, %27, %cst_51 {dimension_numbers = #tpu.dot_dimension_numbers<[1], [0], [0], [1], [0, 0, 1, 1], [], []>} : vector<256x24xbf16>, vector<24x16xbf16>, vector<256x16xf32> -> vector<256x16xf32>
    %c0_52 = arith.constant 0 : index
    %c0_53 = arith.constant 0 : index
    %29 = vector.load %arg8[%c0_52, %c0_53] : memref<256x16xf32, #tpu.memory_space<vmem>>, vector<256x16xf32>
    %30 = arith.addf %29, %28 : vector<256x16xf32>
    %c0_54 = arith.constant 0 : index
    %c0_55 = arith.constant 0 : index
    %31 = vector.load %arg8[%c0_54, %c0_55] : memref<256x16xf32, #tpu.memory_space<vmem>>, vector<256x16xf32>
    tpu.vector_store %arg8[%c0_54, %c0_55], %30 {strides = array<i32>} : memref<256x16xf32, #tpu.memory_space<vmem>>, vector<256x16xf32>,
    %c2_56 = arith.constant 2 : index
    %c0_57 = arith.constant 0 : index
    %c0_58 = arith.constant 0 : index
    %32 = vector.load %arg7[%c2_56, %c0_57, %c0_58] : memref<18x16x24xbf16, #tpu.memory_space<vmem>>, vector<16x16x24xbf16>
    %33 = vector.shape_cast %32 : vector<16x16x24xbf16> to vector<256x24xbf16>
    %c2_59 = arith.constant 2 : index
    %c0_60 = arith.constant 0 : index
    %c0_61 = arith.constant 0 : index
    %34 = vector.load %arg4[%c2_59, %c0_60, %c0_61] : memref<3x24x16xbf16, #tpu.memory_space<vmem>>, vector<1x24x16xbf16>
    %35 = vector.shape_cast %34 : vector<1x24x16xbf16> to vector<24x16xbf16>
    %cst_62 = arith.constant dense<0.000000e+00> : vector<256x16xf32>
    %36 = tpu.matmul %33, %35, %cst_62 {dimension_numbers = #tpu.dot_dimension_numbers<[1], [0], [0], [1], [0, 0, 1, 1], [], []>} : vector<256x24xbf16>, vector<24x16xbf16>, vector<256x16xf32> -> vector<256x16xf32>
    %c0_63 = arith.constant 0 : index
    %c0_64 = arith.constant 0 : index
    %37 = vector.load %arg8[%c0_63, %c0_64] : memref<256x16xf32, #tpu.memory_space<vmem>>, vector<256x16xf32>
    %38 = arith.addf %37, %36 : vector<256x16xf32>
    %c0_65 = arith.constant 0 : index
    %c0_66 = arith.constant 0 : index
    %39 = vector.load %arg8[%c0_65, %c0_66] : memref<256x16xf32, #tpu.memory_space<vmem>>, vector<256x16xf32>
    tpu.vector_store %arg8[%c0_65, %c0_66], %38 {strides = array<i32>} : memref<256x16xf32, #tpu.memory_space<vmem>>, vector<256x16xf32>,
    %c0_67 = arith.constant 0 : index
    %c0_68 = arith.constant 0 : index
    %40 = vector.load %arg8[%c0_67, %c0_68] : memref<256x16xf32, #tpu.memory_space<vmem>>, vector<256x16xf32>
    %c0_69 = arith.constant 0 : index
    %c0_70 = arith.constant 0 : index
    %41 = vector.load %arg5[%c0_69, %c0_70] : memref<1x16xf32, #tpu.memory_space<vmem>>, vector<1x16xf32>
    %42 = vector.broadcast %41 : vector<1x16xf32> to vector<256x16xf32>
    %43 = arith.addf %40, %42 : vector<256x16xf32>
    %cst_71 = arith.constant 0.000000e+00 : f32
    %44 = vector.broadcast %cst_71 : f32 to vector<256x16xf32>
    %45 = arith.maximumf %43, %44 : vector<256x16xf32>
    %46 = vector.shape_cast %45 : vector<256x16xf32> to vector<8x2x16x16xf32>
    %47 = vector.extract_strided_slice %46 {offsets = [0, 0, 0, 0], sizes = [8, 1, 16, 16], strides = [1, 1, 1, 1]} : vector<8x2x16x16xf32> to vector<8x1x16x16xf32>
    %48 = vector.shape_cast %47 : vector<8x1x16x16xf32> to vector<8x16x16xf32>
    %49 = vector.extract_strided_slice %46 {offsets = [0, 1, 0, 0], sizes = [8, 1, 16, 16], strides = [1, 1, 1, 1]} : vector<8x2x16x16xf32> to vector<8x1x16x16xf32>
    %50 = vector.shape_cast %49 : vector<8x1x16x16xf32> to vector<8x16x16xf32>
    %51 = arith.maximumf %48, %50 : vector<8x16x16xf32>
    %52 = vector.shape_cast %51 : vector<8x16x16xf32> to vector<128x16xf32>
    %c0_72 = arith.constant 0 : index
    %c0_73 = arith.constant 0 : index
    %53 = vector.load %arg8[%c0_72, %c0_73] : memref<256x16xf32, #tpu.memory_space<vmem>>, vector<128x16xf32>
    tpu.vector_store %arg8[%c0_72, %c0_73], %52 {strides = array<i32>} : memref<256x16xf32, #tpu.memory_space<vmem>>, vector<128x16xf32>,
    %c0_74 = arith.constant 0 : index
    %c0_75 = arith.constant 0 : index
    %54 = tpu.strided_load %arg8[%c0_74, %c0_75] {strides = array<i32: 2, 1>} : memref<256x16xf32, #tpu.memory_space<vmem>>, vector<64x16xf32>
    %c1_76 = arith.constant 1 : index
    %c0_77 = arith.constant 0 : index
    %55 = tpu.strided_load %arg8[%c1_76, %c0_77] {strides = array<i32: 2, 1>} : memref<256x16xf32, #tpu.memory_space<vmem>>, vector<64x16xf32>
    %56 = arith.maximumf %54, %55 : vector<64x16xf32>
    %57 = arith.truncf %56 : vector<64x16xf32> to vector<64x16xbf16>
    %c0_78 = arith.constant 0 : index
    %c0_79 = arith.constant 0 : index
    %c0_80 = arith.constant 0 : index
    %c0_81 = arith.constant 0 : index
    %58 = vector.load %arg6[%c0_78, %c0_79, %c0_80, %c0_81] : memref<1x1x64x16xbf16, #tpu.memory_space<vmem>>, vector<1x1x64x16xbf16>
    %59 = vector.shape_cast %58 : vector<1x1x64x16xbf16> to vector<64x16xbf16>
    %60 = vector.shape_cast %57 : vector<64x16xbf16> to vector<1x1x64x16xbf16>
    tpu.vector_store %arg6[%c0_78, %c0_79, %c0_80, %c0_81], %60 {strides = array<i32>} : memref<1x1x64x16xbf16, #tpu.memory_space<vmem>>, vector<1x1x64x16xbf16>,
    return
  }
  func.func @transform_0(%arg0: i32, %arg1: i32) -> (i32, i32, i32, i32) {
    %c0_i32 = arith.constant 0 : i32
    %c0_i32_0 = arith.constant 0 : i32
    %c0_i32_1 = arith.constant 0 : i32
    return %arg0, %arg1, %c0_i32, %c0_i32_0 : i32, i32, i32, i32
  }
  func.func @transform_1(%arg0: i32, %arg1: i32) -> (i32, i32, i32, i32) {
    %c1_i32 = arith.constant 1 : i32
    %0 = arith.addi %arg1, %c1_i32 : i32
    %c2_i32 = arith.constant 2 : i32
    %1 = arith.muli %0, %c2_i32 : i32
    %c0_i32 = arith.constant 0 : i32
    %c0_i32_0 = arith.constant 0 : i32
    %c0_i32_1 = arith.constant 0 : i32
    return %arg0, %1, %c0_i32, %c0_i32_0 : i32, i32, i32, i32
  }
  func.func @transform_2(%arg0: i32, %arg1: i32) -> (i32, i32, i32) {
    %c0_i32 = arith.constant 0 : i32
    %c0_i32_0 = arith.constant 0 : i32
    %c0_i32_1 = arith.constant 0 : i32
    %c0_i32_2 = arith.constant 0 : i32
    return %c0_i32, %c0_i32_0, %c0_i32_1 : i32, i32, i32
  }
  func.func @transform_3(%arg0: i32, %arg1: i32) -> (i32, i32) {
    %c0_i32 = arith.constant 0 : i32
    %c0_i32_0 = arith.constant 0 : i32
    %c0_i32_1 = arith.constant 0 : i32
    return %c0_i32, %c0_i32_0 : i32, i32
  }
  func.func @transform_4(%arg0: i32, %arg1: i32) -> (i32, i32, i32, i32) {
    %c0_i32 = arith.constant 0 : i32
    %c0_i32_0 = arith.constant 0 : i32
    %c0_i32_1 = arith.constant 0 : i32
    return %arg0, %arg1, %c0_i32, %c0_i32_0 : i32, i32, i32, i32
  }
}

module attributes {stable_mosaic.version = 11 : i64} {
  func.func @_tap_conv_kernel(%arg0: i32, %arg1: i32, %arg2: memref<1x8x16x16xbf16, #tpu.memory_space<vmem>>, %arg3: memref<1x8x16x16xbf16, #tpu.memory_space<vmem>>, %arg4: memref<3x48x32xbf16, #tpu.memory_space<vmem>>, %arg5: memref<1x32xf32, #tpu.memory_space<vmem>>, %arg6: memref<1x1x16x32xbf16, #tpu.memory_space<vmem>>, %arg7: memref<10x8x48xbf16, #tpu.memory_space<vmem>>, %arg8: memref<64x32xf32, #tpu.memory_space<vmem>>) attributes {dimension_semantics = [#tpu.dimension_semantics<parallel>, #tpu.dimension_semantics<parallel>], iteration_bounds = array<i64: 2, 1>, scalar_prefetch = 0 : i64, scratch_operands = 2 : i64, tpu.core_type = #tpu.core_type<tc>, window_params = [{transform_indices = @transform_0, window_bounds = array<i64: 1, 8, 16, 16>}, {transform_indices = @transform_1, window_bounds = array<i64: 1, 8, 16, 16>}, {pipeline_mode = #tpu.pipeline_mode<synchronous>, transform_indices = @transform_2, window_bounds = array<i64: 3, 48, 32>}, {pipeline_mode = #tpu.pipeline_mode<synchronous>, transform_indices = @transform_3, window_bounds = array<i64: 1, 32>}, {transform_indices = @transform_4, window_bounds = array<i64: 1, 1, 16, 32>}]} {
    %c0 = arith.constant 0 : index
    %c0_0 = arith.constant 0 : index
    %c0_1 = arith.constant 0 : index
    %c0_2 = arith.constant 0 : index
    %0 = vector.load %arg2[%c0, %c0_0, %c0_1, %c0_2] : memref<1x8x16x16xbf16, #tpu.memory_space<vmem>>, vector<1x8x8x16xbf16>
    %1 = vector.shape_cast %0 : vector<1x8x8x16xbf16> to vector<8x8x16xbf16>
    %c0_3 = arith.constant 0 : index
    %c0_4 = arith.constant 0 : index
    %c0_5 = arith.constant 0 : index
    %2 = vector.load %arg7[%c0_3, %c0_4, %c0_5] : memref<10x8x48xbf16, #tpu.memory_space<vmem>>, vector<8x8x16xbf16>
    tpu.vector_store %arg7[%c0_3, %c0_4, %c0_5], %1 {strides = array<i32>} : memref<10x8x48xbf16, #tpu.memory_space<vmem>>, vector<8x8x16xbf16>,
    %c0_6 = arith.constant 0 : index
    %c0_7 = arith.constant 0 : index
    %c0_8 = arith.constant 0 : index
    %c0_9 = arith.constant 0 : index
    %3 = vector.load %arg3[%c0_6, %c0_7, %c0_8, %c0_9] : memref<1x8x16x16xbf16, #tpu.memory_space<vmem>>, vector<1x2x8x16xbf16>
    %4 = vector.shape_cast %3 : vector<1x2x8x16xbf16> to vector<2x8x16xbf16>
    %c8 = arith.constant 8 : index
    %c0_10 = arith.constant 0 : index
    %c0_11 = arith.constant 0 : index
    %5 = vector.load %arg7[%c8, %c0_10, %c0_11] : memref<10x8x48xbf16, #tpu.memory_space<vmem>>, vector<2x8x16xbf16>
    tpu.vector_store %arg7[%c8, %c0_10, %c0_11], %4 {strides = array<i32>} : memref<10x8x48xbf16, #tpu.memory_space<vmem>>, vector<2x8x16xbf16>,
    %c0_12 = arith.constant 0 : index
    %c0_13 = arith.constant 0 : index
    %c1 = arith.constant 1 : index
    %c0_14 = arith.constant 0 : index
    %6 = vector.load %arg2[%c0_12, %c0_13, %c1, %c0_14] : memref<1x8x16x16xbf16, #tpu.memory_space<vmem>>, vector<1x8x8x16xbf16>
    %7 = vector.shape_cast %6 : vector<1x8x8x16xbf16> to vector<8x8x16xbf16>
    %c0_15 = arith.constant 0 : index
    %c0_16 = arith.constant 0 : index
    %c16 = arith.constant 16 : index
    %8 = vector.load %arg7[%c0_15, %c0_16, %c16] : memref<10x8x48xbf16, #tpu.memory_space<vmem>>, vector<8x8x16xbf16>
    tpu.vector_store %arg7[%c0_15, %c0_16, %c16], %7 {strides = array<i32>} : memref<10x8x48xbf16, #tpu.memory_space<vmem>>, vector<8x8x16xbf16>,
    %c0_17 = arith.constant 0 : index
    %c0_18 = arith.constant 0 : index
    %c1_19 = arith.constant 1 : index
    %c0_20 = arith.constant 0 : index
    %9 = vector.load %arg3[%c0_17, %c0_18, %c1_19, %c0_20] : memref<1x8x16x16xbf16, #tpu.memory_space<vmem>>, vector<1x2x8x16xbf16>
    %10 = vector.shape_cast %9 : vector<1x2x8x16xbf16> to vector<2x8x16xbf16>
    %c8_21 = arith.constant 8 : index
    %c0_22 = arith.constant 0 : index
    %c16_23 = arith.constant 16 : index
    %11 = vector.load %arg7[%c8_21, %c0_22, %c16_23] : memref<10x8x48xbf16, #tpu.memory_space<vmem>>, vector<2x8x16xbf16>
    tpu.vector_store %arg7[%c8_21, %c0_22, %c16_23], %10 {strides = array<i32>} : memref<10x8x48xbf16, #tpu.memory_space<vmem>>, vector<2x8x16xbf16>,
    %c0_24 = arith.constant 0 : index
    %c0_25 = arith.constant 0 : index
    %c2 = arith.constant 2 : index
    %c0_26 = arith.constant 0 : index
    %12 = vector.load %arg2[%c0_24, %c0_25, %c2, %c0_26] : memref<1x8x16x16xbf16, #tpu.memory_space<vmem>>, vector<1x8x8x16xbf16>
    %13 = vector.shape_cast %12 : vector<1x8x8x16xbf16> to vector<8x8x16xbf16>
    %c0_27 = arith.constant 0 : index
    %c0_28 = arith.constant 0 : index
    %c32 = arith.constant 32 : index
    %14 = vector.load %arg7[%c0_27, %c0_28, %c32] : memref<10x8x48xbf16, #tpu.memory_space<vmem>>, vector<8x8x16xbf16>
    tpu.vector_store %arg7[%c0_27, %c0_28, %c32], %13 {strides = array<i32>} : memref<10x8x48xbf16, #tpu.memory_space<vmem>>, vector<8x8x16xbf16>,
    %c0_29 = arith.constant 0 : index
    %c0_30 = arith.constant 0 : index
    %c2_31 = arith.constant 2 : index
    %c0_32 = arith.constant 0 : index
    %15 = vector.load %arg3[%c0_29, %c0_30, %c2_31, %c0_32] : memref<1x8x16x16xbf16, #tpu.memory_space<vmem>>, vector<1x2x8x16xbf16>
    %16 = vector.shape_cast %15 : vector<1x2x8x16xbf16> to vector<2x8x16xbf16>
    %c8_33 = arith.constant 8 : index
    %c0_34 = arith.constant 0 : index
    %c32_35 = arith.constant 32 : index
    %17 = vector.load %arg7[%c8_33, %c0_34, %c32_35] : memref<10x8x48xbf16, #tpu.memory_space<vmem>>, vector<2x8x16xbf16>
    tpu.vector_store %arg7[%c8_33, %c0_34, %c32_35], %16 {strides = array<i32>} : memref<10x8x48xbf16, #tpu.memory_space<vmem>>, vector<2x8x16xbf16>,
    %c0_36 = arith.constant 0 : index
    %c0_37 = arith.constant 0 : index
    %c0_38 = arith.constant 0 : index
    %18 = vector.load %arg7[%c0_36, %c0_37, %c0_38] : memref<10x8x48xbf16, #tpu.memory_space<vmem>>, vector<8x8x48xbf16>
    %19 = vector.shape_cast %18 : vector<8x8x48xbf16> to vector<64x48xbf16>
    %c0_39 = arith.constant 0 : index
    %c0_40 = arith.constant 0 : index
    %c0_41 = arith.constant 0 : index
    %20 = vector.load %arg4[%c0_39, %c0_40, %c0_41] : memref<3x48x32xbf16, #tpu.memory_space<vmem>>, vector<1x48x32xbf16>
    %21 = vector.shape_cast %20 : vector<1x48x32xbf16> to vector<48x32xbf16>
    %cst = arith.constant dense<0.000000e+00> : vector<64x32xf32>
    %22 = tpu.matmul %19, %21, %cst {dimension_numbers = #tpu.dot_dimension_numbers<[1], [0], [0], [1], [0, 0, 1, 1], [], []>} : vector<64x48xbf16>, vector<48x32xbf16>, vector<64x32xf32> -> vector<64x32xf32>
    %c0_42 = arith.constant 0 : index
    %c0_43 = arith.constant 0 : index
    %23 = vector.load %arg8[%c0_42, %c0_43] : memref<64x32xf32, #tpu.memory_space<vmem>>, vector<64x32xf32>
    tpu.vector_store %arg8[%c0_42, %c0_43], %22 {strides = array<i32>} : memref<64x32xf32, #tpu.memory_space<vmem>>, vector<64x32xf32>,
    %c1_44 = arith.constant 1 : index
    %c0_45 = arith.constant 0 : index
    %c0_46 = arith.constant 0 : index
    %24 = vector.load %arg7[%c1_44, %c0_45, %c0_46] : memref<10x8x48xbf16, #tpu.memory_space<vmem>>, vector<8x8x48xbf16>
    %25 = vector.shape_cast %24 : vector<8x8x48xbf16> to vector<64x48xbf16>
    %c1_47 = arith.constant 1 : index
    %c0_48 = arith.constant 0 : index
    %c0_49 = arith.constant 0 : index
    %26 = vector.load %arg4[%c1_47, %c0_48, %c0_49] : memref<3x48x32xbf16, #tpu.memory_space<vmem>>, vector<1x48x32xbf16>
    %27 = vector.shape_cast %26 : vector<1x48x32xbf16> to vector<48x32xbf16>
    %cst_50 = arith.constant dense<0.000000e+00> : vector<64x32xf32>
    %28 = tpu.matmul %25, %27, %cst_50 {dimension_numbers = #tpu.dot_dimension_numbers<[1], [0], [0], [1], [0, 0, 1, 1], [], []>} : vector<64x48xbf16>, vector<48x32xbf16>, vector<64x32xf32> -> vector<64x32xf32>
    %c0_51 = arith.constant 0 : index
    %c0_52 = arith.constant 0 : index
    %29 = vector.load %arg8[%c0_51, %c0_52] : memref<64x32xf32, #tpu.memory_space<vmem>>, vector<64x32xf32>
    %30 = arith.addf %29, %28 : vector<64x32xf32>
    %c0_53 = arith.constant 0 : index
    %c0_54 = arith.constant 0 : index
    %31 = vector.load %arg8[%c0_53, %c0_54] : memref<64x32xf32, #tpu.memory_space<vmem>>, vector<64x32xf32>
    tpu.vector_store %arg8[%c0_53, %c0_54], %30 {strides = array<i32>} : memref<64x32xf32, #tpu.memory_space<vmem>>, vector<64x32xf32>,
    %c2_55 = arith.constant 2 : index
    %c0_56 = arith.constant 0 : index
    %c0_57 = arith.constant 0 : index
    %32 = vector.load %arg7[%c2_55, %c0_56, %c0_57] : memref<10x8x48xbf16, #tpu.memory_space<vmem>>, vector<8x8x48xbf16>
    %33 = vector.shape_cast %32 : vector<8x8x48xbf16> to vector<64x48xbf16>
    %c2_58 = arith.constant 2 : index
    %c0_59 = arith.constant 0 : index
    %c0_60 = arith.constant 0 : index
    %34 = vector.load %arg4[%c2_58, %c0_59, %c0_60] : memref<3x48x32xbf16, #tpu.memory_space<vmem>>, vector<1x48x32xbf16>
    %35 = vector.shape_cast %34 : vector<1x48x32xbf16> to vector<48x32xbf16>
    %cst_61 = arith.constant dense<0.000000e+00> : vector<64x32xf32>
    %36 = tpu.matmul %33, %35, %cst_61 {dimension_numbers = #tpu.dot_dimension_numbers<[1], [0], [0], [1], [0, 0, 1, 1], [], []>} : vector<64x48xbf16>, vector<48x32xbf16>, vector<64x32xf32> -> vector<64x32xf32>
    %c0_62 = arith.constant 0 : index
    %c0_63 = arith.constant 0 : index
    %37 = vector.load %arg8[%c0_62, %c0_63] : memref<64x32xf32, #tpu.memory_space<vmem>>, vector<64x32xf32>
    %38 = arith.addf %37, %36 : vector<64x32xf32>
    %c0_64 = arith.constant 0 : index
    %c0_65 = arith.constant 0 : index
    %39 = vector.load %arg8[%c0_64, %c0_65] : memref<64x32xf32, #tpu.memory_space<vmem>>, vector<64x32xf32>
    tpu.vector_store %arg8[%c0_64, %c0_65], %38 {strides = array<i32>} : memref<64x32xf32, #tpu.memory_space<vmem>>, vector<64x32xf32>,
    %c0_66 = arith.constant 0 : index
    %c0_67 = arith.constant 0 : index
    %40 = vector.load %arg8[%c0_66, %c0_67] : memref<64x32xf32, #tpu.memory_space<vmem>>, vector<64x32xf32>
    %c0_68 = arith.constant 0 : index
    %c0_69 = arith.constant 0 : index
    %41 = vector.load %arg5[%c0_68, %c0_69] : memref<1x32xf32, #tpu.memory_space<vmem>>, vector<1x32xf32>
    %42 = vector.broadcast %41 : vector<1x32xf32> to vector<64x32xf32>
    %43 = arith.addf %40, %42 : vector<64x32xf32>
    %cst_70 = arith.constant 0.000000e+00 : f32
    %44 = vector.broadcast %cst_70 : f32 to vector<64x32xf32>
    %45 = arith.maximumf %43, %44 : vector<64x32xf32>
    %46 = vector.shape_cast %45 : vector<64x32xf32> to vector<4x2x8x32xf32>
    %47 = vector.extract_strided_slice %46 {offsets = [0, 0, 0, 0], sizes = [4, 1, 8, 32], strides = [1, 1, 1, 1]} : vector<4x2x8x32xf32> to vector<4x1x8x32xf32>
    %48 = vector.shape_cast %47 : vector<4x1x8x32xf32> to vector<4x8x32xf32>
    %49 = vector.extract_strided_slice %46 {offsets = [0, 1, 0, 0], sizes = [4, 1, 8, 32], strides = [1, 1, 1, 1]} : vector<4x2x8x32xf32> to vector<4x1x8x32xf32>
    %50 = vector.shape_cast %49 : vector<4x1x8x32xf32> to vector<4x8x32xf32>
    %51 = arith.maximumf %48, %50 : vector<4x8x32xf32>
    %52 = vector.shape_cast %51 : vector<4x8x32xf32> to vector<32x32xf32>
    %c0_71 = arith.constant 0 : index
    %c0_72 = arith.constant 0 : index
    %53 = vector.load %arg8[%c0_71, %c0_72] : memref<64x32xf32, #tpu.memory_space<vmem>>, vector<32x32xf32>
    tpu.vector_store %arg8[%c0_71, %c0_72], %52 {strides = array<i32>} : memref<64x32xf32, #tpu.memory_space<vmem>>, vector<32x32xf32>,
    %c0_73 = arith.constant 0 : index
    %c0_74 = arith.constant 0 : index
    %54 = tpu.strided_load %arg8[%c0_73, %c0_74] {strides = array<i32: 2, 1>} : memref<64x32xf32, #tpu.memory_space<vmem>>, vector<16x32xf32>
    %c1_75 = arith.constant 1 : index
    %c0_76 = arith.constant 0 : index
    %55 = tpu.strided_load %arg8[%c1_75, %c0_76] {strides = array<i32: 2, 1>} : memref<64x32xf32, #tpu.memory_space<vmem>>, vector<16x32xf32>
    %56 = arith.maximumf %54, %55 : vector<16x32xf32>
    %57 = arith.truncf %56 : vector<16x32xf32> to vector<16x32xbf16>
    %c0_77 = arith.constant 0 : index
    %c0_78 = arith.constant 0 : index
    %c0_79 = arith.constant 0 : index
    %c0_80 = arith.constant 0 : index
    %58 = vector.load %arg6[%c0_77, %c0_78, %c0_79, %c0_80] : memref<1x1x16x32xbf16, #tpu.memory_space<vmem>>, vector<1x1x16x32xbf16>
    %59 = vector.shape_cast %58 : vector<1x1x16x32xbf16> to vector<16x32xbf16>
    %60 = vector.shape_cast %57 : vector<16x32xbf16> to vector<1x1x16x32xbf16>
    tpu.vector_store %arg6[%c0_77, %c0_78, %c0_79, %c0_80], %60 {strides = array<i32>} : memref<1x1x16x32xbf16, #tpu.memory_space<vmem>>, vector<1x1x16x32xbf16>,
    return
  }
  func.func @transform_0(%arg0: i32, %arg1: i32) -> (i32, i32, i32, i32) {
    %c0_i32 = arith.constant 0 : i32
    %c0_i32_0 = arith.constant 0 : i32
    %c0_i32_1 = arith.constant 0 : i32
    return %arg0, %arg1, %c0_i32, %c0_i32_0 : i32, i32, i32, i32
  }
  func.func @transform_1(%arg0: i32, %arg1: i32) -> (i32, i32, i32, i32) {
    %c1_i32 = arith.constant 1 : i32
    %0 = arith.addi %arg1, %c1_i32 : i32
    %c1_i32_0 = arith.constant 1 : i32
    %1 = arith.muli %0, %c1_i32_0 : i32
    %c0_i32 = arith.constant 0 : i32
    %c0_i32_1 = arith.constant 0 : i32
    %c0_i32_2 = arith.constant 0 : i32
    return %arg0, %1, %c0_i32, %c0_i32_1 : i32, i32, i32, i32
  }
  func.func @transform_2(%arg0: i32, %arg1: i32) -> (i32, i32, i32) {
    %c0_i32 = arith.constant 0 : i32
    %c0_i32_0 = arith.constant 0 : i32
    %c0_i32_1 = arith.constant 0 : i32
    %c0_i32_2 = arith.constant 0 : i32
    return %c0_i32, %c0_i32_0, %c0_i32_1 : i32, i32, i32
  }
  func.func @transform_3(%arg0: i32, %arg1: i32) -> (i32, i32) {
    %c0_i32 = arith.constant 0 : i32
    %c0_i32_0 = arith.constant 0 : i32
    %c0_i32_1 = arith.constant 0 : i32
    return %c0_i32, %c0_i32_0 : i32, i32
  }
  func.func @transform_4(%arg0: i32, %arg1: i32) -> (i32, i32, i32, i32) {
    %c0_i32 = arith.constant 0 : i32
    %c0_i32_0 = arith.constant 0 : i32
    %c0_i32_1 = arith.constant 0 : i32
    return %arg0, %arg1, %c0_i32, %c0_i32_0 : i32, i32, i32, i32
  }
}

module attributes {stable_mosaic.version = 11 : i64} {
  func.func @_tap_conv_kernel(%arg0: i32, %arg1: i32, %arg2: memref<1x8x16x32xbf16, #tpu.memory_space<vmem>>, %arg3: memref<1x8x16x32xbf16, #tpu.memory_space<vmem>>, %arg4: memref<3x96x64xbf16, #tpu.memory_space<vmem>>, %arg5: memref<1x64xf32, #tpu.memory_space<vmem>>, %arg6: memref<1x1x16x64xbf16, #tpu.memory_space<vmem>>, %arg7: memref<10x8x96xbf16, #tpu.memory_space<vmem>>, %arg8: memref<64x64xf32, #tpu.memory_space<vmem>>) attributes {dimension_semantics = [#tpu.dimension_semantics<parallel>, #tpu.dimension_semantics<parallel>], iteration_bounds = array<i64: 2, 1>, scalar_prefetch = 0 : i64, scratch_operands = 2 : i64, tpu.core_type = #tpu.core_type<tc>, window_params = [{transform_indices = @transform_0, window_bounds = array<i64: 1, 8, 16, 32>}, {transform_indices = @transform_1, window_bounds = array<i64: 1, 8, 16, 32>}, {pipeline_mode = #tpu.pipeline_mode<synchronous>, transform_indices = @transform_2, window_bounds = array<i64: 3, 96, 64>}, {pipeline_mode = #tpu.pipeline_mode<synchronous>, transform_indices = @transform_3, window_bounds = array<i64: 1, 64>}, {transform_indices = @transform_4, window_bounds = array<i64: 1, 1, 16, 64>}]} {
    %c0 = arith.constant 0 : index
    %c0_0 = arith.constant 0 : index
    %c0_1 = arith.constant 0 : index
    %c0_2 = arith.constant 0 : index
    %0 = vector.load %arg2[%c0, %c0_0, %c0_1, %c0_2] : memref<1x8x16x32xbf16, #tpu.memory_space<vmem>>, vector<1x8x8x32xbf16>
    %1 = vector.shape_cast %0 : vector<1x8x8x32xbf16> to vector<8x8x32xbf16>
    %c0_3 = arith.constant 0 : index
    %c0_4 = arith.constant 0 : index
    %c0_5 = arith.constant 0 : index
    %2 = vector.load %arg7[%c0_3, %c0_4, %c0_5] : memref<10x8x96xbf16, #tpu.memory_space<vmem>>, vector<8x8x32xbf16>
    tpu.vector_store %arg7[%c0_3, %c0_4, %c0_5], %1 {strides = array<i32>} : memref<10x8x96xbf16, #tpu.memory_space<vmem>>, vector<8x8x32xbf16>,
    %c0_6 = arith.constant 0 : index
    %c0_7 = arith.constant 0 : index
    %c0_8 = arith.constant 0 : index
    %c0_9 = arith.constant 0 : index
    %3 = vector.load %arg3[%c0_6, %c0_7, %c0_8, %c0_9] : memref<1x8x16x32xbf16, #tpu.memory_space<vmem>>, vector<1x2x8x32xbf16>
    %4 = vector.shape_cast %3 : vector<1x2x8x32xbf16> to vector<2x8x32xbf16>
    %c8 = arith.constant 8 : index
    %c0_10 = arith.constant 0 : index
    %c0_11 = arith.constant 0 : index
    %5 = vector.load %arg7[%c8, %c0_10, %c0_11] : memref<10x8x96xbf16, #tpu.memory_space<vmem>>, vector<2x8x32xbf16>
    tpu.vector_store %arg7[%c8, %c0_10, %c0_11], %4 {strides = array<i32>} : memref<10x8x96xbf16, #tpu.memory_space<vmem>>, vector<2x8x32xbf16>,
    %c0_12 = arith.constant 0 : index
    %c0_13 = arith.constant 0 : index
    %c1 = arith.constant 1 : index
    %c0_14 = arith.constant 0 : index
    %6 = vector.load %arg2[%c0_12, %c0_13, %c1, %c0_14] : memref<1x8x16x32xbf16, #tpu.memory_space<vmem>>, vector<1x8x8x32xbf16>
    %7 = vector.shape_cast %6 : vector<1x8x8x32xbf16> to vector<8x8x32xbf16>
    %c0_15 = arith.constant 0 : index
    %c0_16 = arith.constant 0 : index
    %c32 = arith.constant 32 : index
    %8 = vector.load %arg7[%c0_15, %c0_16, %c32] : memref<10x8x96xbf16, #tpu.memory_space<vmem>>, vector<8x8x32xbf16>
    tpu.vector_store %arg7[%c0_15, %c0_16, %c32], %7 {strides = array<i32>} : memref<10x8x96xbf16, #tpu.memory_space<vmem>>, vector<8x8x32xbf16>,
    %c0_17 = arith.constant 0 : index
    %c0_18 = arith.constant 0 : index
    %c1_19 = arith.constant 1 : index
    %c0_20 = arith.constant 0 : index
    %9 = vector.load %arg3[%c0_17, %c0_18, %c1_19, %c0_20] : memref<1x8x16x32xbf16, #tpu.memory_space<vmem>>, vector<1x2x8x32xbf16>
    %10 = vector.shape_cast %9 : vector<1x2x8x32xbf16> to vector<2x8x32xbf16>
    %c8_21 = arith.constant 8 : index
    %c0_22 = arith.constant 0 : index
    %c32_23 = arith.constant 32 : index
    %11 = vector.load %arg7[%c8_21, %c0_22, %c32_23] : memref<10x8x96xbf16, #tpu.memory_space<vmem>>, vector<2x8x32xbf16>
    tpu.vector_store %arg7[%c8_21, %c0_22, %c32_23], %10 {strides = array<i32>} : memref<10x8x96xbf16, #tpu.memory_space<vmem>>, vector<2x8x32xbf16>,
    %c0_24 = arith.constant 0 : index
    %c0_25 = arith.constant 0 : index
    %c2 = arith.constant 2 : index
    %c0_26 = arith.constant 0 : index
    %12 = vector.load %arg2[%c0_24, %c0_25, %c2, %c0_26] : memref<1x8x16x32xbf16, #tpu.memory_space<vmem>>, vector<1x8x8x32xbf16>
    %13 = vector.shape_cast %12 : vector<1x8x8x32xbf16> to vector<8x8x32xbf16>
    %c0_27 = arith.constant 0 : index
    %c0_28 = arith.constant 0 : index
    %c64 = arith.constant 64 : index
    %14 = vector.load %arg7[%c0_27, %c0_28, %c64] : memref<10x8x96xbf16, #tpu.memory_space<vmem>>, vector<8x8x32xbf16>
    tpu.vector_store %arg7[%c0_27, %c0_28, %c64], %13 {strides = array<i32>} : memref<10x8x96xbf16, #tpu.memory_space<vmem>>, vector<8x8x32xbf16>,
    %c0_29 = arith.constant 0 : index
    %c0_30 = arith.constant 0 : index
    %c2_31 = arith.constant 2 : index
    %c0_32 = arith.constant 0 : index
    %15 = vector.load %arg3[%c0_29, %c0_30, %c2_31, %c0_32] : memref<1x8x16x32xbf16, #tpu.memory_space<vmem>>, vector<1x2x8x32xbf16>
    %16 = vector.shape_cast %15 : vector<1x2x8x32xbf16> to vector<2x8x32xbf16>
    %c8_33 = arith.constant 8 : index
    %c0_34 = arith.constant 0 : index
    %c64_35 = arith.constant 64 : index
    %17 = vector.load %arg7[%c8_33, %c0_34, %c64_35] : memref<10x8x96xbf16, #tpu.memory_space<vmem>>, vector<2x8x32xbf16>
    tpu.vector_store %arg7[%c8_33, %c0_34, %c64_35], %16 {strides = array<i32>} : memref<10x8x96xbf16, #tpu.memory_space<vmem>>, vector<2x8x32xbf16>,
    %c0_36 = arith.constant 0 : index
    %c0_37 = arith.constant 0 : index
    %c0_38 = arith.constant 0 : index
    %18 = vector.load %arg7[%c0_36, %c0_37, %c0_38] : memref<10x8x96xbf16, #tpu.memory_space<vmem>>, vector<8x8x96xbf16>
    %19 = vector.shape_cast %18 : vector<8x8x96xbf16> to vector<64x96xbf16>
    %c0_39 = arith.constant 0 : index
    %c0_40 = arith.constant 0 : index
    %c0_41 = arith.constant 0 : index
    %20 = vector.load %arg4[%c0_39, %c0_40, %c0_41] : memref<3x96x64xbf16, #tpu.memory_space<vmem>>, vector<1x96x64xbf16>
    %21 = vector.shape_cast %20 : vector<1x96x64xbf16> to vector<96x64xbf16>
    %cst = arith.constant dense<0.000000e+00> : vector<64x64xf32>
    %22 = tpu.matmul %19, %21, %cst {dimension_numbers = #tpu.dot_dimension_numbers<[1], [0], [0], [1], [0, 0, 1, 1], [], []>} : vector<64x96xbf16>, vector<96x64xbf16>, vector<64x64xf32> -> vector<64x64xf32>
    %c0_42 = arith.constant 0 : index
    %c0_43 = arith.constant 0 : index
    %23 = vector.load %arg8[%c0_42, %c0_43] : memref<64x64xf32, #tpu.memory_space<vmem>>, vector<64x64xf32>
    tpu.vector_store %arg8[%c0_42, %c0_43], %22 {strides = array<i32>} : memref<64x64xf32, #tpu.memory_space<vmem>>, vector<64x64xf32>,
    %c1_44 = arith.constant 1 : index
    %c0_45 = arith.constant 0 : index
    %c0_46 = arith.constant 0 : index
    %24 = vector.load %arg7[%c1_44, %c0_45, %c0_46] : memref<10x8x96xbf16, #tpu.memory_space<vmem>>, vector<8x8x96xbf16>
    %25 = vector.shape_cast %24 : vector<8x8x96xbf16> to vector<64x96xbf16>
    %c1_47 = arith.constant 1 : index
    %c0_48 = arith.constant 0 : index
    %c0_49 = arith.constant 0 : index
    %26 = vector.load %arg4[%c1_47, %c0_48, %c0_49] : memref<3x96x64xbf16, #tpu.memory_space<vmem>>, vector<1x96x64xbf16>
    %27 = vector.shape_cast %26 : vector<1x96x64xbf16> to vector<96x64xbf16>
    %cst_50 = arith.constant dense<0.000000e+00> : vector<64x64xf32>
    %28 = tpu.matmul %25, %27, %cst_50 {dimension_numbers = #tpu.dot_dimension_numbers<[1], [0], [0], [1], [0, 0, 1, 1], [], []>} : vector<64x96xbf16>, vector<96x64xbf16>, vector<64x64xf32> -> vector<64x64xf32>
    %c0_51 = arith.constant 0 : index
    %c0_52 = arith.constant 0 : index
    %29 = vector.load %arg8[%c0_51, %c0_52] : memref<64x64xf32, #tpu.memory_space<vmem>>, vector<64x64xf32>
    %30 = arith.addf %29, %28 : vector<64x64xf32>
    %c0_53 = arith.constant 0 : index
    %c0_54 = arith.constant 0 : index
    %31 = vector.load %arg8[%c0_53, %c0_54] : memref<64x64xf32, #tpu.memory_space<vmem>>, vector<64x64xf32>
    tpu.vector_store %arg8[%c0_53, %c0_54], %30 {strides = array<i32>} : memref<64x64xf32, #tpu.memory_space<vmem>>, vector<64x64xf32>,
    %c2_55 = arith.constant 2 : index
    %c0_56 = arith.constant 0 : index
    %c0_57 = arith.constant 0 : index
    %32 = vector.load %arg7[%c2_55, %c0_56, %c0_57] : memref<10x8x96xbf16, #tpu.memory_space<vmem>>, vector<8x8x96xbf16>
    %33 = vector.shape_cast %32 : vector<8x8x96xbf16> to vector<64x96xbf16>
    %c2_58 = arith.constant 2 : index
    %c0_59 = arith.constant 0 : index
    %c0_60 = arith.constant 0 : index
    %34 = vector.load %arg4[%c2_58, %c0_59, %c0_60] : memref<3x96x64xbf16, #tpu.memory_space<vmem>>, vector<1x96x64xbf16>
    %35 = vector.shape_cast %34 : vector<1x96x64xbf16> to vector<96x64xbf16>
    %cst_61 = arith.constant dense<0.000000e+00> : vector<64x64xf32>
    %36 = tpu.matmul %33, %35, %cst_61 {dimension_numbers = #tpu.dot_dimension_numbers<[1], [0], [0], [1], [0, 0, 1, 1], [], []>} : vector<64x96xbf16>, vector<96x64xbf16>, vector<64x64xf32> -> vector<64x64xf32>
    %c0_62 = arith.constant 0 : index
    %c0_63 = arith.constant 0 : index
    %37 = vector.load %arg8[%c0_62, %c0_63] : memref<64x64xf32, #tpu.memory_space<vmem>>, vector<64x64xf32>
    %38 = arith.addf %37, %36 : vector<64x64xf32>
    %c0_64 = arith.constant 0 : index
    %c0_65 = arith.constant 0 : index
    %39 = vector.load %arg8[%c0_64, %c0_65] : memref<64x64xf32, #tpu.memory_space<vmem>>, vector<64x64xf32>
    tpu.vector_store %arg8[%c0_64, %c0_65], %38 {strides = array<i32>} : memref<64x64xf32, #tpu.memory_space<vmem>>, vector<64x64xf32>,
    %c0_66 = arith.constant 0 : index
    %c0_67 = arith.constant 0 : index
    %40 = vector.load %arg8[%c0_66, %c0_67] : memref<64x64xf32, #tpu.memory_space<vmem>>, vector<64x64xf32>
    %c0_68 = arith.constant 0 : index
    %c0_69 = arith.constant 0 : index
    %41 = vector.load %arg5[%c0_68, %c0_69] : memref<1x64xf32, #tpu.memory_space<vmem>>, vector<1x64xf32>
    %42 = vector.broadcast %41 : vector<1x64xf32> to vector<64x64xf32>
    %43 = arith.addf %40, %42 : vector<64x64xf32>
    %cst_70 = arith.constant 0.000000e+00 : f32
    %44 = vector.broadcast %cst_70 : f32 to vector<64x64xf32>
    %45 = arith.maximumf %43, %44 : vector<64x64xf32>
    %46 = vector.shape_cast %45 : vector<64x64xf32> to vector<4x2x8x64xf32>
    %47 = vector.extract_strided_slice %46 {offsets = [0, 0, 0, 0], sizes = [4, 1, 8, 64], strides = [1, 1, 1, 1]} : vector<4x2x8x64xf32> to vector<4x1x8x64xf32>
    %48 = vector.shape_cast %47 : vector<4x1x8x64xf32> to vector<4x8x64xf32>
    %49 = vector.extract_strided_slice %46 {offsets = [0, 1, 0, 0], sizes = [4, 1, 8, 64], strides = [1, 1, 1, 1]} : vector<4x2x8x64xf32> to vector<4x1x8x64xf32>
    %50 = vector.shape_cast %49 : vector<4x1x8x64xf32> to vector<4x8x64xf32>
    %51 = arith.maximumf %48, %50 : vector<4x8x64xf32>
    %52 = vector.shape_cast %51 : vector<4x8x64xf32> to vector<32x64xf32>
    %c0_71 = arith.constant 0 : index
    %c0_72 = arith.constant 0 : index
    %53 = vector.load %arg8[%c0_71, %c0_72] : memref<64x64xf32, #tpu.memory_space<vmem>>, vector<32x64xf32>
    tpu.vector_store %arg8[%c0_71, %c0_72], %52 {strides = array<i32>} : memref<64x64xf32, #tpu.memory_space<vmem>>, vector<32x64xf32>,
    %c0_73 = arith.constant 0 : index
    %c0_74 = arith.constant 0 : index
    %54 = tpu.strided_load %arg8[%c0_73, %c0_74] {strides = array<i32: 2, 1>} : memref<64x64xf32, #tpu.memory_space<vmem>>, vector<16x64xf32>
    %c1_75 = arith.constant 1 : index
    %c0_76 = arith.constant 0 : index
    %55 = tpu.strided_load %arg8[%c1_75, %c0_76] {strides = array<i32: 2, 1>} : memref<64x64xf32, #tpu.memory_space<vmem>>, vector<16x64xf32>
    %56 = arith.maximumf %54, %55 : vector<16x64xf32>
    %57 = arith.truncf %56 : vector<16x64xf32> to vector<16x64xbf16>
    %c0_77 = arith.constant 0 : index
    %c0_78 = arith.constant 0 : index
    %c0_79 = arith.constant 0 : index
    %c0_80 = arith.constant 0 : index
    %58 = vector.load %arg6[%c0_77, %c0_78, %c0_79, %c0_80] : memref<1x1x16x64xbf16, #tpu.memory_space<vmem>>, vector<1x1x16x64xbf16>
    %59 = vector.shape_cast %58 : vector<1x1x16x64xbf16> to vector<16x64xbf16>
    %60 = vector.shape_cast %57 : vector<16x64xbf16> to vector<1x1x16x64xbf16>
    tpu.vector_store %arg6[%c0_77, %c0_78, %c0_79, %c0_80], %60 {strides = array<i32>} : memref<1x1x16x64xbf16, #tpu.memory_space<vmem>>, vector<1x1x16x64xbf16>,
    return
  }
  func.func @transform_0(%arg0: i32, %arg1: i32) -> (i32, i32, i32, i32) {
    %c0_i32 = arith.constant 0 : i32
    %c0_i32_0 = arith.constant 0 : i32
    %c0_i32_1 = arith.constant 0 : i32
    return %arg0, %arg1, %c0_i32, %c0_i32_0 : i32, i32, i32, i32
  }
  func.func @transform_1(%arg0: i32, %arg1: i32) -> (i32, i32, i32, i32) {
    %c1_i32 = arith.constant 1 : i32
    %0 = arith.addi %arg1, %c1_i32 : i32
    %c1_i32_0 = arith.constant 1 : i32
    %1 = arith.muli %0, %c1_i32_0 : i32
    %c0_i32 = arith.constant 0 : i32
    %c0_i32_1 = arith.constant 0 : i32
    %c0_i32_2 = arith.constant 0 : i32
    return %arg0, %1, %c0_i32, %c0_i32_1 : i32, i32, i32, i32
  }
  func.func @transform_2(%arg0: i32, %arg1: i32) -> (i32, i32, i32) {
    %c0_i32 = arith.constant 0 : i32
    %c0_i32_0 = arith.constant 0 : i32
    %c0_i32_1 = arith.constant 0 : i32
    %c0_i32_2 = arith.constant 0 : i32
    return %c0_i32, %c0_i32_0, %c0_i32_1 : i32, i32, i32
  }
  func.func @transform_3(%arg0: i32, %arg1: i32) -> (i32, i32) {
    %c0_i32 = arith.constant 0 : i32
    %c0_i32_0 = arith.constant 0 : i32
    %c0_i32_1 = arith.constant 0 : i32
    return %c0_i32, %c0_i32_0 : i32, i32
  }
  func.func @transform_4(%arg0: i32, %arg1: i32) -> (i32, i32, i32, i32) {
    %c0_i32 = arith.constant 0 : i32
    %c0_i32_0 = arith.constant 0 : i32
    %c0_i32_1 = arith.constant 0 : i32
    return %arg0, %arg1, %c0_i32, %c0_i32_0 : i32, i32, i32, i32
  }
}

module attributes {stable_mosaic.version = 11 : i64} {
  func.func @_tap_conv_kernel(%arg0: i32, %arg1: i32, %arg2: memref<1x8x16x64xbf16, #tpu.memory_space<vmem>>, %arg3: memref<1x8x16x64xbf16, #tpu.memory_space<vmem>>, %arg4: memref<2x128x128xbf16, #tpu.memory_space<vmem>>, %arg5: memref<1x128xf32, #tpu.memory_space<vmem>>, %arg6: memref<1x1x64x128xbf16, #tpu.memory_space<vmem>>, %arg7: memref<9x8x128xbf16, #tpu.memory_space<vmem>>, %arg8: memref<64x128xf32, #tpu.memory_space<vmem>>) attributes {dimension_semantics = [#tpu.dimension_semantics<parallel>, #tpu.dimension_semantics<parallel>], iteration_bounds = array<i64: 2, 1>, scalar_prefetch = 0 : i64, scratch_operands = 2 : i64, tpu.core_type = #tpu.core_type<tc>, window_params = [{transform_indices = @transform_0, window_bounds = array<i64: 1, 8, 16, 64>}, {transform_indices = @transform_1, window_bounds = array<i64: 1, 8, 16, 64>}, {pipeline_mode = #tpu.pipeline_mode<synchronous>, transform_indices = @transform_2, window_bounds = array<i64: 2, 128, 128>}, {pipeline_mode = #tpu.pipeline_mode<synchronous>, transform_indices = @transform_3, window_bounds = array<i64: 1, 128>}, {transform_indices = @transform_4, window_bounds = array<i64: 1, 1, 64, 128>}]} {
    %c0 = arith.constant 0 : index
    %c0_0 = arith.constant 0 : index
    %c0_1 = arith.constant 0 : index
    %c0_2 = arith.constant 0 : index
    %0 = vector.load %arg2[%c0, %c0_0, %c0_1, %c0_2] : memref<1x8x16x64xbf16, #tpu.memory_space<vmem>>, vector<1x8x8x64xbf16>
    %1 = vector.shape_cast %0 : vector<1x8x8x64xbf16> to vector<8x8x64xbf16>
    %c0_3 = arith.constant 0 : index
    %c0_4 = arith.constant 0 : index
    %c0_5 = arith.constant 0 : index
    %2 = vector.load %arg7[%c0_3, %c0_4, %c0_5] : memref<9x8x128xbf16, #tpu.memory_space<vmem>>, vector<8x8x64xbf16>
    tpu.vector_store %arg7[%c0_3, %c0_4, %c0_5], %1 {strides = array<i32>} : memref<9x8x128xbf16, #tpu.memory_space<vmem>>, vector<8x8x64xbf16>,
    %c0_6 = arith.constant 0 : index
    %c0_7 = arith.constant 0 : index
    %c0_8 = arith.constant 0 : index
    %c0_9 = arith.constant 0 : index
    %3 = vector.load %arg3[%c0_6, %c0_7, %c0_8, %c0_9] : memref<1x8x16x64xbf16, #tpu.memory_space<vmem>>, vector<1x1x8x64xbf16>
    %4 = vector.shape_cast %3 : vector<1x1x8x64xbf16> to vector<1x8x64xbf16>
    %c8 = arith.constant 8 : index
    %c0_10 = arith.constant 0 : index
    %c0_11 = arith.constant 0 : index
    %5 = vector.load %arg7[%c8, %c0_10, %c0_11] : memref<9x8x128xbf16, #tpu.memory_space<vmem>>, vector<1x8x64xbf16>
    tpu.vector_store %arg7[%c8, %c0_10, %c0_11], %4 {strides = array<i32>} : memref<9x8x128xbf16, #tpu.memory_space<vmem>>, vector<1x8x64xbf16>,
    %c0_12 = arith.constant 0 : index
    %c0_13 = arith.constant 0 : index
    %c1 = arith.constant 1 : index
    %c0_14 = arith.constant 0 : index
    %6 = vector.load %arg2[%c0_12, %c0_13, %c1, %c0_14] : memref<1x8x16x64xbf16, #tpu.memory_space<vmem>>, vector<1x8x8x64xbf16>
    %7 = vector.shape_cast %6 : vector<1x8x8x64xbf16> to vector<8x8x64xbf16>
    %c0_15 = arith.constant 0 : index
    %c0_16 = arith.constant 0 : index
    %c64 = arith.constant 64 : index
    %8 = vector.load %arg7[%c0_15, %c0_16, %c64] : memref<9x8x128xbf16, #tpu.memory_space<vmem>>, vector<8x8x64xbf16>
    tpu.vector_store %arg7[%c0_15, %c0_16, %c64], %7 {strides = array<i32>} : memref<9x8x128xbf16, #tpu.memory_space<vmem>>, vector<8x8x64xbf16>,
    %c0_17 = arith.constant 0 : index
    %c0_18 = arith.constant 0 : index
    %c1_19 = arith.constant 1 : index
    %c0_20 = arith.constant 0 : index
    %9 = vector.load %arg3[%c0_17, %c0_18, %c1_19, %c0_20] : memref<1x8x16x64xbf16, #tpu.memory_space<vmem>>, vector<1x1x8x64xbf16>
    %10 = vector.shape_cast %9 : vector<1x1x8x64xbf16> to vector<1x8x64xbf16>
    %c8_21 = arith.constant 8 : index
    %c0_22 = arith.constant 0 : index
    %c64_23 = arith.constant 64 : index
    %11 = vector.load %arg7[%c8_21, %c0_22, %c64_23] : memref<9x8x128xbf16, #tpu.memory_space<vmem>>, vector<1x8x64xbf16>
    tpu.vector_store %arg7[%c8_21, %c0_22, %c64_23], %10 {strides = array<i32>} : memref<9x8x128xbf16, #tpu.memory_space<vmem>>, vector<1x8x64xbf16>,
    %c0_24 = arith.constant 0 : index
    %c0_25 = arith.constant 0 : index
    %c0_26 = arith.constant 0 : index
    %12 = vector.load %arg7[%c0_24, %c0_25, %c0_26] : memref<9x8x128xbf16, #tpu.memory_space<vmem>>, vector<8x8x128xbf16>
    %13 = vector.shape_cast %12 : vector<8x8x128xbf16> to vector<64x128xbf16>
    %c0_27 = arith.constant 0 : index
    %c0_28 = arith.constant 0 : index
    %c0_29 = arith.constant 0 : index
    %14 = vector.load %arg4[%c0_27, %c0_28, %c0_29] : memref<2x128x128xbf16, #tpu.memory_space<vmem>>, vector<1x128x128xbf16>
    %15 = vector.shape_cast %14 : vector<1x128x128xbf16> to vector<128x128xbf16>
    %cst = arith.constant dense<0.000000e+00> : vector<64x128xf32>
    %16 = tpu.matmul %13, %15, %cst {dimension_numbers = #tpu.dot_dimension_numbers<[1], [0], [0], [1], [0, 0, 1, 1], [], []>} : vector<64x128xbf16>, vector<128x128xbf16>, vector<64x128xf32> -> vector<64x128xf32>
    %c0_30 = arith.constant 0 : index
    %c0_31 = arith.constant 0 : index
    %17 = vector.load %arg8[%c0_30, %c0_31] : memref<64x128xf32, #tpu.memory_space<vmem>>, vector<64x128xf32>
    tpu.vector_store %arg8[%c0_30, %c0_31], %16 {strides = array<i32>} : memref<64x128xf32, #tpu.memory_space<vmem>>, vector<64x128xf32>,
    %c1_32 = arith.constant 1 : index
    %c0_33 = arith.constant 0 : index
    %c0_34 = arith.constant 0 : index
    %18 = vector.load %arg7[%c1_32, %c0_33, %c0_34] : memref<9x8x128xbf16, #tpu.memory_space<vmem>>, vector<8x8x128xbf16>
    %19 = vector.shape_cast %18 : vector<8x8x128xbf16> to vector<64x128xbf16>
    %c1_35 = arith.constant 1 : index
    %c0_36 = arith.constant 0 : index
    %c0_37 = arith.constant 0 : index
    %20 = vector.load %arg4[%c1_35, %c0_36, %c0_37] : memref<2x128x128xbf16, #tpu.memory_space<vmem>>, vector<1x128x128xbf16>
    %21 = vector.shape_cast %20 : vector<1x128x128xbf16> to vector<128x128xbf16>
    %cst_38 = arith.constant dense<0.000000e+00> : vector<64x128xf32>
    %22 = tpu.matmul %19, %21, %cst_38 {dimension_numbers = #tpu.dot_dimension_numbers<[1], [0], [0], [1], [0, 0, 1, 1], [], []>} : vector<64x128xbf16>, vector<128x128xbf16>, vector<64x128xf32> -> vector<64x128xf32>
    %c0_39 = arith.constant 0 : index
    %c0_40 = arith.constant 0 : index
    %23 = vector.load %arg8[%c0_39, %c0_40] : memref<64x128xf32, #tpu.memory_space<vmem>>, vector<64x128xf32>
    %24 = arith.addf %23, %22 : vector<64x128xf32>
    %c0_41 = arith.constant 0 : index
    %c0_42 = arith.constant 0 : index
    %25 = vector.load %arg8[%c0_41, %c0_42] : memref<64x128xf32, #tpu.memory_space<vmem>>, vector<64x128xf32>
    tpu.vector_store %arg8[%c0_41, %c0_42], %24 {strides = array<i32>} : memref<64x128xf32, #tpu.memory_space<vmem>>, vector<64x128xf32>,
    %c0_43 = arith.constant 0 : index
    %c0_44 = arith.constant 0 : index
    %26 = vector.load %arg8[%c0_43, %c0_44] : memref<64x128xf32, #tpu.memory_space<vmem>>, vector<64x128xf32>
    %c0_45 = arith.constant 0 : index
    %c0_46 = arith.constant 0 : index
    %27 = vector.load %arg5[%c0_45, %c0_46] : memref<1x128xf32, #tpu.memory_space<vmem>>, vector<1x128xf32>
    %28 = vector.broadcast %27 : vector<1x128xf32> to vector<64x128xf32>
    %29 = arith.addf %26, %28 : vector<64x128xf32>
    %cst_47 = arith.constant 0.000000e+00 : f32
    %30 = vector.broadcast %cst_47 : f32 to vector<64x128xf32>
    %31 = arith.maximumf %29, %30 : vector<64x128xf32>
    %32 = arith.truncf %31 : vector<64x128xf32> to vector<64x128xbf16>
    %c0_48 = arith.constant 0 : index
    %c0_49 = arith.constant 0 : index
    %c0_50 = arith.constant 0 : index
    %c0_51 = arith.constant 0 : index
    %33 = vector.load %arg6[%c0_48, %c0_49, %c0_50, %c0_51] : memref<1x1x64x128xbf16, #tpu.memory_space<vmem>>, vector<1x1x64x128xbf16>
    %34 = vector.shape_cast %33 : vector<1x1x64x128xbf16> to vector<64x128xbf16>
    %35 = vector.shape_cast %32 : vector<64x128xbf16> to vector<1x1x64x128xbf16>
    tpu.vector_store %arg6[%c0_48, %c0_49, %c0_50, %c0_51], %35 {strides = array<i32>} : memref<1x1x64x128xbf16, #tpu.memory_space<vmem>>, vector<1x1x64x128xbf16>,
    return
  }
  func.func @transform_0(%arg0: i32, %arg1: i32) -> (i32, i32, i32, i32) {
    %c0_i32 = arith.constant 0 : i32
    %c0_i32_0 = arith.constant 0 : i32
    %c0_i32_1 = arith.constant 0 : i32
    return %arg0, %arg1, %c0_i32, %c0_i32_0 : i32, i32, i32, i32
  }
  func.func @transform_1(%arg0: i32, %arg1: i32) -> (i32, i32, i32, i32) {
    %c1_i32 = arith.constant 1 : i32
    %0 = arith.addi %arg1, %c1_i32 : i32
    %c1_i32_0 = arith.constant 1 : i32
    %1 = arith.muli %0, %c1_i32_0 : i32
    %c0_i32 = arith.constant 0 : i32
    %c0_i32_1 = arith.constant 0 : i32
    %c0_i32_2 = arith.constant 0 : i32
    return %arg0, %1, %c0_i32, %c0_i32_1 : i32, i32, i32, i32
  }
  func.func @transform_2(%arg0: i32, %arg1: i32) -> (i32, i32, i32) {
    %c0_i32 = arith.constant 0 : i32
    %c0_i32_0 = arith.constant 0 : i32
    %c0_i32_1 = arith.constant 0 : i32
    %c0_i32_2 = arith.constant 0 : i32
    return %c0_i32, %c0_i32_0, %c0_i32_1 : i32, i32, i32
  }
  func.func @transform_3(%arg0: i32, %arg1: i32) -> (i32, i32) {
    %c0_i32 = arith.constant 0 : i32
    %c0_i32_0 = arith.constant 0 : i32
    %c0_i32_1 = arith.constant 0 : i32
    return %c0_i32, %c0_i32_0 : i32, i32
  }
  func.func @transform_4(%arg0: i32, %arg1: i32) -> (i32, i32, i32, i32) {
    %c0_i32 = arith.constant 0 : i32
    %c0_i32_0 = arith.constant 0 : i32
    %c0_i32_1 = arith.constant 0 : i32
    return %arg0, %arg1, %c0_i32, %c0_i32_0 : i32, i32, i32, i32
  }
}

module attributes {stable_mosaic.version = 11 : i64} {
  func.func @_tap_conv_kernel(%arg0: i32, %arg1: i32, %arg2: memref<1x8x16x32xbf16, #tpu.memory_space<vmem>>, %arg3: memref<1x8x16x32xbf16, #tpu.memory_space<vmem>>, %arg4: memref<2x64x64xbf16, #tpu.memory_space<vmem>>, %arg5: memref<1x64xf32, #tpu.memory_space<vmem>>, %arg6: memref<1x1x64x64xbf16, #tpu.memory_space<vmem>>, %arg7: memref<9x8x64xbf16, #tpu.memory_space<vmem>>, %arg8: memref<64x64xf32, #tpu.memory_space<vmem>>) attributes {dimension_semantics = [#tpu.dimension_semantics<parallel>, #tpu.dimension_semantics<parallel>], iteration_bounds = array<i64: 2, 1>, scalar_prefetch = 0 : i64, scratch_operands = 2 : i64, tpu.core_type = #tpu.core_type<tc>, window_params = [{transform_indices = @transform_0, window_bounds = array<i64: 1, 8, 16, 32>}, {transform_indices = @transform_1, window_bounds = array<i64: 1, 8, 16, 32>}, {pipeline_mode = #tpu.pipeline_mode<synchronous>, transform_indices = @transform_2, window_bounds = array<i64: 2, 64, 64>}, {pipeline_mode = #tpu.pipeline_mode<synchronous>, transform_indices = @transform_3, window_bounds = array<i64: 1, 64>}, {transform_indices = @transform_4, window_bounds = array<i64: 1, 1, 64, 64>}]} {
    %c0 = arith.constant 0 : index
    %c0_0 = arith.constant 0 : index
    %c0_1 = arith.constant 0 : index
    %c0_2 = arith.constant 0 : index
    %0 = vector.load %arg2[%c0, %c0_0, %c0_1, %c0_2] : memref<1x8x16x32xbf16, #tpu.memory_space<vmem>>, vector<1x8x8x32xbf16>
    %1 = vector.shape_cast %0 : vector<1x8x8x32xbf16> to vector<8x8x32xbf16>
    %c0_3 = arith.constant 0 : index
    %c0_4 = arith.constant 0 : index
    %c0_5 = arith.constant 0 : index
    %2 = vector.load %arg7[%c0_3, %c0_4, %c0_5] : memref<9x8x64xbf16, #tpu.memory_space<vmem>>, vector<8x8x32xbf16>
    tpu.vector_store %arg7[%c0_3, %c0_4, %c0_5], %1 {strides = array<i32>} : memref<9x8x64xbf16, #tpu.memory_space<vmem>>, vector<8x8x32xbf16>,
    %c0_6 = arith.constant 0 : index
    %c0_7 = arith.constant 0 : index
    %c0_8 = arith.constant 0 : index
    %c0_9 = arith.constant 0 : index
    %3 = vector.load %arg3[%c0_6, %c0_7, %c0_8, %c0_9] : memref<1x8x16x32xbf16, #tpu.memory_space<vmem>>, vector<1x1x8x32xbf16>
    %4 = vector.shape_cast %3 : vector<1x1x8x32xbf16> to vector<1x8x32xbf16>
    %c8 = arith.constant 8 : index
    %c0_10 = arith.constant 0 : index
    %c0_11 = arith.constant 0 : index
    %5 = vector.load %arg7[%c8, %c0_10, %c0_11] : memref<9x8x64xbf16, #tpu.memory_space<vmem>>, vector<1x8x32xbf16>
    tpu.vector_store %arg7[%c8, %c0_10, %c0_11], %4 {strides = array<i32>} : memref<9x8x64xbf16, #tpu.memory_space<vmem>>, vector<1x8x32xbf16>,
    %c0_12 = arith.constant 0 : index
    %c0_13 = arith.constant 0 : index
    %c1 = arith.constant 1 : index
    %c0_14 = arith.constant 0 : index
    %6 = vector.load %arg2[%c0_12, %c0_13, %c1, %c0_14] : memref<1x8x16x32xbf16, #tpu.memory_space<vmem>>, vector<1x8x8x32xbf16>
    %7 = vector.shape_cast %6 : vector<1x8x8x32xbf16> to vector<8x8x32xbf16>
    %c0_15 = arith.constant 0 : index
    %c0_16 = arith.constant 0 : index
    %c32 = arith.constant 32 : index
    %8 = vector.load %arg7[%c0_15, %c0_16, %c32] : memref<9x8x64xbf16, #tpu.memory_space<vmem>>, vector<8x8x32xbf16>
    tpu.vector_store %arg7[%c0_15, %c0_16, %c32], %7 {strides = array<i32>} : memref<9x8x64xbf16, #tpu.memory_space<vmem>>, vector<8x8x32xbf16>,
    %c0_17 = arith.constant 0 : index
    %c0_18 = arith.constant 0 : index
    %c1_19 = arith.constant 1 : index
    %c0_20 = arith.constant 0 : index
    %9 = vector.load %arg3[%c0_17, %c0_18, %c1_19, %c0_20] : memref<1x8x16x32xbf16, #tpu.memory_space<vmem>>, vector<1x1x8x32xbf16>
    %10 = vector.shape_cast %9 : vector<1x1x8x32xbf16> to vector<1x8x32xbf16>
    %c8_21 = arith.constant 8 : index
    %c0_22 = arith.constant 0 : index
    %c32_23 = arith.constant 32 : index
    %11 = vector.load %arg7[%c8_21, %c0_22, %c32_23] : memref<9x8x64xbf16, #tpu.memory_space<vmem>>, vector<1x8x32xbf16>
    tpu.vector_store %arg7[%c8_21, %c0_22, %c32_23], %10 {strides = array<i32>} : memref<9x8x64xbf16, #tpu.memory_space<vmem>>, vector<1x8x32xbf16>,
    %c0_24 = arith.constant 0 : index
    %c0_25 = arith.constant 0 : index
    %c0_26 = arith.constant 0 : index
    %12 = vector.load %arg7[%c0_24, %c0_25, %c0_26] : memref<9x8x64xbf16, #tpu.memory_space<vmem>>, vector<8x8x64xbf16>
    %13 = vector.shape_cast %12 : vector<8x8x64xbf16> to vector<64x64xbf16>
    %c0_27 = arith.constant 0 : index
    %c0_28 = arith.constant 0 : index
    %c0_29 = arith.constant 0 : index
    %14 = vector.load %arg4[%c0_27, %c0_28, %c0_29] : memref<2x64x64xbf16, #tpu.memory_space<vmem>>, vector<1x64x64xbf16>
    %15 = vector.shape_cast %14 : vector<1x64x64xbf16> to vector<64x64xbf16>
    %cst = arith.constant dense<0.000000e+00> : vector<64x64xf32>
    %16 = tpu.matmul %13, %15, %cst {dimension_numbers = #tpu.dot_dimension_numbers<[1], [0], [0], [1], [0, 0, 1, 1], [], []>} : vector<64x64xbf16>, vector<64x64xbf16>, vector<64x64xf32> -> vector<64x64xf32>
    %c0_30 = arith.constant 0 : index
    %c0_31 = arith.constant 0 : index
    %17 = vector.load %arg8[%c0_30, %c0_31] : memref<64x64xf32, #tpu.memory_space<vmem>>, vector<64x64xf32>
    tpu.vector_store %arg8[%c0_30, %c0_31], %16 {strides = array<i32>} : memref<64x64xf32, #tpu.memory_space<vmem>>, vector<64x64xf32>,
    %c1_32 = arith.constant 1 : index
    %c0_33 = arith.constant 0 : index
    %c0_34 = arith.constant 0 : index
    %18 = vector.load %arg7[%c1_32, %c0_33, %c0_34] : memref<9x8x64xbf16, #tpu.memory_space<vmem>>, vector<8x8x64xbf16>
    %19 = vector.shape_cast %18 : vector<8x8x64xbf16> to vector<64x64xbf16>
    %c1_35 = arith.constant 1 : index
    %c0_36 = arith.constant 0 : index
    %c0_37 = arith.constant 0 : index
    %20 = vector.load %arg4[%c1_35, %c0_36, %c0_37] : memref<2x64x64xbf16, #tpu.memory_space<vmem>>, vector<1x64x64xbf16>
    %21 = vector.shape_cast %20 : vector<1x64x64xbf16> to vector<64x64xbf16>
    %cst_38 = arith.constant dense<0.000000e+00> : vector<64x64xf32>
    %22 = tpu.matmul %19, %21, %cst_38 {dimension_numbers = #tpu.dot_dimension_numbers<[1], [0], [0], [1], [0, 0, 1, 1], [], []>} : vector<64x64xbf16>, vector<64x64xbf16>, vector<64x64xf32> -> vector<64x64xf32>
    %c0_39 = arith.constant 0 : index
    %c0_40 = arith.constant 0 : index
    %23 = vector.load %arg8[%c0_39, %c0_40] : memref<64x64xf32, #tpu.memory_space<vmem>>, vector<64x64xf32>
    %24 = arith.addf %23, %22 : vector<64x64xf32>
    %c0_41 = arith.constant 0 : index
    %c0_42 = arith.constant 0 : index
    %25 = vector.load %arg8[%c0_41, %c0_42] : memref<64x64xf32, #tpu.memory_space<vmem>>, vector<64x64xf32>
    tpu.vector_store %arg8[%c0_41, %c0_42], %24 {strides = array<i32>} : memref<64x64xf32, #tpu.memory_space<vmem>>, vector<64x64xf32>,
    %c0_43 = arith.constant 0 : index
    %c0_44 = arith.constant 0 : index
    %26 = vector.load %arg8[%c0_43, %c0_44] : memref<64x64xf32, #tpu.memory_space<vmem>>, vector<64x64xf32>
    %c0_45 = arith.constant 0 : index
    %c0_46 = arith.constant 0 : index
    %27 = vector.load %arg5[%c0_45, %c0_46] : memref<1x64xf32, #tpu.memory_space<vmem>>, vector<1x64xf32>
    %28 = vector.broadcast %27 : vector<1x64xf32> to vector<64x64xf32>
    %29 = arith.addf %26, %28 : vector<64x64xf32>
    %cst_47 = arith.constant 0.000000e+00 : f32
    %30 = vector.broadcast %cst_47 : f32 to vector<64x64xf32>
    %31 = arith.maximumf %29, %30 : vector<64x64xf32>
    %32 = arith.truncf %31 : vector<64x64xf32> to vector<64x64xbf16>
    %c0_48 = arith.constant 0 : index
    %c0_49 = arith.constant 0 : index
    %c0_50 = arith.constant 0 : index
    %c0_51 = arith.constant 0 : index
    %33 = vector.load %arg6[%c0_48, %c0_49, %c0_50, %c0_51] : memref<1x1x64x64xbf16, #tpu.memory_space<vmem>>, vector<1x1x64x64xbf16>
    %34 = vector.shape_cast %33 : vector<1x1x64x64xbf16> to vector<64x64xbf16>
    %35 = vector.shape_cast %32 : vector<64x64xbf16> to vector<1x1x64x64xbf16>
    tpu.vector_store %arg6[%c0_48, %c0_49, %c0_50, %c0_51], %35 {strides = array<i32>} : memref<1x1x64x64xbf16, #tpu.memory_space<vmem>>, vector<1x1x64x64xbf16>,
    return
  }
  func.func @transform_0(%arg0: i32, %arg1: i32) -> (i32, i32, i32, i32) {
    %c0_i32 = arith.constant 0 : i32
    %c0_i32_0 = arith.constant 0 : i32
    %c0_i32_1 = arith.constant 0 : i32
    return %arg0, %arg1, %c0_i32, %c0_i32_0 : i32, i32, i32, i32
  }
  func.func @transform_1(%arg0: i32, %arg1: i32) -> (i32, i32, i32, i32) {
    %c1_i32 = arith.constant 1 : i32
    %0 = arith.addi %arg1, %c1_i32 : i32
    %c1_i32_0 = arith.constant 1 : i32
    %1 = arith.muli %0, %c1_i32_0 : i32
    %c0_i32 = arith.constant 0 : i32
    %c0_i32_1 = arith.constant 0 : i32
    %c0_i32_2 = arith.constant 0 : i32
    return %arg0, %1, %c0_i32, %c0_i32_1 : i32, i32, i32, i32
  }
  func.func @transform_2(%arg0: i32, %arg1: i32) -> (i32, i32, i32) {
    %c0_i32 = arith.constant 0 : i32
    %c0_i32_0 = arith.constant 0 : i32
    %c0_i32_1 = arith.constant 0 : i32
    %c0_i32_2 = arith.constant 0 : i32
    return %c0_i32, %c0_i32_0, %c0_i32_1 : i32, i32, i32
  }
  func.func @transform_3(%arg0: i32, %arg1: i32) -> (i32, i32) {
    %c0_i32 = arith.constant 0 : i32
    %c0_i32_0 = arith.constant 0 : i32
    %c0_i32_1 = arith.constant 0 : i32
    return %c0_i32, %c0_i32_0 : i32, i32
  }
  func.func @transform_4(%arg0: i32, %arg1: i32) -> (i32, i32, i32, i32) {
    %c0_i32 = arith.constant 0 : i32
    %c0_i32_0 = arith.constant 0 : i32
    %c0_i32_1 = arith.constant 0 : i32
    return %arg0, %arg1, %c0_i32, %c0_i32_0 : i32, i32, i32, i32
  }
}

module attributes {stable_mosaic.version = 11 : i64} {
  func.func @_tap_conv_kernel(%arg0: i32, %arg1: i32, %arg2: memref<1x8x16x16xbf16, #tpu.memory_space<vmem>>, %arg3: memref<1x8x16x16xbf16, #tpu.memory_space<vmem>>, %arg4: memref<3x48x8xbf16, #tpu.memory_space<vmem>>, %arg5: memref<1x8xf32, #tpu.memory_space<vmem>>, %arg6: memref<1x1x64x8xf32, #tpu.memory_space<vmem>>, %arg7: memref<10x8x48xbf16, #tpu.memory_space<vmem>>, %arg8: memref<64x8xf32, #tpu.memory_space<vmem>>) attributes {dimension_semantics = [#tpu.dimension_semantics<parallel>, #tpu.dimension_semantics<parallel>], iteration_bounds = array<i64: 2, 1>, scalar_prefetch = 0 : i64, scratch_operands = 2 : i64, tpu.core_type = #tpu.core_type<tc>, window_params = [{transform_indices = @transform_0, window_bounds = array<i64: 1, 8, 16, 16>}, {transform_indices = @transform_1, window_bounds = array<i64: 1, 8, 16, 16>}, {pipeline_mode = #tpu.pipeline_mode<synchronous>, transform_indices = @transform_2, window_bounds = array<i64: 3, 48, 8>}, {pipeline_mode = #tpu.pipeline_mode<synchronous>, transform_indices = @transform_3, window_bounds = array<i64: 1, 8>}, {transform_indices = @transform_4, window_bounds = array<i64: 1, 1, 64, 8>}]} {
    %c0 = arith.constant 0 : index
    %c0_0 = arith.constant 0 : index
    %c0_1 = arith.constant 0 : index
    %c0_2 = arith.constant 0 : index
    %0 = vector.load %arg2[%c0, %c0_0, %c0_1, %c0_2] : memref<1x8x16x16xbf16, #tpu.memory_space<vmem>>, vector<1x8x8x16xbf16>
    %1 = vector.shape_cast %0 : vector<1x8x8x16xbf16> to vector<8x8x16xbf16>
    %c0_3 = arith.constant 0 : index
    %c0_4 = arith.constant 0 : index
    %c0_5 = arith.constant 0 : index
    %2 = vector.load %arg7[%c0_3, %c0_4, %c0_5] : memref<10x8x48xbf16, #tpu.memory_space<vmem>>, vector<8x8x16xbf16>
    tpu.vector_store %arg7[%c0_3, %c0_4, %c0_5], %1 {strides = array<i32>} : memref<10x8x48xbf16, #tpu.memory_space<vmem>>, vector<8x8x16xbf16>,
    %c0_6 = arith.constant 0 : index
    %c0_7 = arith.constant 0 : index
    %c0_8 = arith.constant 0 : index
    %c0_9 = arith.constant 0 : index
    %3 = vector.load %arg3[%c0_6, %c0_7, %c0_8, %c0_9] : memref<1x8x16x16xbf16, #tpu.memory_space<vmem>>, vector<1x2x8x16xbf16>
    %4 = vector.shape_cast %3 : vector<1x2x8x16xbf16> to vector<2x8x16xbf16>
    %c8 = arith.constant 8 : index
    %c0_10 = arith.constant 0 : index
    %c0_11 = arith.constant 0 : index
    %5 = vector.load %arg7[%c8, %c0_10, %c0_11] : memref<10x8x48xbf16, #tpu.memory_space<vmem>>, vector<2x8x16xbf16>
    tpu.vector_store %arg7[%c8, %c0_10, %c0_11], %4 {strides = array<i32>} : memref<10x8x48xbf16, #tpu.memory_space<vmem>>, vector<2x8x16xbf16>,
    %c0_12 = arith.constant 0 : index
    %c0_13 = arith.constant 0 : index
    %c1 = arith.constant 1 : index
    %c0_14 = arith.constant 0 : index
    %6 = vector.load %arg2[%c0_12, %c0_13, %c1, %c0_14] : memref<1x8x16x16xbf16, #tpu.memory_space<vmem>>, vector<1x8x8x16xbf16>
    %7 = vector.shape_cast %6 : vector<1x8x8x16xbf16> to vector<8x8x16xbf16>
    %c0_15 = arith.constant 0 : index
    %c0_16 = arith.constant 0 : index
    %c16 = arith.constant 16 : index
    %8 = vector.load %arg7[%c0_15, %c0_16, %c16] : memref<10x8x48xbf16, #tpu.memory_space<vmem>>, vector<8x8x16xbf16>
    tpu.vector_store %arg7[%c0_15, %c0_16, %c16], %7 {strides = array<i32>} : memref<10x8x48xbf16, #tpu.memory_space<vmem>>, vector<8x8x16xbf16>,
    %c0_17 = arith.constant 0 : index
    %c0_18 = arith.constant 0 : index
    %c1_19 = arith.constant 1 : index
    %c0_20 = arith.constant 0 : index
    %9 = vector.load %arg3[%c0_17, %c0_18, %c1_19, %c0_20] : memref<1x8x16x16xbf16, #tpu.memory_space<vmem>>, vector<1x2x8x16xbf16>
    %10 = vector.shape_cast %9 : vector<1x2x8x16xbf16> to vector<2x8x16xbf16>
    %c8_21 = arith.constant 8 : index
    %c0_22 = arith.constant 0 : index
    %c16_23 = arith.constant 16 : index
    %11 = vector.load %arg7[%c8_21, %c0_22, %c16_23] : memref<10x8x48xbf16, #tpu.memory_space<vmem>>, vector<2x8x16xbf16>
    tpu.vector_store %arg7[%c8_21, %c0_22, %c16_23], %10 {strides = array<i32>} : memref<10x8x48xbf16, #tpu.memory_space<vmem>>, vector<2x8x16xbf16>,
    %c0_24 = arith.constant 0 : index
    %c0_25 = arith.constant 0 : index
    %c2 = arith.constant 2 : index
    %c0_26 = arith.constant 0 : index
    %12 = vector.load %arg2[%c0_24, %c0_25, %c2, %c0_26] : memref<1x8x16x16xbf16, #tpu.memory_space<vmem>>, vector<1x8x8x16xbf16>
    %13 = vector.shape_cast %12 : vector<1x8x8x16xbf16> to vector<8x8x16xbf16>
    %c0_27 = arith.constant 0 : index
    %c0_28 = arith.constant 0 : index
    %c32 = arith.constant 32 : index
    %14 = vector.load %arg7[%c0_27, %c0_28, %c32] : memref<10x8x48xbf16, #tpu.memory_space<vmem>>, vector<8x8x16xbf16>
    tpu.vector_store %arg7[%c0_27, %c0_28, %c32], %13 {strides = array<i32>} : memref<10x8x48xbf16, #tpu.memory_space<vmem>>, vector<8x8x16xbf16>,
    %c0_29 = arith.constant 0 : index
    %c0_30 = arith.constant 0 : index
    %c2_31 = arith.constant 2 : index
    %c0_32 = arith.constant 0 : index
    %15 = vector.load %arg3[%c0_29, %c0_30, %c2_31, %c0_32] : memref<1x8x16x16xbf16, #tpu.memory_space<vmem>>, vector<1x2x8x16xbf16>
    %16 = vector.shape_cast %15 : vector<1x2x8x16xbf16> to vector<2x8x16xbf16>
    %c8_33 = arith.constant 8 : index
    %c0_34 = arith.constant 0 : index
    %c32_35 = arith.constant 32 : index
    %17 = vector.load %arg7[%c8_33, %c0_34, %c32_35] : memref<10x8x48xbf16, #tpu.memory_space<vmem>>, vector<2x8x16xbf16>
    tpu.vector_store %arg7[%c8_33, %c0_34, %c32_35], %16 {strides = array<i32>} : memref<10x8x48xbf16, #tpu.memory_space<vmem>>, vector<2x8x16xbf16>,
    %c0_36 = arith.constant 0 : index
    %c0_37 = arith.constant 0 : index
    %c0_38 = arith.constant 0 : index
    %18 = vector.load %arg7[%c0_36, %c0_37, %c0_38] : memref<10x8x48xbf16, #tpu.memory_space<vmem>>, vector<8x8x48xbf16>
    %19 = vector.shape_cast %18 : vector<8x8x48xbf16> to vector<64x48xbf16>
    %c0_39 = arith.constant 0 : index
    %c0_40 = arith.constant 0 : index
    %c0_41 = arith.constant 0 : index
    %20 = vector.load %arg4[%c0_39, %c0_40, %c0_41] : memref<3x48x8xbf16, #tpu.memory_space<vmem>>, vector<1x48x8xbf16>
    %21 = vector.shape_cast %20 : vector<1x48x8xbf16> to vector<48x8xbf16>
    %cst = arith.constant dense<0.000000e+00> : vector<64x8xf32>
    %22 = tpu.matmul %19, %21, %cst {dimension_numbers = #tpu.dot_dimension_numbers<[1], [0], [0], [1], [0, 0, 1, 1], [], []>} : vector<64x48xbf16>, vector<48x8xbf16>, vector<64x8xf32> -> vector<64x8xf32>
    %c0_42 = arith.constant 0 : index
    %c0_43 = arith.constant 0 : index
    %23 = vector.load %arg8[%c0_42, %c0_43] : memref<64x8xf32, #tpu.memory_space<vmem>>, vector<64x8xf32>
    tpu.vector_store %arg8[%c0_42, %c0_43], %22 {strides = array<i32>} : memref<64x8xf32, #tpu.memory_space<vmem>>, vector<64x8xf32>,
    %c1_44 = arith.constant 1 : index
    %c0_45 = arith.constant 0 : index
    %c0_46 = arith.constant 0 : index
    %24 = vector.load %arg7[%c1_44, %c0_45, %c0_46] : memref<10x8x48xbf16, #tpu.memory_space<vmem>>, vector<8x8x48xbf16>
    %25 = vector.shape_cast %24 : vector<8x8x48xbf16> to vector<64x48xbf16>
    %c1_47 = arith.constant 1 : index
    %c0_48 = arith.constant 0 : index
    %c0_49 = arith.constant 0 : index
    %26 = vector.load %arg4[%c1_47, %c0_48, %c0_49] : memref<3x48x8xbf16, #tpu.memory_space<vmem>>, vector<1x48x8xbf16>
    %27 = vector.shape_cast %26 : vector<1x48x8xbf16> to vector<48x8xbf16>
    %cst_50 = arith.constant dense<0.000000e+00> : vector<64x8xf32>
    %28 = tpu.matmul %25, %27, %cst_50 {dimension_numbers = #tpu.dot_dimension_numbers<[1], [0], [0], [1], [0, 0, 1, 1], [], []>} : vector<64x48xbf16>, vector<48x8xbf16>, vector<64x8xf32> -> vector<64x8xf32>
    %c0_51 = arith.constant 0 : index
    %c0_52 = arith.constant 0 : index
    %29 = vector.load %arg8[%c0_51, %c0_52] : memref<64x8xf32, #tpu.memory_space<vmem>>, vector<64x8xf32>
    %30 = arith.addf %29, %28 : vector<64x8xf32>
    %c0_53 = arith.constant 0 : index
    %c0_54 = arith.constant 0 : index
    %31 = vector.load %arg8[%c0_53, %c0_54] : memref<64x8xf32, #tpu.memory_space<vmem>>, vector<64x8xf32>
    tpu.vector_store %arg8[%c0_53, %c0_54], %30 {strides = array<i32>} : memref<64x8xf32, #tpu.memory_space<vmem>>, vector<64x8xf32>,
    %c2_55 = arith.constant 2 : index
    %c0_56 = arith.constant 0 : index
    %c0_57 = arith.constant 0 : index
    %32 = vector.load %arg7[%c2_55, %c0_56, %c0_57] : memref<10x8x48xbf16, #tpu.memory_space<vmem>>, vector<8x8x48xbf16>
    %33 = vector.shape_cast %32 : vector<8x8x48xbf16> to vector<64x48xbf16>
    %c2_58 = arith.constant 2 : index
    %c0_59 = arith.constant 0 : index
    %c0_60 = arith.constant 0 : index
    %34 = vector.load %arg4[%c2_58, %c0_59, %c0_60] : memref<3x48x8xbf16, #tpu.memory_space<vmem>>, vector<1x48x8xbf16>
    %35 = vector.shape_cast %34 : vector<1x48x8xbf16> to vector<48x8xbf16>
    %cst_61 = arith.constant dense<0.000000e+00> : vector<64x8xf32>
    %36 = tpu.matmul %33, %35, %cst_61 {dimension_numbers = #tpu.dot_dimension_numbers<[1], [0], [0], [1], [0, 0, 1, 1], [], []>} : vector<64x48xbf16>, vector<48x8xbf16>, vector<64x8xf32> -> vector<64x8xf32>
    %c0_62 = arith.constant 0 : index
    %c0_63 = arith.constant 0 : index
    %37 = vector.load %arg8[%c0_62, %c0_63] : memref<64x8xf32, #tpu.memory_space<vmem>>, vector<64x8xf32>
    %38 = arith.addf %37, %36 : vector<64x8xf32>
    %c0_64 = arith.constant 0 : index
    %c0_65 = arith.constant 0 : index
    %39 = vector.load %arg8[%c0_64, %c0_65] : memref<64x8xf32, #tpu.memory_space<vmem>>, vector<64x8xf32>
    tpu.vector_store %arg8[%c0_64, %c0_65], %38 {strides = array<i32>} : memref<64x8xf32, #tpu.memory_space<vmem>>, vector<64x8xf32>,
    %c0_66 = arith.constant 0 : index
    %c0_67 = arith.constant 0 : index
    %40 = vector.load %arg8[%c0_66, %c0_67] : memref<64x8xf32, #tpu.memory_space<vmem>>, vector<64x8xf32>
    %c0_68 = arith.constant 0 : index
    %c0_69 = arith.constant 0 : index
    %41 = vector.load %arg5[%c0_68, %c0_69] : memref<1x8xf32, #tpu.memory_space<vmem>>, vector<1x8xf32>
    %42 = vector.broadcast %41 : vector<1x8xf32> to vector<64x8xf32>
    %43 = arith.addf %40, %42 : vector<64x8xf32>
    %cst_70 = arith.constant 0.000000e+00 : f32
    %44 = vector.broadcast %cst_70 : f32 to vector<64x8xf32>
    %45 = arith.subf %44, %43 : vector<64x8xf32>
    %46 = math.exp %45 : vector<64x8xf32>
    %cst_71 = arith.constant 1.000000e+00 : f32
    %47 = vector.broadcast %cst_71 : f32 to vector<64x8xf32>
    %48 = arith.addf %47, %46 : vector<64x8xf32>
    %cst_72 = arith.constant 1.000000e+00 : f32
    %49 = vector.broadcast %cst_72 : f32 to vector<64x8xf32>
    %50 = arith.divf %49, %48 : vector<64x8xf32>
    %c0_73 = arith.constant 0 : index
    %c0_74 = arith.constant 0 : index
    %c0_75 = arith.constant 0 : index
    %c0_76 = arith.constant 0 : index
    %51 = vector.load %arg6[%c0_73, %c0_74, %c0_75, %c0_76] : memref<1x1x64x8xf32, #tpu.memory_space<vmem>>, vector<1x1x64x8xf32>
    %52 = vector.shape_cast %51 : vector<1x1x64x8xf32> to vector<64x8xf32>
    %53 = vector.shape_cast %50 : vector<64x8xf32> to vector<1x1x64x8xf32>
    tpu.vector_store %arg6[%c0_73, %c0_74, %c0_75, %c0_76], %53 {strides = array<i32>} : memref<1x1x64x8xf32, #tpu.memory_space<vmem>>, vector<1x1x64x8xf32>,
    return
  }
  func.func @transform_0(%arg0: i32, %arg1: i32) -> (i32, i32, i32, i32) {
    %c0_i32 = arith.constant 0 : i32
    %c0_i32_0 = arith.constant 0 : i32
    %c0_i32_1 = arith.constant 0 : i32
    return %arg0, %arg1, %c0_i32, %c0_i32_0 : i32, i32, i32, i32
  }
  func.func @transform_1(%arg0: i32, %arg1: i32) -> (i32, i32, i32, i32) {
    %c1_i32 = arith.constant 1 : i32
    %0 = arith.addi %arg1, %c1_i32 : i32
    %c1_i32_0 = arith.constant 1 : i32
    %1 = arith.muli %0, %c1_i32_0 : i32
    %c0_i32 = arith.constant 0 : i32
    %c0_i32_1 = arith.constant 0 : i32
    %c0_i32_2 = arith.constant 0 : i32
    return %arg0, %1, %c0_i32, %c0_i32_1 : i32, i32, i32, i32
  }
  func.func @transform_2(%arg0: i32, %arg1: i32) -> (i32, i32, i32) {
    %c0_i32 = arith.constant 0 : i32
    %c0_i32_0 = arith.constant 0 : i32
    %c0_i32_1 = arith.constant 0 : i32
    %c0_i32_2 = arith.constant 0 : i32
    return %c0_i32, %c0_i32_0, %c0_i32_1 : i32, i32, i32
  }
  func.func @transform_3(%arg0: i32, %arg1: i32) -> (i32, i32) {
    %c0_i32 = arith.constant 0 : i32
    %c0_i32_0 = arith.constant 0 : i32
    %c0_i32_1 = arith.constant 0 : i32
    return %c0_i32, %c0_i32_0 : i32, i32
  }
  func.func @transform_4(%arg0: i32, %arg1: i32) -> (i32, i32, i32, i32) {
    %c0_i32 = arith.constant 0 : i32
    %c0_i32_0 = arith.constant 0 : i32
    %c0_i32_1 = arith.constant 0 : i32
    return %arg0, %arg1, %c0_i32, %c0_i32_0 : i32, i32, i32, i32
  }
}

</mosaic_0001>

<llo_original>
// kernel: edge_detection_encoder.7
$region0: #{edge_detection_encoder.7}
  #allocation0 [shape = 'u32[]', space=smem, size = 0x4, offset = 0x4, fixed_abs, tag = 'smem constant byte address 0x4 - core index']
  #allocation1 [shape = 'u32[144,128]{1,0:T(1,128)}', space=vmem, size = 0x12000, scoped, tag = 'internal scratch']
  #allocation2 [shape = 'bf16[10,8,48]{2,1,0:T(8,128)(2,1)}', space=vmem, size = 0x5000, scoped, tag = 'scratch operand']
  #allocation3 [shape = 'f32[64,32]{1,0:T(8,128)}', space=vmem, size = 0x8000, scoped, tag = 'scratch operand']
  %s0 = inlined_call_operand.vmem [shape: bf16[2,16,16,16], index: 0, kind: input, shape index: {}, may-alias: {0,1}]
  %s1 = inlined_call_operand.vmem [shape: bf16[2,16,16,16], index: 1, kind: input, shape index: {}, may-alias: {0,1}]
  %s2 = inlined_call_operand.vmem [shape: bf16[3,48,32], index: 2, kind: input, shape index: {}]
  %s3 = inlined_call_operand.vmem [shape: f32[1,32], index: 3, kind: input, shape index: {}]
  %s4 = inlined_call_operand.vmem [shape: bf16[2,1,16,32], index: 4, kind: output, shape index: {}]
  %s5 = sld [smem:[#allocation0]]
  $region49: #{edge_detection_encoder.7} parent=0
    _
  %s7 = ssub.s32 1, %s5
  %s8 = scalar_select 0, %s7, %s5
  loop: start=0, step=1, limit=4
  $region2: #{edge_detection_encoder.7} parent=0 // loop_pre_header
    _
  $region3: #{edge_detection_encoder.7} parent=0 // loop_header
    %s10 = sphi 0, %s14
    %p11 = scmp.ge.s32.totalorder %s10, 4
    %s17 = sphi 0, %s29
    %s18 = sphi 0, %s25
    %s19 = sphi 0, %s17
    %s20 = sphi 0, %s18
    %s21 = sphi 0, %s19
    %s22 = sphi 0, %s20
    %s34 = sphi 0, %s36
    %s37 = sphi 0, %s34
    %s38 = sphi 0, %s37
    %s54 = sphi 0, %s38
    %s64 = sphi 0, %s66
    %s67 = sphi 0, %s64
    %s68 = sphi 0, %s67
    %s84 = sphi 0, %s68
    %s88 = sphi 0, %s88
    %s90 = sphi 0, %s88
    %s91 = sphi 0, %s90
    %s105 = sphi 0, %s91
    %s109 = sphi 0, %s109
    %s111 = sphi 0, %s109
    %s112 = sphi 0, %s111
    %s126 = sphi 0, %s112
    %s134 = sphi 0, %s136
    %s137 = sphi 0, %s134
    %s138 = sphi 0, %s137
    %s154 = sphi 0, %s138
  $region4: #{edge_detection_encoder.7} parent=0 // loop_header_branch
    %13 = sbr.rel (%p11) target = $region8
  $region5: #{edge_detection_encoder.7} parent=0 // loop_body
    %s15 = ssub.s32 %s10, 1
    %s16 = ssub.s32 %s10, 2
    %s23 = sadd.s32 1, %s18
    %p24 = scmp.ge.s32.totalorder %s23, 1
    %s25 = scalar_select %p24, 0, %s23
    %s26 = sadd.s32 1, %s17
    %s27 = scalar_select %p24, %s26, %s17
    %p28 = scmp.ge.s32.totalorder %s27, 2
    %s29 = scalar_select %p28, 0, %s27
    %s30 = ssub.s32 %s17, %s29
    %s31 = ssub.s32 %s18, %s25
    %s32 = sor.u32 %s30, %s31
    %p33 = scmp.eq.s32.totalorder %s32, 0
    %s35 = sadd.s32 %s34, 1
    %s36 = scalar_select %p33, %s34, %s35
    %p39 = pneg %p33
    %p40 = scmp.eq.s32.totalorder %s10, 1
    %p41 = por %p39, %p40
    %p42 = scmp.ne.s32.totalorder %s34, %s37
    %p43 = scmp.eq.s32.totalorder %s10, 0
    %p44 = por %p42, %p43
    %p45 = scmp.ne.s32.totalorder %s34, %s37
    %p46 = scmp.eq.s32.totalorder %s15, 1
    %p47 = por %p45, %p46
    %p48 = scmp.ne.s32.totalorder %s37, %s38
    %p49 = scmp.eq.s32.totalorder %s15, 0
    %p50 = por %p48, %p49
    %p51 = scmp.ne.s32.totalorder %s37, %s38
    %p52 = scmp.eq.s32.totalorder %s16, 1
    %p53 = por %p51, %p52
    %p55 = scmp.ne.s32.totalorder %s38, %s54
    %p56 = scmp.eq.s32.totalorder %s16, 0
    %p57 = por %p55, %p56
    %s58 = sadd.s32 %s18, 1
    %s59 = sadd.s32 %s25, 1
    %s60 = ssub.s32 %s17, %s29
    %s61 = ssub.s32 %s58, %s59
    %s62 = sor.u32 %s60, %s61
    %p63 = scmp.eq.s32.totalorder %s62, 0
    %s65 = sadd.s32 %s64, 1
    %s66 = scalar_select %p63, %s64, %s65
    %p69 = pneg %p63
    %p70 = scmp.eq.s32.totalorder %s10, 1
    %p71 = por %p69, %p70
    %p72 = scmp.ne.s32.totalorder %s64, %s67
    %p73 = scmp.eq.s32.totalorder %s10, 0
    %p74 = por %p72, %p73
    %p75 = scmp.ne.s32.totalorder %s64, %s67
    %p76 = scmp.eq.s32.totalorder %s15, 1
    %p77 = por %p75, %p76
    %p78 = scmp.ne.s32.totalorder %s67, %s68
    %p79 = scmp.eq.s32.totalorder %s15, 0
    %p80 = por %p78, %p79
    %p81 = scmp.ne.s32.totalorder %s67, %s68
    %p82 = scmp.eq.s32.totalorder %s16, 1
    %p83 = por %p81, %p82
    %p85 = scmp.ne.s32.totalorder %s68, %s84
    %p86 = scmp.eq.s32.totalorder %s16, 0
    %p87 = por %p85, %p86
    %s89 = sadd.s32 %s88, 1
    %p92 = scmp.eq.s32.totalorder %s10, 1
    %p93 = scmp.ne.s32.totalorder %s88, %s90
    %p94 = scmp.eq.s32.totalorder %s10, 0
    %p95 = por %p93, %p94
    %p96 = scmp.ne.s32.totalorder %s88, %s90
    %p97 = scmp.eq.s32.totalorder %s15, 1
    %p98 = por %p96, %p97
    %p99 = scmp.ne.s32.totalorder %s90, %s91
    %p100 = scmp.eq.s32.totalorder %s15, 0
    %p101 = por %p99, %p100
    %p102 = scmp.ne.s32.totalorder %s90, %s91
    %p103 = scmp.eq.s32.totalorder %s16, 1
    %p104 = por %p102, %p103
    %p106 = scmp.ne.s32.totalorder %s91, %s105
    %p107 = scmp.eq.s32.totalorder %s16, 0
    %p108 = por %p106, %p107
    %s110 = sadd.s32 %s109, 1
    %p113 = scmp.eq.s32.totalorder %s10, 1
    %p114 = scmp.ne.s32.totalorder %s109, %s111
    %p115 = scmp.eq.s32.totalorder %s10, 0
    %p116 = por %p114, %p115
    %p117 = scmp.ne.s32.totalorder %s109, %s111
    %p118 = scmp.eq.s32.totalorder %s15, 1
    %p119 = por %p117, %p118
    %p120 = scmp.ne.s32.totalorder %s111, %s112
    %p121 = scmp.eq.s32.totalorder %s15, 0
    %p122 = por %p120, %p121
    %p123 = scmp.ne.s32.totalorder %s111, %s112
    %p124 = scmp.eq.s32.totalorder %s16, 1
    %p125 = por %p123, %p124
    %p127 = scmp.ne.s32.totalorder %s112, %s126
    %p128 = scmp.eq.s32.totalorder %s16, 0
    %p129 = por %p127, %p128
    %s130 = ssub.s32 %s17, %s29
    %s131 = ssub.s32 %s18, %s25
    %s132 = sor.u32 %s130, %s131
    %p133 = scmp.eq.s32.totalorder %s132, 0
    %s135 = sadd.s32 %s134, 1
    %s136 = scalar_select %p133, %s134, %s135
    %p139 = pneg %p133
    %p140 = scmp.eq.s32.totalorder %s10, 1
    %p141 = por %p139, %p140
    %p142 = scmp.ne.s32.totalorder %s134, %s137
    %p143 = scmp.eq.s32.totalorder %s10, 0
    %p144 = por %p142, %p143
    %p145 = scmp.ne.s32.totalorder %s134, %s137
    %p146 = scmp.eq.s32.totalorder %s15, 1
    %p147 = por %p145, %p146
    %p148 = scmp.ne.s32.totalorder %s137, %s138
    %p149 = scmp.eq.s32.totalorder %s15, 0
    %p150 = por %p148, %p149
    %p151 = scmp.ne.s32.totalorder %s137, %s138
    %p152 = scmp.eq.s32.totalorder %s16, 1
    %p153 = por %p151, %p152
    %p155 = scmp.ne.s32.totalorder %s138, %s154
    %p156 = scmp.eq.s32.totalorder %s16, 0
    %p157 = por %p155, %p156
    %p158 = scmp.le.s32.totalorder 1, %s10
    %p159 = scmp.lt.s32.totalorder %s10, 3
    %p160 = pnand %p158, %p159
    %p161 = pneg %p160
    // Predicated region
    $region9: #{edge_detection_encoder.7} parent=5 // pred_check
      _
    $region10: #{edge_detection_encoder.7} parent=5 // pred_check_branch
      %163 = sbr.rel (%p160) target = $region12
    $region11: #{edge_detection_encoder.7} parent=5 // pred_region
      %s164 = ssub.s32 %s10, 1
      // Predicated region
      $region13: #{edge_detection_encoder.7} parent=11 // pred_check
        %p165 = pneg %p101
      $region14: #{edge_detection_encoder.7} parent=11 // pred_check_branch
        %167 = sbr.rel (%p165) target = $region16
      $region15: #{edge_detection_encoder.7} parent=11 // pred_region
        _
      $region16: #{edge_detection_encoder.7} parent=11 // pred_fallthru
        _
      // Predicated region
      $region17: #{edge_detection_encoder.7} parent=11 // pred_check
        %p168 = pneg %p122
      $region18: #{edge_detection_encoder.7} parent=11 // pred_check_branch
        %170 = sbr.rel (%p168) target = $region20
      $region19: #{edge_detection_encoder.7} parent=11 // pred_region
        _
      $region20: #{edge_detection_encoder.7} parent=11 // pred_fallthru
        _
    $region12: #{edge_detection_encoder.7} parent=5 // pred_fallthru
      _
    %p171 = scmp.lt.s32.totalorder %s10, 2
    // Predicated region
    $region21: #{edge_detection_encoder.7} parent=5 // pred_check
      %p172 = pneg %p171
    $region22: #{edge_detection_encoder.7} parent=5 // pred_check_branch
      %174 = sbr.rel (%p172) target = $region24
    $region23: #{edge_detection_encoder.7} parent=5 // pred_region
      // Predicated region
      $region25: #{edge_detection_encoder.7} parent=23 // pred_check
        %p175 = pneg %p44
      $region26: #{edge_detection_encoder.7} parent=23 // pred_check_branch
        %177 = sbr.rel (%p175) target = $region28
      $region27: #{edge_detection_encoder.7} parent=23 // pred_region
        %s178 = smul.u32 8, %s18
        %p179 = scmp.lt.s32.totalorder %s17, 1
        %s180 = scalar_select %p179, %s17, 1
        %p181 = scmp.lt.s32.totalorder %s178, 15
        %s182 = scalar_select %p181, %s178, 15
        %s183 = smul.addr %s182, 2
        %s184 = smul.addr %s180, 32
        %s185 = sadd.s32 %s183, %s184
        %s186 = smul.addr %s185, 4
        %s187 = scalar_lea.vmem %s0, %s186
        %s188 = smul.u32 8, %s18
      $region28: #{edge_detection_encoder.7} parent=23 // pred_fallthru
        _
      // Predicated region
      $region29: #{edge_detection_encoder.7} parent=23 // pred_check
        %p189 = pneg %p74
      $region30: #{edge_detection_encoder.7} parent=23 // pred_check_branch
        %191 = sbr.rel (%p189) target = $region32
      $region31: #{edge_detection_encoder.7} parent=23 // pred_region
        %s192 = sadd.s32 %s18, 1
        %s193 = smul.u32 8, %s192
        %p194 = scmp.lt.s32.totalorder %s17, 1
        %s195 = scalar_select %p194, %s17, 1
        %p196 = scmp.lt.s32.totalorder %s193, 15
        %s197 = scalar_select %p196, %s193, 15
        %s198 = smul.addr %s197, 2
        %s199 = smul.addr %s195, 32
        %s200 = sadd.s32 %s198, %s199
        %s201 = smul.addr %s200, 4
        %s202 = scalar_lea.vmem %s1, %s201
        %s203 = sadd.s32 %s18, 1
        %s204 = smul.u32 8, %s203
      $region32: #{edge_detection_encoder.7} parent=23 // pred_fallthru
        _
    $region24: #{edge_detection_encoder.7} parent=5 // pred_fallthru
      _
    %p205 = scmp.le.s32.totalorder 1, %s10
    %p206 = scmp.lt.s32.totalorder %s10, 3
    %p207 = pnand %p205, %p206
    %p208 = pneg %p207
    // Predicated region
    $region33: #{edge_detection_encoder.7} parent=5 // pred_check
      _
    $region34: #{edge_detection_encoder.7} parent=5 // pred_check_branch
      %210 = sbr.rel (%p207) target = $region36
    $region35: #{edge_detection_encoder.7} parent=5 // pred_region
      %s211 = ssub.s32 %s10, 1
      %s212 = smul.u32 8, %s20
      %p213 = scmp.lt.s32.totalorder %s19, 1
      %s214 = scalar_select %p213, %s19, 1
      %p215 = scmp.lt.s32.totalorder %s212, 15
      %s216 = scalar_select %p215, %s212, 15
      %s217 = smul.addr %s216, 2
      %s218 = smul.addr %s214, 32
      %s219 = sadd.s32 %s217, %s218
      %s220 = smul.addr %s219, 4
      %s221 = scalar_lea.vmem %s0, %s220
      %p222 = pneg %p50
      %p223 = pneg %p47
      %s224 = sadd.s32 %s20, 1
      %s225 = smul.u32 8, %s224
      %p226 = scmp.lt.s32.totalorder %s19, 1
      %s227 = scalar_select %p226, %s19, 1
      %p228 = scmp.lt.s32.totalorder %s225, 15
      %s229 = scalar_select %p228, %s225, 15
      %s230 = smul.addr %s229, 2
      %s231 = smul.addr %s227, 32
      %s232 = sadd.s32 %s230, %s231
      %s233 = smul.addr %s232, 4
      %s234 = scalar_lea.vmem %s1, %s233
      %p235 = pneg %p80
      %p236 = pneg %p77
      %p237 = pneg %p101
      %p238 = pneg %p98
      %p239 = pneg %p122
      %p240 = pneg %p119
      %p241 = pneg %p150
      %p242 = pneg %p147
      %p243 = scmp.lt.s32.totalorder %s19, 1
      %s244 = scalar_select %p243, %s19, 1
      %p245 = scmp.lt.s32.totalorder %s20, 0
      %s246 = scalar_select %p245, %s20, 0
      %s247 = smul.addr %s246, 2
      %s248 = smul.addr %s244, 2
      %s249 = sadd.s32 %s247, %s248
      %s250 = smul.addr %s249, 4
      %s251 = scalar_lea.vmem %s4, %s250
      %s252 = smul.u32 8, %s20
      %p253 = scmp.lt.s32.totalorder %s19, 1
      %s254 = scalar_select %p253, %s19, 1
      %p255 = scmp.lt.s32.totalorder %s252, 15
      %s256 = scalar_select %p255, %s252, 15
      %s257 = smul.addr %s256, 2
      %s258 = smul.addr %s254, 32
      %s259 = sadd.s32 %s257, %s258
      %s260 = smul.addr %s259, 4
      %s261 = scalar_lea.vmem %s0, %s260
      %s262 = smul.u32 8, %s20
      %s263 = sadd.s32 %s20, 1
      %s264 = smul.u32 8, %s263
      %p265 = scmp.lt.s32.totalorder %s19, 1
      %s266 = scalar_select %p265, %s19, 1
      %p267 = scmp.lt.s32.totalorder %s264, 15
      %s268 = scalar_select %p267, %s264, 15
      %s269 = smul.addr %s268, 2
      %s270 = smul.addr %s266, 32
      %s271 = sadd.s32 %s269, %s270
      %s272 = smul.addr %s271, 4
      %s273 = scalar_lea.vmem %s1, %s272
      %s274 = sadd.s32 %s20, 1
      %s275 = smul.u32 8, %s274
      %p276 = scmp.lt.s32.totalorder %s19, 1
      %s277 = scalar_select %p276, %s19, 1
      %p278 = scmp.lt.s32.totalorder %s20, 0
      %s279 = scalar_select %p278, %s20, 0
      %s280 = smul.addr %s279, 2
      %s281 = smul.addr %s277, 2
      %s282 = sadd.s32 %s280, %s281
      %s283 = smul.addr %s282, 4
      %s284 = scalar_lea.vmem %s4, %s283
      %v286 = vld [vmem:[%s261] sm:$0xf]
      %v287 = vld [vmem:[%s261 + $0x8] sm:$0xf]
      %v288 = vld [vmem:[%s261 + $0x10] sm:$0xf]
      %v289 = vld [vmem:[%s261 + $0x18] sm:$0xf]
      %v290 = vld [vmem:[%s261 + $0x20] sm:$0xf]
      %v291 = vld [vmem:[%s261 + $0x28] sm:$0xf]
      %v292 = vld [vmem:[%s261 + $0x30] sm:$0xf]
      %v293 = vld [vmem:[%s261 + $0x38] sm:$0xf]
      %vm294 = vcmask 125952
      %295 = vst.msk [vmem:[#allocation2] sm:$0xf] %vm294, %v286
      %296 = vst.msk [vmem:[#allocation2 + $0x4] sm:$0xf] %vm294, %v287
      %297 = vst.msk [vmem:[#allocation2 + $0x8] sm:$0xf] %vm294, %v288
      %298 = vst.msk [vmem:[#allocation2 + $0xc] sm:$0xf] %vm294, %v289
      %299 = vst.msk [vmem:[#allocation2 + $0x10] sm:$0xf] %vm294, %v290
      %300 = vst.msk [vmem:[#allocation2 + $0x14] sm:$0xf] %vm294, %v291
      %301 = vst.msk [vmem:[#allocation2 + $0x18] sm:$0xf] %vm294, %v292
      %302 = vst.msk [vmem:[#allocation2 + $0x1c] sm:$0xf] %vm294, %v293
      %v303 = vld [vmem:[%s273] sm:$0xf]
      %v304 = vld [vmem:[%s273 + $0x8] sm:$0xf]
      %s305 = scalar_lea.vmem [#allocation2], 32
      %306 = vst.msk [vmem:[%s305] sm:$0xf] %vm294, %v303
      %307 = vst.msk [vmem:[%s305 + $0x4] sm:$0xf] %vm294, %v304
      %v308 = vld [vmem:[%s261] sm:$0xf]
      %v309 = vld [vmem:[%s261 + $0x4] sm:$0x1]
      %v310 = vld [vmem:[%s261 + $0x8] sm:$0xf]
      %v311 = vld [vmem:[%s261 + $0xc] sm:$0x1]
      %v312 = vld [vmem:[%s261 + $0x10] sm:$0xf]
      %v313 = vld [vmem:[%s261 + $0x14] sm:$0x1]
      %v314 = vld [vmem:[%s261 + $0x18] sm:$0xf]
      %v315 = vld [vmem:[%s261 + $0x1c] sm:$0x1]
      %v316 = vld [vmem:[%s261 + $0x20] sm:$0xf]
      %v317 = vld [vmem:[%s261 + $0x24] sm:$0x1]
      %v318 = vld [vmem:[%s261 + $0x28] sm:$0xf]
      %v319 = vld [vmem:[%s261 + $0x2c] sm:$0x1]
      %v320 = vld [vmem:[%s261 + $0x30] sm:$0xf]
      %v321 = vld [vmem:[%s261 + $0x34] sm:$0x1]
      %v322 = vld [vmem:[%s261 + $0x38] sm:$0xf]
      %v323 = vld [vmem:[%s261 + $0x3c] sm:$0x1]
      %vm324 = vsmask.f32 3328
      %vm325 = vsmask.f32 7440
      %vm326 = vmor %vm324, %vm325
      %v328 = vshrl.u32 %v308, 16
      %v330 = vrot.slane %v328, 4
      %v331 = vshll.u32 %v308, 16
      %v333 = vrot.slane %v331, 5
      %v334 = vor.u32 %v330, %v333
      %v335 = vrot.slane %v334, 4
      %v337 = vshll.u32 %v309, 16
      %v339 = vrot.slane %v337, 5
      %v340 = vsel %vm326, %v335, %v339
      %v342 = vshrl.u32 %v310, 16
      %v344 = vrot.slane %v342, 4
      %v345 = vshll.u32 %v310, 16
      %v347 = vrot.slane %v345, 5
      %v348 = vor.u32 %v344, %v347
      %v349 = vrot.slane %v348, 4
      %v351 = vshll.u32 %v311, 16
      %v353 = vrot.slane %v351, 5
      %v354 = vsel %vm326, %v349, %v353
      %v356 = vshrl.u32 %v312, 16
      %v358 = vrot.slane %v356, 4
      %v359 = vshll.u32 %v312, 16
      %v361 = vrot.slane %v359, 5
      %v362 = vor.u32 %v358, %v361
      %v363 = vrot.slane %v362, 4
      %v365 = vshll.u32 %v313, 16
      %v367 = vrot.slane %v365, 5
      %v368 = vsel %vm326, %v363, %v367
      %v370 = vshrl.u32 %v314, 16
      %v372 = vrot.slane %v370, 4
      %v373 = vshll.u32 %v314, 16
      %v375 = vrot.slane %v373, 5
      %v376 = vor.u32 %v372, %v375
      %v377 = vrot.slane %v376, 4
      %v379 = vshll.u32 %v315, 16
      %v381 = vrot.slane %v379, 5
      %v382 = vsel %vm326, %v377, %v381
      %v384 = vshrl.u32 %v316, 16
      %v386 = vrot.slane %v384, 4
      %v387 = vshll.u32 %v316, 16
      %v389 = vrot.slane %v387, 5
      %v390 = vor.u32 %v386, %v389
      %v391 = vrot.slane %v390, 4
      %v393 = vshll.u32 %v317, 16
      %v395 = vrot.slane %v393, 5
      %v396 = vsel %vm326, %v391, %v395
      %v398 = vshrl.u32 %v318, 16
      %v400 = vrot.slane %v398, 4
      %v401 = vshll.u32 %v318, 16
      %v403 = vrot.slane %v401, 5
      %v404 = vor.u32 %v400, %v403
      %v405 = vrot.slane %v404, 4
      %v407 = vshll.u32 %v319, 16
      %v409 = vrot.slane %v407, 5
      %v410 = vsel %vm326, %v405, %v409
      %v412 = vshrl.u32 %v320, 16
      %v414 = vrot.slane %v412, 4
      %v415 = vshll.u32 %v320, 16
      %v417 = vrot.slane %v415, 5
      %v418 = vor.u32 %v414, %v417
      %v419 = vrot.slane %v418, 4
      %v421 = vshll.u32 %v321, 16
      %v423 = vrot.slane %v421, 5
      %v424 = vsel %vm326, %v419, %v423
      %v426 = vshrl.u32 %v322, 16
      %v428 = vrot.slane %v426, 4
      %v429 = vshll.u32 %v322, 16
      %v431 = vrot.slane %v429, 5
      %v432 = vor.u32 %v428, %v431
      %v433 = vrot.slane %v432, 4
      %v435 = vshll.u32 %v323, 16
      %v437 = vrot.slane %v435, 5
      %v438 = vsel %vm326, %v433, %v437
      %439 = vrot.lane.b32.xlu0 %v340, 16
      %v440 = vpop.permute.xlu0 %439
      %441 = vrot.lane.b32.xlu0 %v354, 16
      %v442 = vpop.permute.xlu0 %441
      %443 = vrot.lane.b32.xlu0 %v368, 16
      %v444 = vpop.permute.xlu0 %443
      %445 = vrot.lane.b32.xlu0 %v382, 16
      %v446 = vpop.permute.xlu0 %445
      %447 = vrot.lane.b32.xlu0 %v396, 16
      %v448 = vpop.permute.xlu0 %447
      %449 = vrot.lane.b32.xlu0 %v410, 16
      %v450 = vpop.permute.xlu0 %449
      %451 = vrot.lane.b32.xlu0 %v424, 16
      %v452 = vpop.permute.xlu0 %451
      %453 = vrot.lane.b32.xlu0 %v438, 16
      %v454 = vpop.permute.xlu0 %453
      %vm463 = vcmask 257152
      %464 = vst.msk [vmem:[#allocation2] sm:$0xf] %vm463, %v440
      %465 = vst.msk [vmem:[#allocation2 + $0x4] sm:$0xf] %vm463, %v442
      %466 = vst.msk [vmem:[#allocation2 + $0x8] sm:$0xf] %vm463, %v444
      %467 = vst.msk [vmem:[#allocation2 + $0xc] sm:$0xf] %vm463, %v446
      %468 = vst.msk [vmem:[#allocation2 + $0x10] sm:$0xf] %vm463, %v448
      %469 = vst.msk [vmem:[#allocation2 + $0x14] sm:$0xf] %vm463, %v450
      %470 = vst.msk [vmem:[#allocation2 + $0x18] sm:$0xf] %vm463, %v452
      %471 = vst.msk [vmem:[#allocation2 + $0x1c] sm:$0xf] %vm463, %v454
      %v472 = vld [vmem:[%s273] sm:$0xf]
      %v473 = vld [vmem:[%s273 + $0x4] sm:$0x1]
      %v474 = vld [vmem:[%s273 + $0x8] sm:$0xf]
      %v475 = vld [vmem:[%s273 + $0xc] sm:$0x1]
      %v477 = vshrl.u32 %v472, 16
      %v479 = vrot.slane %v477, 4
      %v480 = vshll.u32 %v472, 16
      %v482 = vrot.slane %v480, 5
      %v483 = vor.u32 %v479, %v482
      %v484 = vrot.slane %v483, 4
      %v486 = vshll.u32 %v473, 16
      %v488 = vrot.slane %v486, 5
      %v489 = vsel %vm326, %v484, %v488
      %v491 = vshrl.u32 %v474, 16
      %v493 = vrot.slane %v491, 4
      %v494 = vshll.u32 %v474, 16
      %v496 = vrot.slane %v494, 5
      %v497 = vor.u32 %v493, %v496
      %v498 = vrot.slane %v497, 4
      %v500 = vshll.u32 %v475, 16
      %v502 = vrot.slane %v500, 5
      %v503 = vsel %vm326, %v498, %v502
      %504 = vrot.lane.b32.xlu0 %v489, 16
      %v505 = vpop.permute.xlu0 %504
      %506 = vrot.lane.b32.xlu0 %v503, 16
      %v507 = vpop.permute.xlu0 %506
      %510 = vst.msk [vmem:[%s305] sm:$0xf] %vm463, %v505
      %511 = vst.msk [vmem:[%s305 + $0x4] sm:$0xf] %vm463, %v507
      %v512 = vld [vmem:[%s261] sm:$0xe]
      %v513 = vld [vmem:[%s261 + $0x4] sm:$0x1]
      %v514 = vld [vmem:[%s261 + $0x8] sm:$0xe]
      %v515 = vld [vmem:[%s261 + $0xc] sm:$0x1]
      %v516 = vld [vmem:[%s261 + $0x10] sm:$0xe]
      %v517 = vld [vmem:[%s261 + $0x14] sm:$0x1]
      %v518 = vld [vmem:[%s261 + $0x18] sm:$0xe]
      %v519 = vld [vmem:[%s261 + $0x1c] sm:$0x1]
      %v520 = vld [vmem:[%s261 + $0x20] sm:$0xe]
      %v521 = vld [vmem:[%s261 + $0x24] sm:$0x1]
      %v522 = vld [vmem:[%s261 + $0x28] sm:$0xe]
      %v523 = vld [vmem:[%s261 + $0x2c] sm:$0x1]
      %v524 = vld [vmem:[%s261 + $0x30] sm:$0xe]
      %v525 = vld [vmem:[%s261 + $0x34] sm:$0x1]
      %v526 = vld [vmem:[%s261 + $0x38] sm:$0xe]
      %v527 = vld [vmem:[%s261 + $0x3c] sm:$0x1]
      %vm544 = vcmask 1042432
      %vm545 = vcmask 1046532
      %vm546 = vmor %vm544, %vm545
      %v547 = vrot.slane %v512, 5
      %v548 = vrot.slane %v547, 4
      %v549 = vrot.slane %v513, 5
      %v550 = vsel %vm546, %v548, %v549
      %v551 = vrot.slane %v514, 5
      %v552 = vrot.slane %v551, 4
      %v553 = vrot.slane %v515, 5
      %v554 = vsel %vm546, %v552, %v553
      %v555 = vrot.slane %v516, 5
      %v556 = vrot.slane %v555, 4
      %v557 = vrot.slane %v517, 5
      %v558 = vsel %vm546, %v556, %v557
      %v559 = vrot.slane %v518, 5
      %v560 = vrot.slane %v559, 4
      %v561 = vrot.slane %v519, 5
      %v562 = vsel %vm546, %v560, %v561
      %v563 = vrot.slane %v520, 5
      %v564 = vrot.slane %v563, 4
      %v565 = vrot.slane %v521, 5
      %v566 = vsel %vm546, %v564, %v565
      %v567 = vrot.slane %v522, 5
      %v568 = vrot.slane %v567, 4
      %v569 = vrot.slane %v523, 5
      %v570 = vsel %vm546, %v568, %v569
      %v571 = vrot.slane %v524, 5
      %v572 = vrot.slane %v571, 4
      %v573 = vrot.slane %v525, 5
      %v574 = vsel %vm546, %v572, %v573
      %v575 = vrot.slane %v526, 5
      %v576 = vrot.slane %v575, 4
      %v577 = vrot.slane %v527, 5
      %v578 = vsel %vm546, %v576, %v577
      %579 = vrot.lane.b32.xlu0 %v550, 32
      %v580 = vpop.permute.xlu0 %579
      %581 = vrot.lane.b32.xlu0 %v554, 32
      %v582 = vpop.permute.xlu0 %581
      %583 = vrot.lane.b32.xlu0 %v558, 32
      %v584 = vpop.permute.xlu0 %583
      %585 = vrot.lane.b32.xlu0 %v562, 32
      %v586 = vpop.permute.xlu0 %585
      %587 = vrot.lane.b32.xlu0 %v566, 32
      %v588 = vpop.permute.xlu0 %587
      %589 = vrot.lane.b32.xlu0 %v570, 32
      %v590 = vpop.permute.xlu0 %589
      %591 = vrot.lane.b32.xlu0 %v574, 32
      %v592 = vpop.permute.xlu0 %591
      %593 = vrot.lane.b32.xlu0 %v578, 32
      %v594 = vpop.permute.xlu0 %593
      %vm603 = vcmask 388352
      %604 = vst.msk [vmem:[#allocation2] sm:$0xf] %vm603, %v580
      %605 = vst.msk [vmem:[#allocation2 + $0x4] sm:$0xf] %vm603, %v582
      %606 = vst.msk [vmem:[#allocation2 + $0x8] sm:$0xf] %vm603, %v584
      %607 = vst.msk [vmem:[#allocation2 + $0xc] sm:$0xf] %vm603, %v586
      %608 = vst.msk [vmem:[#allocation2 + $0x10] sm:$0xf] %vm603, %v588
      %609 = vst.msk [vmem:[#allocation2 + $0x14] sm:$0xf] %vm603, %v590
      %610 = vst.msk [vmem:[#allocation2 + $0x18] sm:$0xf] %vm603, %v592
      %611 = vst.msk [vmem:[#allocation2 + $0x1c] sm:$0xf] %vm603, %v594
      %v612 = vld [vmem:[%s273] sm:$0xe]
      %v613 = vld [vmem:[%s273 + $0x4] sm:$0x1]
      %v614 = vld [vmem:[%s273 + $0x8] sm:$0xe]
      %v615 = vld [vmem:[%s273 + $0xc] sm:$0x1]
      %v620 = vrot.slane %v612, 5
      %v621 = vrot.slane %v620, 4
      %v622 = vrot.slane %v613, 5
      %v623 = vsel %vm546, %v621, %v622
      %v624 = vrot.slane %v614, 5
      %v625 = vrot.slane %v624, 4
      %v626 = vrot.slane %v615, 5
      %v627 = vsel %vm546, %v625, %v626
      %628 = vrot.lane.b32.xlu0 %v623, 32
      %v629 = vpop.permute.xlu0 %628
      %630 = vrot.lane.b32.xlu0 %v627, 32
      %v631 = vpop.permute.xlu0 %630
      %634 = vst.msk [vmem:[%s305] sm:$0xf] %vm603, %v629
      %635 = vst.msk [vmem:[%s305 + $0x4] sm:$0xf] %vm603, %v631
      %v636 = vld [vmem:[#allocation2] sm:$0xf]
      %v637 = vld [vmem:[#allocation2 + $0x4] sm:$0xf]
      %v638 = vld [vmem:[#allocation2 + $0x8] sm:$0xf]
      %v639 = vld [vmem:[#allocation2 + $0xc] sm:$0xf]
      %v640 = vld [vmem:[#allocation2 + $0x10] sm:$0xf]
      %v641 = vld [vmem:[#allocation2 + $0x14] sm:$0xf]
      %v642 = vld [vmem:[#allocation2 + $0x18] sm:$0xf]
      %v643 = vld [vmem:[#allocation2 + $0x1c] sm:$0xf]
      %v644 = vld [vmem:[%s2] sm:$0xf]
      %v645 = vld [vmem:[%s2 + $0x4] sm:$0xf]
      %v646 = vld [vmem:[%s2 + $0x8] sm:$0xf]
      %v647 = vld [vmem:[%s2 + $0xc] sm:$0xf]
      %v648 = vld [vmem:[%s2 + $0x10] sm:$0xf]
      %v649 = vld [vmem:[%s2 + $0x14] sm:$0xf]
      %v658 = vunpack.c.l.b16 %v636
      %v659 = vunpack.c.l.b16 %v637
      %v660 = vunpack.c.l.b16 %v638
      %v661 = vunpack.c.l.b16 %v639
      %v662 = vunpack.c.l.b16 %v640
      %v663 = vunpack.c.l.b16 %v641
      %v664 = vunpack.c.l.b16 %v642
      %v665 = vunpack.c.l.b16 %v643
      %v666 = vpack.c.b16 %v659, %v658
      %v667 = vpack.c.b16 %v661, %v660
      %v668 = vpack.c.b16 %v663, %v662
      %v669 = vpack.c.b16 %v665, %v664
      %v676 = vunpack.c.l.b16 %v644
      %v677 = vunpack.c.l.b16 %v645
      %v678 = vunpack.c.l.b16 %v646
      %v679 = vunpack.c.l.b16 %v647
      %v680 = vunpack.c.l.b16 %v648
      %v681 = vunpack.c.l.b16 %v649
      %v682 = vpack.c.b16 %v677, %v676
      %v683 = vpack.c.b16 %v679, %v678
      %v684 = vpack.c.b16 %v681, %v680
      %vm688 = vcmask 392192
      %v690 = vsel %vm688, %v666, 0
      %v693 = vsel %vm688, %v667, 0
      %v696 = vsel %vm688, %v668, 0
      %v699 = vsel %vm688, %v669, 0
      %701 = vmatprep.subr.bf16.mxu0 0
      %702 = vmatpush1.bf16.msra.mxu0 %v682
      %703 = vmatprep.subr.bf16.mxu0 0
      %704 = vmatpush1.bf16.msra.mxu0 %v683
      %705 = vmatprep.subr.bf16.mxu0 0
      %706 = vmatpush1.bf16.msra.mxu0 %v684
      %707 = vmatprep.subr.bf16.mxu0 0
      %708 = vmatpush1.bf16.msra.mxu0 0
      %709 = vmatprep.subr.bf16.mxu0 0
      %710 = vmatpush1.bf16.msra.mxu0 0
      %711 = vmatprep.subr.bf16.mxu0 0
      %712 = vmatpush1.bf16.msra.mxu0 0
      %713 = vmatprep.subr.bf16.mxu0 0
      %714 = vmatpush1.bf16.msra.mxu0 0
      %715 = vmatprep.subr.bf16.mxu0 0
      %716 = vmatpush1.bf16.msra.mxu0 0
      %717 = vmatprep.subr.bf16.mxu0 0
      %718 = vmatpush1.bf16.msra.mxu0 0
      %719 = vmatprep.subr.bf16.mxu0 0
      %720 = vmatpush1.bf16.msra.mxu0 0
      %721 = vmatprep.subr.bf16.mxu0 0
      %722 = vmatpush1.bf16.msra.mxu0 0
      %723 = vmatprep.subr.bf16.mxu0 0
      %724 = vmatpush1.bf16.msra.mxu0 0
      %725 = vmatprep.subr.bf16.mxu0 0
      %726 = vmatpush1.bf16.msra.mxu0 0
      %727 = vmatprep.subr.bf16.mxu0 0
      %728 = vmatpush1.bf16.msra.mxu0 0
      %729 = vmatprep.subr.bf16.mxu0 0
      %730 = vmatpush1.bf16.msra.mxu0 0
      %731 = vmatprep.subr.bf16.mxu0 0
      %732 = vmatpush1.bf16.msra.mxu0 0
      %733 = vmatprep.mubr.bf16.mxu0 0
      %734 = vmatmul.mubr.bf16.gmra.mrb[0].mxu0 %v690
      %v735 = vpop.f32.mrb[0].mxu0
      %v736 = vadd.f32 0.0, %v735
      %v737 = vpop.f32.mrb[0].mxu0
      %v738 = vpop.f32.mrb[0].mxu0
      %v739 = vadd.f32 0.0, %v738
      %v740 = vpop.f32.mrb[0].mxu0
      %741 = vmatprep.mubr.bf16.mxu0 0
      %742 = vmatmul.mubr.bf16.gmra.mrb[0].mxu0 %v693
      %v743 = vpop.f32.mrb[0].mxu0
      %v744 = vadd.f32 0.0, %v743
      %v745 = vpop.f32.mrb[0].mxu0
      %v746 = vpop.f32.mrb[0].mxu0
      %v747 = vadd.f32 0.0, %v746
      %v748 = vpop.f32.mrb[0].mxu0
      %749 = vmatprep.mubr.bf16.mxu0 0
      %750 = vmatmul.mubr.bf16.gmra.mrb[0].mxu0 %v696
      %v751 = vpop.f32.mrb[0].mxu0
      %v752 = vadd.f32 0.0, %v751
      %v753 = vpop.f32.mrb[0].mxu0
      %v754 = vpop.f32.mrb[0].mxu0
      %v755 = vadd.f32 0.0, %v754
      %v756 = vpop.f32.mrb[0].mxu0
      %757 = vmatprep.mubr.bf16.mxu0 0
      %758 = vmatmul.mubr.bf16.gmra.mrb[0].mxu0 %v699
      %v759 = vpop.f32.mrb[0].mxu0
      %v760 = vadd.f32 0.0, %v759
      %v761 = vpop.f32.mrb[0].mxu0
      %v762 = vpop.f32.mrb[0].mxu0
      %v763 = vadd.f32 0.0, %v762
      %v764 = vpop.f32.mrb[0].mxu0
      %765 = vdwg.mxu0
      %vm766 = vcmask 261120
      %767 = vst.msk [vmem:[#allocation3] sm:$0xff] %vm766, %v736
      %768 = vst.msk [vmem:[#allocation3 + $0x8] sm:$0xff] %vm766, %v739
      %769 = vst.msk [vmem:[#allocation3 + $0x10] sm:$0xff] %vm766, %v744
      %770 = vst.msk [vmem:[#allocation3 + $0x18] sm:$0xff] %vm766, %v747
      %771 = vst.msk [vmem:[#allocation3 + $0x20] sm:$0xff] %vm766, %v752
      %772 = vst.msk [vmem:[#allocation3 + $0x28] sm:$0xff] %vm766, %v755
      %773 = vst.msk [vmem:[#allocation3 + $0x30] sm:$0xff] %vm766, %v760
      %774 = vst.msk [vmem:[#allocation3 + $0x38] sm:$0xff] %vm766, %v763
      %s775 = scalar_lea.vmem [#allocation2], 4
      %v776 = vld [vmem:[%s775] sm:$0xf]
      %v777 = vld [vmem:[%s775 + $0x4] sm:$0xf]
      %v778 = vld [vmem:[%s775 + $0x8] sm:$0xf]
      %v779 = vld [vmem:[%s775 + $0xc] sm:$0xf]
      %v780 = vld [vmem:[%s775 + $0x10] sm:$0xf]
      %v781 = vld [vmem:[%s775 + $0x14] sm:$0xf]
      %v782 = vld [vmem:[%s775 + $0x18] sm:$0xf]
      %v783 = vld [vmem:[%s775 + $0x1c] sm:$0xf]
      %s784 = scalar_lea.vmem %s2, 24
      %v785 = vld [vmem:[%s784] sm:$0xf]
      %v786 = vld [vmem:[%s784 + $0x4] sm:$0xf]
      %v787 = vld [vmem:[%s784 + $0x8] sm:$0xf]
      %v788 = vld [vmem:[%s784 + $0xc] sm:$0xf]
      %v789 = vld [vmem:[%s784 + $0x10] sm:$0xf]
      %v790 = vld [vmem:[%s784 + $0x14] sm:$0xf]
      %v799 = vunpack.c.l.b16 %v776
      %v800 = vunpack.c.l.b16 %v777
      %v801 = vunpack.c.l.b16 %v778
      %v802 = vunpack.c.l.b16 %v779
      %v803 = vunpack.c.l.b16 %v780
      %v804 = vunpack.c.l.b16 %v781
      %v805 = vunpack.c.l.b16 %v782
      %v806 = vunpack.c.l.b16 %v783
      %v807 = vpack.c.b16 %v800, %v799
      %v808 = vpack.c.b16 %v802, %v801
      %v809 = vpack.c.b16 %v804, %v803
      %v810 = vpack.c.b16 %v806, %v805
      %v817 = vunpack.c.l.b16 %v785
      %v818 = vunpack.c.l.b16 %v786
      %v819 = vunpack.c.l.b16 %v787
      %v820 = vunpack.c.l.b16 %v788
      %v821 = vunpack.c.l.b16 %v789
      %v822 = vunpack.c.l.b16 %v790
      %v823 = vpack.c.b16 %v818, %v817
      %v824 = vpack.c.b16 %v820, %v819
      %v825 = vpack.c.b16 %v822, %v821
      %v830 = vsel %vm688, %v807, 0
      %v833 = vsel %vm688, %v808, 0
      %v836 = vsel %vm688, %v809, 0
      %v839 = vsel %vm688, %v810, 0
      %841 = vmatprep.subr.bf16.mxu0 0
      %842 = vmatpush1.bf16.msra.mxu0 %v823
      %843 = vmatprep.subr.bf16.mxu0 0
      %844 = vmatpush1.bf16.msra.mxu0 %v824
      %845 = vmatprep.subr.bf16.mxu0 0
      %846 = vmatpush1.bf16.msra.mxu0 %v825
      %847 = vmatprep.subr.bf16.mxu0 0
      %848 = vmatpush1.bf16.msra.mxu0 0
      %849 = vmatprep.subr.bf16.mxu0 0
      %850 = vmatpush1.bf16.msra.mxu0 0
      %851 = vmatprep.subr.bf16.mxu0 0
      %852 = vmatpush1.bf16.msra.mxu0 0
      %853 = vmatprep.subr.bf16.mxu0 0
      %854 = vmatpush1.bf16.msra.mxu0 0
      %855 = vmatprep.subr.bf16.mxu0 0
      %856 = vmatpush1.bf16.msra.mxu0 0
      %857 = vmatprep.subr.bf16.mxu0 0
      %858 = vmatpush1.bf16.msra.mxu0 0
      %859 = vmatprep.subr.bf16.mxu0 0
      %860 = vmatpush1.bf16.msra.mxu0 0
      %861 = vmatprep.subr.bf16.mxu0 0
      %862 = vmatpush1.bf16.msra.mxu0 0
      %863 = vmatprep.subr.bf16.mxu0 0
      %864 = vmatpush1.bf16.msra.mxu0 0
      %865 = vmatprep.subr.bf16.mxu0 0
      %866 = vmatpush1.bf16.msra.mxu0 0
      %867 = vmatprep.subr.bf16.mxu0 0
      %868 = vmatpush1.bf16.msra.mxu0 0
      %869 = vmatprep.subr.bf16.mxu0 0
      %870 = vmatpush1.bf16.msra.mxu0 0
      %871 = vmatprep.subr.bf16.mxu0 0
      %872 = vmatpush1.bf16.msra.mxu0 0
      %873 = vmatprep.mubr.bf16.mxu0 0
      %874 = vmatmul.mubr.bf16.gmra.mrb[0].mxu0 %v830
      %v875 = vpop.f32.mrb[0].mxu0
      %v876 = vadd.f32 0.0, %v875
      %v877 = vpop.f32.mrb[0].mxu0
      %v878 = vpop.f32.mrb[0].mxu0
      %v879 = vadd.f32 0.0, %v878
      %v880 = vpop.f32.mrb[0].mxu0
      %881 = vmatprep.mubr.bf16.mxu0 0
      %882 = vmatmul.mubr.bf16.gmra.mrb[0].mxu0 %v833
      %v883 = vpop.f32.mrb[0].mxu0
      %v884 = vadd.f32 0.0, %v883
      %v885 = vpop.f32.mrb[0].mxu0
      %v886 = vpop.f32.mrb[0].mxu0
      %v887 = vadd.f32 0.0, %v886
      %v888 = vpop.f32.mrb[0].mxu0
      %889 = vmatprep.mubr.bf16.mxu0 0
      %890 = vmatmul.mubr.bf16.gmra.mrb[0].mxu0 %v836
      %v891 = vpop.f32.mrb[0].mxu0
      %v892 = vadd.f32 0.0, %v891
      %v893 = vpop.f32.mrb[0].mxu0
      %v894 = vpop.f32.mrb[0].mxu0
      %v895 = vadd.f32 0.0, %v894
      %v896 = vpop.f32.mrb[0].mxu0
      %897 = vmatprep.mubr.bf16.mxu0 0
      %898 = vmatmul.mubr.bf16.gmra.mrb[0].mxu0 %v839
      %v899 = vpop.f32.mrb[0].mxu0
      %v900 = vadd.f32 0.0, %v899
      %v901 = vpop.f32.mrb[0].mxu0
      %v902 = vpop.f32.mrb[0].mxu0
      %v903 = vadd.f32 0.0, %v902
      %v904 = vpop.f32.mrb[0].mxu0
      %905 = vdwg.mxu0
      %v906 = vld [vmem:[#allocation3] sm:$0xff]
      %v907 = vld [vmem:[#allocation3 + $0x8] sm:$0xff]
      %v908 = vld [vmem:[#allocation3 + $0x10] sm:$0xff]
      %v909 = vld [vmem:[#allocation3 + $0x18] sm:$0xff]
      %v910 = vld [vmem:[#allocation3 + $0x20] sm:$0xff]
      %v911 = vld [vmem:[#allocation3 + $0x28] sm:$0xff]
      %v912 = vld [vmem:[#allocation3 + $0x30] sm:$0xff]
      %v913 = vld [vmem:[#allocation3 + $0x38] sm:$0xff]
      %v914 = vadd.f32 %v906, %v876
      %v915 = vadd.f32 %v907, %v879
      %v916 = vadd.f32 %v908, %v884
      %v917 = vadd.f32 %v909, %v887
      %v918 = vadd.f32 %v910, %v892
      %v919 = vadd.f32 %v911, %v895
      %v920 = vadd.f32 %v912, %v900
      %v921 = vadd.f32 %v913, %v903
      %922 = vst.msk [vmem:[#allocation3] sm:$0xff] %vm766, %v914
      %923 = vst.msk [vmem:[#allocation3 + $0x8] sm:$0xff] %vm766, %v915
      %924 = vst.msk [vmem:[#allocation3 + $0x10] sm:$0xff] %vm766, %v916
      %925 = vst.msk [vmem:[#allocation3 + $0x18] sm:$0xff] %vm766, %v917
      %926 = vst.msk [vmem:[#allocation3 + $0x20] sm:$0xff] %vm766, %v918
      %927 = vst.msk [vmem:[#allocation3 + $0x28] sm:$0xff] %vm766, %v919
      %928 = vst.msk [vmem:[#allocation3 + $0x30] sm:$0xff] %vm766, %v920
      %929 = vst.msk [vmem:[#allocation3 + $0x38] sm:$0xff] %vm766, %v921
      %s930 = scalar_lea.vmem [#allocation2], 8
      %v931 = vld [vmem:[%s930] sm:$0xf]
      %v932 = vld [vmem:[%s930 + $0x4] sm:$0xf]
      %v933 = vld [vmem:[%s930 + $0x8] sm:$0xf]
      %v934 = vld [vmem:[%s930 + $0xc] sm:$0xf]
      %v935 = vld [vmem:[%s930 + $0x10] sm:$0xf]
      %v936 = vld [vmem:[%s930 + $0x14] sm:$0xf]
      %v937 = vld [vmem:[%s930 + $0x18] sm:$0xf]
      %v938 = vld [vmem:[%s930 + $0x1c] sm:$0xf]
      %s939 = scalar_lea.vmem %s2, 48
      %v940 = vld [vmem:[%s939] sm:$0xf]
      %v941 = vld [vmem:[%s939 + $0x4] sm:$0xf]
      %v942 = vld [vmem:[%s939 + $0x8] sm:$0xf]
      %v943 = vld [vmem:[%s939 + $0xc] sm:$0xf]
      %v944 = vld [vmem:[%s939 + $0x10] sm:$0xf]
      %v945 = vld [vmem:[%s939 + $0x14] sm:$0xf]
      %v954 = vunpack.c.l.b16 %v931
      %v955 = vunpack.c.l.b16 %v932
      %v956 = vunpack.c.l.b16 %v933
      %v957 = vunpack.c.l.b16 %v934
      %v958 = vunpack.c.l.b16 %v935
      %v959 = vunpack.c.l.b16 %v936
      %v960 = vunpack.c.l.b16 %v937
      %v961 = vunpack.c.l.b16 %v938
      %v962 = vpack.c.b16 %v955, %v954
      %v963 = vpack.c.b16 %v957, %v956
      %v964 = vpack.c.b16 %v959, %v958
      %v965 = vpack.c.b16 %v961, %v960
      %v972 = vunpack.c.l.b16 %v940
      %v973 = vunpack.c.l.b16 %v941
      %v974 = vunpack.c.l.b16 %v942
      %v975 = vunpack.c.l.b16 %v943
      %v976 = vunpack.c.l.b16 %v944
      %v977 = vunpack.c.l.b16 %v945
      %v978 = vpack.c.b16 %v973, %v972
      %v979 = vpack.c.b16 %v975, %v974
      %v980 = vpack.c.b16 %v977, %v976
      %v985 = vsel %vm688, %v962, 0
      %v988 = vsel %vm688, %v963, 0
      %v991 = vsel %vm688, %v964, 0
      %v994 = vsel %vm688, %v965, 0
      %996 = vmatprep.subr.bf16.mxu0 0
      %997 = vmatpush1.bf16.msra.mxu0 %v978
      %998 = vmatprep.subr.bf16.mxu0 0
      %999 = vmatpush1.bf16.msra.mxu0 %v979
      %1000 = vmatprep.subr.bf16.mxu0 0
      %1001 = vmatpush1.bf16.msra.mxu0 %v980
      %1002 = vmatprep.subr.bf16.mxu0 0
      %1003 = vmatpush1.bf16.msra.mxu0 0
      %1004 = vmatprep.subr.bf16.mxu0 0
      %1005 = vmatpush1.bf16.msra.mxu0 0
      %1006 = vmatprep.subr.bf16.mxu0 0
      %1007 = vmatpush1.bf16.msra.mxu0 0
      %1008 = vmatprep.subr.bf16.mxu0 0
      %1009 = vmatpush1.bf16.msra.mxu0 0
      %1010 = vmatprep.subr.bf16.mxu0 0
      %1011 = vmatpush1.bf16.msra.mxu0 0
      %1012 = vmatprep.subr.bf16.mxu0 0
      %1013 = vmatpush1.bf16.msra.mxu0 0
      %1014 = vmatprep.subr.bf16.mxu0 0
      %1015 = vmatpush1.bf16.msra.mxu0 0
      %1016 = vmatprep.subr.bf16.mxu0 0
      %1017 = vmatpush1.bf16.msra.mxu0 0
      %1018 = vmatprep.subr.bf16.mxu0 0
      %1019 = vmatpush1.bf16.msra.mxu0 0
      %1020 = vmatprep.subr.bf16.mxu0 0
      %1021 = vmatpush1.bf16.msra.mxu0 0
      %1022 = vmatprep.subr.bf16.mxu0 0
      %1023 = vmatpush1.bf16.msra.mxu0 0
      %1024 = vmatprep.subr.bf16.mxu0 0
      %1025 = vmatpush1.bf16.msra.mxu0 0
      %1026 = vmatprep.subr.bf16.mxu0 0
      %1027 = vmatpush1.bf16.msra.mxu0 0
      %1028 = vmatprep.mubr.bf16.mxu0 0
      %1029 = vmatmul.mubr.bf16.gmra.mrb[0].mxu0 %v985
      %v1030 = vpop.f32.mrb[0].mxu0
      %v1031 = vadd.f32 0.0, %v1030
      %v1032 = vpop.f32.mrb[0].mxu0
      %v1033 = vpop.f32.mrb[0].mxu0
      %v1034 = vadd.f32 0.0, %v1033
      %v1035 = vpop.f32.mrb[0].mxu0
      %1036 = vmatprep.mubr.bf16.mxu0 0
      %1037 = vmatmul.mubr.bf16.gmra.mrb[0].mxu0 %v988
      %v1038 = vpop.f32.mrb[0].mxu0
      %v1039 = vadd.f32 0.0, %v1038
      %v1040 = vpop.f32.mrb[0].mxu0
      %v1041 = vpop.f32.mrb[0].mxu0
      %v1042 = vadd.f32 0.0, %v1041
      %v1043 = vpop.f32.mrb[0].mxu0
      %1044 = vmatprep.mubr.bf16.mxu0 0
      %1045 = vmatmul.mubr.bf16.gmra.mrb[0].mxu0 %v991
      %v1046 = vpop.f32.mrb[0].mxu0
      %v1047 = vadd.f32 0.0, %v1046
      %v1048 = vpop.f32.mrb[0].mxu0
      %v1049 = vpop.f32.mrb[0].mxu0
      %v1050 = vadd.f32 0.0, %v1049
      %v1051 = vpop.f32.mrb[0].mxu0
      %1052 = vmatprep.mubr.bf16.mxu0 0
      %1053 = vmatmul.mubr.bf16.gmra.mrb[0].mxu0 %v994
      %v1054 = vpop.f32.mrb[0].mxu0
      %v1055 = vadd.f32 0.0, %v1054
      %v1056 = vpop.f32.mrb[0].mxu0
      %v1057 = vpop.f32.mrb[0].mxu0
      %v1058 = vadd.f32 0.0, %v1057
      %v1059 = vpop.f32.mrb[0].mxu0
      %1060 = vdwg.mxu0
      %v1061 = vld [vmem:[#allocation3] sm:$0xff]
      %v1062 = vld [vmem:[#allocation3 + $0x8] sm:$0xff]
      %v1063 = vld [vmem:[#allocation3 + $0x10] sm:$0xff]
      %v1064 = vld [vmem:[#allocation3 + $0x18] sm:$0xff]
      %v1065 = vld [vmem:[#allocation3 + $0x20] sm:$0xff]
      %v1066 = vld [vmem:[#allocation3 + $0x28] sm:$0xff]
      %v1067 = vld [vmem:[#allocation3 + $0x30] sm:$0xff]
      %v1068 = vld [vmem:[#allocation3 + $0x38] sm:$0xff]
      %v1069 = vadd.f32 %v1061, %v1031
      %v1070 = vadd.f32 %v1062, %v1034
      %v1071 = vadd.f32 %v1063, %v1039
      %v1072 = vadd.f32 %v1064, %v1042
      %v1073 = vadd.f32 %v1065, %v1047
      %v1074 = vadd.f32 %v1066, %v1050
      %v1075 = vadd.f32 %v1067, %v1055
      %v1076 = vadd.f32 %v1068, %v1058
      %1077 = vst.msk [vmem:[#allocation3] sm:$0xff] %vm766, %v1069
      %1078 = vst.msk [vmem:[#allocation3 + $0x8] sm:$0xff] %vm766, %v1070
      %1079 = vst.msk [vmem:[#allocation3 + $0x10] sm:$0xff] %vm766, %v1071
      %1080 = vst.msk [vmem:[#allocation3 + $0x18] sm:$0xff] %vm766, %v1072
      %1081 = vst.msk [vmem:[#allocation3 + $0x20] sm:$0xff] %vm766, %v1073
      %1082 = vst.msk [vmem:[#allocation3 + $0x28] sm:$0xff] %vm766, %v1074
      %1083 = vst.msk [vmem:[#allocation3 + $0x30] sm:$0xff] %vm766, %v1075
      %1084 = vst.msk [vmem:[#allocation3 + $0x38] sm:$0xff] %vm766, %v1076
      %v1085 = vld [vmem:[#allocation3] sm:$0xff]
      %v1086 = vld [vmem:[#allocation3 + $0x8] sm:$0xff]
      %v1087 = vld [vmem:[#allocation3 + $0x10] sm:$0xff]
      %v1088 = vld [vmem:[#allocation3 + $0x18] sm:$0xff]
      %v1089 = vld [vmem:[#allocation3 + $0x20] sm:$0xff]
      %v1090 = vld [vmem:[#allocation3 + $0x28] sm:$0xff]
      %v1091 = vld [vmem:[#allocation3 + $0x30] sm:$0xff]
      %v1092 = vld [vmem:[#allocation3 + $0x38] sm:$0xff]
      %v1093 = vld [vmem:[%s3] sm:$0x1]
      %v1095 = vlaneseq
      %v1096 = vshrl.u32 %v1095, 7
      %v1097 = vsub.s32 0, %v1096
      %v1098 = vrot.slane %v1093, %v1097
      %v1100 = vadd.f32 %v1085, %v1098
      %v1101 = vadd.f32 %v1086, %v1098
      %v1102 = vadd.f32 %v1087, %v1098
      %v1103 = vadd.f32 %v1088, %v1098
      %v1104 = vadd.f32 %v1089, %v1098
      %v1105 = vadd.f32 %v1090, %v1098
      %v1106 = vadd.f32 %v1091, %v1098
      %v1107 = vadd.f32 %v1092, %v1098
      %v1108 = vmax.f32 %v1100, 0.0
      %v1109 = vmax.f32 %v1101, 0.0
      %v1110 = vmax.f32 %v1102, 0.0
      %v1111 = vmax.f32 %v1103, 0.0
      %v1112 = vmax.f32 %v1104, 0.0
      %v1113 = vmax.f32 %v1105, 0.0
      %v1114 = vmax.f32 %v1106, 0.0
      %v1115 = vmax.f32 %v1107, 0.0
      %v1116 = vmax.f32 %v1108, %v1109
      %v1117 = vmax.f32 %v1110, %v1111
      %v1118 = vmax.f32 %v1112, %v1113
      %v1119 = vmax.f32 %v1114, %v1115
      %1120 = vst.msk [vmem:[#allocation3] sm:$0xff] %vm766, %v1116
      %1121 = vst.msk [vmem:[#allocation3 + $0x8] sm:$0xff] %vm766, %v1117
      %1122 = vst.msk [vmem:[#allocation3 + $0x10] sm:$0xff] %vm766, %v1118
      %1123 = vst.msk [vmem:[#allocation3 + $0x18] sm:$0xff] %vm766, %v1119
      %v1124 = vld [vmem:[#allocation3] ss:$2 sm:$0xff]
      %s1125 = scalar_lea.vmem [#allocation3], 16
      %v1126 = vld [vmem:[%s1125] ss:$2 sm:$0xff]
      %s1127 = scalar_lea.vmem [#allocation3], 1
      %v1128 = vld [vmem:[%s1127] ss:$2 sm:$0xff]
      %s1129 = scalar_lea.vmem [#allocation3], 17
      %v1130 = vld [vmem:[%s1129] ss:$2 sm:$0xff]
      %v1131 = vmax.f32 %v1124, %v1128
      %v1132 = vmax.f32 %v1126, %v1130
      %v1133 = vpack.c.bf16 %v1132, %v1131
      %v1135 = vunpack.c.l.b16 %v1133
      %v1136 = vunpack.c.h.b16 %v1133
      %v1137 = vpack.c.b16 %v1135, %v1135
      %v1138 = vpack.c.b16 %v1136, %v1136
      %vm1141 = vcmask 257024
      %1142 = vst.msk [vmem:[%s284] sm:$0xf] %vm1141, %v1137
      %1143 = vst.msk [vmem:[%s284 + $0x4] sm:$0xf] %vm1141, %v1138
      %p1144 = scmp.lt.s32.totalorder %s19, 1
      %s1145 = scalar_select %p1144, %s19, 1
      %p1146 = scmp.lt.s32.totalorder %s20, 0
      %s1147 = scalar_select %p1146, %s20, 0
      %s1148 = smul.addr %s1147, 2
      %s1149 = smul.addr %s1145, 2
      %s1150 = sadd.s32 %s1148, %s1149
      %s1151 = smul.addr %s1150, 4
      %s1152 = scalar_lea.vmem %s4, %s1151
      // Predicated region
      $region37: #{edge_detection_encoder.7} parent=35 // pred_check
        %p1153 = pneg %p147
      $region38: #{edge_detection_encoder.7} parent=35 // pred_check_branch
        %1155 = sbr.rel (%p1153) target = $region40
      $region39: #{edge_detection_encoder.7} parent=35 // pred_region
        _
      $region40: #{edge_detection_encoder.7} parent=35 // pred_fallthru
        _
    $region36: #{edge_detection_encoder.7} parent=5 // pred_fallthru
      _
    %p1156 = scmp.le.s32.totalorder 2, %s10
    // Predicated region
    $region41: #{edge_detection_encoder.7} parent=5 // pred_check
      %p1157 = pneg %p1156
    $region42: #{edge_detection_encoder.7} parent=5 // pred_check_branch
      %1159 = sbr.rel (%p1157) target = $region44
    $region43: #{edge_detection_encoder.7} parent=5 // pred_region
      %s1160 = ssub.s32 %s10, 2
      // Predicated region
      $region45: #{edge_detection_encoder.7} parent=43 // pred_check
        %p1161 = pneg %p153
      $region46: #{edge_detection_encoder.7} parent=43 // pred_check_branch
        %1163 = sbr.rel (%p1161) target = $region48
      $region47: #{edge_detection_encoder.7} parent=43 // pred_region
        %p1164 = scmp.lt.s32.totalorder %s21, 1
        %s1165 = scalar_select %p1164, %s21, 1
        %p1166 = scmp.lt.s32.totalorder %s22, 0
        %s1167 = scalar_select %p1166, %s22, 0
        %s1168 = smul.addr %s1167, 2
        %s1169 = smul.addr %s1165, 2
        %s1170 = sadd.s32 %s1168, %s1169
        %s1171 = smul.addr %s1170, 4
        %s1172 = scalar_lea.vmem %s4, %s1171
      $region48: #{edge_detection_encoder.7} parent=43 // pred_fallthru
        _
    $region44: #{edge_detection_encoder.7} parent=5 // pred_fallthru
      _
  $region6: #{edge_detection_encoder.7} parent=0 // loop_footer
    %s14 = sadd.s32 1, %s10
  $region7: #{edge_detection_encoder.7} parent=0 // loop_footer_branch
    %9 = sbr.rel target = $region3
  $region8: #{edge_detection_encoder.7} parent=0 // loop_exit
    _

// kernel: edge_detection_encoder.8
$region0: #{edge_detection_encoder.8}
  #allocation0 [shape = 'u32[]', space=smem, size = 0x4, offset = 0x4, fixed_abs, tag = 'smem constant byte address 0x4 - core index']
  #allocation1 [shape = 'u32[144,128]{1,0:T(1,128)}', space=vmem, size = 0x12000, scoped, tag = 'internal scratch']
  #allocation2 [shape = 'bf16[10,8,96]{2,1,0:T(8,128)(2,1)}', space=vmem, size = 0x5000, scoped, tag = 'scratch operand']
  #allocation3 [shape = 'f32[64,64]{1,0:T(8,128)}', space=vmem, size = 0x8000, scoped, tag = 'scratch operand']
  %s0 = inlined_call_operand.vmem [shape: bf16[2,16,16,32], index: 0, kind: input, shape index: {}, may-alias: {0,1}]
  %s1 = inlined_call_operand.vmem [shape: bf16[2,16,16,32], index: 1, kind: input, shape index: {}, may-alias: {0,1}]
  %s2 = inlined_call_operand.vmem [shape: bf16[3,96,64], index: 2, kind: input, shape index: {}]
  %s3 = inlined_call_operand.vmem [shape: f32[1,64], index: 3, kind: input, shape index: {}]
  %s4 = inlined_call_operand.vmem [shape: bf16[2,1,16,64], index: 4, kind: output, shape index: {}]
  %s5 = sld [smem:[#allocation0]]
  $region49: #{edge_detection_encoder.8} parent=0
    _
  %s7 = ssub.s32 1, %s5
  %s8 = scalar_select 0, %s7, %s5
  loop: start=0, step=1, limit=4
  $region2: #{edge_detection_encoder.8} parent=0 // loop_pre_header
    _
  $region3: #{edge_detection_encoder.8} parent=0 // loop_header
    %s10 = sphi 0, %s14
    %p11 = scmp.ge.s32.totalorder %s10, 4
    %s17 = sphi 0, %s29
    %s18 = sphi 0, %s25
    %s19 = sphi 0, %s17
    %s20 = sphi 0, %s18
    %s21 = sphi 0, %s19
    %s22 = sphi 0, %s20
    %s34 = sphi 0, %s36
    %s37 = sphi 0, %s34
    %s38 = sphi 0, %s37
    %s54 = sphi 0, %s38
    %s64 = sphi 0, %s66
    %s67 = sphi 0, %s64
    %s68 = sphi 0, %s67
    %s84 = sphi 0, %s68
    %s88 = sphi 0, %s88
    %s90 = sphi 0, %s88
    %s91 = sphi 0, %s90
    %s105 = sphi 0, %s91
    %s109 = sphi 0, %s109
    %s111 = sphi 0, %s109
    %s112 = sphi 0, %s111
    %s126 = sphi 0, %s112
    %s134 = sphi 0, %s136
    %s137 = sphi 0, %s134
    %s138 = sphi 0, %s137
    %s154 = sphi 0, %s138
  $region4: #{edge_detection_encoder.8} parent=0 // loop_header_branch
    %13 = sbr.rel (%p11) target = $region8
  $region5: #{edge_detection_encoder.8} parent=0 // loop_body
    %s15 = ssub.s32 %s10, 1
    %s16 = ssub.s32 %s10, 2
    %s23 = sadd.s32 1, %s18
    %p24 = scmp.ge.s32.totalorder %s23, 1
    %s25 = scalar_select %p24, 0, %s23
    %s26 = sadd.s32 1, %s17
    %s27 = scalar_select %p24, %s26, %s17
    %p28 = scmp.ge.s32.totalorder %s27, 2
    %s29 = scalar_select %p28, 0, %s27
    %s30 = ssub.s32 %s17, %s29
    %s31 = ssub.s32 %s18, %s25
    %s32 = sor.u32 %s30, %s31
    %p33 = scmp.eq.s32.totalorder %s32, 0
    %s35 = sadd.s32 %s34, 1
    %s36 = scalar_select %p33, %s34, %s35
    %p39 = pneg %p33
    %p40 = scmp.eq.s32.totalorder %s10, 1
    %p41 = por %p39, %p40
    %p42 = scmp.ne.s32.totalorder %s34, %s37
    %p43 = scmp.eq.s32.totalorder %s10, 0
    %p44 = por %p42, %p43
    %p45 = scmp.ne.s32.totalorder %s34, %s37
    %p46 = scmp.eq.s32.totalorder %s15, 1
    %p47 = por %p45, %p46
    %p48 = scmp.ne.s32.totalorder %s37, %s38
    %p49 = scmp.eq.s32.totalorder %s15, 0
    %p50 = por %p48, %p49
    %p51 = scmp.ne.s32.totalorder %s37, %s38
    %p52 = scmp.eq.s32.totalorder %s16, 1
    %p53 = por %p51, %p52
    %p55 = scmp.ne.s32.totalorder %s38, %s54
    %p56 = scmp.eq.s32.totalorder %s16, 0
    %p57 = por %p55, %p56
    %s58 = sadd.s32 %s18, 1
    %s59 = sadd.s32 %s25, 1
    %s60 = ssub.s32 %s17, %s29
    %s61 = ssub.s32 %s58, %s59
    %s62 = sor.u32 %s60, %s61
    %p63 = scmp.eq.s32.totalorder %s62, 0
    %s65 = sadd.s32 %s64, 1
    %s66 = scalar_select %p63, %s64, %s65
    %p69 = pneg %p63
    %p70 = scmp.eq.s32.totalorder %s10, 1
    %p71 = por %p69, %p70
    %p72 = scmp.ne.s32.totalorder %s64, %s67
    %p73 = scmp.eq.s32.totalorder %s10, 0
    %p74 = por %p72, %p73
    %p75 = scmp.ne.s32.totalorder %s64, %s67
    %p76 = scmp.eq.s32.totalorder %s15, 1
    %p77 = por %p75, %p76
    %p78 = scmp.ne.s32.totalorder %s67, %s68
    %p79 = scmp.eq.s32.totalorder %s15, 0
    %p80 = por %p78, %p79
    %p81 = scmp.ne.s32.totalorder %s67, %s68
    %p82 = scmp.eq.s32.totalorder %s16, 1
    %p83 = por %p81, %p82
    %p85 = scmp.ne.s32.totalorder %s68, %s84
    %p86 = scmp.eq.s32.totalorder %s16, 0
    %p87 = por %p85, %p86
    %s89 = sadd.s32 %s88, 1
    %p92 = scmp.eq.s32.totalorder %s10, 1
    %p93 = scmp.ne.s32.totalorder %s88, %s90
    %p94 = scmp.eq.s32.totalorder %s10, 0
    %p95 = por %p93, %p94
    %p96 = scmp.ne.s32.totalorder %s88, %s90
    %p97 = scmp.eq.s32.totalorder %s15, 1
    %p98 = por %p96, %p97
    %p99 = scmp.ne.s32.totalorder %s90, %s91
    %p100 = scmp.eq.s32.totalorder %s15, 0
    %p101 = por %p99, %p100
    %p102 = scmp.ne.s32.totalorder %s90, %s91
    %p103 = scmp.eq.s32.totalorder %s16, 1
    %p104 = por %p102, %p103
    %p106 = scmp.ne.s32.totalorder %s91, %s105
    %p107 = scmp.eq.s32.totalorder %s16, 0
    %p108 = por %p106, %p107
    %s110 = sadd.s32 %s109, 1
    %p113 = scmp.eq.s32.totalorder %s10, 1
    %p114 = scmp.ne.s32.totalorder %s109, %s111
    %p115 = scmp.eq.s32.totalorder %s10, 0
    %p116 = por %p114, %p115
    %p117 = scmp.ne.s32.totalorder %s109, %s111
    %p118 = scmp.eq.s32.totalorder %s15, 1
    %p119 = por %p117, %p118
    %p120 = scmp.ne.s32.totalorder %s111, %s112
    %p121 = scmp.eq.s32.totalorder %s15, 0
    %p122 = por %p120, %p121
    %p123 = scmp.ne.s32.totalorder %s111, %s112
    %p124 = scmp.eq.s32.totalorder %s16, 1
    %p125 = por %p123, %p124
    %p127 = scmp.ne.s32.totalorder %s112, %s126
    %p128 = scmp.eq.s32.totalorder %s16, 0
    %p129 = por %p127, %p128
    %s130 = ssub.s32 %s17, %s29
    %s131 = ssub.s32 %s18, %s25
    %s132 = sor.u32 %s130, %s131
    %p133 = scmp.eq.s32.totalorder %s132, 0
    %s135 = sadd.s32 %s134, 1
    %s136 = scalar_select %p133, %s134, %s135
    %p139 = pneg %p133
    %p140 = scmp.eq.s32.totalorder %s10, 1
    %p141 = por %p139, %p140
    %p142 = scmp.ne.s32.totalorder %s134, %s137
    %p143 = scmp.eq.s32.totalorder %s10, 0
    %p144 = por %p142, %p143
    %p145 = scmp.ne.s32.totalorder %s134, %s137
    %p146 = scmp.eq.s32.totalorder %s15, 1
    %p147 = por %p145, %p146
    %p148 = scmp.ne.s32.totalorder %s137, %s138
    %p149 = scmp.eq.s32.totalorder %s15, 0
    %p150 = por %p148, %p149
    %p151 = scmp.ne.s32.totalorder %s137, %s138
    %p152 = scmp.eq.s32.totalorder %s16, 1
    %p153 = por %p151, %p152
    %p155 = scmp.ne.s32.totalorder %s138, %s154
    %p156 = scmp.eq.s32.totalorder %s16, 0
    %p157 = por %p155, %p156
    %p158 = scmp.le.s32.totalorder 1, %s10
    %p159 = scmp.lt.s32.totalorder %s10, 3
    %p160 = pnand %p158, %p159
    %p161 = pneg %p160
    // Predicated region
    $region9: #{edge_detection_encoder.8} parent=5 // pred_check
      _
    $region10: #{edge_detection_encoder.8} parent=5 // pred_check_branch
      %163 = sbr.rel (%p160) target = $region12
    $region11: #{edge_detection_encoder.8} parent=5 // pred_region
      %s164 = ssub.s32 %s10, 1
      // Predicated region
      $region13: #{edge_detection_encoder.8} parent=11 // pred_check
        %p165 = pneg %p101
      $region14: #{edge_detection_encoder.8} parent=11 // pred_check_branch
        %167 = sbr.rel (%p165) target = $region16
      $region15: #{edge_detection_encoder.8} parent=11 // pred_region
        _
      $region16: #{edge_detection_encoder.8} parent=11 // pred_fallthru
        _
      // Predicated region
      $region17: #{edge_detection_encoder.8} parent=11 // pred_check
        %p168 = pneg %p122
      $region18: #{edge_detection_encoder.8} parent=11 // pred_check_branch
        %170 = sbr.rel (%p168) target = $region20
      $region19: #{edge_detection_encoder.8} parent=11 // pred_region
        _
      $region20: #{edge_detection_encoder.8} parent=11 // pred_fallthru
        _
    $region12: #{edge_detection_encoder.8} parent=5 // pred_fallthru
      _
    %p171 = scmp.lt.s32.totalorder %s10, 2
    // Predicated region
    $region21: #{edge_detection_encoder.8} parent=5 // pred_check
      %p172 = pneg %p171
    $region22: #{edge_detection_encoder.8} parent=5 // pred_check_branch
      %174 = sbr.rel (%p172) target = $region24
    $region23: #{edge_detection_encoder.8} parent=5 // pred_region
      // Predicated region
      $region25: #{edge_detection_encoder.8} parent=23 // pred_check
        %p175 = pneg %p44
      $region26: #{edge_detection_encoder.8} parent=23 // pred_check_branch
        %177 = sbr.rel (%p175) target = $region28
      $region27: #{edge_detection_encoder.8} parent=23 // pred_region
        %s178 = smul.u32 8, %s18
        %p179 = scmp.lt.s32.totalorder %s17, 1
        %s180 = scalar_select %p179, %s17, 1
        %p181 = scmp.lt.s32.totalorder %s178, 15
        %s182 = scalar_select %p181, %s178, 15
        %s183 = smul.addr %s182, 2
        %s184 = smul.addr %s180, 32
        %s185 = sadd.s32 %s183, %s184
        %s186 = smul.addr %s185, 4
        %s187 = scalar_lea.vmem %s0, %s186
        %s188 = smul.u32 8, %s18
      $region28: #{edge_detection_encoder.8} parent=23 // pred_fallthru
        _
      // Predicated region
      $region29: #{edge_detection_encoder.8} parent=23 // pred_check
        %p189 = pneg %p74
      $region30: #{edge_detection_encoder.8} parent=23 // pred_check_branch
        %191 = sbr.rel (%p189) target = $region32
      $region31: #{edge_detection_encoder.8} parent=23 // pred_region
        %s192 = sadd.s32 %s18, 1
        %s193 = smul.u32 8, %s192
        %p194 = scmp.lt.s32.totalorder %s17, 1
        %s195 = scalar_select %p194, %s17, 1
        %p196 = scmp.lt.s32.totalorder %s193, 15
        %s197 = scalar_select %p196, %s193, 15
        %s198 = smul.addr %s197, 2
        %s199 = smul.addr %s195, 32
        %s200 = sadd.s32 %s198, %s199
        %s201 = smul.addr %s200, 4
        %s202 = scalar_lea.vmem %s1, %s201
        %s203 = sadd.s32 %s18, 1
        %s204 = smul.u32 8, %s203
      $region32: #{edge_detection_encoder.8} parent=23 // pred_fallthru
        _
    $region24: #{edge_detection_encoder.8} parent=5 // pred_fallthru
      _
    %p205 = scmp.le.s32.totalorder 1, %s10
    %p206 = scmp.lt.s32.totalorder %s10, 3
    %p207 = pnand %p205, %p206
    %p208 = pneg %p207
    // Predicated region
    $region33: #{edge_detection_encoder.8} parent=5 // pred_check
      _
    $region34: #{edge_detection_encoder.8} parent=5 // pred_check_branch
      %210 = sbr.rel (%p207) target = $region36
    $region35: #{edge_detection_encoder.8} parent=5 // pred_region
      %s211 = ssub.s32 %s10, 1
      %s212 = smul.u32 8, %s20
      %p213 = scmp.lt.s32.totalorder %s19, 1
      %s214 = scalar_select %p213, %s19, 1
      %p215 = scmp.lt.s32.totalorder %s212, 15
      %s216 = scalar_select %p215, %s212, 15
      %s217 = smul.addr %s216, 2
      %s218 = smul.addr %s214, 32
      %s219 = sadd.s32 %s217, %s218
      %s220 = smul.addr %s219, 4
      %s221 = scalar_lea.vmem %s0, %s220
      %p222 = pneg %p50
      %p223 = pneg %p47
      %s224 = sadd.s32 %s20, 1
      %s225 = smul.u32 8, %s224
      %p226 = scmp.lt.s32.totalorder %s19, 1
      %s227 = scalar_select %p226, %s19, 1
      %p228 = scmp.lt.s32.totalorder %s225, 15
      %s229 = scalar_select %p228, %s225, 15
      %s230 = smul.addr %s229, 2
      %s231 = smul.addr %s227, 32
      %s232 = sadd.s32 %s230, %s231
      %s233 = smul.addr %s232, 4
      %s234 = scalar_lea.vmem %s1, %s233
      %p235 = pneg %p80
      %p236 = pneg %p77
      %p237 = pneg %p101
      %p238 = pneg %p98
      %p239 = pneg %p122
      %p240 = pneg %p119
      %p241 = pneg %p150
      %p242 = pneg %p147
      %p243 = scmp.lt.s32.totalorder %s19, 1
      %s244 = scalar_select %p243, %s19, 1
      %p245 = scmp.lt.s32.totalorder %s20, 0
      %s246 = scalar_select %p245, %s20, 0
      %s247 = smul.addr %s246, 2
      %s248 = smul.addr %s244, 2
      %s249 = sadd.s32 %s247, %s248
      %s250 = smul.addr %s249, 4
      %s251 = scalar_lea.vmem %s4, %s250
      %s252 = smul.u32 8, %s20
      %p253 = scmp.lt.s32.totalorder %s19, 1
      %s254 = scalar_select %p253, %s19, 1
      %p255 = scmp.lt.s32.totalorder %s252, 15
      %s256 = scalar_select %p255, %s252, 15
      %s257 = smul.addr %s256, 2
      %s258 = smul.addr %s254, 32
      %s259 = sadd.s32 %s257, %s258
      %s260 = smul.addr %s259, 4
      %s261 = scalar_lea.vmem %s0, %s260
      %s262 = smul.u32 8, %s20
      %s263 = sadd.s32 %s20, 1
      %s264 = smul.u32 8, %s263
      %p265 = scmp.lt.s32.totalorder %s19, 1
      %s266 = scalar_select %p265, %s19, 1
      %p267 = scmp.lt.s32.totalorder %s264, 15
      %s268 = scalar_select %p267, %s264, 15
      %s269 = smul.addr %s268, 2
      %s270 = smul.addr %s266, 32
      %s271 = sadd.s32 %s269, %s270
      %s272 = smul.addr %s271, 4
      %s273 = scalar_lea.vmem %s1, %s272
      %s274 = sadd.s32 %s20, 1
      %s275 = smul.u32 8, %s274
      %p276 = scmp.lt.s32.totalorder %s19, 1
      %s277 = scalar_select %p276, %s19, 1
      %p278 = scmp.lt.s32.totalorder %s20, 0
      %s279 = scalar_select %p278, %s20, 0
      %s280 = smul.addr %s279, 2
      %s281 = smul.addr %s277, 2
      %s282 = sadd.s32 %s280, %s281
      %s283 = smul.addr %s282, 4
      %s284 = scalar_lea.vmem %s4, %s283
      %v286 = vld [vmem:[%s261] sm:$0xf]
      %v287 = vld [vmem:[%s261 + $0x8] sm:$0xf]
      %v288 = vld [vmem:[%s261 + $0x10] sm:$0xf]
      %v289 = vld [vmem:[%s261 + $0x18] sm:$0xf]
      %v290 = vld [vmem:[%s261 + $0x20] sm:$0xf]
      %v291 = vld [vmem:[%s261 + $0x28] sm:$0xf]
      %v292 = vld [vmem:[%s261 + $0x30] sm:$0xf]
      %v293 = vld [vmem:[%s261 + $0x38] sm:$0xf]
      %vm294 = vcmask 257024
      %295 = vst.msk [vmem:[#allocation2] sm:$0xf] %vm294, %v286
      %296 = vst.msk [vmem:[#allocation2 + $0x4] sm:$0xf] %vm294, %v287
      %297 = vst.msk [vmem:[#allocation2 + $0x8] sm:$0xf] %vm294, %v288
      %298 = vst.msk [vmem:[#allocation2 + $0xc] sm:$0xf] %vm294, %v289
      %299 = vst.msk [vmem:[#allocation2 + $0x10] sm:$0xf] %vm294, %v290
      %300 = vst.msk [vmem:[#allocation2 + $0x14] sm:$0xf] %vm294, %v291
      %301 = vst.msk [vmem:[#allocation2 + $0x18] sm:$0xf] %vm294, %v292
      %302 = vst.msk [vmem:[#allocation2 + $0x1c] sm:$0xf] %vm294, %v293
      %v303 = vld [vmem:[%s273] sm:$0xf]
      %v304 = vld [vmem:[%s273 + $0x8] sm:$0xf]
      %s305 = scalar_lea.vmem [#allocation2], 32
      %306 = vst.msk [vmem:[%s305] sm:$0xf] %vm294, %v303
      %307 = vst.msk [vmem:[%s305 + $0x4] sm:$0xf] %vm294, %v304
      %v308 = vld [vmem:[%s261] sm:$0xf]
      %v309 = vld [vmem:[%s261 + $0x4] sm:$0x1]
      %v310 = vld [vmem:[%s261 + $0x8] sm:$0xf]
      %v311 = vld [vmem:[%s261 + $0xc] sm:$0x1]
      %v312 = vld [vmem:[%s261 + $0x10] sm:$0xf]
      %v313 = vld [vmem:[%s261 + $0x14] sm:$0x1]
      %v314 = vld [vmem:[%s261 + $0x18] sm:$0xf]
      %v315 = vld [vmem:[%s261 + $0x1c] sm:$0x1]
      %v316 = vld [vmem:[%s261 + $0x20] sm:$0xf]
      %v317 = vld [vmem:[%s261 + $0x24] sm:$0x1]
      %v318 = vld [vmem:[%s261 + $0x28] sm:$0xf]
      %v319 = vld [vmem:[%s261 + $0x2c] sm:$0x1]
      %v320 = vld [vmem:[%s261 + $0x30] sm:$0xf]
      %v321 = vld [vmem:[%s261 + $0x34] sm:$0x1]
      %v322 = vld [vmem:[%s261 + $0x38] sm:$0xf]
      %v323 = vld [vmem:[%s261 + $0x3c] sm:$0x1]
      %vm324 = vsmask.f32 3328
      %vm325 = vsmask.f32 7440
      %vm326 = vmor %vm324, %vm325
      %v328 = vshrl.u32 %v308, 16
      %v330 = vrot.slane %v328, 4
      %v331 = vshll.u32 %v308, 16
      %v333 = vrot.slane %v331, 5
      %v334 = vor.u32 %v330, %v333
      %v335 = vrot.slane %v334, 4
      %v337 = vshll.u32 %v309, 16
      %v339 = vrot.slane %v337, 5
      %v340 = vsel %vm326, %v335, %v339
      %v342 = vshrl.u32 %v310, 16
      %v344 = vrot.slane %v342, 4
      %v345 = vshll.u32 %v310, 16
      %v347 = vrot.slane %v345, 5
      %v348 = vor.u32 %v344, %v347
      %v349 = vrot.slane %v348, 4
      %v351 = vshll.u32 %v311, 16
      %v353 = vrot.slane %v351, 5
      %v354 = vsel %vm326, %v349, %v353
      %v356 = vshrl.u32 %v312, 16
      %v358 = vrot.slane %v356, 4
      %v359 = vshll.u32 %v312, 16
      %v361 = vrot.slane %v359, 5
      %v362 = vor.u32 %v358, %v361
      %v363 = vrot.slane %v362, 4
      %v365 = vshll.u32 %v313, 16
      %v367 = vrot.slane %v365, 5
      %v368 = vsel %vm326, %v363, %v367
      %v370 = vshrl.u32 %v314, 16
      %v372 = vrot.slane %v370, 4
      %v373 = vshll.u32 %v314, 16
      %v375 = vrot.slane %v373, 5
      %v376 = vor.u32 %v372, %v375
      %v377 = vrot.slane %v376, 4
      %v379 = vshll.u32 %v315, 16
      %v381 = vrot.slane %v379, 5
      %v382 = vsel %vm326, %v377, %v381
      %v384 = vshrl.u32 %v316, 16
      %v386 = vrot.slane %v384, 4
      %v387 = vshll.u32 %v316, 16
      %v389 = vrot.slane %v387, 5
      %v390 = vor.u32 %v386, %v389
      %v391 = vrot.slane %v390, 4
      %v393 = vshll.u32 %v317, 16
      %v395 = vrot.slane %v393, 5
      %v396 = vsel %vm326, %v391, %v395
      %v398 = vshrl.u32 %v318, 16
      %v400 = vrot.slane %v398, 4
      %v401 = vshll.u32 %v318, 16
      %v403 = vrot.slane %v401, 5
      %v404 = vor.u32 %v400, %v403
      %v405 = vrot.slane %v404, 4
      %v407 = vshll.u32 %v319, 16
      %v409 = vrot.slane %v407, 5
      %v410 = vsel %vm326, %v405, %v409
      %v412 = vshrl.u32 %v320, 16
      %v414 = vrot.slane %v412, 4
      %v415 = vshll.u32 %v320, 16
      %v417 = vrot.slane %v415, 5
      %v418 = vor.u32 %v414, %v417
      %v419 = vrot.slane %v418, 4
      %v421 = vshll.u32 %v321, 16
      %v423 = vrot.slane %v421, 5
      %v424 = vsel %vm326, %v419, %v423
      %v426 = vshrl.u32 %v322, 16
      %v428 = vrot.slane %v426, 4
      %v429 = vshll.u32 %v322, 16
      %v431 = vrot.slane %v429, 5
      %v432 = vor.u32 %v428, %v431
      %v433 = vrot.slane %v432, 4
      %v435 = vshll.u32 %v323, 16
      %v437 = vrot.slane %v435, 5
      %v438 = vsel %vm326, %v433, %v437
      %439 = vrot.lane.b32.xlu0 %v340, 32
      %v440 = vpop.permute.xlu0 %439
      %441 = vrot.lane.b32.xlu0 %v354, 32
      %v442 = vpop.permute.xlu0 %441
      %443 = vrot.lane.b32.xlu0 %v368, 32
      %v444 = vpop.permute.xlu0 %443
      %445 = vrot.lane.b32.xlu0 %v382, 32
      %v446 = vpop.permute.xlu0 %445
      %447 = vrot.lane.b32.xlu0 %v396, 32
      %v448 = vpop.permute.xlu0 %447
      %449 = vrot.lane.b32.xlu0 %v410, 32
      %v450 = vpop.permute.xlu0 %449
      %451 = vrot.lane.b32.xlu0 %v424, 32
      %v452 = vpop.permute.xlu0 %451
      %453 = vrot.lane.b32.xlu0 %v438, 32
      %v454 = vpop.permute.xlu0 %453
      %vm463 = vcmask 519424
      %464 = vst.msk [vmem:[#allocation2] sm:$0xf] %vm463, %v440
      %465 = vst.msk [vmem:[#allocation2 + $0x4] sm:$0xf] %vm463, %v442
      %466 = vst.msk [vmem:[#allocation2 + $0x8] sm:$0xf] %vm463, %v444
      %467 = vst.msk [vmem:[#allocation2 + $0xc] sm:$0xf] %vm463, %v446
      %468 = vst.msk [vmem:[#allocation2 + $0x10] sm:$0xf] %vm463, %v448
      %469 = vst.msk [vmem:[#allocation2 + $0x14] sm:$0xf] %vm463, %v450
      %470 = vst.msk [vmem:[#allocation2 + $0x18] sm:$0xf] %vm463, %v452
      %471 = vst.msk [vmem:[#allocation2 + $0x1c] sm:$0xf] %vm463, %v454
      %v472 = vld [vmem:[%s273] sm:$0xf]
      %v473 = vld [vmem:[%s273 + $0x4] sm:$0x1]
      %v474 = vld [vmem:[%s273 + $0x8] sm:$0xf]
      %v475 = vld [vmem:[%s273 + $0xc] sm:$0x1]
      %v477 = vshrl.u32 %v472, 16
      %v479 = vrot.slane %v477, 4
      %v480 = vshll.u32 %v472, 16
      %v482 = vrot.slane %v480, 5
      %v483 = vor.u32 %v479, %v482
      %v484 = vrot.slane %v483, 4
      %v486 = vshll.u32 %v473, 16
      %v488 = vrot.slane %v486, 5
      %v489 = vsel %vm326, %v484, %v488
      %v491 = vshrl.u32 %v474, 16
      %v493 = vrot.slane %v491, 4
      %v494 = vshll.u32 %v474, 16
      %v496 = vrot.slane %v494, 5
      %v497 = vor.u32 %v493, %v496
      %v498 = vrot.slane %v497, 4
      %v500 = vshll.u32 %v475, 16
      %v502 = vrot.slane %v500, 5
      %v503 = vsel %vm326, %v498, %v502
      %504 = vrot.lane.b32.xlu0 %v489, 32
      %v505 = vpop.permute.xlu0 %504
      %506 = vrot.lane.b32.xlu0 %v503, 32
      %v507 = vpop.permute.xlu0 %506
      %510 = vst.msk [vmem:[%s305] sm:$0xf] %vm463, %v505
      %511 = vst.msk [vmem:[%s305 + $0x4] sm:$0xf] %vm463, %v507
      %v512 = vld [vmem:[%s261] sm:$0xe]
      %v513 = vld [vmem:[%s261 + $0x4] sm:$0x1]
      %v514 = vld [vmem:[%s261 + $0x8] sm:$0xe]
      %v515 = vld [vmem:[%s261 + $0xc] sm:$0x1]
      %v516 = vld [vmem:[%s261 + $0x10] sm:$0xe]
      %v517 = vld [vmem:[%s261 + $0x14] sm:$0x1]
      %v518 = vld [vmem:[%s261 + $0x18] sm:$0xe]
      %v519 = vld [vmem:[%s261 + $0x1c] sm:$0x1]
      %v520 = vld [vmem:[%s261 + $0x20] sm:$0xe]
      %v521 = vld [vmem:[%s261 + $0x24] sm:$0x1]
      %v522 = vld [vmem:[%s261 + $0x28] sm:$0xe]
      %v523 = vld [vmem:[%s261 + $0x2c] sm:$0x1]
      %v524 = vld [vmem:[%s261 + $0x30] sm:$0xe]
      %v525 = vld [vmem:[%s261 + $0x34] sm:$0x1]
      %v526 = vld [vmem:[%s261 + $0x38] sm:$0xe]
      %v527 = vld [vmem:[%s261 + $0x3c] sm:$0x1]
      %vm544 = vcmask 1042432
      %vm545 = vcmask 1046532
      %vm546 = vmor %vm544, %vm545
      %v547 = vrot.slane %v512, 5
      %v548 = vrot.slane %v547, 4
      %v549 = vrot.slane %v513, 5
      %v550 = vsel %vm546, %v548, %v549
      %v551 = vrot.slane %v514, 5
      %v552 = vrot.slane %v551, 4
      %v553 = vrot.slane %v515, 5
      %v554 = vsel %vm546, %v552, %v553
      %v555 = vrot.slane %v516, 5
      %v556 = vrot.slane %v555, 4
      %v557 = vrot.slane %v517, 5
      %v558 = vsel %vm546, %v556, %v557
      %v559 = vrot.slane %v518, 5
      %v560 = vrot.slane %v559, 4
      %v561 = vrot.slane %v519, 5
      %v562 = vsel %vm546, %v560, %v561
      %v563 = vrot.slane %v520, 5
      %v564 = vrot.slane %v563, 4
      %v565 = vrot.slane %v521, 5
      %v566 = vsel %vm546, %v564, %v565
      %v567 = vrot.slane %v522, 5
      %v568 = vrot.slane %v567, 4
      %v569 = vrot.slane %v523, 5
      %v570 = vsel %vm546, %v568, %v569
      %v571 = vrot.slane %v524, 5
      %v572 = vrot.slane %v571, 4
      %v573 = vrot.slane %v525, 5
      %v574 = vsel %vm546, %v572, %v573
      %v575 = vrot.slane %v526, 5
      %v576 = vrot.slane %v575, 4
      %v577 = vrot.slane %v527, 5
      %v578 = vsel %vm546, %v576, %v577
      %579 = vrot.lane.b32.xlu0 %v550, 64
      %v580 = vpop.permute.xlu0 %579
      %581 = vrot.lane.b32.xlu0 %v554, 64
      %v582 = vpop.permute.xlu0 %581
      %583 = vrot.lane.b32.xlu0 %v558, 64
      %v584 = vpop.permute.xlu0 %583
      %585 = vrot.lane.b32.xlu0 %v562, 64
      %v586 = vpop.permute.xlu0 %585
      %587 = vrot.lane.b32.xlu0 %v566, 64
      %v588 = vpop.permute.xlu0 %587
      %589 = vrot.lane.b32.xlu0 %v570, 64
      %v590 = vpop.permute.xlu0 %589
      %591 = vrot.lane.b32.xlu0 %v574, 64
      %v592 = vpop.permute.xlu0 %591
      %593 = vrot.lane.b32.xlu0 %v578, 64
      %v594 = vpop.permute.xlu0 %593
      %vm603 = vcmask 781824
      %604 = vst.msk [vmem:[#allocation2] sm:$0xf] %vm603, %v580
      %605 = vst.msk [vmem:[#allocation2 + $0x4] sm:$0xf] %vm603, %v582
      %606 = vst.msk [vmem:[#allocation2 + $0x8] sm:$0xf] %vm603, %v584
      %607 = vst.msk [vmem:[#allocation2 + $0xc] sm:$0xf] %vm603, %v586
      %608 = vst.msk [vmem:[#allocation2 + $0x10] sm:$0xf] %vm603, %v588
      %609 = vst.msk [vmem:[#allocation2 + $0x14] sm:$0xf] %vm603, %v590
      %610 = vst.msk [vmem:[#allocation2 + $0x18] sm:$0xf] %vm603, %v592
      %611 = vst.msk [vmem:[#allocation2 + $0x1c] sm:$0xf] %vm603, %v594
      %v612 = vld [vmem:[%s273] sm:$0xe]
      %v613 = vld [vmem:[%s273 + $0x4] sm:$0x1]
      %v614 = vld [vmem:[%s273 + $0x8] sm:$0xe]
      %v615 = vld [vmem:[%s273 + $0xc] sm:$0x1]
      %v620 = vrot.slane %v612, 5
      %v621 = vrot.slane %v620, 4
      %v622 = vrot.slane %v613, 5
      %v623 = vsel %vm546, %v621, %v622
      %v624 = vrot.slane %v614, 5
      %v625 = vrot.slane %v624, 4
      %v626 = vrot.slane %v615, 5
      %v627 = vsel %vm546, %v625, %v626
      %628 = vrot.lane.b32.xlu0 %v623, 64
      %v629 = vpop.permute.xlu0 %628
      %630 = vrot.lane.b32.xlu0 %v627, 64
      %v631 = vpop.permute.xlu0 %630
      %634 = vst.msk [vmem:[%s305] sm:$0xf] %vm603, %v629
      %635 = vst.msk [vmem:[%s305 + $0x4] sm:$0xf] %vm603, %v631
      %v636 = vld [vmem:[#allocation2] sm:$0xf]
      %v637 = vld [vmem:[#allocation2 + $0x4] sm:$0xf]
      %v638 = vld [vmem:[#allocation2 + $0x8] sm:$0xf]
      %v639 = vld [vmem:[#allocation2 + $0xc] sm:$0xf]
      %v640 = vld [vmem:[#allocation2 + $0x10] sm:$0xf]
      %v641 = vld [vmem:[#allocation2 + $0x14] sm:$0xf]
      %v642 = vld [vmem:[#allocation2 + $0x18] sm:$0xf]
      %v643 = vld [vmem:[#allocation2 + $0x1c] sm:$0xf]
      %v644 = vld [vmem:[%s2] sm:$0xf]
      %v645 = vld [vmem:[%s2 + $0x4] sm:$0xf]
      %v646 = vld [vmem:[%s2 + $0x8] sm:$0xf]
      %v647 = vld [vmem:[%s2 + $0xc] sm:$0xf]
      %v648 = vld [vmem:[%s2 + $0x10] sm:$0xf]
      %v649 = vld [vmem:[%s2 + $0x14] sm:$0xf]
      %v650 = vld [vmem:[%s2 + $0x18] sm:$0xf]
      %v651 = vld [vmem:[%s2 + $0x1c] sm:$0xf]
      %v652 = vld [vmem:[%s2 + $0x20] sm:$0xf]
      %v653 = vld [vmem:[%s2 + $0x24] sm:$0xf]
      %v654 = vld [vmem:[%s2 + $0x28] sm:$0xf]
      %v655 = vld [vmem:[%s2 + $0x2c] sm:$0xf]
      %v664 = vunpack.c.l.b16 %v636
      %v665 = vunpack.c.l.b16 %v637
      %v666 = vunpack.c.l.b16 %v638
      %v667 = vunpack.c.l.b16 %v639
      %v668 = vunpack.c.l.b16 %v640
      %v669 = vunpack.c.l.b16 %v641
      %v670 = vunpack.c.l.b16 %v642
      %v671 = vunpack.c.l.b16 %v643
      %v672 = vpack.c.b16 %v665, %v664
      %v673 = vpack.c.b16 %v667, %v666
      %v674 = vpack.c.b16 %v669, %v668
      %v675 = vpack.c.b16 %v671, %v670
      %v688 = vunpack.c.l.b16 %v644
      %v689 = vunpack.c.l.b16 %v645
      %v690 = vunpack.c.l.b16 %v646
      %v691 = vunpack.c.l.b16 %v647
      %v692 = vunpack.c.l.b16 %v648
      %v693 = vunpack.c.l.b16 %v649
      %v694 = vunpack.c.l.b16 %v650
      %v695 = vunpack.c.l.b16 %v651
      %v696 = vunpack.c.l.b16 %v652
      %v697 = vunpack.c.l.b16 %v653
      %v698 = vunpack.c.l.b16 %v654
      %v699 = vunpack.c.l.b16 %v655
      %v700 = vpack.c.b16 %v689, %v688
      %v701 = vpack.c.b16 %v691, %v690
      %v702 = vpack.c.b16 %v693, %v692
      %v703 = vpack.c.b16 %v695, %v694
      %v704 = vpack.c.b16 %v697, %v696
      %v705 = vpack.c.b16 %v699, %v698
      %vm712 = vcmask 785408
      %v714 = vsel %vm712, %v672, 0
      %v717 = vsel %vm712, %v673, 0
      %v720 = vsel %vm712, %v674, 0
      %v723 = vsel %vm712, %v675, 0
      %725 = vmatprep.subr.bf16.mxu0 0
      %726 = vmatpush1.bf16.msra.mxu0 %v700
      %727 = vmatprep.subr.bf16.mxu0 0
      %728 = vmatpush1.bf16.msra.mxu0 %v701
      %729 = vmatprep.subr.bf16.mxu0 0
      %730 = vmatpush1.bf16.msra.mxu0 %v702
      %731 = vmatprep.subr.bf16.mxu0 0
      %732 = vmatpush1.bf16.msra.mxu0 %v703
      %733 = vmatprep.subr.bf16.mxu0 0
      %734 = vmatpush1.bf16.msra.mxu0 %v704
      %735 = vmatprep.subr.bf16.mxu0 0
      %736 = vmatpush1.bf16.msra.mxu0 %v705
      %737 = vmatprep.subr.bf16.mxu0 0
      %738 = vmatpush1.bf16.msra.mxu0 0
      %739 = vmatprep.subr.bf16.mxu0 0
      %740 = vmatpush1.bf16.msra.mxu0 0
      %741 = vmatprep.subr.bf16.mxu0 0
      %742 = vmatpush1.bf16.msra.mxu0 0
      %743 = vmatprep.subr.bf16.mxu0 0
      %744 = vmatpush1.bf16.msra.mxu0 0
      %745 = vmatprep.subr.bf16.mxu0 0
      %746 = vmatpush1.bf16.msra.mxu0 0
      %747 = vmatprep.subr.bf16.mxu0 0
      %748 = vmatpush1.bf16.msra.mxu0 0
      %749 = vmatprep.subr.bf16.mxu0 0
      %750 = vmatpush1.bf16.msra.mxu0 0
      %751 = vmatprep.subr.bf16.mxu0 0
      %752 = vmatpush1.bf16.msra.mxu0 0
      %753 = vmatprep.subr.bf16.mxu0 0
      %754 = vmatpush1.bf16.msra.mxu0 0
      %755 = vmatprep.subr.bf16.mxu0 0
      %756 = vmatpush1.bf16.msra.mxu0 0
      %757 = vmatprep.mubr.bf16.mxu0 0
      %758 = vmatmul.mubr.bf16.gmra.mrb[0].mxu0 %v714
      %v759 = vpop.f32.mrb[0].mxu0
      %v760 = vadd.f32 0.0, %v759
      %v761 = vpop.f32.mrb[0].mxu0
      %v762 = vpop.f32.mrb[0].mxu0
      %v763 = vadd.f32 0.0, %v762
      %v764 = vpop.f32.mrb[0].mxu0
      %765 = vmatprep.mubr.bf16.mxu0 0
      %766 = vmatmul.mubr.bf16.gmra.mrb[0].mxu0 %v717
      %v767 = vpop.f32.mrb[0].mxu0
      %v768 = vadd.f32 0.0, %v767
      %v769 = vpop.f32.mrb[0].mxu0
      %v770 = vpop.f32.mrb[0].mxu0
      %v771 = vadd.f32 0.0, %v770
      %v772 = vpop.f32.mrb[0].mxu0
      %773 = vmatprep.mubr.bf16.mxu0 0
      %774 = vmatmul.mubr.bf16.gmra.mrb[0].mxu0 %v720
      %v775 = vpop.f32.mrb[0].mxu0
      %v776 = vadd.f32 0.0, %v775
      %v777 = vpop.f32.mrb[0].mxu0
      %v778 = vpop.f32.mrb[0].mxu0
      %v779 = vadd.f32 0.0, %v778
      %v780 = vpop.f32.mrb[0].mxu0
      %781 = vmatprep.mubr.bf16.mxu0 0
      %782 = vmatmul.mubr.bf16.gmra.mrb[0].mxu0 %v723
      %v783 = vpop.f32.mrb[0].mxu0
      %v784 = vadd.f32 0.0, %v783
      %v785 = vpop.f32.mrb[0].mxu0
      %v786 = vpop.f32.mrb[0].mxu0
      %v787 = vadd.f32 0.0, %v786
      %v788 = vpop.f32.mrb[0].mxu0
      %789 = vdwg.mxu0
      %vm790 = vcmask 523264
      %791 = vst.msk [vmem:[#allocation3] sm:$0xff] %vm790, %v760
      %792 = vst.msk [vmem:[#allocation3 + $0x8] sm:$0xff] %vm790, %v763
      %793 = vst.msk [vmem:[#allocation3 + $0x10] sm:$0xff] %vm790, %v768
      %794 = vst.msk [vmem:[#allocation3 + $0x18] sm:$0xff] %vm790, %v771
      %795 = vst.msk [vmem:[#allocation3 + $0x20] sm:$0xff] %vm790, %v776
      %796 = vst.msk [vmem:[#allocation3 + $0x28] sm:$0xff] %vm790, %v779
      %797 = vst.msk [vmem:[#allocation3 + $0x30] sm:$0xff] %vm790, %v784
      %798 = vst.msk [vmem:[#allocation3 + $0x38] sm:$0xff] %vm790, %v787
      %s799 = scalar_lea.vmem [#allocation2], 4
      %v800 = vld [vmem:[%s799] sm:$0xf]
      %v801 = vld [vmem:[%s799 + $0x4] sm:$0xf]
      %v802 = vld [vmem:[%s799 + $0x8] sm:$0xf]
      %v803 = vld [vmem:[%s799 + $0xc] sm:$0xf]
      %v804 = vld [vmem:[%s799 + $0x10] sm:$0xf]
      %v805 = vld [vmem:[%s799 + $0x14] sm:$0xf]
      %v806 = vld [vmem:[%s799 + $0x18] sm:$0xf]
      %v807 = vld [vmem:[%s799 + $0x1c] sm:$0xf]
      %s808 = scalar_lea.vmem %s2, 48
      %v809 = vld [vmem:[%s808] sm:$0xf]
      %v810 = vld [vmem:[%s808 + $0x4] sm:$0xf]
      %v811 = vld [vmem:[%s808 + $0x8] sm:$0xf]
      %v812 = vld [vmem:[%s808 + $0xc] sm:$0xf]
      %v813 = vld [vmem:[%s808 + $0x10] sm:$0xf]
      %v814 = vld [vmem:[%s808 + $0x14] sm:$0xf]
      %v815 = vld [vmem:[%s808 + $0x18] sm:$0xf]
      %v816 = vld [vmem:[%s808 + $0x1c] sm:$0xf]
      %v817 = vld [vmem:[%s808 + $0x20] sm:$0xf]
      %v818 = vld [vmem:[%s808 + $0x24] sm:$0xf]
      %v819 = vld [vmem:[%s808 + $0x28] sm:$0xf]
      %v820 = vld [vmem:[%s808 + $0x2c] sm:$0xf]
      %v829 = vunpack.c.l.b16 %v800
      %v830 = vunpack.c.l.b16 %v801
      %v831 = vunpack.c.l.b16 %v802
      %v832 = vunpack.c.l.b16 %v803
      %v833 = vunpack.c.l.b16 %v804
      %v834 = vunpack.c.l.b16 %v805
      %v835 = vunpack.c.l.b16 %v806
      %v836 = vunpack.c.l.b16 %v807
      %v837 = vpack.c.b16 %v830, %v829
      %v838 = vpack.c.b16 %v832, %v831
      %v839 = vpack.c.b16 %v834, %v833
      %v840 = vpack.c.b16 %v836, %v835
      %v853 = vunpack.c.l.b16 %v809
      %v854 = vunpack.c.l.b16 %v810
      %v855 = vunpack.c.l.b16 %v811
      %v856 = vunpack.c.l.b16 %v812
      %v857 = vunpack.c.l.b16 %v813
      %v858 = vunpack.c.l.b16 %v814
      %v859 = vunpack.c.l.b16 %v815
      %v860 = vunpack.c.l.b16 %v816
      %v861 = vunpack.c.l.b16 %v817
      %v862 = vunpack.c.l.b16 %v818
      %v863 = vunpack.c.l.b16 %v819
      %v864 = vunpack.c.l.b16 %v820
      %v865 = vpack.c.b16 %v854, %v853
      %v866 = vpack.c.b16 %v856, %v855
      %v867 = vpack.c.b16 %v858, %v857
      %v868 = vpack.c.b16 %v860, %v859
      %v869 = vpack.c.b16 %v862, %v861
      %v870 = vpack.c.b16 %v864, %v863
      %v878 = vsel %vm712, %v837, 0
      %v881 = vsel %vm712, %v838, 0
      %v884 = vsel %vm712, %v839, 0
      %v887 = vsel %vm712, %v840, 0
      %889 = vmatprep.subr.bf16.mxu0 0
      %890 = vmatpush1.bf16.msra.mxu0 %v865
      %891 = vmatprep.subr.bf16.mxu0 0
      %892 = vmatpush1.bf16.msra.mxu0 %v866
      %893 = vmatprep.subr.bf16.mxu0 0
      %894 = vmatpush1.bf16.msra.mxu0 %v867
      %895 = vmatprep.subr.bf16.mxu0 0
      %896 = vmatpush1.bf16.msra.mxu0 %v868
      %897 = vmatprep.subr.bf16.mxu0 0
      %898 = vmatpush1.bf16.msra.mxu0 %v869
      %899 = vmatprep.subr.bf16.mxu0 0
      %900 = vmatpush1.bf16.msra.mxu0 %v870
      %901 = vmatprep.subr.bf16.mxu0 0
      %902 = vmatpush1.bf16.msra.mxu0 0
      %903 = vmatprep.subr.bf16.mxu0 0
      %904 = vmatpush1.bf16.msra.mxu0 0
      %905 = vmatprep.subr.bf16.mxu0 0
      %906 = vmatpush1.bf16.msra.mxu0 0
      %907 = vmatprep.subr.bf16.mxu0 0
      %908 = vmatpush1.bf16.msra.mxu0 0
      %909 = vmatprep.subr.bf16.mxu0 0
      %910 = vmatpush1.bf16.msra.mxu0 0
      %911 = vmatprep.subr.bf16.mxu0 0
      %912 = vmatpush1.bf16.msra.mxu0 0
      %913 = vmatprep.subr.bf16.mxu0 0
      %914 = vmatpush1.bf16.msra.mxu0 0
      %915 = vmatprep.subr.bf16.mxu0 0
      %916 = vmatpush1.bf16.msra.mxu0 0
      %917 = vmatprep.subr.bf16.mxu0 0
      %918 = vmatpush1.bf16.msra.mxu0 0
      %919 = vmatprep.subr.bf16.mxu0 0
      %920 = vmatpush1.bf16.msra.mxu0 0
      %921 = vmatprep.mubr.bf16.mxu0 0
      %922 = vmatmul.mubr.bf16.gmra.mrb[0].mxu0 %v878
      %v923 = vpop.f32.mrb[0].mxu0
      %v924 = vadd.f32 0.0, %v923
      %v925 = vpop.f32.mrb[0].mxu0
      %v926 = vpop.f32.mrb[0].mxu0
      %v927 = vadd.f32 0.0, %v926
      %v928 = vpop.f32.mrb[0].mxu0
      %929 = vmatprep.mubr.bf16.mxu0 0
      %930 = vmatmul.mubr.bf16.gmra.mrb[0].mxu0 %v881
      %v931 = vpop.f32.mrb[0].mxu0
      %v932 = vadd.f32 0.0, %v931
      %v933 = vpop.f32.mrb[0].mxu0
      %v934 = vpop.f32.mrb[0].mxu0
      %v935 = vadd.f32 0.0, %v934
      %v936 = vpop.f32.mrb[0].mxu0
      %937 = vmatprep.mubr.bf16.mxu0 0
      %938 = vmatmul.mubr.bf16.gmra.mrb[0].mxu0 %v884
      %v939 = vpop.f32.mrb[0].mxu0
      %v940 = vadd.f32 0.0, %v939
      %v941 = vpop.f32.mrb[0].mxu0
      %v942 = vpop.f32.mrb[0].mxu0
      %v943 = vadd.f32 0.0, %v942
      %v944 = vpop.f32.mrb[0].mxu0
      %945 = vmatprep.mubr.bf16.mxu0 0
      %946 = vmatmul.mubr.bf16.gmra.mrb[0].mxu0 %v887
      %v947 = vpop.f32.mrb[0].mxu0
      %v948 = vadd.f32 0.0, %v947
      %v949 = vpop.f32.mrb[0].mxu0
      %v950 = vpop.f32.mrb[0].mxu0
      %v951 = vadd.f32 0.0, %v950
      %v952 = vpop.f32.mrb[0].mxu0
      %953 = vdwg.mxu0
      %v954 = vld [vmem:[#allocation3] sm:$0xff]
      %v955 = vld [vmem:[#allocation3 + $0x8] sm:$0xff]
      %v956 = vld [vmem:[#allocation3 + $0x10] sm:$0xff]
      %v957 = vld [vmem:[#allocation3 + $0x18] sm:$0xff]
      %v958 = vld [vmem:[#allocation3 + $0x20] sm:$0xff]
      %v959 = vld [vmem:[#allocation3 + $0x28] sm:$0xff]
      %v960 = vld [vmem:[#allocation3 + $0x30] sm:$0xff]
      %v961 = vld [vmem:[#allocation3 + $0x38] sm:$0xff]
      %v962 = vadd.f32 %v954, %v924
      %v963 = vadd.f32 %v955, %v927
      %v964 = vadd.f32 %v956, %v932
      %v965 = vadd.f32 %v957, %v935
      %v966 = vadd.f32 %v958, %v940
      %v967 = vadd.f32 %v959, %v943
      %v968 = vadd.f32 %v960, %v948
      %v969 = vadd.f32 %v961, %v951
      %970 = vst.msk [vmem:[#allocation3] sm:$0xff] %vm790, %v962
      %971 = vst.msk [vmem:[#allocation3 + $0x8] sm:$0xff] %vm790, %v963
      %972 = vst.msk [vmem:[#allocation3 + $0x10] sm:$0xff] %vm790, %v964
      %973 = vst.msk [vmem:[#allocation3 + $0x18] sm:$0xff] %vm790, %v965
      %974 = vst.msk [vmem:[#allocation3 + $0x20] sm:$0xff] %vm790, %v966
      %975 = vst.msk [vmem:[#allocation3 + $0x28] sm:$0xff] %vm790, %v967
      %976 = vst.msk [vmem:[#allocation3 + $0x30] sm:$0xff] %vm790, %v968
      %977 = vst.msk [vmem:[#allocation3 + $0x38] sm:$0xff] %vm790, %v969
      %s978 = scalar_lea.vmem [#allocation2], 8
      %v979 = vld [vmem:[%s978] sm:$0xf]
      %v980 = vld [vmem:[%s978 + $0x4] sm:$0xf]
      %v981 = vld [vmem:[%s978 + $0x8] sm:$0xf]
      %v982 = vld [vmem:[%s978 + $0xc] sm:$0xf]
      %v983 = vld [vmem:[%s978 + $0x10] sm:$0xf]
      %v984 = vld [vmem:[%s978 + $0x14] sm:$0xf]
      %v985 = vld [vmem:[%s978 + $0x18] sm:$0xf]
      %v986 = vld [vmem:[%s978 + $0x1c] sm:$0xf]
      %s987 = scalar_lea.vmem %s2, 96
      %v988 = vld [vmem:[%s987] sm:$0xf]
      %v989 = vld [vmem:[%s987 + $0x4] sm:$0xf]
      %v990 = vld [vmem:[%s987 + $0x8] sm:$0xf]
      %v991 = vld [vmem:[%s987 + $0xc] sm:$0xf]
      %v992 = vld [vmem:[%s987 + $0x10] sm:$0xf]
      %v993 = vld [vmem:[%s987 + $0x14] sm:$0xf]
      %v994 = vld [vmem:[%s987 + $0x18] sm:$0xf]
      %v995 = vld [vmem:[%s987 + $0x1c] sm:$0xf]
      %v996 = vld [vmem:[%s987 + $0x20] sm:$0xf]
      %v997 = vld [vmem:[%s987 + $0x24] sm:$0xf]
      %v998 = vld [vmem:[%s987 + $0x28] sm:$0xf]
      %v999 = vld [vmem:[%s987 + $0x2c] sm:$0xf]
      %v1008 = vunpack.c.l.b16 %v979
      %v1009 = vunpack.c.l.b16 %v980
      %v1010 = vunpack.c.l.b16 %v981
      %v1011 = vunpack.c.l.b16 %v982
      %v1012 = vunpack.c.l.b16 %v983
      %v1013 = vunpack.c.l.b16 %v984
      %v1014 = vunpack.c.l.b16 %v985
      %v1015 = vunpack.c.l.b16 %v986
      %v1016 = vpack.c.b16 %v1009, %v1008
      %v1017 = vpack.c.b16 %v1011, %v1010
      %v1018 = vpack.c.b16 %v1013, %v1012
      %v1019 = vpack.c.b16 %v1015, %v1014
      %v1032 = vunpack.c.l.b16 %v988
      %v1033 = vunpack.c.l.b16 %v989
      %v1034 = vunpack.c.l.b16 %v990
      %v1035 = vunpack.c.l.b16 %v991
      %v1036 = vunpack.c.l.b16 %v992
      %v1037 = vunpack.c.l.b16 %v993
      %v1038 = vunpack.c.l.b16 %v994
      %v1039 = vunpack.c.l.b16 %v995
      %v1040 = vunpack.c.l.b16 %v996
      %v1041 = vunpack.c.l.b16 %v997
      %v1042 = vunpack.c.l.b16 %v998
      %v1043 = vunpack.c.l.b16 %v999
      %v1044 = vpack.c.b16 %v1033, %v1032
      %v1045 = vpack.c.b16 %v1035, %v1034
      %v1046 = vpack.c.b16 %v1037, %v1036
      %v1047 = vpack.c.b16 %v1039, %v1038
      %v1048 = vpack.c.b16 %v1041, %v1040
      %v1049 = vpack.c.b16 %v1043, %v1042
      %v1057 = vsel %vm712, %v1016, 0
      %v1060 = vsel %vm712, %v1017, 0
      %v1063 = vsel %vm712, %v1018, 0
      %v1066 = vsel %vm712, %v1019, 0
      %1068 = vmatprep.subr.bf16.mxu0 0
      %1069 = vmatpush1.bf16.msra.mxu0 %v1044
      %1070 = vmatprep.subr.bf16.mxu0 0
      %1071 = vmatpush1.bf16.msra.mxu0 %v1045
      %1072 = vmatprep.subr.bf16.mxu0 0
      %1073 = vmatpush1.bf16.msra.mxu0 %v1046
      %1074 = vmatprep.subr.bf16.mxu0 0
      %1075 = vmatpush1.bf16.msra.mxu0 %v1047
      %1076 = vmatprep.subr.bf16.mxu0 0
      %1077 = vmatpush1.bf16.msra.mxu0 %v1048
      %1078 = vmatprep.subr.bf16.mxu0 0
      %1079 = vmatpush1.bf16.msra.mxu0 %v1049
      %1080 = vmatprep.subr.bf16.mxu0 0
      %1081 = vmatpush1.bf16.msra.mxu0 0
      %1082 = vmatprep.subr.bf16.mxu0 0
      %1083 = vmatpush1.bf16.msra.mxu0 0
      %1084 = vmatprep.subr.bf16.mxu0 0
      %1085 = vmatpush1.bf16.msra.mxu0 0
      %1086 = vmatprep.subr.bf16.mxu0 0
      %1087 = vmatpush1.bf16.msra.mxu0 0
      %1088 = vmatprep.subr.bf16.mxu0 0
      %1089 = vmatpush1.bf16.msra.mxu0 0
      %1090 = vmatprep.subr.bf16.mxu0 0
      %1091 = vmatpush1.bf16.msra.mxu0 0
      %1092 = vmatprep.subr.bf16.mxu0 0
      %1093 = vmatpush1.bf16.msra.mxu0 0
      %1094 = vmatprep.subr.bf16.mxu0 0
      %1095 = vmatpush1.bf16.msra.mxu0 0
      %1096 = vmatprep.subr.bf16.mxu0 0
      %1097 = vmatpush1.bf16.msra.mxu0 0
      %1098 = vmatprep.subr.bf16.mxu0 0
      %1099 = vmatpush1.bf16.msra.mxu0 0
      %1100 = vmatprep.mubr.bf16.mxu0 0
      %1101 = vmatmul.mubr.bf16.gmra.mrb[0].mxu0 %v1057
      %v1102 = vpop.f32.mrb[0].mxu0
      %v1103 = vadd.f32 0.0, %v1102
      %v1104 = vpop.f32.mrb[0].mxu0
      %v1105 = vpop.f32.mrb[0].mxu0
      %v1106 = vadd.f32 0.0, %v1105
      %v1107 = vpop.f32.mrb[0].mxu0
      %1108 = vmatprep.mubr.bf16.mxu0 0
      %1109 = vmatmul.mubr.bf16.gmra.mrb[0].mxu0 %v1060
      %v1110 = vpop.f32.mrb[0].mxu0
      %v1111 = vadd.f32 0.0, %v1110
      %v1112 = vpop.f32.mrb[0].mxu0
      %v1113 = vpop.f32.mrb[0].mxu0
      %v1114 = vadd.f32 0.0, %v1113
      %v1115 = vpop.f32.mrb[0].mxu0
      %1116 = vmatprep.mubr.bf16.mxu0 0
      %1117 = vmatmul.mubr.bf16.gmra.mrb[0].mxu0 %v1063
      %v1118 = vpop.f32.mrb[0].mxu0
      %v1119 = vadd.f32 0.0, %v1118
      %v1120 = vpop.f32.mrb[0].mxu0
      %v1121 = vpop.f32.mrb[0].mxu0
      %v1122 = vadd.f32 0.0, %v1121
      %v1123 = vpop.f32.mrb[0].mxu0
      %1124 = vmatprep.mubr.bf16.mxu0 0
      %1125 = vmatmul.mubr.bf16.gmra.mrb[0].mxu0 %v1066
      %v1126 = vpop.f32.mrb[0].mxu0
      %v1127 = vadd.f32 0.0, %v1126
      %v1128 = vpop.f32.mrb[0].mxu0
      %v1129 = vpop.f32.mrb[0].mxu0
      %v1130 = vadd.f32 0.0, %v1129
      %v1131 = vpop.f32.mrb[0].mxu0
      %1132 = vdwg.mxu0
      %v1133 = vld [vmem:[#allocation3] sm:$0xff]
      %v1134 = vld [vmem:[#allocation3 + $0x8] sm:$0xff]
      %v1135 = vld [vmem:[#allocation3 + $0x10] sm:$0xff]
      %v1136 = vld [vmem:[#allocation3 + $0x18] sm:$0xff]
      %v1137 = vld [vmem:[#allocation3 + $0x20] sm:$0xff]
      %v1138 = vld [vmem:[#allocation3 + $0x28] sm:$0xff]
      %v1139 = vld [vmem:[#allocation3 + $0x30] sm:$0xff]
      %v1140 = vld [vmem:[#allocation3 + $0x38] sm:$0xff]
      %v1141 = vadd.f32 %v1133, %v1103
      %v1142 = vadd.f32 %v1134, %v1106
      %v1143 = vadd.f32 %v1135, %v1111
      %v1144 = vadd.f32 %v1136, %v1114
      %v1145 = vadd.f32 %v1137, %v1119
      %v1146 = vadd.f32 %v1138, %v1122
      %v1147 = vadd.f32 %v1139, %v1127
      %v1148 = vadd.f32 %v1140, %v1130
      %1149 = vst.msk [vmem:[#allocation3] sm:$0xff] %vm790, %v1141
      %1150 = vst.msk [vmem:[#allocation3 + $0x8] sm:$0xff] %vm790, %v1142
      %1151 = vst.msk [vmem:[#allocation3 + $0x10] sm:$0xff] %vm790, %v1143
      %1152 = vst.msk [vmem:[#allocation3 + $0x18] sm:$0xff] %vm790, %v1144
      %1153 = vst.msk [vmem:[#allocation3 + $0x20] sm:$0xff] %vm790, %v1145
      %1154 = vst.msk [vmem:[#allocation3 + $0x28] sm:$0xff] %vm790, %v1146
      %1155 = vst.msk [vmem:[#allocation3 + $0x30] sm:$0xff] %vm790, %v1147
      %1156 = vst.msk [vmem:[#allocation3 + $0x38] sm:$0xff] %vm790, %v1148
      %v1157 = vld [vmem:[#allocation3] sm:$0xff]
      %v1158 = vld [vmem:[#allocation3 + $0x8] sm:$0xff]
      %v1159 = vld [vmem:[#allocation3 + $0x10] sm:$0xff]
      %v1160 = vld [vmem:[#allocation3 + $0x18] sm:$0xff]
      %v1161 = vld [vmem:[#allocation3 + $0x20] sm:$0xff]
      %v1162 = vld [vmem:[#allocation3 + $0x28] sm:$0xff]
      %v1163 = vld [vmem:[#allocation3 + $0x30] sm:$0xff]
      %v1164 = vld [vmem:[#allocation3 + $0x38] sm:$0xff]
      %v1165 = vld [vmem:[%s3] sm:$0x1]
      %v1167 = vlaneseq
      %v1168 = vshrl.u32 %v1167, 7
      %v1169 = vsub.s32 0, %v1168
      %v1170 = vrot.slane %v1165, %v1169
      %v1172 = vadd.f32 %v1157, %v1170
      %v1173 = vadd.f32 %v1158, %v1170
      %v1174 = vadd.f32 %v1159, %v1170
      %v1175 = vadd.f32 %v1160, %v1170
      %v1176 = vadd.f32 %v1161, %v1170
      %v1177 = vadd.f32 %v1162, %v1170
      %v1178 = vadd.f32 %v1163, %v1170
      %v1179 = vadd.f32 %v1164, %v1170
      %v1180 = vmax.f32 %v1172, 0.0
      %v1181 = vmax.f32 %v1173, 0.0
      %v1182 = vmax.f32 %v1174, 0.0
      %v1183 = vmax.f32 %v1175, 0.0
      %v1184 = vmax.f32 %v1176, 0.0
      %v1185 = vmax.f32 %v1177, 0.0
      %v1186 = vmax.f32 %v1178, 0.0
      %v1187 = vmax.f32 %v1179, 0.0
      %v1188 = vmax.f32 %v1180, %v1181
      %v1189 = vmax.f32 %v1182, %v1183
      %v1190 = vmax.f32 %v1184, %v1185
      %v1191 = vmax.f32 %v1186, %v1187
      %1192 = vst.msk [vmem:[#allocation3] sm:$0xff] %vm790, %v1188
      %1193 = vst.msk [vmem:[#allocation3 + $0x8] sm:$0xff] %vm790, %v1189
      %1194 = vst.msk [vmem:[#allocation3 + $0x10] sm:$0xff] %vm790, %v1190
      %1195 = vst.msk [vmem:[#allocation3 + $0x18] sm:$0xff] %vm790, %v1191
      %v1196 = vld [vmem:[#allocation3] ss:$2 sm:$0xff]
      %s1197 = scalar_lea.vmem [#allocation3], 16
      %v1198 = vld [vmem:[%s1197] ss:$2 sm:$0xff]
      %s1199 = scalar_lea.vmem [#allocation3], 1
      %v1200 = vld [vmem:[%s1199] ss:$2 sm:$0xff]
      %s1201 = scalar_lea.vmem [#allocation3], 17
      %v1202 = vld [vmem:[%s1201] ss:$2 sm:$0xff]
      %v1203 = vmax.f32 %v1196, %v1200
      %v1204 = vmax.f32 %v1198, %v1202
      %v1205 = vpack.c.bf16 %v1204, %v1203
      %v1207 = vunpack.c.l.b16 %v1205
      %v1208 = vunpack.c.h.b16 %v1205
      %v1209 = vpack.c.b16 %v1207, %v1207
      %v1210 = vpack.c.b16 %v1208, %v1208
      %vm1213 = vcmask 519168
      %1214 = vst.msk [vmem:[%s284] sm:$0xf] %vm1213, %v1209
      %1215 = vst.msk [vmem:[%s284 + $0x4] sm:$0xf] %vm1213, %v1210
      %p1216 = scmp.lt.s32.totalorder %s19, 1
      %s1217 = scalar_select %p1216, %s19, 1
      %p1218 = scmp.lt.s32.totalorder %s20, 0
      %s1219 = scalar_select %p1218, %s20, 0
      %s1220 = smul.addr %s1219, 2
      %s1221 = smul.addr %s1217, 2
      %s1222 = sadd.s32 %s1220, %s1221
      %s1223 = smul.addr %s1222, 4
      %s1224 = scalar_lea.vmem %s4, %s1223
      // Predicated region
      $region37: #{edge_detection_encoder.8} parent=35 // pred_check
        %p1225 = pneg %p147
      $region38: #{edge_detection_encoder.8} parent=35 // pred_check_branch
        %1227 = sbr.rel (%p1225) target = $region40
      $region39: #{edge_detection_encoder.8} parent=35 // pred_region
        _
      $region40: #{edge_detection_encoder.8} parent=35 // pred_fallthru
        _
    $region36: #{edge_detection_encoder.8} parent=5 // pred_fallthru
      _
    %p1228 = scmp.le.s32.totalorder 2, %s10
    // Predicated region
    $region41: #{edge_detection_encoder.8} parent=5 // pred_check
      %p1229 = pneg %p1228
    $region42: #{edge_detection_encoder.8} parent=5 // pred_check_branch
      %1231 = sbr.rel (%p1229) target = $region44
    $region43: #{edge_detection_encoder.8} parent=5 // pred_region
      %s1232 = ssub.s32 %s10, 2
      // Predicated region
      $region45: #{edge_detection_encoder.8} parent=43 // pred_check
        %p1233 = pneg %p153
      $region46: #{edge_detection_encoder.8} parent=43 // pred_check_branch
        %1235 = sbr.rel (%p1233) target = $region48
      $region47: #{edge_detection_encoder.8} parent=43 // pred_region
        %p1236 = scmp.lt.s32.totalorder %s21, 1
        %s1237 = scalar_select %p1236, %s21, 1
        %p1238 = scmp.lt.s32.totalorder %s22, 0
        %s1239 = scalar_select %p1238, %s22, 0
        %s1240 = smul.addr %s1239, 2
        %s1241 = smul.addr %s1237, 2
        %s1242 = sadd.s32 %s1240, %s1241
        %s1243 = smul.addr %s1242, 4
        %s1244 = scalar_lea.vmem %s4, %s1243
      $region48: #{edge_detection_encoder.8} parent=43 // pred_fallthru
        _
    $region44: #{edge_detection_encoder.8} parent=5 // pred_fallthru
      _
  $region6: #{edge_detection_encoder.8} parent=0 // loop_footer
    %s14 = sadd.s32 1, %s10
  $region7: #{edge_detection_encoder.8} parent=0 // loop_footer_branch
    %9 = sbr.rel target = $region3
  $region8: #{edge_detection_encoder.8} parent=0 // loop_exit
    _

// kernel: tile.13
$region0: #{tile.13}
  #allocation0 [shape = 's32[1]{0}', space=sflag, size = 0x4, scoped, tag = 'scoped memory for tile.13']
  %s0 = inlined_call_operand.vmem [shape: f32[32], index: 0, kind: input, shape index: {}]
  %s1 = inlined_call_operand.vmem [shape: f32[4,32], index: 1, kind: output, shape index: {}]
  // Predicated region
  $region2: #{tile.13} parent=0 // pred_check
    _
  $region3: #{tile.13} parent=0 // pred_check_branch
    %3 = sbr.rel (0) target = $region5
  $region4: #{tile.13} parent=0 // pred_region
    _
  $region5: #{tile.13} parent=0 // pred_fallthru
    _
  %v4 = vld [vmem:[%s0] ss:$0 sm:$0xff]
  %5 = vst [vmem:[%s1] sm:$0xf] %v4

// kernel: tile.14
$region0: #{tile.14}
  %s0 = inlined_call_operand.vmem [shape: f32[4,32], index: 0, kind: input, shape index: {}]
  %s1 = inlined_call_operand.vmem [shape: f32[1,128], index: 1, kind: output, shape index: {}]
  $region1: #{tile.14} parent=0
    #allocation0 [shape = 'u8[4096]{0}', space=vmem, size = 0x1000, scoped, tag = 'scoped mem for output reshape']
    #allocation1 [shape = 'u8[4096]{0}', space=vmem, size = 0x1000, scoped, tag = 'scoped mem for input reshape']
    %s3 = sshllo.u32 0, 4
    %v4 = vld [vmem:[%s0] sm:%s3]
    %5 = vst [vmem:[#allocation1] sm:%s3] %v4
    %v6 = vld [vmem:[#allocation1] sm:$0x1]
    %vm7 = vcmask 261120
    %8 = vst.msk [vmem:[#allocation0] sm:$0x1] %vm7, %v6
    %s9 = scalar_lea.vmem [#allocation1], 3
    %v10 = vld [vmem:[%s9] sm:$0x1]
    %11 = vrot.lane.b32.xlu0 %v10, 96
    %v12 = vpop.permute.xlu0 %11
    %vm13 = vcmask 1048320
    %14 = vst.msk [vmem:[#allocation0] sm:$0x1] %vm13, %v12
    %s15 = scalar_lea.vmem [#allocation1], 2
    %v16 = vld [vmem:[%s15] sm:$0x1]
    %17 = vrot.lane.b32.xlu0 %v16, 64
    %v18 = vpop.permute.xlu0 %17
    %vm19 = vcmask 785920
    %20 = vst.msk [vmem:[#allocation0] sm:$0x1] %vm19, %v18
    %s21 = scalar_lea.vmem [#allocation1], 1
    %v22 = vld [vmem:[%s21] sm:$0x1]
    %23 = vrot.lane.b32.xlu0 %v22, 32
    %v24 = vpop.permute.xlu0 %23
    %vm25 = vcmask 523520
    %26 = vst.msk [vmem:[#allocation0] sm:$0x1] %vm25, %v24
    %s28 = sshllo.u32 0, 1
    %v30 = vld [vmem:[#allocation0] sm:%s28]
    %s31 = sshllo.u32 0, 1
    %32 = vst [vmem:[%s1] sm:%s31] %v30

// kernel: edge_detection_encoder.6
$region0: #{edge_detection_encoder.6}
  #allocation0 [shape = 'u32[]', space=smem, size = 0x4, offset = 0x4, fixed_abs, tag = 'smem constant byte address 0x4 - core index']
  #allocation1 [shape = 'u32[144,128]{1,0:T(1,128)}', space=vmem, size = 0x12000, scoped, tag = 'internal scratch']
  #allocation2 [shape = 'bf16[18,16,24]{2,1,0:T(16,128)(2,1)}', space=vmem, size = 0x12000, scoped, tag = 'scratch operand']
  #allocation3 [shape = 'f32[256,16]{1,0:T(8,128)}', space=vmem, size = 0x20000, scoped, tag = 'scratch operand']
  %s0 = inlined_call_operand.vmem [shape: bf16[2,24,24,8], index: 0, kind: input, shape index: {}, may-alias: {0,1}]
  %s1 = inlined_call_operand.vmem [shape: bf16[2,24,24,8], index: 1, kind: input, shape index: {}, may-alias: {0,1}]
  %s2 = inlined_call_operand.vmem [shape: bf16[3,24,16], index: 2, kind: input, shape index: {}]
  %s3 = inlined_call_operand.vmem [shape: f32[1,16], index: 3, kind: input, shape index: {}]
  %s4 = inlined_call_operand.vmem [shape: bf16[2,1,64,16], index: 4, kind: output, shape index: {}]
  %s5 = sld [smem:[#allocation0]]
  $region49: #{edge_detection_encoder.6} parent=0
    _
  %s7 = ssub.s32 1, %s5
  %s8 = scalar_select 0, %s7, %s5
  loop: start=0, step=1, limit=4
  $region2: #{edge_detection_encoder.6} parent=0 // loop_pre_header
    _
  $region3: #{edge_detection_encoder.6} parent=0 // loop_header
    %s10 = sphi 0, %s14
    %p11 = scmp.ge.s32.totalorder %s10, 4
    %s17 = sphi 0, %s29
    %s18 = sphi 0, %s25
    %s19 = sphi 0, %s17
    %s20 = sphi 0, %s18
    %s21 = sphi 0, %s19
    %s22 = sphi 0, %s20
    %s34 = sphi 0, %s36
    %s37 = sphi 0, %s34
    %s38 = sphi 0, %s37
    %s54 = sphi 0, %s38
    %s66 = sphi 0, %s68
    %s69 = sphi 0, %s66
    %s70 = sphi 0, %s69
    %s86 = sphi 0, %s70
    %s90 = sphi 0, %s90
    %s92 = sphi 0, %s90
    %s93 = sphi 0, %s92
    %s107 = sphi 0, %s93
    %s111 = sphi 0, %s111
    %s113 = sphi 0, %s111
    %s114 = sphi 0, %s113
    %s128 = sphi 0, %s114
    %s136 = sphi 0, %s138
    %s139 = sphi 0, %s136
    %s140 = sphi 0, %s139
    %s156 = sphi 0, %s140
  $region4: #{edge_detection_encoder.6} parent=0 // loop_header_branch
    %13 = sbr.rel (%p11) target = $region8
  $region5: #{edge_detection_encoder.6} parent=0 // loop_body
    %s15 = ssub.s32 %s10, 1
    %s16 = ssub.s32 %s10, 2
    %s23 = sadd.s32 1, %s18
    %p24 = scmp.ge.s32.totalorder %s23, 1
    %s25 = scalar_select %p24, 0, %s23
    %s26 = sadd.s32 1, %s17
    %s27 = scalar_select %p24, %s26, %s17
    %p28 = scmp.ge.s32.totalorder %s27, 2
    %s29 = scalar_select %p28, 0, %s27
    %s30 = ssub.s32 %s17, %s29
    %s31 = ssub.s32 %s18, %s25
    %s32 = sor.u32 %s30, %s31
    %p33 = scmp.eq.s32.totalorder %s32, 0
    %s35 = sadd.s32 %s34, 1
    %s36 = scalar_select %p33, %s34, %s35
    %p39 = pneg %p33
    %p40 = scmp.eq.s32.totalorder %s10, 1
    %p41 = por %p39, %p40
    %p42 = scmp.ne.s32.totalorder %s34, %s37
    %p43 = scmp.eq.s32.totalorder %s10, 0
    %p44 = por %p42, %p43
    %p45 = scmp.ne.s32.totalorder %s34, %s37
    %p46 = scmp.eq.s32.totalorder %s15, 1
    %p47 = por %p45, %p46
    %p48 = scmp.ne.s32.totalorder %s37, %s38
    %p49 = scmp.eq.s32.totalorder %s15, 0
    %p50 = por %p48, %p49
    %p51 = scmp.ne.s32.totalorder %s37, %s38
    %p52 = scmp.eq.s32.totalorder %s16, 1
    %p53 = por %p51, %p52
    %p55 = scmp.ne.s32.totalorder %s38, %s54
    %p56 = scmp.eq.s32.totalorder %s16, 0
    %p57 = por %p55, %p56
    %s58 = sadd.s32 %s18, 1
    %s59 = smul.u32 %s58, 2
    %s60 = sadd.s32 %s25, 1
    %s61 = smul.u32 %s60, 2
    %s62 = ssub.s32 %s17, %s29
    %s63 = ssub.s32 %s59, %s61
    %s64 = sor.u32 %s62, %s63
    %p65 = scmp.eq.s32.totalorder %s64, 0
    %s67 = sadd.s32 %s66, 1
    %s68 = scalar_select %p65, %s66, %s67
    %p71 = pneg %p65
    %p72 = scmp.eq.s32.totalorder %s10, 1
    %p73 = por %p71, %p72
    %p74 = scmp.ne.s32.totalorder %s66, %s69
    %p75 = scmp.eq.s32.totalorder %s10, 0
    %p76 = por %p74, %p75
    %p77 = scmp.ne.s32.totalorder %s66, %s69
    %p78 = scmp.eq.s32.totalorder %s15, 1
    %p79 = por %p77, %p78
    %p80 = scmp.ne.s32.totalorder %s69, %s70
    %p81 = scmp.eq.s32.totalorder %s15, 0
    %p82 = por %p80, %p81
    %p83 = scmp.ne.s32.totalorder %s69, %s70
    %p84 = scmp.eq.s32.totalorder %s16, 1
    %p85 = por %p83, %p84
    %p87 = scmp.ne.s32.totalorder %s70, %s86
    %p88 = scmp.eq.s32.totalorder %s16, 0
    %p89 = por %p87, %p88
    %s91 = sadd.s32 %s90, 1
    %p94 = scmp.eq.s32.totalorder %s10, 1
    %p95 = scmp.ne.s32.totalorder %s90, %s92
    %p96 = scmp.eq.s32.totalorder %s10, 0
    %p97 = por %p95, %p96
    %p98 = scmp.ne.s32.totalorder %s90, %s92
    %p99 = scmp.eq.s32.totalorder %s15, 1
    %p100 = por %p98, %p99
    %p101 = scmp.ne.s32.totalorder %s92, %s93
    %p102 = scmp.eq.s32.totalorder %s15, 0
    %p103 = por %p101, %p102
    %p104 = scmp.ne.s32.totalorder %s92, %s93
    %p105 = scmp.eq.s32.totalorder %s16, 1
    %p106 = por %p104, %p105
    %p108 = scmp.ne.s32.totalorder %s93, %s107
    %p109 = scmp.eq.s32.totalorder %s16, 0
    %p110 = por %p108, %p109
    %s112 = sadd.s32 %s111, 1
    %p115 = scmp.eq.s32.totalorder %s10, 1
    %p116 = scmp.ne.s32.totalorder %s111, %s113
    %p117 = scmp.eq.s32.totalorder %s10, 0
    %p118 = por %p116, %p117
    %p119 = scmp.ne.s32.totalorder %s111, %s113
    %p120 = scmp.eq.s32.totalorder %s15, 1
    %p121 = por %p119, %p120
    %p122 = scmp.ne.s32.totalorder %s113, %s114
    %p123 = scmp.eq.s32.totalorder %s15, 0
    %p124 = por %p122, %p123
    %p125 = scmp.ne.s32.totalorder %s113, %s114
    %p126 = scmp.eq.s32.totalorder %s16, 1
    %p127 = por %p125, %p126
    %p129 = scmp.ne.s32.totalorder %s114, %s128
    %p130 = scmp.eq.s32.totalorder %s16, 0
    %p131 = por %p129, %p130
    %s132 = ssub.s32 %s17, %s29
    %s133 = ssub.s32 %s18, %s25
    %s134 = sor.u32 %s132, %s133
    %p135 = scmp.eq.s32.totalorder %s134, 0
    %s137 = sadd.s32 %s136, 1
    %s138 = scalar_select %p135, %s136, %s137
    %p141 = pneg %p135
    %p142 = scmp.eq.s32.totalorder %s10, 1
    %p143 = por %p141, %p142
    %p144 = scmp.ne.s32.totalorder %s136, %s139
    %p145 = scmp.eq.s32.totalorder %s10, 0
    %p146 = por %p144, %p145
    %p147 = scmp.ne.s32.totalorder %s136, %s139
    %p148 = scmp.eq.s32.totalorder %s15, 1
    %p149 = por %p147, %p148
    %p150 = scmp.ne.s32.totalorder %s139, %s140
    %p151 = scmp.eq.s32.totalorder %s15, 0
    %p152 = por %p150, %p151
    %p153 = scmp.ne.s32.totalorder %s139, %s140
    %p154 = scmp.eq.s32.totalorder %s16, 1
    %p155 = por %p153, %p154
    %p157 = scmp.ne.s32.totalorder %s140, %s156
    %p158 = scmp.eq.s32.totalorder %s16, 0
    %p159 = por %p157, %p158
    %p160 = scmp.le.s32.totalorder 1, %s10
    %p161 = scmp.lt.s32.totalorder %s10, 3
    %p162 = pnand %p160, %p161
    %p163 = pneg %p162
    // Predicated region
    $region9: #{edge_detection_encoder.6} parent=5 // pred_check
      _
    $region10: #{edge_detection_encoder.6} parent=5 // pred_check_branch
      %165 = sbr.rel (%p162) target = $region12
    $region11: #{edge_detection_encoder.6} parent=5 // pred_region
      %s166 = ssub.s32 %s10, 1
      // Predicated region
      $region13: #{edge_detection_encoder.6} parent=11 // pred_check
        %p167 = pneg %p103
      $region14: #{edge_detection_encoder.6} parent=11 // pred_check_branch
        %169 = sbr.rel (%p167) target = $region16
      $region15: #{edge_detection_encoder.6} parent=11 // pred_region
        _
      $region16: #{edge_detection_encoder.6} parent=11 // pred_fallthru
        _
      // Predicated region
      $region17: #{edge_detection_encoder.6} parent=11 // pred_check
        %p170 = pneg %p124
      $region18: #{edge_detection_encoder.6} parent=11 // pred_check_branch
        %172 = sbr.rel (%p170) target = $region20
      $region19: #{edge_detection_encoder.6} parent=11 // pred_region
        _
      $region20: #{edge_detection_encoder.6} parent=11 // pred_fallthru
        _
    $region12: #{edge_detection_encoder.6} parent=5 // pred_fallthru
      _
    %p173 = scmp.lt.s32.totalorder %s10, 2
    // Predicated region
    $region21: #{edge_detection_encoder.6} parent=5 // pred_check
      %p174 = pneg %p173
    $region22: #{edge_detection_encoder.6} parent=5 // pred_check_branch
      %176 = sbr.rel (%p174) target = $region24
    $region23: #{edge_detection_encoder.6} parent=5 // pred_region
      // Predicated region
      $region25: #{edge_detection_encoder.6} parent=23 // pred_check
        %p177 = pneg %p44
      $region26: #{edge_detection_encoder.6} parent=23 // pred_check_branch
        %179 = sbr.rel (%p177) target = $region28
      $region27: #{edge_detection_encoder.6} parent=23 // pred_region
        %s180 = smul.u32 16, %s18
        %s181 = ssub.s32 24, %s180
        %p182 = scmp.lt.s32.totalorder %s181, 16
        %s183 = scalar_select %p182, %s181, 16
        %s184 = smul.u32 64, %s183
        %s185 = smul.u32 %s184, 3
        %p186 = scmp.lt.s32.totalorder %s17, 1
        %s187 = scalar_select %p186, %s17, 1
        %p188 = scmp.lt.s32.totalorder %s180, 23
        %s189 = scalar_select %p188, %s180, 23
        %s190 = smul.addr %s189, 3
        %s191 = smul.addr %s187, 72
        %s192 = sadd.s32 %s190, %s191
        %s193 = smul.addr %s192, 4
        %s194 = scalar_lea.vmem %s0, %s193
        %s195 = smul.u32 16, %s18
        %s196 = ssub.s32 24, %s195
        %p197 = scmp.lt.s32.totalorder %s196, 16
        %s198 = scalar_select %p197, %s196, 16
        %s199 = smul.u32 64, %s198
        %s200 = smul.u32 %s199, 3
      $region28: #{edge_detection_encoder.6} parent=23 // pred_fallthru
        _
      // Predicated region
      $region29: #{edge_detection_encoder.6} parent=23 // pred_check
        %p201 = pneg %p76
      $region30: #{edge_detection_encoder.6} parent=23 // pred_check_branch
        %203 = sbr.rel (%p201) target = $region32
      $region31: #{edge_detection_encoder.6} parent=23 // pred_region
        %s204 = sadd.s32 %s18, 1
        %s205 = smul.u32 %s204, 2
        %s206 = smul.u32 8, %s205
        %p207 = scmp.lt.s32.totalorder %s17, 1
        %s208 = scalar_select %p207, %s17, 1
        %p209 = scmp.lt.s32.totalorder %s206, 23
        %s210 = scalar_select %p209, %s206, 23
        %s211 = smul.addr %s210, 3
        %s212 = smul.addr %s208, 72
        %s213 = sadd.s32 %s211, %s212
        %s214 = smul.addr %s213, 4
        %s215 = scalar_lea.vmem %s1, %s214
        %s216 = sadd.s32 %s18, 1
        %s217 = smul.u32 %s216, 2
        %s218 = smul.u32 8, %s217
      $region32: #{edge_detection_encoder.6} parent=23 // pred_fallthru
        _
    $region24: #{edge_detection_encoder.6} parent=5 // pred_fallthru
      _
    %p219 = scmp.le.s32.totalorder 1, %s10
    %p220 = scmp.lt.s32.totalorder %s10, 3
    %p221 = pnand %p219, %p220
    %p222 = pneg %p221
    // Predicated region
    $region33: #{edge_detection_encoder.6} parent=5 // pred_check
      _
    $region34: #{edge_detection_encoder.6} parent=5 // pred_check_branch
      %224 = sbr.rel (%p221) target = $region36
    $region35: #{edge_detection_encoder.6} parent=5 // pred_region
      %s225 = ssub.s32 %s10, 1
      %s226 = smul.u32 16, %s20
      %s227 = ssub.s32 24, %s226
      %p228 = scmp.lt.s32.totalorder %s227, 16
      %s229 = scalar_select %p228, %s227, 16
      %s230 = smul.u32 64, %s229
      %s231 = smul.u32 %s230, 3
      %p232 = scmp.lt.s32.totalorder %s19, 1
      %s233 = scalar_select %p232, %s19, 1
      %p234 = scmp.lt.s32.totalorder %s226, 23
      %s235 = scalar_select %p234, %s226, 23
      %s236 = smul.addr %s235, 3
      %s237 = smul.addr %s233, 72
      %s238 = sadd.s32 %s236, %s237
      %s239 = smul.addr %s238, 4
      %s240 = scalar_lea.vmem %s0, %s239
      %p241 = pneg %p50
      %p242 = pneg %p47
      %s243 = sadd.s32 %s20, 1
      %s244 = smul.u32 %s243, 2
      %s245 = smul.u32 8, %s244
      %p246 = scmp.lt.s32.totalorder %s19, 1
      %s247 = scalar_select %p246, %s19, 1
      %p248 = scmp.lt.s32.totalorder %s245, 23
      %s249 = scalar_select %p248, %s245, 23
      %s250 = smul.addr %s249, 3
      %s251 = smul.addr %s247, 72
      %s252 = sadd.s32 %s250, %s251
      %s253 = smul.addr %s252, 4
      %s254 = scalar_lea.vmem %s1, %s253
      %p255 = pneg %p82
      %p256 = pneg %p79
      %p257 = pneg %p103
      %p258 = pneg %p100
      %p259 = pneg %p124
      %p260 = pneg %p121
      %p261 = pneg %p152
      %p262 = pneg %p149
      %p263 = scmp.lt.s32.totalorder %s19, 1
      %s264 = scalar_select %p263, %s19, 1
      %p265 = scmp.lt.s32.totalorder %s20, 0
      %s266 = scalar_select %p265, %s20, 0
      %s267 = smul.addr %s266, 8
      %s268 = smul.addr %s264, 8
      %s269 = sadd.s32 %s267, %s268
      %s270 = smul.addr %s269, 4
      %s271 = scalar_lea.vmem %s4, %s270
      %s272 = smul.u32 16, %s20
      %s273 = ssub.s32 24, %s272
      %p274 = scmp.lt.s32.totalorder %s273, 16
      %s275 = scalar_select %p274, %s273, 16
      %s276 = smul.u32 64, %s275
      %s277 = smul.u32 %s276, 3
      %p278 = scmp.lt.s32.totalorder %s19, 1
      %s279 = scalar_select %p278, %s19, 1
      %p280 = scmp.lt.s32.totalorder %s272, 23
      %s281 = scalar_select %p280, %s272, 23
      %s282 = smul.addr %s281, 3
      %s283 = smul.addr %s279, 72
      %s284 = sadd.s32 %s282, %s283
      %s285 = smul.addr %s284, 4
      %s286 = scalar_lea.vmem %s0, %s285
      %s287 = smul.u32 16, %s20
      %s288 = ssub.s32 24, %s287
      %p289 = scmp.lt.s32.totalorder %s288, 16
      %s290 = scalar_select %p289, %s288, 16
      %s291 = smul.u32 64, %s290
      %s292 = smul.u32 %s291, 3
      %s293 = sadd.s32 %s20, 1
      %s294 = smul.u32 %s293, 2
      %s295 = smul.u32 8, %s294
      %p296 = scmp.lt.s32.totalorder %s19, 1
      %s297 = scalar_select %p296, %s19, 1
      %p298 = scmp.lt.s32.totalorder %s295, 23
      %s299 = scalar_select %p298, %s295, 23
      %s300 = smul.addr %s299, 3
      %s301 = smul.addr %s297, 72
      %s302 = sadd.s32 %s300, %s301
      %s303 = smul.addr %s302, 4
      %s304 = scalar_lea.vmem %s1, %s303
      %s305 = sadd.s32 %s20, 1
      %s306 = smul.u32 %s305, 2
      %s307 = smul.u32 8, %s306
      %p308 = scmp.lt.s32.totalorder %s19, 1
      %s309 = scalar_select %p308, %s19, 1
      %p310 = scmp.lt.s32.totalorder %s20, 0
      %s311 = scalar_select %p310, %s20, 0
      %s312 = smul.addr %s311, 8
      %s313 = smul.addr %s309, 8
      %s314 = sadd.s32 %s312, %s313
      %s315 = smul.addr %s314, 4
      %s316 = scalar_lea.vmem %s4, %s315
      %v318 = vld [vmem:[%s286] sm:$0xf]
      %v319 = vld [vmem:[%s286 + $0x4] sm:$0xf]
      %v320 = vld [vmem:[%s286 + $0xc] sm:$0xf]
      %v321 = vld [vmem:[%s286 + $0x10] sm:$0xf]
      %v322 = vld [vmem:[%s286 + $0x18] sm:$0xf]
      %v323 = vld [vmem:[%s286 + $0x1c] sm:$0xf]
      %v324 = vld [vmem:[%s286 + $0x24] sm:$0xf]
      %v325 = vld [vmem:[%s286 + $0x28] sm:$0xf]
      %v326 = vld [vmem:[%s286 + $0x30] sm:$0xf]
      %v327 = vld [vmem:[%s286 + $0x34] sm:$0xf]
      %v328 = vld [vmem:[%s286 + $0x3c] sm:$0xf]
      %v329 = vld [vmem:[%s286 + $0x40] sm:$0xf]
      %v330 = vld [vmem:[%s286 + $0x48] sm:$0xf]
      %v331 = vld [vmem:[%s286 + $0x4c] sm:$0xf]
      %v332 = vld [vmem:[%s286 + $0x54] sm:$0xf]
      %v333 = vld [vmem:[%s286 + $0x58] sm:$0xf]
      %v334 = vld [vmem:[%s286 + $0x60] sm:$0xf]
      %v335 = vld [vmem:[%s286 + $0x64] sm:$0xf]
      %v336 = vld [vmem:[%s286 + $0x6c] sm:$0xf]
      %v337 = vld [vmem:[%s286 + $0x70] sm:$0xf]
      %v338 = vld [vmem:[%s286 + $0x78] sm:$0xf]
      %v339 = vld [vmem:[%s286 + $0x7c] sm:$0xf]
      %v340 = vld [vmem:[%s286 + $0x84] sm:$0xf]
      %v341 = vld [vmem:[%s286 + $0x88] sm:$0xf]
      %v342 = vld [vmem:[%s286 + $0x90] sm:$0xf]
      %v343 = vld [vmem:[%s286 + $0x94] sm:$0xf]
      %v344 = vld [vmem:[%s286 + $0x9c] sm:$0xf]
      %v345 = vld [vmem:[%s286 + $0xa0] sm:$0xf]
      %v346 = vld [vmem:[%s286 + $0xa8] sm:$0xf]
      %v347 = vld [vmem:[%s286 + $0xac] sm:$0xf]
      %v348 = vld [vmem:[%s286 + $0xb4] sm:$0xf]
      %v349 = vld [vmem:[%s286 + $0xb8] sm:$0xf]
      %v382 = vunpack.c.l.b16 %v318
      %v383 = vunpack.c.l.b16 %v319
      %v384 = vunpack.c.l.b16 %v320
      %v385 = vunpack.c.l.b16 %v321
      %v386 = vunpack.c.l.b16 %v322
      %v387 = vunpack.c.l.b16 %v323
      %v388 = vunpack.c.l.b16 %v324
      %v389 = vunpack.c.l.b16 %v325
      %v390 = vunpack.c.l.b16 %v326
      %v391 = vunpack.c.l.b16 %v327
      %v392 = vunpack.c.l.b16 %v328
      %v393 = vunpack.c.l.b16 %v329
      %v394 = vunpack.c.l.b16 %v330
      %v395 = vunpack.c.l.b16 %v331
      %v396 = vunpack.c.l.b16 %v332
      %v397 = vunpack.c.l.b16 %v333
      %v398 = vunpack.c.l.b16 %v334
      %v399 = vunpack.c.l.b16 %v335
      %v400 = vunpack.c.l.b16 %v336
      %v401 = vunpack.c.l.b16 %v337
      %v402 = vunpack.c.l.b16 %v338
      %v403 = vunpack.c.l.b16 %v339
      %v404 = vunpack.c.l.b16 %v340
      %v405 = vunpack.c.l.b16 %v341
      %v406 = vunpack.c.l.b16 %v342
      %v407 = vunpack.c.l.b16 %v343
      %v408 = vunpack.c.l.b16 %v344
      %v409 = vunpack.c.l.b16 %v345
      %v410 = vunpack.c.l.b16 %v346
      %v411 = vunpack.c.l.b16 %v347
      %v412 = vunpack.c.l.b16 %v348
      %v413 = vunpack.c.l.b16 %v349
      %v414 = vpack.c.b16 %v383, %v382
      %v415 = vpack.c.b16 %v385, %v384
      %v416 = vpack.c.b16 %v387, %v386
      %v417 = vpack.c.b16 %v389, %v388
      %v418 = vpack.c.b16 %v391, %v390
      %v419 = vpack.c.b16 %v393, %v392
      %v420 = vpack.c.b16 %v395, %v394
      %v421 = vpack.c.b16 %v397, %v396
      %v422 = vpack.c.b16 %v399, %v398
      %v423 = vpack.c.b16 %v401, %v400
      %v424 = vpack.c.b16 %v403, %v402
      %v425 = vpack.c.b16 %v405, %v404
      %v426 = vpack.c.b16 %v407, %v406
      %v427 = vpack.c.b16 %v409, %v408
      %v428 = vpack.c.b16 %v411, %v410
      %v429 = vpack.c.b16 %v413, %v412
      %vm446 = vcmask 64512
      %447 = vst.msk [vmem:[#allocation2] sm:$0xff] %vm446, %v414
      %448 = vst.msk [vmem:[#allocation2 + $0x8] sm:$0xff] %vm446, %v415
      %449 = vst.msk [vmem:[#allocation2 + $0x10] sm:$0xff] %vm446, %v416
      %450 = vst.msk [vmem:[#allocation2 + $0x18] sm:$0xff] %vm446, %v417
      %451 = vst.msk [vmem:[#allocation2 + $0x20] sm:$0xff] %vm446, %v418
      %452 = vst.msk [vmem:[#allocation2 + $0x28] sm:$0xff] %vm446, %v419
      %453 = vst.msk [vmem:[#allocation2 + $0x30] sm:$0xff] %vm446, %v420
      %454 = vst.msk [vmem:[#allocation2 + $0x38] sm:$0xff] %vm446, %v421
      %455 = vst.msk [vmem:[#allocation2 + $0x40] sm:$0xff] %vm446, %v422
      %456 = vst.msk [vmem:[#allocation2 + $0x48] sm:$0xff] %vm446, %v423
      %457 = vst.msk [vmem:[#allocation2 + $0x50] sm:$0xff] %vm446, %v424
      %458 = vst.msk [vmem:[#allocation2 + $0x58] sm:$0xff] %vm446, %v425
      %459 = vst.msk [vmem:[#allocation2 + $0x60] sm:$0xff] %vm446, %v426
      %460 = vst.msk [vmem:[#allocation2 + $0x68] sm:$0xff] %vm446, %v427
      %461 = vst.msk [vmem:[#allocation2 + $0x70] sm:$0xff] %vm446, %v428
      %462 = vst.msk [vmem:[#allocation2 + $0x78] sm:$0xff] %vm446, %v429
      %v463 = vld [vmem:[%s304] sm:$0xf]
      %v464 = vld [vmem:[%s304 + $0x4] sm:$0xf]
      %v465 = vld [vmem:[%s304 + $0xc] sm:$0xf]
      %v466 = vld [vmem:[%s304 + $0x10] sm:$0xf]
      %v471 = vunpack.c.l.b16 %v463
      %v472 = vunpack.c.l.b16 %v464
      %v473 = vunpack.c.l.b16 %v465
      %v474 = vunpack.c.l.b16 %v466
      %v475 = vpack.c.b16 %v472, %v471
      %v476 = vpack.c.b16 %v474, %v473
      %s479 = scalar_lea.vmem [#allocation2], 128
      %480 = vst.msk [vmem:[%s479] sm:$0xff] %vm446, %v475
      %481 = vst.msk [vmem:[%s479 + $0x8] sm:$0xff] %vm446, %v476
      %v482 = vld [vmem:[%s286] sm:$0xf]
      %v483 = vld [vmem:[%s286 + $0x4] sm:$0xf]
      %v484 = vld [vmem:[%s286 + $0x8] sm:$0x1]
      %v485 = vld [vmem:[%s286 + $0xc] sm:$0xf]
      %v486 = vld [vmem:[%s286 + $0x10] sm:$0xf]
      %v487 = vld [vmem:[%s286 + $0x14] sm:$0x1]
      %v488 = vld [vmem:[%s286 + $0x18] sm:$0xf]
      %v489 = vld [vmem:[%s286 + $0x1c] sm:$0xf]
      %v490 = vld [vmem:[%s286 + $0x20] sm:$0x1]
      %v491 = vld [vmem:[%s286 + $0x24] sm:$0xf]
      %v492 = vld [vmem:[%s286 + $0x28] sm:$0xf]
      %v493 = vld [vmem:[%s286 + $0x2c] sm:$0x1]
      %v494 = vld [vmem:[%s286 + $0x30] sm:$0xf]
      %v495 = vld [vmem:[%s286 + $0x34] sm:$0xf]
      %v496 = vld [vmem:[%s286 + $0x38] sm:$0x1]
      %v497 = vld [vmem:[%s286 + $0x3c] sm:$0xf]
      %v498 = vld [vmem:[%s286 + $0x40] sm:$0xf]
      %v499 = vld [vmem:[%s286 + $0x44] sm:$0x1]
      %v500 = vld [vmem:[%s286 + $0x48] sm:$0xf]
      %v501 = vld [vmem:[%s286 + $0x4c] sm:$0xf]
      %v502 = vld [vmem:[%s286 + $0x50] sm:$0x1]
      %v503 = vld [vmem:[%s286 + $0x54] sm:$0xf]
      %v504 = vld [vmem:[%s286 + $0x58] sm:$0xf]
      %v505 = vld [vmem:[%s286 + $0x5c] sm:$0x1]
      %v506 = vld [vmem:[%s286 + $0x60] sm:$0xf]
      %v507 = vld [vmem:[%s286 + $0x64] sm:$0xf]
      %v508 = vld [vmem:[%s286 + $0x68] sm:$0x1]
      %v509 = vld [vmem:[%s286 + $0x6c] sm:$0xf]
      %v510 = vld [vmem:[%s286 + $0x70] sm:$0xf]
      %v511 = vld [vmem:[%s286 + $0x74] sm:$0x1]
      %v512 = vld [vmem:[%s286 + $0x78] sm:$0xf]
      %v513 = vld [vmem:[%s286 + $0x7c] sm:$0xf]
      %v514 = vld [vmem:[%s286 + $0x80] sm:$0x1]
      %v515 = vld [vmem:[%s286 + $0x84] sm:$0xf]
      %v516 = vld [vmem:[%s286 + $0x88] sm:$0xf]
      %v517 = vld [vmem:[%s286 + $0x8c] sm:$0x1]
      %v518 = vld [vmem:[%s286 + $0x90] sm:$0xf]
      %v519 = vld [vmem:[%s286 + $0x94] sm:$0xf]
      %v520 = vld [vmem:[%s286 + $0x98] sm:$0x1]
      %v521 = vld [vmem:[%s286 + $0x9c] sm:$0xf]
      %v522 = vld [vmem:[%s286 + $0xa0] sm:$0xf]
      %v523 = vld [vmem:[%s286 + $0xa4] sm:$0x1]
      %v524 = vld [vmem:[%s286 + $0xa8] sm:$0xf]
      %v525 = vld [vmem:[%s286 + $0xac] sm:$0xf]
      %v526 = vld [vmem:[%s286 + $0xb0] sm:$0x1]
      %v527 = vld [vmem:[%s286 + $0xb4] sm:$0xf]
      %v528 = vld [vmem:[%s286 + $0xb8] sm:$0xf]
      %v529 = vld [vmem:[%s286 + $0xbc] sm:$0x1]
      %v578 = vunpack.c.l.b16 %v482
      %v579 = vunpack.c.l.b16 %v483
      %v580 = vunpack.c.l.b16 %v484
      %v581 = vunpack.c.l.b16 %v485
      %v582 = vunpack.c.l.b16 %v486
      %v583 = vunpack.c.l.b16 %v487
      %v584 = vunpack.c.l.b16 %v488
      %v585 = vunpack.c.l.b16 %v489
      %v586 = vunpack.c.l.b16 %v490
      %v587 = vunpack.c.l.b16 %v491
      %v588 = vunpack.c.l.b16 %v492
      %v589 = vunpack.c.l.b16 %v493
      %v590 = vunpack.c.l.b16 %v494
      %v591 = vunpack.c.l.b16 %v495
      %v592 = vunpack.c.l.b16 %v496
      %v593 = vunpack.c.l.b16 %v497
      %v594 = vunpack.c.l.b16 %v498
      %v595 = vunpack.c.l.b16 %v499
      %v596 = vunpack.c.l.b16 %v500
      %v597 = vunpack.c.l.b16 %v501
      %v598 = vunpack.c.l.b16 %v502
      %v599 = vunpack.c.l.b16 %v503
      %v600 = vunpack.c.l.b16 %v504
      %v601 = vunpack.c.l.b16 %v505
      %v602 = vunpack.c.l.b16 %v506
      %v603 = vunpack.c.l.b16 %v507
      %v604 = vunpack.c.l.b16 %v508
      %v605 = vunpack.c.l.b16 %v509
      %v606 = vunpack.c.l.b16 %v510
      %v607 = vunpack.c.l.b16 %v511
      %v608 = vunpack.c.l.b16 %v512
      %v609 = vunpack.c.l.b16 %v513
      %v610 = vunpack.c.l.b16 %v514
      %v611 = vunpack.c.l.b16 %v515
      %v612 = vunpack.c.l.b16 %v516
      %v613 = vunpack.c.l.b16 %v517
      %v614 = vunpack.c.l.b16 %v518
      %v615 = vunpack.c.l.b16 %v519
      %v616 = vunpack.c.l.b16 %v520
      %v617 = vunpack.c.l.b16 %v521
      %v618 = vunpack.c.l.b16 %v522
      %v619 = vunpack.c.l.b16 %v523
      %v620 = vunpack.c.l.b16 %v524
      %v621 = vunpack.c.l.b16 %v525
      %v622 = vunpack.c.l.b16 %v526
      %v623 = vunpack.c.l.b16 %v527
      %v624 = vunpack.c.l.b16 %v528
      %v625 = vunpack.c.l.b16 %v529
      %v626 = vpack.c.b16 %v579, %v578
      %v627 = vpack.c.b16 %v580, %v580
      %v628 = vpack.c.b16 %v582, %v581
      %v629 = vpack.c.b16 %v583, %v583
      %v630 = vpack.c.b16 %v585, %v584
      %v631 = vpack.c.b16 %v586, %v586
      %v632 = vpack.c.b16 %v588, %v587
      %v633 = vpack.c.b16 %v589, %v589
      %v634 = vpack.c.b16 %v591, %v590
      %v635 = vpack.c.b16 %v592, %v592
      %v636 = vpack.c.b16 %v594, %v593
      %v637 = vpack.c.b16 %v595, %v595
      %v638 = vpack.c.b16 %v597, %v596
      %v639 = vpack.c.b16 %v598, %v598
      %v640 = vpack.c.b16 %v600, %v599
      %v641 = vpack.c.b16 %v601, %v601
      %v642 = vpack.c.b16 %v603, %v602
      %v643 = vpack.c.b16 %v604, %v604
      %v644 = vpack.c.b16 %v606, %v605
      %v645 = vpack.c.b16 %v607, %v607
      %v646 = vpack.c.b16 %v609, %v608
      %v647 = vpack.c.b16 %v610, %v610
      %v648 = vpack.c.b16 %v612, %v611
      %v649 = vpack.c.b16 %v613, %v613
      %v650 = vpack.c.b16 %v615, %v614
      %v651 = vpack.c.b16 %v616, %v616
      %v652 = vpack.c.b16 %v618, %v617
      %v653 = vpack.c.b16 %v619, %v619
      %v654 = vpack.c.b16 %v621, %v620
      %v655 = vpack.c.b16 %v622, %v622
      %v656 = vpack.c.b16 %v624, %v623
      %v657 = vpack.c.b16 %v625, %v625
      %vm658 = vsmask.f32 7424
      %v660 = vshrl.u32 %v626, 16
      %v662 = vshll.u32 %v626, 16
      %v664 = vrot.slane %v662, 1
      %v665 = vor.u32 %v660, %v664
      %v667 = vshll.u32 %v627, 16
      %v669 = vrot.slane %v667, 1
      %v670 = vsel %vm658, %v665, %v669
      %v672 = vshrl.u32 %v628, 16
      %v674 = vshll.u32 %v628, 16
      %v676 = vrot.slane %v674, 1
      %v677 = vor.u32 %v672, %v676
      %v679 = vshll.u32 %v629, 16
      %v681 = vrot.slane %v679, 1
      %v682 = vsel %vm658, %v677, %v681
      %v684 = vshrl.u32 %v630, 16
      %v686 = vshll.u32 %v630, 16
      %v688 = vrot.slane %v686, 1
      %v689 = vor.u32 %v684, %v688
      %v691 = vshll.u32 %v631, 16
      %v693 = vrot.slane %v691, 1
      %v694 = vsel %vm658, %v689, %v693
      %v696 = vshrl.u32 %v632, 16
      %v698 = vshll.u32 %v632, 16
      %v700 = vrot.slane %v698, 1
      %v701 = vor.u32 %v696, %v700
      %v703 = vshll.u32 %v633, 16
      %v705 = vrot.slane %v703, 1
      %v706 = vsel %vm658, %v701, %v705
      %v708 = vshrl.u32 %v634, 16
      %v710 = vshll.u32 %v634, 16
      %v712 = vrot.slane %v710, 1
      %v713 = vor.u32 %v708, %v712
      %v715 = vshll.u32 %v635, 16
      %v717 = vrot.slane %v715, 1
      %v718 = vsel %vm658, %v713, %v717
      %v720 = vshrl.u32 %v636, 16
      %v722 = vshll.u32 %v636, 16
      %v724 = vrot.slane %v722, 1
      %v725 = vor.u32 %v720, %v724
      %v727 = vshll.u32 %v637, 16
      %v729 = vrot.slane %v727, 1
      %v730 = vsel %vm658, %v725, %v729
      %v732 = vshrl.u32 %v638, 16
      %v734 = vshll.u32 %v638, 16
      %v736 = vrot.slane %v734, 1
      %v737 = vor.u32 %v732, %v736
      %v739 = vshll.u32 %v639, 16
      %v741 = vrot.slane %v739, 1
      %v742 = vsel %vm658, %v737, %v741
      %v744 = vshrl.u32 %v640, 16
      %v746 = vshll.u32 %v640, 16
      %v748 = vrot.slane %v746, 1
      %v749 = vor.u32 %v744, %v748
      %v751 = vshll.u32 %v641, 16
      %v753 = vrot.slane %v751, 1
      %v754 = vsel %vm658, %v749, %v753
      %v756 = vshrl.u32 %v642, 16
      %v758 = vshll.u32 %v642, 16
      %v760 = vrot.slane %v758, 1
      %v761 = vor.u32 %v756, %v760
      %v763 = vshll.u32 %v643, 16
      %v765 = vrot.slane %v763, 1
      %v766 = vsel %vm658, %v761, %v765
      %v768 = vshrl.u32 %v644, 16
      %v770 = vshll.u32 %v644, 16
      %v772 = vrot.slane %v770, 1
      %v773 = vor.u32 %v768, %v772
      %v775 = vshll.u32 %v645, 16
      %v777 = vrot.slane %v775, 1
      %v778 = vsel %vm658, %v773, %v777
      %v780 = vshrl.u32 %v646, 16
      %v782 = vshll.u32 %v646, 16
      %v784 = vrot.slane %v782, 1
      %v785 = vor.u32 %v780, %v784
      %v787 = vshll.u32 %v647, 16
      %v789 = vrot.slane %v787, 1
      %v790 = vsel %vm658, %v785, %v789
      %v792 = vshrl.u32 %v648, 16
      %v794 = vshll.u32 %v648, 16
      %v796 = vrot.slane %v794, 1
      %v797 = vor.u32 %v792, %v796
      %v799 = vshll.u32 %v649, 16
      %v801 = vrot.slane %v799, 1
      %v802 = vsel %vm658, %v797, %v801
      %v804 = vshrl.u32 %v650, 16
      %v806 = vshll.u32 %v650, 16
      %v808 = vrot.slane %v806, 1
      %v809 = vor.u32 %v804, %v808
      %v811 = vshll.u32 %v651, 16
      %v813 = vrot.slane %v811, 1
      %v814 = vsel %vm658, %v809, %v813
      %v816 = vshrl.u32 %v652, 16
      %v818 = vshll.u32 %v652, 16
      %v820 = vrot.slane %v818, 1
      %v821 = vor.u32 %v816, %v820
      %v823 = vshll.u32 %v653, 16
      %v825 = vrot.slane %v823, 1
      %v826 = vsel %vm658, %v821, %v825
      %v828 = vshrl.u32 %v654, 16
      %v830 = vshll.u32 %v654, 16
      %v832 = vrot.slane %v830, 1
      %v833 = vor.u32 %v828, %v832
      %v835 = vshll.u32 %v655, 16
      %v837 = vrot.slane %v835, 1
      %v838 = vsel %vm658, %v833, %v837
      %v840 = vshrl.u32 %v656, 16
      %v842 = vshll.u32 %v656, 16
      %v844 = vrot.slane %v842, 1
      %v845 = vor.u32 %v840, %v844
      %v847 = vshll.u32 %v657, 16
      %v849 = vrot.slane %v847, 1
      %v850 = vsel %vm658, %v845, %v849
      %851 = vrot.lane.b32.xlu0 %v670, 8
      %v852 = vpop.permute.xlu0 %851
      %853 = vrot.lane.b32.xlu0 %v682, 8
      %v854 = vpop.permute.xlu0 %853
      %855 = vrot.lane.b32.xlu0 %v694, 8
      %v856 = vpop.permute.xlu0 %855
      %857 = vrot.lane.b32.xlu0 %v706, 8
      %v858 = vpop.permute.xlu0 %857
      %859 = vrot.lane.b32.xlu0 %v718, 8
      %v860 = vpop.permute.xlu0 %859
      %861 = vrot.lane.b32.xlu0 %v730, 8
      %v862 = vpop.permute.xlu0 %861
      %863 = vrot.lane.b32.xlu0 %v742, 8
      %v864 = vpop.permute.xlu0 %863
      %865 = vrot.lane.b32.xlu0 %v754, 8
      %v866 = vpop.permute.xlu0 %865
      %867 = vrot.lane.b32.xlu0 %v766, 8
      %v868 = vpop.permute.xlu0 %867
      %869 = vrot.lane.b32.xlu0 %v778, 8
      %v870 = vpop.permute.xlu0 %869
      %871 = vrot.lane.b32.xlu0 %v790, 8
      %v872 = vpop.permute.xlu0 %871
      %873 = vrot.lane.b32.xlu0 %v802, 8
      %v874 = vpop.permute.xlu0 %873
      %875 = vrot.lane.b32.xlu0 %v814, 8
      %v876 = vpop.permute.xlu0 %875
      %877 = vrot.lane.b32.xlu0 %v826, 8
      %v878 = vpop.permute.xlu0 %877
      %879 = vrot.lane.b32.xlu0 %v838, 8
      %v880 = vpop.permute.xlu0 %879
      %881 = vrot.lane.b32.xlu0 %v850, 8
      %v882 = vpop.permute.xlu0 %881
      %vm899 = vcmask 130112
      %900 = vst.msk [vmem:[#allocation2] sm:$0xff] %vm899, %v852
      %901 = vst.msk [vmem:[#allocation2 + $0x8] sm:$0xff] %vm899, %v854
      %902 = vst.msk [vmem:[#allocation2 + $0x10] sm:$0xff] %vm899, %v856
      %903 = vst.msk [vmem:[#allocation2 + $0x18] sm:$0xff] %vm899, %v858
      %904 = vst.msk [vmem:[#allocation2 + $0x20] sm:$0xff] %vm899, %v860
      %905 = vst.msk [vmem:[#allocation2 + $0x28] sm:$0xff] %vm899, %v862
      %906 = vst.msk [vmem:[#allocation2 + $0x30] sm:$0xff] %vm899, %v864
      %907 = vst.msk [vmem:[#allocation2 + $0x38] sm:$0xff] %vm899, %v866
      %908 = vst.msk [vmem:[#allocation2 + $0x40] sm:$0xff] %vm899, %v868
      %909 = vst.msk [vmem:[#allocation2 + $0x48] sm:$0xff] %vm899, %v870
      %910 = vst.msk [vmem:[#allocation2 + $0x50] sm:$0xff] %vm899, %v872
      %911 = vst.msk [vmem:[#allocation2 + $0x58] sm:$0xff] %vm899, %v874
      %912 = vst.msk [vmem:[#allocation2 + $0x60] sm:$0xff] %vm899, %v876
      %913 = vst.msk [vmem:[#allocation2 + $0x68] sm:$0xff] %vm899, %v878
      %914 = vst.msk [vmem:[#allocation2 + $0x70] sm:$0xff] %vm899, %v880
      %915 = vst.msk [vmem:[#allocation2 + $0x78] sm:$0xff] %vm899, %v882
      %v916 = vld [vmem:[%s304] sm:$0xf]
      %v917 = vld [vmem:[%s304 + $0x4] sm:$0xf]
      %v918 = vld [vmem:[%s304 + $0x8] sm:$0x1]
      %v919 = vld [vmem:[%s304 + $0xc] sm:$0xf]
      %v920 = vld [vmem:[%s304 + $0x10] sm:$0xf]
      %v921 = vld [vmem:[%s304 + $0x14] sm:$0x1]
      %v928 = vunpack.c.l.b16 %v916
      %v929 = vunpack.c.l.b16 %v917
      %v930 = vunpack.c.l.b16 %v918
      %v931 = vunpack.c.l.b16 %v919
      %v932 = vunpack.c.l.b16 %v920
      %v933 = vunpack.c.l.b16 %v921
      %v934 = vpack.c.b16 %v929, %v928
      %v935 = vpack.c.b16 %v930, %v930
      %v936 = vpack.c.b16 %v932, %v931
      %v937 = vpack.c.b16 %v933, %v933
      %v939 = vshrl.u32 %v934, 16
      %v941 = vshll.u32 %v934, 16
      %v943 = vrot.slane %v941, 1
      %v944 = vor.u32 %v939, %v943
      %v946 = vshll.u32 %v935, 16
      %v948 = vrot.slane %v946, 1
      %v949 = vsel %vm658, %v944, %v948
      %v951 = vshrl.u32 %v936, 16
      %v953 = vshll.u32 %v936, 16
      %v955 = vrot.slane %v953, 1
      %v956 = vor.u32 %v951, %v955
      %v958 = vshll.u32 %v937, 16
      %v960 = vrot.slane %v958, 1
      %v961 = vsel %vm658, %v956, %v960
      %962 = vrot.lane.b32.xlu0 %v949, 8
      %v963 = vpop.permute.xlu0 %962
      %964 = vrot.lane.b32.xlu0 %v961, 8
      %v965 = vpop.permute.xlu0 %964
      %968 = vst.msk [vmem:[%s479] sm:$0xff] %vm899, %v963
      %969 = vst.msk [vmem:[%s479 + $0x8] sm:$0xff] %vm899, %v965
      %v970 = vld [vmem:[%s286] sm:$0xe]
      %v971 = vld [vmem:[%s286 + $0x4] sm:$0xf]
      %v972 = vld [vmem:[%s286 + $0x8] sm:$0x1]
      %v973 = vld [vmem:[%s286 + $0xc] sm:$0xe]
      %v974 = vld [vmem:[%s286 + $0x10] sm:$0xf]
      %v975 = vld [vmem:[%s286 + $0x14] sm:$0x1]
      %v976 = vld [vmem:[%s286 + $0x18] sm:$0xe]
      %v977 = vld [vmem:[%s286 + $0x1c] sm:$0xf]
      %v978 = vld [vmem:[%s286 + $0x20] sm:$0x1]
      %v979 = vld [vmem:[%s286 + $0x24] sm:$0xe]
      %v980 = vld [vmem:[%s286 + $0x28] sm:$0xf]
      %v981 = vld [vmem:[%s286 + $0x2c] sm:$0x1]
      %v982 = vld [vmem:[%s286 + $0x30] sm:$0xe]
      %v983 = vld [vmem:[%s286 + $0x34] sm:$0xf]
      %v984 = vld [vmem:[%s286 + $0x38] sm:$0x1]
      %v985 = vld [vmem:[%s286 + $0x3c] sm:$0xe]
      %v986 = vld [vmem:[%s286 + $0x40] sm:$0xf]
      %v987 = vld [vmem:[%s286 + $0x44] sm:$0x1]
      %v988 = vld [vmem:[%s286 + $0x48] sm:$0xe]
      %v989 = vld [vmem:[%s286 + $0x4c] sm:$0xf]
      %v990 = vld [vmem:[%s286 + $0x50] sm:$0x1]
      %v991 = vld [vmem:[%s286 + $0x54] sm:$0xe]
      %v992 = vld [vmem:[%s286 + $0x58] sm:$0xf]
      %v993 = vld [vmem:[%s286 + $0x5c] sm:$0x1]
      %v994 = vld [vmem:[%s286 + $0x60] sm:$0xe]
      %v995 = vld [vmem:[%s286 + $0x64] sm:$0xf]
      %v996 = vld [vmem:[%s286 + $0x68] sm:$0x1]
      %v997 = vld [vmem:[%s286 + $0x6c] sm:$0xe]
      %v998 = vld [vmem:[%s286 + $0x70] sm:$0xf]
      %v999 = vld [vmem:[%s286 + $0x74] sm:$0x1]
      %v1000 = vld [vmem:[%s286 + $0x78] sm:$0xe]
      %v1001 = vld [vmem:[%s286 + $0x7c] sm:$0xf]
      %v1002 = vld [vmem:[%s286 + $0x80] sm:$0x1]
      %v1003 = vld [vmem:[%s286 + $0x84] sm:$0xe]
      %v1004 = vld [vmem:[%s286 + $0x88] sm:$0xf]
      %v1005 = vld [vmem:[%s286 + $0x8c] sm:$0x1]
      %v1006 = vld [vmem:[%s286 + $0x90] sm:$0xe]
      %v1007 = vld [vmem:[%s286 + $0x94] sm:$0xf]
      %v1008 = vld [vmem:[%s286 + $0x98] sm:$0x1]
      %v1009 = vld [vmem:[%s286 + $0x9c] sm:$0xe]
      %v1010 = vld [vmem:[%s286 + $0xa0] sm:$0xf]
      %v1011 = vld [vmem:[%s286 + $0xa4] sm:$0x1]
      %v1012 = vld [vmem:[%s286 + $0xa8] sm:$0xe]
      %v1013 = vld [vmem:[%s286 + $0xac] sm:$0xf]
      %v1014 = vld [vmem:[%s286 + $0xb0] sm:$0x1]
      %v1015 = vld [vmem:[%s286 + $0xb4] sm:$0xe]
      %v1016 = vld [vmem:[%s286 + $0xb8] sm:$0xf]
      %v1017 = vld [vmem:[%s286 + $0xbc] sm:$0x1]
      %v1066 = vunpack.c.l.b16 %v970
      %v1067 = vunpack.c.l.b16 %v971
      %v1068 = vunpack.c.l.b16 %v972
      %v1069 = vunpack.c.l.b16 %v973
      %v1070 = vunpack.c.l.b16 %v974
      %v1071 = vunpack.c.l.b16 %v975
      %v1072 = vunpack.c.l.b16 %v976
      %v1073 = vunpack.c.l.b16 %v977
      %v1074 = vunpack.c.l.b16 %v978
      %v1075 = vunpack.c.l.b16 %v979
      %v1076 = vunpack.c.l.b16 %v980
      %v1077 = vunpack.c.l.b16 %v981
      %v1078 = vunpack.c.l.b16 %v982
      %v1079 = vunpack.c.l.b16 %v983
      %v1080 = vunpack.c.l.b16 %v984
      %v1081 = vunpack.c.l.b16 %v985
      %v1082 = vunpack.c.l.b16 %v986
      %v1083 = vunpack.c.l.b16 %v987
      %v1084 = vunpack.c.l.b16 %v988
      %v1085 = vunpack.c.l.b16 %v989
      %v1086 = vunpack.c.l.b16 %v990
      %v1087 = vunpack.c.l.b16 %v991
      %v1088 = vunpack.c.l.b16 %v992
      %v1089 = vunpack.c.l.b16 %v993
      %v1090 = vunpack.c.l.b16 %v994
      %v1091 = vunpack.c.l.b16 %v995
      %v1092 = vunpack.c.l.b16 %v996
      %v1093 = vunpack.c.l.b16 %v997
      %v1094 = vunpack.c.l.b16 %v998
      %v1095 = vunpack.c.l.b16 %v999
      %v1096 = vunpack.c.l.b16 %v1000
      %v1097 = vunpack.c.l.b16 %v1001
      %v1098 = vunpack.c.l.b16 %v1002
      %v1099 = vunpack.c.l.b16 %v1003
      %v1100 = vunpack.c.l.b16 %v1004
      %v1101 = vunpack.c.l.b16 %v1005
      %v1102 = vunpack.c.l.b16 %v1006
      %v1103 = vunpack.c.l.b16 %v1007
      %v1104 = vunpack.c.l.b16 %v1008
      %v1105 = vunpack.c.l.b16 %v1009
      %v1106 = vunpack.c.l.b16 %v1010
      %v1107 = vunpack.c.l.b16 %v1011
      %v1108 = vunpack.c.l.b16 %v1012
      %v1109 = vunpack.c.l.b16 %v1013
      %v1110 = vunpack.c.l.b16 %v1014
      %v1111 = vunpack.c.l.b16 %v1015
      %v1112 = vunpack.c.l.b16 %v1016
      %v1113 = vunpack.c.l.b16 %v1017
      %v1114 = vpack.c.b16 %v1067, %v1066
      %v1115 = vpack.c.b16 %v1068, %v1068
      %v1116 = vpack.c.b16 %v1070, %v1069
      %v1117 = vpack.c.b16 %v1071, %v1071
      %v1118 = vpack.c.b16 %v1073, %v1072
      %v1119 = vpack.c.b16 %v1074, %v1074
      %v1120 = vpack.c.b16 %v1076, %v1075
      %v1121 = vpack.c.b16 %v1077, %v1077
      %v1122 = vpack.c.b16 %v1079, %v1078
      %v1123 = vpack.c.b16 %v1080, %v1080
      %v1124 = vpack.c.b16 %v1082, %v1081
      %v1125 = vpack.c.b16 %v1083, %v1083
      %v1126 = vpack.c.b16 %v1085, %v1084
      %v1127 = vpack.c.b16 %v1086, %v1086
      %v1128 = vpack.c.b16 %v1088, %v1087
      %v1129 = vpack.c.b16 %v1089, %v1089
      %v1130 = vpack.c.b16 %v1091, %v1090
      %v1131 = vpack.c.b16 %v1092, %v1092
      %v1132 = vpack.c.b16 %v1094, %v1093
      %v1133 = vpack.c.b16 %v1095, %v1095
      %v1134 = vpack.c.b16 %v1097, %v1096
      %v1135 = vpack.c.b16 %v1098, %v1098
      %v1136 = vpack.c.b16 %v1100, %v1099
      %v1137 = vpack.c.b16 %v1101, %v1101
      %v1138 = vpack.c.b16 %v1103, %v1102
      %v1139 = vpack.c.b16 %v1104, %v1104
      %v1140 = vpack.c.b16 %v1106, %v1105
      %v1141 = vpack.c.b16 %v1107, %v1107
      %v1142 = vpack.c.b16 %v1109, %v1108
      %v1143 = vpack.c.b16 %v1110, %v1110
      %v1144 = vpack.c.b16 %v1112, %v1111
      %v1145 = vpack.c.b16 %v1113, %v1113
      %vm1146 = vcmask 1046528
      %v1147 = vrot.slane %v1114, 1
      %v1148 = vrot.slane %v1115, 1
      %v1149 = vsel %vm1146, %v1147, %v1148
      %v1150 = vrot.slane %v1116, 1
      %v1151 = vrot.slane %v1117, 1
      %v1152 = vsel %vm1146, %v1150, %v1151
      %v1153 = vrot.slane %v1118, 1
      %v1154 = vrot.slane %v1119, 1
      %v1155 = vsel %vm1146, %v1153, %v1154
      %v1156 = vrot.slane %v1120, 1
      %v1157 = vrot.slane %v1121, 1
      %v1158 = vsel %vm1146, %v1156, %v1157
      %v1159 = vrot.slane %v1122, 1
      %v1160 = vrot.slane %v1123, 1
      %v1161 = vsel %vm1146, %v1159, %v1160
      %v1162 = vrot.slane %v1124, 1
      %v1163 = vrot.slane %v1125, 1
      %v1164 = vsel %vm1146, %v1162, %v1163
      %v1165 = vrot.slane %v1126, 1
      %v1166 = vrot.slane %v1127, 1
      %v1167 = vsel %vm1146, %v1165, %v1166
      %v1168 = vrot.slane %v1128, 1
      %v1169 = vrot.slane %v1129, 1
      %v1170 = vsel %vm1146, %v1168, %v1169
      %v1171 = vrot.slane %v1130, 1
      %v1172 = vrot.slane %v1131, 1
      %v1173 = vsel %vm1146, %v1171, %v1172
      %v1174 = vrot.slane %v1132, 1
      %v1175 = vrot.slane %v1133, 1
      %v1176 = vsel %vm1146, %v1174, %v1175
      %v1177 = vrot.slane %v1134, 1
      %v1178 = vrot.slane %v1135, 1
      %v1179 = vsel %vm1146, %v1177, %v1178
      %v1180 = vrot.slane %v1136, 1
      %v1181 = vrot.slane %v1137, 1
      %v1182 = vsel %vm1146, %v1180, %v1181
      %v1183 = vrot.slane %v1138, 1
      %v1184 = vrot.slane %v1139, 1
      %v1185 = vsel %vm1146, %v1183, %v1184
      %v1186 = vrot.slane %v1140, 1
      %v1187 = vrot.slane %v1141, 1
      %v1188 = vsel %vm1146, %v1186, %v1187
      %v1189 = vrot.slane %v1142, 1
      %v1190 = vrot.slane %v1143, 1
      %v1191 = vsel %vm1146, %v1189, %v1190
      %v1192 = vrot.slane %v1144, 1
      %v1193 = vrot.slane %v1145, 1
      %v1194 = vsel %vm1146, %v1192, %v1193
      %1195 = vrot.lane.b32.xlu0 %v1149, 16
      %v1196 = vpop.permute.xlu0 %1195
      %1197 = vrot.lane.b32.xlu0 %v1152, 16
      %v1198 = vpop.permute.xlu0 %1197
      %1199 = vrot.lane.b32.xlu0 %v1155, 16
      %v1200 = vpop.permute.xlu0 %1199
      %1201 = vrot.lane.b32.xlu0 %v1158, 16
      %v1202 = vpop.permute.xlu0 %1201
      %1203 = vrot.lane.b32.xlu0 %v1161, 16
      %v1204 = vpop.permute.xlu0 %1203
      %1205 = vrot.lane.b32.xlu0 %v1164, 16
      %v1206 = vpop.permute.xlu0 %1205
      %1207 = vrot.lane.b32.xlu0 %v1167, 16
      %v1208 = vpop.permute.xlu0 %1207
      %1209 = vrot.lane.b32.xlu0 %v1170, 16
      %v1210 = vpop.permute.xlu0 %1209
      %1211 = vrot.lane.b32.xlu0 %v1173, 16
      %v1212 = vpop.permute.xlu0 %1211
      %1213 = vrot.lane.b32.xlu0 %v1176, 16
      %v1214 = vpop.permute.xlu0 %1213
      %1215 = vrot.lane.b32.xlu0 %v1179, 16
      %v1216 = vpop.permute.xlu0 %1215
      %1217 = vrot.lane.b32.xlu0 %v1182, 16
      %v1218 = vpop.permute.xlu0 %1217
      %1219 = vrot.lane.b32.xlu0 %v1185, 16
      %v1220 = vpop.permute.xlu0 %1219
      %1221 = vrot.lane.b32.xlu0 %v1188, 16
      %v1222 = vpop.permute.xlu0 %1221
      %1223 = vrot.lane.b32.xlu0 %v1191, 16
      %v1224 = vpop.permute.xlu0 %1223
      %1225 = vrot.lane.b32.xlu0 %v1194, 16
      %v1226 = vpop.permute.xlu0 %1225
      %vm1243 = vcmask 195712
      %1244 = vst.msk [vmem:[#allocation2] sm:$0xff] %vm1243, %v1196
      %1245 = vst.msk [vmem:[#allocation2 + $0x8] sm:$0xff] %vm1243, %v1198
      %1246 = vst.msk [vmem:[#allocation2 + $0x10] sm:$0xff] %vm1243, %v1200
      %1247 = vst.msk [vmem:[#allocation2 + $0x18] sm:$0xff] %vm1243, %v1202
      %1248 = vst.msk [vmem:[#allocation2 + $0x20] sm:$0xff] %vm1243, %v1204
      %1249 = vst.msk [vmem:[#allocation2 + $0x28] sm:$0xff] %vm1243, %v1206
      %1250 = vst.msk [vmem:[#allocation2 + $0x30] sm:$0xff] %vm1243, %v1208
      %1251 = vst.msk [vmem:[#allocation2 + $0x38] sm:$0xff] %vm1243, %v1210
      %1252 = vst.msk [vmem:[#allocation2 + $0x40] sm:$0xff] %vm1243, %v1212
      %1253 = vst.msk [vmem:[#allocation2 + $0x48] sm:$0xff] %vm1243, %v1214
      %1254 = vst.msk [vmem:[#allocation2 + $0x50] sm:$0xff] %vm1243, %v1216
      %1255 = vst.msk [vmem:[#allocation2 + $0x58] sm:$0xff] %vm1243, %v1218
      %1256 = vst.msk [vmem:[#allocation2 + $0x60] sm:$0xff] %vm1243, %v1220
      %1257 = vst.msk [vmem:[#allocation2 + $0x68] sm:$0xff] %vm1243, %v1222
      %1258 = vst.msk [vmem:[#allocation2 + $0x70] sm:$0xff] %vm1243, %v1224
      %1259 = vst.msk [vmem:[#allocation2 + $0x78] sm:$0xff] %vm1243, %v1226
      %v1260 = vld [vmem:[%s304] sm:$0xe]
      %v1261 = vld [vmem:[%s304 + $0x4] sm:$0xf]
      %v1262 = vld [vmem:[%s304 + $0x8] sm:$0x1]
      %v1263 = vld [vmem:[%s304 + $0xc] sm:$0xe]
      %v1264 = vld [vmem:[%s304 + $0x10] sm:$0xf]
      %v1265 = vld [vmem:[%s304 + $0x14] sm:$0x1]
      %v1272 = vunpack.c.l.b16 %v1260
      %v1273 = vunpack.c.l.b16 %v1261
      %v1274 = vunpack.c.l.b16 %v1262
      %v1275 = vunpack.c.l.b16 %v1263
      %v1276 = vunpack.c.l.b16 %v1264
      %v1277 = vunpack.c.l.b16 %v1265
      %v1278 = vpack.c.b16 %v1273, %v1272
      %v1279 = vpack.c.b16 %v1274, %v1274
      %v1280 = vpack.c.b16 %v1276, %v1275
      %v1281 = vpack.c.b16 %v1277, %v1277
      %v1282 = vrot.slane %v1278, 1
      %v1283 = vrot.slane %v1279, 1
      %v1284 = vsel %vm1146, %v1282, %v1283
      %v1285 = vrot.slane %v1280, 1
      %v1286 = vrot.slane %v1281, 1
      %v1287 = vsel %vm1146, %v1285, %v1286
      %1288 = vrot.lane.b32.xlu0 %v1284, 16
      %v1289 = vpop.permute.xlu0 %1288
      %1290 = vrot.lane.b32.xlu0 %v1287, 16
      %v1291 = vpop.permute.xlu0 %1290
      %1294 = vst.msk [vmem:[%s479] sm:$0xff] %vm1243, %v1289
      %1295 = vst.msk [vmem:[%s479 + $0x8] sm:$0xff] %vm1243, %v1291
      %v1296 = vld [vmem:[#allocation2] sm:$0xff]
      %v1297 = vld [vmem:[#allocation2 + $0x8] sm:$0xff]
      %v1298 = vld [vmem:[#allocation2 + $0x10] sm:$0xff]
      %v1299 = vld [vmem:[#allocation2 + $0x18] sm:$0xff]
      %v1300 = vld [vmem:[#allocation2 + $0x20] sm:$0xff]
      %v1301 = vld [vmem:[#allocation2 + $0x28] sm:$0xff]
      %v1302 = vld [vmem:[#allocation2 + $0x30] sm:$0xff]
      %v1303 = vld [vmem:[#allocation2 + $0x38] sm:$0xff]
      %v1304 = vld [vmem:[#allocation2 + $0x40] sm:$0xff]
      %v1305 = vld [vmem:[#allocation2 + $0x48] sm:$0xff]
      %v1306 = vld [vmem:[#allocation2 + $0x50] sm:$0xff]
      %v1307 = vld [vmem:[#allocation2 + $0x58] sm:$0xff]
      %v1308 = vld [vmem:[#allocation2 + $0x60] sm:$0xff]
      %v1309 = vld [vmem:[#allocation2 + $0x68] sm:$0xff]
      %v1310 = vld [vmem:[#allocation2 + $0x70] sm:$0xff]
      %v1311 = vld [vmem:[#allocation2 + $0x78] sm:$0xff]
      %v1312 = vld [vmem:[%s2] sm:$0xf]
      %v1313 = vld [vmem:[%s2 + $0x4] sm:$0xf]
      %v1314 = vld [vmem:[%s2 + $0x8] sm:$0xf]
      %v1318 = vunpack.c.l.b16 %v1312
      %v1319 = vunpack.c.l.b16 %v1313
      %v1320 = vunpack.c.l.b16 %v1314
      %v1321 = vpack.c.b16 %v1319, %v1318
      %v1322 = vpack.c.b16 %v1320, %v1320
      %vm1324 = vcmask 195584
      %v1326 = vsel %vm1324, %v1296, 0
      %v1329 = vsel %vm1324, %v1297, 0
      %v1332 = vsel %vm1324, %v1298, 0
      %v1335 = vsel %vm1324, %v1299, 0
      %v1338 = vsel %vm1324, %v1300, 0
      %v1341 = vsel %vm1324, %v1301, 0
      %v1344 = vsel %vm1324, %v1302, 0
      %v1347 = vsel %vm1324, %v1303, 0
      %v1350 = vsel %vm1324, %v1304, 0
      %v1353 = vsel %vm1324, %v1305, 0
      %v1356 = vsel %vm1324, %v1306, 0
      %v1359 = vsel %vm1324, %v1307, 0
      %v1362 = vsel %vm1324, %v1308, 0
      %v1365 = vsel %vm1324, %v1309, 0
      %v1368 = vsel %vm1324, %v1310, 0
      %v1371 = vsel %vm1324, %v1311, 0
      %vm1373 = vcmask 1043456
      %v1375 = vsel %vm1373, %v1322, 0
      %1377 = vmatprep.subr.bf16.mxu0 0
      %1378 = vmatpush1.bf16.msra.mxu0 %v1321
      %1379 = vmatprep.subr.bf16.mxu0 0
      %1380 = vmatpush1.bf16.msra.mxu0 %v1375
      %1381 = vmatprep.subr.bf16.mxu0 0
      %1382 = vmatpush1.bf16.msra.mxu0 0
      %1383 = vmatprep.subr.bf16.mxu0 0
      %1384 = vmatpush1.bf16.msra.mxu0 0
      %1385 = vmatprep.subr.bf16.mxu0 0
      %1386 = vmatpush1.bf16.msra.mxu0 0
      %1387 = vmatprep.subr.bf16.mxu0 0
      %1388 = vmatpush1.bf16.msra.mxu0 0
      %1389 = vmatprep.subr.bf16.mxu0 0
      %1390 = vmatpush1.bf16.msra.mxu0 0
      %1391 = vmatprep.subr.bf16.mxu0 0
      %1392 = vmatpush1.bf16.msra.mxu0 0
      %1393 = vmatprep.subr.bf16.mxu0 0
      %1394 = vmatpush1.bf16.msra.mxu0 0
      %1395 = vmatprep.subr.bf16.mxu0 0
      %1396 = vmatpush1.bf16.msra.mxu0 0
      %1397 = vmatprep.subr.bf16.mxu0 0
      %1398 = vmatpush1.bf16.msra.mxu0 0
      %1399 = vmatprep.subr.bf16.mxu0 0
      %1400 = vmatpush1.bf16.msra.mxu0 0
      %1401 = vmatprep.subr.bf16.mxu0 0
      %1402 = vmatpush1.bf16.msra.mxu0 0
      %1403 = vmatprep.subr.bf16.mxu0 0
      %1404 = vmatpush1.bf16.msra.mxu0 0
      %1405 = vmatprep.subr.bf16.mxu0 0
      %1406 = vmatpush1.bf16.msra.mxu0 0
      %1407 = vmatprep.subr.bf16.mxu0 0
      %1408 = vmatpush1.bf16.msra.mxu0 0
      %1409 = vmatprep.mubr.bf16.mxu0 0
      %1410 = vmatmul.mubr.bf16.gmra.mrb[0].mxu0 %v1326
      %v1411 = vpop.f32.mrb[0].mxu0
      %v1412 = vadd.f32 0.0, %v1411
      %v1413 = vpop.f32.mrb[0].mxu0
      %v1414 = vpop.f32.mrb[0].mxu0
      %v1415 = vadd.f32 0.0, %v1414
      %v1416 = vpop.f32.mrb[0].mxu0
      %1417 = vmatprep.mubr.bf16.mxu0 0
      %1418 = vmatmul.mubr.bf16.gmra.mrb[0].mxu0 %v1329
      %v1419 = vpop.f32.mrb[0].mxu0
      %v1420 = vadd.f32 0.0, %v1419
      %v1421 = vpop.f32.mrb[0].mxu0
      %v1422 = vpop.f32.mrb[0].mxu0
      %v1423 = vadd.f32 0.0, %v1422
      %v1424 = vpop.f32.mrb[0].mxu0
      %1425 = vmatprep.mubr.bf16.mxu0 0
      %1426 = vmatmul.mubr.bf16.gmra.mrb[0].mxu0 %v1332
      %v1427 = vpop.f32.mrb[0].mxu0
      %v1428 = vadd.f32 0.0, %v1427
      %v1429 = vpop.f32.mrb[0].mxu0
      %v1430 = vpop.f32.mrb[0].mxu0
      %v1431 = vadd.f32 0.0, %v1430
      %v1432 = vpop.f32.mrb[0].mxu0
      %1433 = vmatprep.mubr.bf16.mxu0 0
      %1434 = vmatmul.mubr.bf16.gmra.mrb[0].mxu0 %v1335
      %v1435 = vpop.f32.mrb[0].mxu0
      %v1436 = vadd.f32 0.0, %v1435
      %v1437 = vpop.f32.mrb[0].mxu0
      %v1438 = vpop.f32.mrb[0].mxu0
      %v1439 = vadd.f32 0.0, %v1438
      %v1440 = vpop.f32.mrb[0].mxu0
      %1441 = vmatprep.mubr.bf16.mxu0 0
      %1442 = vmatmul.mubr.bf16.gmra.mrb[0].mxu0 %v1338
      %v1443 = vpop.f32.mrb[0].mxu0
      %v1444 = vadd.f32 0.0, %v1443
      %v1445 = vpop.f32.mrb[0].mxu0
      %v1446 = vpop.f32.mrb[0].mxu0
      %v1447 = vadd.f32 0.0, %v1446
      %v1448 = vpop.f32.mrb[0].mxu0
      %1449 = vmatprep.mubr.bf16.mxu0 0
      %1450 = vmatmul.mubr.bf16.gmra.mrb[0].mxu0 %v1341
      %v1451 = vpop.f32.mrb[0].mxu0
      %v1452 = vadd.f32 0.0, %v1451
      %v1453 = vpop.f32.mrb[0].mxu0
      %v1454 = vpop.f32.mrb[0].mxu0
      %v1455 = vadd.f32 0.0, %v1454
      %v1456 = vpop.f32.mrb[0].mxu0
      %1457 = vmatprep.mubr.bf16.mxu0 0
      %1458 = vmatmul.mubr.bf16.gmra.mrb[0].mxu0 %v1344
      %v1459 = vpop.f32.mrb[0].mxu0
      %v1460 = vadd.f32 0.0, %v1459
      %v1461 = vpop.f32.mrb[0].mxu0
      %v1462 = vpop.f32.mrb[0].mxu0
      %v1463 = vadd.f32 0.0, %v1462
      %v1464 = vpop.f32.mrb[0].mxu0
      %1465 = vmatprep.mubr.bf16.mxu0 0
      %1466 = vmatmul.mubr.bf16.gmra.mrb[0].mxu0 %v1347
      %v1467 = vpop.f32.mrb[0].mxu0
      %v1468 = vadd.f32 0.0, %v1467
      %v1469 = vpop.f32.mrb[0].mxu0
      %v1470 = vpop.f32.mrb[0].mxu0
      %v1471 = vadd.f32 0.0, %v1470
      %v1472 = vpop.f32.mrb[0].mxu0
      %1473 = vmatprep.mubr.bf16.mxu0 0
      %1474 = vmatmul.mubr.bf16.gmra.mrb[0].mxu0 %v1350
      %v1475 = vpop.f32.mrb[0].mxu0
      %v1476 = vadd.f32 0.0, %v1475
      %v1477 = vpop.f32.mrb[0].mxu0
      %v1478 = vpop.f32.mrb[0].mxu0
      %v1479 = vadd.f32 0.0, %v1478
      %v1480 = vpop.f32.mrb[0].mxu0
      %1481 = vmatprep.mubr.bf16.mxu0 0
      %1482 = vmatmul.mubr.bf16.gmra.mrb[0].mxu0 %v1353
      %v1483 = vpop.f32.mrb[0].mxu0
      %v1484 = vadd.f32 0.0, %v1483
      %v1485 = vpop.f32.mrb[0].mxu0
      %v1486 = vpop.f32.mrb[0].mxu0
      %v1487 = vadd.f32 0.0, %v1486
      %v1488 = vpop.f32.mrb[0].mxu0
      %1489 = vmatprep.mubr.bf16.mxu0 0
      %1490 = vmatmul.mubr.bf16.gmra.mrb[0].mxu0 %v1356
      %v1491 = vpop.f32.mrb[0].mxu0
      %v1492 = vadd.f32 0.0, %v1491
      %v1493 = vpop.f32.mrb[0].mxu0
      %v1494 = vpop.f32.mrb[0].mxu0
      %v1495 = vadd.f32 0.0, %v1494
      %v1496 = vpop.f32.mrb[0].mxu0
      %1497 = vmatprep.mubr.bf16.mxu0 0
      %1498 = vmatmul.mubr.bf16.gmra.mrb[0].mxu0 %v1359
      %v1499 = vpop.f32.mrb[0].mxu0
      %v1500 = vadd.f32 0.0, %v1499
      %v1501 = vpop.f32.mrb[0].mxu0
      %v1502 = vpop.f32.mrb[0].mxu0
      %v1503 = vadd.f32 0.0, %v1502
      %v1504 = vpop.f32.mrb[0].mxu0
      %1505 = vmatprep.mubr.bf16.mxu0 0
      %1506 = vmatmul.mubr.bf16.gmra.mrb[0].mxu0 %v1362
      %v1507 = vpop.f32.mrb[0].mxu0
      %v1508 = vadd.f32 0.0, %v1507
      %v1509 = vpop.f32.mrb[0].mxu0
      %v1510 = vpop.f32.mrb[0].mxu0
      %v1511 = vadd.f32 0.0, %v1510
      %v1512 = vpop.f32.mrb[0].mxu0
      %1513 = vmatprep.mubr.bf16.mxu0 0
      %1514 = vmatmul.mubr.bf16.gmra.mrb[0].mxu0 %v1365
      %v1515 = vpop.f32.mrb[0].mxu0
      %v1516 = vadd.f32 0.0, %v1515
      %v1517 = vpop.f32.mrb[0].mxu0
      %v1518 = vpop.f32.mrb[0].mxu0
      %v1519 = vadd.f32 0.0, %v1518
      %v1520 = vpop.f32.mrb[0].mxu0
      %1521 = vmatprep.mubr.bf16.mxu0 0
      %1522 = vmatmul.mubr.bf16.gmra.mrb[0].mxu0 %v1368
      %v1523 = vpop.f32.mrb[0].mxu0
      %v1524 = vadd.f32 0.0, %v1523
      %v1525 = vpop.f32.mrb[0].mxu0
      %v1526 = vpop.f32.mrb[0].mxu0
      %v1527 = vadd.f32 0.0, %v1526
      %v1528 = vpop.f32.mrb[0].mxu0
      %1529 = vmatprep.mubr.bf16.mxu0 0
      %1530 = vmatmul.mubr.bf16.gmra.mrb[0].mxu0 %v1371
      %v1531 = vpop.f32.mrb[0].mxu0
      %v1532 = vadd.f32 0.0, %v1531
      %v1533 = vpop.f32.mrb[0].mxu0
      %v1534 = vpop.f32.mrb[0].mxu0
      %v1535 = vadd.f32 0.0, %v1534
      %v1536 = vpop.f32.mrb[0].mxu0
      %1537 = vdwg.mxu0
      %vm1538 = vcmask 130048
      %1539 = vst.msk [vmem:[#allocation3] sm:$0xff] %vm1538, %v1412
      %1540 = vst.msk [vmem:[#allocation3 + $0x8] sm:$0xff] %vm1538, %v1415
      %1541 = vst.msk [vmem:[#allocation3 + $0x10] sm:$0xff] %vm1538, %v1420
      %1542 = vst.msk [vmem:[#allocation3 + $0x18] sm:$0xff] %vm1538, %v1423
      %1543 = vst.msk [vmem:[#allocation3 + $0x20] sm:$0xff] %vm1538, %v1428
      %1544 = vst.msk [vmem:[#allocation3 + $0x28] sm:$0xff] %vm1538, %v1431
      %1545 = vst.msk [vmem:[#allocation3 + $0x30] sm:$0xff] %vm1538, %v1436
      %1546 = vst.msk [vmem:[#allocation3 + $0x38] sm:$0xff] %vm1538, %v1439
      %1547 = vst.msk [vmem:[#allocation3 + $0x40] sm:$0xff] %vm1538, %v1444
      %1548 = vst.msk [vmem:[#allocation3 + $0x48] sm:$0xff] %vm1538, %v1447
      %1549 = vst.msk [vmem:[#allocation3 + $0x50] sm:$0xff] %vm1538, %v1452
      %1550 = vst.msk [vmem:[#allocation3 + $0x58] sm:$0xff] %vm1538, %v1455
      %1551 = vst.msk [vmem:[#allocation3 + $0x60] sm:$0xff] %vm1538, %v1460
      %1552 = vst.msk [vmem:[#allocation3 + $0x68] sm:$0xff] %vm1538, %v1463
      %1553 = vst.msk [vmem:[#allocation3 + $0x70] sm:$0xff] %vm1538, %v1468
      %1554 = vst.msk [vmem:[#allocation3 + $0x78] sm:$0xff] %vm1538, %v1471
      %1555 = vst.msk [vmem:[#allocation3 + $0x80] sm:$0xff] %vm1538, %v1476
      %1556 = vst.msk [vmem:[#allocation3 + $0x88] sm:$0xff] %vm1538, %v1479
      %1557 = vst.msk [vmem:[#allocation3 + $0x90] sm:$0xff] %vm1538, %v1484
      %1558 = vst.msk [vmem:[#allocation3 + $0x98] sm:$0xff] %vm1538, %v1487
      %1559 = vst.msk [vmem:[#allocation3 + $0xa0] sm:$0xff] %vm1538, %v1492
      %1560 = vst.msk [vmem:[#allocation3 + $0xa8] sm:$0xff] %vm1538, %v1495
      %1561 = vst.msk [vmem:[#allocation3 + $0xb0] sm:$0xff] %vm1538, %v1500
      %1562 = vst.msk [vmem:[#allocation3 + $0xb8] sm:$0xff] %vm1538, %v1503
      %1563 = vst.msk [vmem:[#allocation3 + $0xc0] sm:$0xff] %vm1538, %v1508
      %1564 = vst.msk [vmem:[#allocation3 + $0xc8] sm:$0xff] %vm1538, %v1511
      %1565 = vst.msk [vmem:[#allocation3 + $0xd0] sm:$0xff] %vm1538, %v1516
      %1566 = vst.msk [vmem:[#allocation3 + $0xd8] sm:$0xff] %vm1538, %v1519
      %1567 = vst.msk [vmem:[#allocation3 + $0xe0] sm:$0xff] %vm1538, %v1524
      %1568 = vst.msk [vmem:[#allocation3 + $0xe8] sm:$0xff] %vm1538, %v1527
      %1569 = vst.msk [vmem:[#allocation3 + $0xf0] sm:$0xff] %vm1538, %v1532
      %1570 = vst.msk [vmem:[#allocation3 + $0xf8] sm:$0xff] %vm1538, %v1535
      %s1571 = scalar_lea.vmem [#allocation2], 8
      %v1572 = vld [vmem:[%s1571] sm:$0xff]
      %v1573 = vld [vmem:[%s1571 + $0x8] sm:$0xff]
      %v1574 = vld [vmem:[%s1571 + $0x10] sm:$0xff]
      %v1575 = vld [vmem:[%s1571 + $0x18] sm:$0xff]
      %v1576 = vld [vmem:[%s1571 + $0x20] sm:$0xff]
      %v1577 = vld [vmem:[%s1571 + $0x28] sm:$0xff]
      %v1578 = vld [vmem:[%s1571 + $0x30] sm:$0xff]
      %v1579 = vld [vmem:[%s1571 + $0x38] sm:$0xff]
      %v1580 = vld [vmem:[%s1571 + $0x40] sm:$0xff]
      %v1581 = vld [vmem:[%s1571 + $0x48] sm:$0xff]
      %v1582 = vld [vmem:[%s1571 + $0x50] sm:$0xff]
      %v1583 = vld [vmem:[%s1571 + $0x58] sm:$0xff]
      %v1584 = vld [vmem:[%s1571 + $0x60] sm:$0xff]
      %v1585 = vld [vmem:[%s1571 + $0x68] sm:$0xff]
      %v1586 = vld [vmem:[%s1571 + $0x70] sm:$0xff]
      %v1587 = vld [vmem:[%s1571 + $0x78] sm:$0xff]
      %s1588 = scalar_lea.vmem %s2, 12
      %v1589 = vld [vmem:[%s1588] sm:$0xf]
      %v1590 = vld [vmem:[%s1588 + $0x4] sm:$0xf]
      %v1591 = vld [vmem:[%s1588 + $0x8] sm:$0xf]
      %v1595 = vunpack.c.l.b16 %v1589
      %v1596 = vunpack.c.l.b16 %v1590
      %v1597 = vunpack.c.l.b16 %v1591
      %v1598 = vpack.c.b16 %v1596, %v1595
      %v1599 = vpack.c.b16 %v1597, %v1597
      %v1602 = vsel %vm1324, %v1572, 0
      %v1605 = vsel %vm1324, %v1573, 0
      %v1608 = vsel %vm1324, %v1574, 0
      %v1611 = vsel %vm1324, %v1575, 0
      %v1614 = vsel %vm1324, %v1576, 0
      %v1617 = vsel %vm1324, %v1577, 0
      %v1620 = vsel %vm1324, %v1578, 0
      %v1623 = vsel %vm1324, %v1579, 0
      %v1626 = vsel %vm1324, %v1580, 0
      %v1629 = vsel %vm1324, %v1581, 0
      %v1632 = vsel %vm1324, %v1582, 0
      %v1635 = vsel %vm1324, %v1583, 0
      %v1638 = vsel %vm1324, %v1584, 0
      %v1641 = vsel %vm1324, %v1585, 0
      %v1644 = vsel %vm1324, %v1586, 0
      %v1647 = vsel %vm1324, %v1587, 0
      %v1650 = vsel %vm1373, %v1599, 0
      %1652 = vmatprep.subr.bf16.mxu0 0
      %1653 = vmatpush1.bf16.msra.mxu0 %v1598
      %1654 = vmatprep.subr.bf16.mxu0 0
      %1655 = vmatpush1.bf16.msra.mxu0 %v1650
      %1656 = vmatprep.subr.bf16.mxu0 0
      %1657 = vmatpush1.bf16.msra.mxu0 0
      %1658 = vmatprep.subr.bf16.mxu0 0
      %1659 = vmatpush1.bf16.msra.mxu0 0
      %1660 = vmatprep.subr.bf16.mxu0 0
      %1661 = vmatpush1.bf16.msra.mxu0 0
      %1662 = vmatprep.subr.bf16.mxu0 0
      %1663 = vmatpush1.bf16.msra.mxu0 0
      %1664 = vmatprep.subr.bf16.mxu0 0
      %1665 = vmatpush1.bf16.msra.mxu0 0
      %1666 = vmatprep.subr.bf16.mxu0 0
      %1667 = vmatpush1.bf16.msra.mxu0 0
      %1668 = vmatprep.subr.bf16.mxu0 0
      %1669 = vmatpush1.bf16.msra.mxu0 0
      %1670 = vmatprep.subr.bf16.mxu0 0
      %1671 = vmatpush1.bf16.msra.mxu0 0
      %1672 = vmatprep.subr.bf16.mxu0 0
      %1673 = vmatpush1.bf16.msra.mxu0 0
      %1674 = vmatprep.subr.bf16.mxu0 0
      %1675 = vmatpush1.bf16.msra.mxu0 0
      %1676 = vmatprep.subr.bf16.mxu0 0
      %1677 = vmatpush1.bf16.msra.mxu0 0
      %1678 = vmatprep.subr.bf16.mxu0 0
      %1679 = vmatpush1.bf16.msra.mxu0 0
      %1680 = vmatprep.subr.bf16.mxu0 0
      %1681 = vmatpush1.bf16.msra.mxu0 0
      %1682 = vmatprep.subr.bf16.mxu0 0
      %1683 = vmatpush1.bf16.msra.mxu0 0
      %1684 = vmatprep.mubr.bf16.mxu0 0
      %1685 = vmatmul.mubr.bf16.gmra.mrb[0].mxu0 %v1602
      %v1686 = vpop.f32.mrb[0].mxu0
      %v1687 = vadd.f32 0.0, %v1686
      %v1688 = vpop.f32.mrb[0].mxu0
      %v1689 = vpop.f32.mrb[0].mxu0
      %v1690 = vadd.f32 0.0, %v1689
      %v1691 = vpop.f32.mrb[0].mxu0
      %1692 = vmatprep.mubr.bf16.mxu0 0
      %1693 = vmatmul.mubr.bf16.gmra.mrb[0].mxu0 %v1605
      %v1694 = vpop.f32.mrb[0].mxu0
      %v1695 = vadd.f32 0.0, %v1694
      %v1696 = vpop.f32.mrb[0].mxu0
      %v1697 = vpop.f32.mrb[0].mxu0
      %v1698 = vadd.f32 0.0, %v1697
      %v1699 = vpop.f32.mrb[0].mxu0
      %1700 = vmatprep.mubr.bf16.mxu0 0
      %1701 = vmatmul.mubr.bf16.gmra.mrb[0].mxu0 %v1608
      %v1702 = vpop.f32.mrb[0].mxu0
      %v1703 = vadd.f32 0.0, %v1702
      %v1704 = vpop.f32.mrb[0].mxu0
      %v1705 = vpop.f32.mrb[0].mxu0
      %v1706 = vadd.f32 0.0, %v1705
      %v1707 = vpop.f32.mrb[0].mxu0
      %1708 = vmatprep.mubr.bf16.mxu0 0
      %1709 = vmatmul.mubr.bf16.gmra.mrb[0].mxu0 %v1611
      %v1710 = vpop.f32.mrb[0].mxu0
      %v1711 = vadd.f32 0.0, %v1710
      %v1712 = vpop.f32.mrb[0].mxu0
      %v1713 = vpop.f32.mrb[0].mxu0
      %v1714 = vadd.f32 0.0, %v1713
      %v1715 = vpop.f32.mrb[0].mxu0
      %1716 = vmatprep.mubr.bf16.mxu0 0
      %1717 = vmatmul.mubr.bf16.gmra.mrb[0].mxu0 %v1614
      %v1718 = vpop.f32.mrb[0].mxu0
      %v1719 = vadd.f32 0.0, %v1718
      %v1720 = vpop.f32.mrb[0].mxu0
      %v1721 = vpop.f32.mrb[0].mxu0
      %v1722 = vadd.f32 0.0, %v1721
      %v1723 = vpop.f32.mrb[0].mxu0
      %1724 = vmatprep.mubr.bf16.mxu0 0
      %1725 = vmatmul.mubr.bf16.gmra.mrb[0].mxu0 %v1617
      %v1726 = vpop.f32.mrb[0].mxu0
      %v1727 = vadd.f32 0.0, %v1726
      %v1728 = vpop.f32.mrb[0].mxu0
      %v1729 = vpop.f32.mrb[0].mxu0
      %v1730 = vadd.f32 0.0, %v1729
      %v1731 = vpop.f32.mrb[0].mxu0
      %1732 = vmatprep.mubr.bf16.mxu0 0
      %1733 = vmatmul.mubr.bf16.gmra.mrb[0].mxu0 %v1620
      %v1734 = vpop.f32.mrb[0].mxu0
      %v1735 = vadd.f32 0.0, %v1734
      %v1736 = vpop.f32.mrb[0].mxu0
      %v1737 = vpop.f32.mrb[0].mxu0
      %v1738 = vadd.f32 0.0, %v1737
      %v1739 = vpop.f32.mrb[0].mxu0
      %1740 = vmatprep.mubr.bf16.mxu0 0
      %1741 = vmatmul.mubr.bf16.gmra.mrb[0].mxu0 %v1623
      %v1742 = vpop.f32.mrb[0].mxu0
      %v1743 = vadd.f32 0.0, %v1742
      %v1744 = vpop.f32.mrb[0].mxu0
      %v1745 = vpop.f32.mrb[0].mxu0
      %v1746 = vadd.f32 0.0, %v1745
      %v1747 = vpop.f32.mrb[0].mxu0
      %1748 = vmatprep.mubr.bf16.mxu0 0
      %1749 = vmatmul.mubr.bf16.gmra.mrb[0].mxu0 %v1626
      %v1750 = vpop.f32.mrb[0].mxu0
      %v1751 = vadd.f32 0.0, %v1750
      %v1752 = vpop.f32.mrb[0].mxu0
      %v1753 = vpop.f32.mrb[0].mxu0
      %v1754 = vadd.f32 0.0, %v1753
      %v1755 = vpop.f32.mrb[0].mxu0
      %1756 = vmatprep.mubr.bf16.mxu0 0
      %1757 = vmatmul.mubr.bf16.gmra.mrb[0].mxu0 %v1629
      %v1758 = vpop.f32.mrb[0].mxu0
      %v1759 = vadd.f32 0.0, %v1758
      %v1760 = vpop.f32.mrb[0].mxu0
      %v1761 = vpop.f32.mrb[0].mxu0
      %v1762 = vadd.f32 0.0, %v1761
      %v1763 = vpop.f32.mrb[0].mxu0
      %1764 = vmatprep.mubr.bf16.mxu0 0
      %1765 = vmatmul.mubr.bf16.gmra.mrb[0].mxu0 %v1632
      %v1766 = vpop.f32.mrb[0].mxu0
      %v1767 = vadd.f32 0.0, %v1766
      %v1768 = vpop.f32.mrb[0].mxu0
      %v1769 = vpop.f32.mrb[0].mxu0
      %v1770 = vadd.f32 0.0, %v1769
      %v1771 = vpop.f32.mrb[0].mxu0
      %1772 = vmatprep.mubr.bf16.mxu0 0
      %1773 = vmatmul.mubr.bf16.gmra.mrb[0].mxu0 %v1635
      %v1774 = vpop.f32.mrb[0].mxu0
      %v1775 = vadd.f32 0.0, %v1774
      %v1776 = vpop.f32.mrb[0].mxu0
      %v1777 = vpop.f32.mrb[0].mxu0
      %v1778 = vadd.f32 0.0, %v1777
      %v1779 = vpop.f32.mrb[0].mxu0
      %1780 = vmatprep.mubr.bf16.mxu0 0
      %1781 = vmatmul.mubr.bf16.gmra.mrb[0].mxu0 %v1638
      %v1782 = vpop.f32.mrb[0].mxu0
      %v1783 = vadd.f32 0.0, %v1782
      %v1784 = vpop.f32.mrb[0].mxu0
      %v1785 = vpop.f32.mrb[0].mxu0
      %v1786 = vadd.f32 0.0, %v1785
      %v1787 = vpop.f32.mrb[0].mxu0
      %1788 = vmatprep.mubr.bf16.mxu0 0
      %1789 = vmatmul.mubr.bf16.gmra.mrb[0].mxu0 %v1641
      %v1790 = vpop.f32.mrb[0].mxu0
      %v1791 = vadd.f32 0.0, %v1790
      %v1792 = vpop.f32.mrb[0].mxu0
      %v1793 = vpop.f32.mrb[0].mxu0
      %v1794 = vadd.f32 0.0, %v1793
      %v1795 = vpop.f32.mrb[0].mxu0
      %1796 = vmatprep.mubr.bf16.mxu0 0
      %1797 = vmatmul.mubr.bf16.gmra.mrb[0].mxu0 %v1644
      %v1798 = vpop.f32.mrb[0].mxu0
      %v1799 = vadd.f32 0.0, %v1798
      %v1800 = vpop.f32.mrb[0].mxu0
      %v1801 = vpop.f32.mrb[0].mxu0
      %v1802 = vadd.f32 0.0, %v1801
      %v1803 = vpop.f32.mrb[0].mxu0
      %1804 = vmatprep.mubr.bf16.mxu0 0
      %1805 = vmatmul.mubr.bf16.gmra.mrb[0].mxu0 %v1647
      %v1806 = vpop.f32.mrb[0].mxu0
      %v1807 = vadd.f32 0.0, %v1806
      %v1808 = vpop.f32.mrb[0].mxu0
      %v1809 = vpop.f32.mrb[0].mxu0
      %v1810 = vadd.f32 0.0, %v1809
      %v1811 = vpop.f32.mrb[0].mxu0
      %1812 = vdwg.mxu0
      %v1813 = vld [vmem:[#allocation3] sm:$0xff]
      %v1814 = vld [vmem:[#allocation3 + $0x8] sm:$0xff]
      %v1815 = vld [vmem:[#allocation3 + $0x10] sm:$0xff]
      %v1816 = vld [vmem:[#allocation3 + $0x18] sm:$0xff]
      %v1817 = vld [vmem:[#allocation3 + $0x20] sm:$0xff]
      %v1818 = vld [vmem:[#allocation3 + $0x28] sm:$0xff]
      %v1819 = vld [vmem:[#allocation3 + $0x30] sm:$0xff]
      %v1820 = vld [vmem:[#allocation3 + $0x38] sm:$0xff]
      %v1821 = vld [vmem:[#allocation3 + $0x40] sm:$0xff]
      %v1822 = vld [vmem:[#allocation3 + $0x48] sm:$0xff]
      %v1823 = vld [vmem:[#allocation3 + $0x50] sm:$0xff]
      %v1824 = vld [vmem:[#allocation3 + $0x58] sm:$0xff]
      %v1825 = vld [vmem:[#allocation3 + $0x60] sm:$0xff]
      %v1826 = vld [vmem:[#allocation3 + $0x68] sm:$0xff]
      %v1827 = vld [vmem:[#allocation3 + $0x70] sm:$0xff]
      %v1828 = vld [vmem:[#allocation3 + $0x78] sm:$0xff]
      %v1829 = vld [vmem:[#allocation3 + $0x80] sm:$0xff]
      %v1830 = vld [vmem:[#allocation3 + $0x88] sm:$0xff]
      %v1831 = vld [vmem:[#allocation3 + $0x90] sm:$0xff]
      %v1832 = vld [vmem:[#allocation3 + $0x98] sm:$0xff]
      %v1833 = vld [vmem:[#allocation3 + $0xa0] sm:$0xff]
      %v1834 = vld [vmem:[#allocation3 + $0xa8] sm:$0xff]
      %v1835 = vld [vmem:[#allocation3 + $0xb0] sm:$0xff]
      %v1836 = vld [vmem:[#allocation3 + $0xb8] sm:$0xff]
      %v1837 = vld [vmem:[#allocation3 + $0xc0] sm:$0xff]
      %v1838 = vld [vmem:[#allocation3 + $0xc8] sm:$0xff]
      %v1839 = vld [vmem:[#allocation3 + $0xd0] sm:$0xff]
      %v1840 = vld [vmem:[#allocation3 + $0xd8] sm:$0xff]
      %v1841 = vld [vmem:[#allocation3 + $0xe0] sm:$0xff]
      %v1842 = vld [vmem:[#allocation3 + $0xe8] sm:$0xff]
      %v1843 = vld [vmem:[#allocation3 + $0xf0] sm:$0xff]
      %v1844 = vld [vmem:[#allocation3 + $0xf8] sm:$0xff]
      %v1845 = vadd.f32 %v1813, %v1687
      %v1846 = vadd.f32 %v1814, %v1690
      %v1847 = vadd.f32 %v1815, %v1695
      %v1848 = vadd.f32 %v1816, %v1698
      %v1849 = vadd.f32 %v1817, %v1703
      %v1850 = vadd.f32 %v1818, %v1706
      %v1851 = vadd.f32 %v1819, %v1711
      %v1852 = vadd.f32 %v1820, %v1714
      %v1853 = vadd.f32 %v1821, %v1719
      %v1854 = vadd.f32 %v1822, %v1722
      %v1855 = vadd.f32 %v1823, %v1727
      %v1856 = vadd.f32 %v1824, %v1730
      %v1857 = vadd.f32 %v1825, %v1735
      %v1858 = vadd.f32 %v1826, %v1738
      %v1859 = vadd.f32 %v1827, %v1743
      %v1860 = vadd.f32 %v1828, %v1746
      %v1861 = vadd.f32 %v1829, %v1751
      %v1862 = vadd.f32 %v1830, %v1754
      %v1863 = vadd.f32 %v1831, %v1759
      %v1864 = vadd.f32 %v1832, %v1762
      %v1865 = vadd.f32 %v1833, %v1767
      %v1866 = vadd.f32 %v1834, %v1770
      %v1867 = vadd.f32 %v1835, %v1775
      %v1868 = vadd.f32 %v1836, %v1778
      %v1869 = vadd.f32 %v1837, %v1783
      %v1870 = vadd.f32 %v1838, %v1786
      %v1871 = vadd.f32 %v1839, %v1791
      %v1872 = vadd.f32 %v1840, %v1794
      %v1873 = vadd.f32 %v1841, %v1799
      %v1874 = vadd.f32 %v1842, %v1802
      %v1875 = vadd.f32 %v1843, %v1807
      %v1876 = vadd.f32 %v1844, %v1810
      %1877 = vst.msk [vmem:[#allocation3] sm:$0xff] %vm1538, %v1845
      %1878 = vst.msk [vmem:[#allocation3 + $0x8] sm:$0xff] %vm1538, %v1846
      %1879 = vst.msk [vmem:[#allocation3 + $0x10] sm:$0xff] %vm1538, %v1847
      %1880 = vst.msk [vmem:[#allocation3 + $0x18] sm:$0xff] %vm1538, %v1848
      %1881 = vst.msk [vmem:[#allocation3 + $0x20] sm:$0xff] %vm1538, %v1849
      %1882 = vst.msk [vmem:[#allocation3 + $0x28] sm:$0xff] %vm1538, %v1850
      %1883 = vst.msk [vmem:[#allocation3 + $0x30] sm:$0xff] %vm1538, %v1851
      %1884 = vst.msk [vmem:[#allocation3 + $0x38] sm:$0xff] %vm1538, %v1852
      %1885 = vst.msk [vmem:[#allocation3 + $0x40] sm:$0xff] %vm1538, %v1853
      %1886 = vst.msk [vmem:[#allocation3 + $0x48] sm:$0xff] %vm1538, %v1854
      %1887 = vst.msk [vmem:[#allocation3 + $0x50] sm:$0xff] %vm1538, %v1855
      %1888 = vst.msk [vmem:[#allocation3 + $0x58] sm:$0xff] %vm1538, %v1856
      %1889 = vst.msk [vmem:[#allocation3 + $0x60] sm:$0xff] %vm1538, %v1857
      %1890 = vst.msk [vmem:[#allocation3 + $0x68] sm:$0xff] %vm1538, %v1858
      %1891 = vst.msk [vmem:[#allocation3 + $0x70] sm:$0xff] %vm1538, %v1859
      %1892 = vst.msk [vmem:[#allocation3 + $0x78] sm:$0xff] %vm1538, %v1860
      %1893 = vst.msk [vmem:[#allocation3 + $0x80] sm:$0xff] %vm1538, %v1861
      %1894 = vst.msk [vmem:[#allocation3 + $0x88] sm:$0xff] %vm1538, %v1862
      %1895 = vst.msk [vmem:[#allocation3 + $0x90] sm:$0xff] %vm1538, %v1863
      %1896 = vst.msk [vmem:[#allocation3 + $0x98] sm:$0xff] %vm1538, %v1864
      %1897 = vst.msk [vmem:[#allocation3 + $0xa0] sm:$0xff] %vm1538, %v1865
      %1898 = vst.msk [vmem:[#allocation3 + $0xa8] sm:$0xff] %vm1538, %v1866
      %1899 = vst.msk [vmem:[#allocation3 + $0xb0] sm:$0xff] %vm1538, %v1867
      %1900 = vst.msk [vmem:[#allocation3 + $0xb8] sm:$0xff] %vm1538, %v1868
      %1901 = vst.msk [vmem:[#allocation3 + $0xc0] sm:$0xff] %vm1538, %v1869
      %1902 = vst.msk [vmem:[#allocation3 + $0xc8] sm:$0xff] %vm1538, %v1870
      %1903 = vst.msk [vmem:[#allocation3 + $0xd0] sm:$0xff] %vm1538, %v1871
      %1904 = vst.msk [vmem:[#allocation3 + $0xd8] sm:$0xff] %vm1538, %v1872
      %1905 = vst.msk [vmem:[#allocation3 + $0xe0] sm:$0xff] %vm1538, %v1873
      %1906 = vst.msk [vmem:[#allocation3 + $0xe8] sm:$0xff] %vm1538, %v1874
      %1907 = vst.msk [vmem:[#allocation3 + $0xf0] sm:$0xff] %vm1538, %v1875
      %1908 = vst.msk [vmem:[#allocation3 + $0xf8] sm:$0xff] %vm1538, %v1876
      %s1909 = scalar_lea.vmem [#allocation2], 16
      %v1910 = vld [vmem:[%s1909] sm:$0xff]
      %v1911 = vld [vmem:[%s1909 + $0x8] sm:$0xff]
      %v1912 = vld [vmem:[%s1909 + $0x10] sm:$0xff]
      %v1913 = vld [vmem:[%s1909 + $0x18] sm:$0xff]
      %v1914 = vld [vmem:[%s1909 + $0x20] sm:$0xff]
      %v1915 = vld [vmem:[%s1909 + $0x28] sm:$0xff]
      %v1916 = vld [vmem:[%s1909 + $0x30] sm:$0xff]
      %v1917 = vld [vmem:[%s1909 + $0x38] sm:$0xff]
      %v1918 = vld [vmem:[%s1909 + $0x40] sm:$0xff]
      %v1919 = vld [vmem:[%s1909 + $0x48] sm:$0xff]
      %v1920 = vld [vmem:[%s1909 + $0x50] sm:$0xff]
      %v1921 = vld [vmem:[%s1909 + $0x58] sm:$0xff]
      %v1922 = vld [vmem:[%s1909 + $0x60] sm:$0xff]
      %v1923 = vld [vmem:[%s1909 + $0x68] sm:$0xff]
      %v1924 = vld [vmem:[%s1909 + $0x70] sm:$0xff]
      %v1925 = vld [vmem:[%s1909 + $0x78] sm:$0xff]
      %s1926 = scalar_lea.vmem %s2, 24
      %v1927 = vld [vmem:[%s1926] sm:$0xf]
      %v1928 = vld [vmem:[%s1926 + $0x4] sm:$0xf]
      %v1929 = vld [vmem:[%s1926 + $0x8] sm:$0xf]
      %v1933 = vunpack.c.l.b16 %v1927
      %v1934 = vunpack.c.l.b16 %v1928
      %v1935 = vunpack.c.l.b16 %v1929
      %v1936 = vpack.c.b16 %v1934, %v1933
      %v1937 = vpack.c.b16 %v1935, %v1935
      %v1940 = vsel %vm1324, %v1910, 0
      %v1943 = vsel %vm1324, %v1911, 0
      %v1946 = vsel %vm1324, %v1912, 0
      %v1949 = vsel %vm1324, %v1913, 0
      %v1952 = vsel %vm1324, %v1914, 0
      %v1955 = vsel %vm1324, %v1915, 0
      %v1958 = vsel %vm1324, %v1916, 0
      %v1961 = vsel %vm1324, %v1917, 0
      %v1964 = vsel %vm1324, %v1918, 0
      %v1967 = vsel %vm1324, %v1919, 0
      %v1970 = vsel %vm1324, %v1920, 0
      %v1973 = vsel %vm1324, %v1921, 0
      %v1976 = vsel %vm1324, %v1922, 0
      %v1979 = vsel %vm1324, %v1923, 0
      %v1982 = vsel %vm1324, %v1924, 0
      %v1985 = vsel %vm1324, %v1925, 0
      %v1988 = vsel %vm1373, %v1937, 0
      %1990 = vmatprep.subr.bf16.mxu0 0
      %1991 = vmatpush1.bf16.msra.mxu0 %v1936
      %1992 = vmatprep.subr.bf16.mxu0 0
      %1993 = vmatpush1.bf16.msra.mxu0 %v1988
      %1994 = vmatprep.subr.bf16.mxu0 0
      %1995 = vmatpush1.bf16.msra.mxu0 0
      %1996 = vmatprep.subr.bf16.mxu0 0
      %1997 = vmatpush1.bf16.msra.mxu0 0
      %1998 = vmatprep.subr.bf16.mxu0 0
      %1999 = vmatpush1.bf16.msra.mxu0 0
      %2000 = vmatprep.subr.bf16.mxu0 0
      %2001 = vmatpush1.bf16.msra.mxu0 0
      %2002 = vmatprep.subr.bf16.mxu0 0
      %2003 = vmatpush1.bf16.msra.mxu0 0
      %2004 = vmatprep.subr.bf16.mxu0 0
      %2005 = vmatpush1.bf16.msra.mxu0 0
      %2006 = vmatprep.subr.bf16.mxu0 0
      %2007 = vmatpush1.bf16.msra.mxu0 0
      %2008 = vmatprep.subr.bf16.mxu0 0
      %2009 = vmatpush1.bf16.msra.mxu0 0
      %2010 = vmatprep.subr.bf16.mxu0 0
      %2011 = vmatpush1.bf16.msra.mxu0 0
      %2012 = vmatprep.subr.bf16.mxu0 0
      %2013 = vmatpush1.bf16.msra.mxu0 0
      %2014 = vmatprep.subr.bf16.mxu0 0
      %2015 = vmatpush1.bf16.msra.mxu0 0
      %2016 = vmatprep.subr.bf16.mxu0 0
      %2017 = vmatpush1.bf16.msra.mxu0 0
      %2018 = vmatprep.subr.bf16.mxu0 0
      %2019 = vmatpush1.bf16.msra.mxu0 0
      %2020 = vmatprep.subr.bf16.mxu0 0
      %2021 = vmatpush1.bf16.msra.mxu0 0
      %2022 = vmatprep.mubr.bf16.mxu0 0
      %2023 = vmatmul.mubr.bf16.gmra.mrb[0].mxu0 %v1940
      %v2024 = vpop.f32.mrb[0].mxu0
      %v2025 = vadd.f32 0.0, %v2024
      %v2026 = vpop.f32.mrb[0].mxu0
      %v2027 = vpop.f32.mrb[0].mxu0
      %v2028 = vadd.f32 0.0, %v2027
      %v2029 = vpop.f32.mrb[0].mxu0
      %2030 = vmatprep.mubr.bf16.mxu0 0
      %2031 = vmatmul.mubr.bf16.gmra.mrb[0].mxu0 %v1943
      %v2032 = vpop.f32.mrb[0].mxu0
      %v2033 = vadd.f32 0.0, %v2032
      %v2034 = vpop.f32.mrb[0].mxu0
      %v2035 = vpop.f32.mrb[0].mxu0
      %v2036 = vadd.f32 0.0, %v2035
      %v2037 = vpop.f32.mrb[0].mxu0
      %2038 = vmatprep.mubr.bf16.mxu0 0
      %2039 = vmatmul.mubr.bf16.gmra.mrb[0].mxu0 %v1946
      %v2040 = vpop.f32.mrb[0].mxu0
      %v2041 = vadd.f32 0.0, %v2040
      %v2042 = vpop.f32.mrb[0].mxu0
      %v2043 = vpop.f32.mrb[0].mxu0
      %v2044 = vadd.f32 0.0, %v2043
      %v2045 = vpop.f32.mrb[0].mxu0
      %2046 = vmatprep.mubr.bf16.mxu0 0
      %2047 = vmatmul.mubr.bf16.gmra.mrb[0].mxu0 %v1949
      %v2048 = vpop.f32.mrb[0].mxu0
      %v2049 = vadd.f32 0.0, %v2048
      %v2050 = vpop.f32.mrb[0].mxu0
      %v2051 = vpop.f32.mrb[0].mxu0
      %v2052 = vadd.f32 0.0, %v2051
      %v2053 = vpop.f32.mrb[0].mxu0
      %2054 = vmatprep.mubr.bf16.mxu0 0
      %2055 = vmatmul.mubr.bf16.gmra.mrb[0].mxu0 %v1952
      %v2056 = vpop.f32.mrb[0].mxu0
      %v2057 = vadd.f32 0.0, %v2056
      %v2058 = vpop.f32.mrb[0].mxu0
      %v2059 = vpop.f32.mrb[0].mxu0
      %v2060 = vadd.f32 0.0, %v2059
      %v2061 = vpop.f32.mrb[0].mxu0
      %2062 = vmatprep.mubr.bf16.mxu0 0
      %2063 = vmatmul.mubr.bf16.gmra.mrb[0].mxu0 %v1955
      %v2064 = vpop.f32.mrb[0].mxu0
      %v2065 = vadd.f32 0.0, %v2064
      %v2066 = vpop.f32.mrb[0].mxu0
      %v2067 = vpop.f32.mrb[0].mxu0
      %v2068 = vadd.f32 0.0, %v2067
      %v2069 = vpop.f32.mrb[0].mxu0
      %2070 = vmatprep.mubr.bf16.mxu0 0
      %2071 = vmatmul.mubr.bf16.gmra.mrb[0].mxu0 %v1958
      %v2072 = vpop.f32.mrb[0].mxu0
      %v2073 = vadd.f32 0.0, %v2072
      %v2074 = vpop.f32.mrb[0].mxu0
      %v2075 = vpop.f32.mrb[0].mxu0
      %v2076 = vadd.f32 0.0, %v2075
      %v2077 = vpop.f32.mrb[0].mxu0
      %2078 = vmatprep.mubr.bf16.mxu0 0
      %2079 = vmatmul.mubr.bf16.gmra.mrb[0].mxu0 %v1961
      %v2080 = vpop.f32.mrb[0].mxu0
      %v2081 = vadd.f32 0.0, %v2080
      %v2082 = vpop.f32.mrb[0].mxu0
      %v2083 = vpop.f32.mrb[0].mxu0
      %v2084 = vadd.f32 0.0, %v2083
      %v2085 = vpop.f32.mrb[0].mxu0
      %2086 = vmatprep.mubr.bf16.mxu0 0
      %2087 = vmatmul.mubr.bf16.gmra.mrb[0].mxu0 %v1964
      %v2088 = vpop.f32.mrb[0].mxu0
      %v2089 = vadd.f32 0.0, %v2088
      %v2090 = vpop.f32.mrb[0].mxu0
      %v2091 = vpop.f32.mrb[0].mxu0
      %v2092 = vadd.f32 0.0, %v2091
      %v2093 = vpop.f32.mrb[0].mxu0
      %2094 = vmatprep.mubr.bf16.mxu0 0
      %2095 = vmatmul.mubr.bf16.gmra.mrb[0].mxu0 %v1967
      %v2096 = vpop.f32.mrb[0].mxu0
      %v2097 = vadd.f32 0.0, %v2096
      %v2098 = vpop.f32.mrb[0].mxu0
      %v2099 = vpop.f32.mrb[0].mxu0
      %v2100 = vadd.f32 0.0, %v2099
      %v2101 = vpop.f32.mrb[0].mxu0
      %2102 = vmatprep.mubr.bf16.mxu0 0
      %2103 = vmatmul.mubr.bf16.gmra.mrb[0].mxu0 %v1970
      %v2104 = vpop.f32.mrb[0].mxu0
      %v2105 = vadd.f32 0.0, %v2104
      %v2106 = vpop.f32.mrb[0].mxu0
      %v2107 = vpop.f32.mrb[0].mxu0
      %v2108 = vadd.f32 0.0, %v2107
      %v2109 = vpop.f32.mrb[0].mxu0
      %2110 = vmatprep.mubr.bf16.mxu0 0
      %2111 = vmatmul.mubr.bf16.gmra.mrb[0].mxu0 %v1973
      %v2112 = vpop.f32.mrb[0].mxu0
      %v2113 = vadd.f32 0.0, %v2112
      %v2114 = vpop.f32.mrb[0].mxu0
      %v2115 = vpop.f32.mrb[0].mxu0
      %v2116 = vadd.f32 0.0, %v2115
      %v2117 = vpop.f32.mrb[0].mxu0
      %2118 = vmatprep.mubr.bf16.mxu0 0
      %2119 = vmatmul.mubr.bf16.gmra.mrb[0].mxu0 %v1976
      %v2120 = vpop.f32.mrb[0].mxu0
      %v2121 = vadd.f32 0.0, %v2120
      %v2122 = vpop.f32.mrb[0].mxu0
      %v2123 = vpop.f32.mrb[0].mxu0
      %v2124 = vadd.f32 0.0, %v2123
      %v2125 = vpop.f32.mrb[0].mxu0
      %2126 = vmatprep.mubr.bf16.mxu0 0
      %2127 = vmatmul.mubr.bf16.gmra.mrb[0].mxu0 %v1979
      %v2128 = vpop.f32.mrb[0].mxu0
      %v2129 = vadd.f32 0.0, %v2128
      %v2130 = vpop.f32.mrb[0].mxu0
      %v2131 = vpop.f32.mrb[0].mxu0
      %v2132 = vadd.f32 0.0, %v2131
      %v2133 = vpop.f32.mrb[0].mxu0
      %2134 = vmatprep.mubr.bf16.mxu0 0
      %2135 = vmatmul.mubr.bf16.gmra.mrb[0].mxu0 %v1982
      %v2136 = vpop.f32.mrb[0].mxu0
      %v2137 = vadd.f32 0.0, %v2136
      %v2138 = vpop.f32.mrb[0].mxu0
      %v2139 = vpop.f32.mrb[0].mxu0
      %v2140 = vadd.f32 0.0, %v2139
      %v2141 = vpop.f32.mrb[0].mxu0
      %2142 = vmatprep.mubr.bf16.mxu0 0
      %2143 = vmatmul.mubr.bf16.gmra.mrb[0].mxu0 %v1985
      %v2144 = vpop.f32.mrb[0].mxu0
      %v2145 = vadd.f32 0.0, %v2144
      %v2146 = vpop.f32.mrb[0].mxu0
      %v2147 = vpop.f32.mrb[0].mxu0
      %v2148 = vadd.f32 0.0, %v2147
      %v2149 = vpop.f32.mrb[0].mxu0
      %2150 = vdwg.mxu0
      %v2151 = vld [vmem:[#allocation3] sm:$0xff]
      %v2152 = vld [vmem:[#allocation3 + $0x8] sm:$0xff]
      %v2153 = vld [vmem:[#allocation3 + $0x10] sm:$0xff]
      %v2154 = vld [vmem:[#allocation3 + $0x18] sm:$0xff]
      %v2155 = vld [vmem:[#allocation3 + $0x20] sm:$0xff]
      %v2156 = vld [vmem:[#allocation3 + $0x28] sm:$0xff]
      %v2157 = vld [vmem:[#allocation3 + $0x30] sm:$0xff]
      %v2158 = vld [vmem:[#allocation3 + $0x38] sm:$0xff]
      %v2159 = vld [vmem:[#allocation3 + $0x40] sm:$0xff]
      %v2160 = vld [vmem:[#allocation3 + $0x48] sm:$0xff]
      %v2161 = vld [vmem:[#allocation3 + $0x50] sm:$0xff]
      %v2162 = vld [vmem:[#allocation3 + $0x58] sm:$0xff]
      %v2163 = vld [vmem:[#allocation3 + $0x60] sm:$0xff]
      %v2164 = vld [vmem:[#allocation3 + $0x68] sm:$0xff]
      %v2165 = vld [vmem:[#allocation3 + $0x70] sm:$0xff]
      %v2166 = vld [vmem:[#allocation3 + $0x78] sm:$0xff]
      %v2167 = vld [vmem:[#allocation3 + $0x80] sm:$0xff]
      %v2168 = vld [vmem:[#allocation3 + $0x88] sm:$0xff]
      %v2169 = vld [vmem:[#allocation3 + $0x90] sm:$0xff]
      %v2170 = vld [vmem:[#allocation3 + $0x98] sm:$0xff]
      %v2171 = vld [vmem:[#allocation3 + $0xa0] sm:$0xff]
      %v2172 = vld [vmem:[#allocation3 + $0xa8] sm:$0xff]
      %v2173 = vld [vmem:[#allocation3 + $0xb0] sm:$0xff]
      %v2174 = vld [vmem:[#allocation3 + $0xb8] sm:$0xff]
      %v2175 = vld [vmem:[#allocation3 + $0xc0] sm:$0xff]
      %v2176 = vld [vmem:[#allocation3 + $0xc8] sm:$0xff]
      %v2177 = vld [vmem:[#allocation3 + $0xd0] sm:$0xff]
      %v2178 = vld [vmem:[#allocation3 + $0xd8] sm:$0xff]
      %v2179 = vld [vmem:[#allocation3 + $0xe0] sm:$0xff]
      %v2180 = vld [vmem:[#allocation3 + $0xe8] sm:$0xff]
      %v2181 = vld [vmem:[#allocation3 + $0xf0] sm:$0xff]
      %v2182 = vld [vmem:[#allocation3 + $0xf8] sm:$0xff]
      %v2183 = vadd.f32 %v2151, %v2025
      %v2184 = vadd.f32 %v2152, %v2028
      %v2185 = vadd.f32 %v2153, %v2033
      %v2186 = vadd.f32 %v2154, %v2036
      %v2187 = vadd.f32 %v2155, %v2041
      %v2188 = vadd.f32 %v2156, %v2044
      %v2189 = vadd.f32 %v2157, %v2049
      %v2190 = vadd.f32 %v2158, %v2052
      %v2191 = vadd.f32 %v2159, %v2057
      %v2192 = vadd.f32 %v2160, %v2060
      %v2193 = vadd.f32 %v2161, %v2065
      %v2194 = vadd.f32 %v2162, %v2068
      %v2195 = vadd.f32 %v2163, %v2073
      %v2196 = vadd.f32 %v2164, %v2076
      %v2197 = vadd.f32 %v2165, %v2081
      %v2198 = vadd.f32 %v2166, %v2084
      %v2199 = vadd.f32 %v2167, %v2089
      %v2200 = vadd.f32 %v2168, %v2092
      %v2201 = vadd.f32 %v2169, %v2097
      %v2202 = vadd.f32 %v2170, %v2100
      %v2203 = vadd.f32 %v2171, %v2105
      %v2204 = vadd.f32 %v2172, %v2108
      %v2205 = vadd.f32 %v2173, %v2113
      %v2206 = vadd.f32 %v2174, %v2116
      %v2207 = vadd.f32 %v2175, %v2121
      %v2208 = vadd.f32 %v2176, %v2124
      %v2209 = vadd.f32 %v2177, %v2129
      %v2210 = vadd.f32 %v2178, %v2132
      %v2211 = vadd.f32 %v2179, %v2137
      %v2212 = vadd.f32 %v2180, %v2140
      %v2213 = vadd.f32 %v2181, %v2145
      %v2214 = vadd.f32 %v2182, %v2148
      %2215 = vst.msk [vmem:[#allocation3] sm:$0xff] %vm1538, %v2183
      %2216 = vst.msk [vmem:[#allocation3 + $0x8] sm:$0xff] %vm1538, %v2184
      %2217 = vst.msk [vmem:[#allocation3 + $0x10] sm:$0xff] %vm1538, %v2185
      %2218 = vst.msk [vmem:[#allocation3 + $0x18] sm:$0xff] %vm1538, %v2186
      %2219 = vst.msk [vmem:[#allocation3 + $0x20] sm:$0xff] %vm1538, %v2187
      %2220 = vst.msk [vmem:[#allocation3 + $0x28] sm:$0xff] %vm1538, %v2188
      %2221 = vst.msk [vmem:[#allocation3 + $0x30] sm:$0xff] %vm1538, %v2189
      %2222 = vst.msk [vmem:[#allocation3 + $0x38] sm:$0xff] %vm1538, %v2190
      %2223 = vst.msk [vmem:[#allocation3 + $0x40] sm:$0xff] %vm1538, %v2191
      %2224 = vst.msk [vmem:[#allocation3 + $0x48] sm:$0xff] %vm1538, %v2192
      %2225 = vst.msk [vmem:[#allocation3 + $0x50] sm:$0xff] %vm1538, %v2193
      %2226 = vst.msk [vmem:[#allocation3 + $0x58] sm:$0xff] %vm1538, %v2194
      %2227 = vst.msk [vmem:[#allocation3 + $0x60] sm:$0xff] %vm1538, %v2195
      %2228 = vst.msk [vmem:[#allocation3 + $0x68] sm:$0xff] %vm1538, %v2196
      %2229 = vst.msk [vmem:[#allocation3 + $0x70] sm:$0xff] %vm1538, %v2197
      %2230 = vst.msk [vmem:[#allocation3 + $0x78] sm:$0xff] %vm1538, %v2198
      %2231 = vst.msk [vmem:[#allocation3 + $0x80] sm:$0xff] %vm1538, %v2199
      %2232 = vst.msk [vmem:[#allocation3 + $0x88] sm:$0xff] %vm1538, %v2200
      %2233 = vst.msk [vmem:[#allocation3 + $0x90] sm:$0xff] %vm1538, %v2201
      %2234 = vst.msk [vmem:[#allocation3 + $0x98] sm:$0xff] %vm1538, %v2202
      %2235 = vst.msk [vmem:[#allocation3 + $0xa0] sm:$0xff] %vm1538, %v2203
      %2236 = vst.msk [vmem:[#allocation3 + $0xa8] sm:$0xff] %vm1538, %v2204
      %2237 = vst.msk [vmem:[#allocation3 + $0xb0] sm:$0xff] %vm1538, %v2205
      %2238 = vst.msk [vmem:[#allocation3 + $0xb8] sm:$0xff] %vm1538, %v2206
      %2239 = vst.msk [vmem:[#allocation3 + $0xc0] sm:$0xff] %vm1538, %v2207
      %2240 = vst.msk [vmem:[#allocation3 + $0xc8] sm:$0xff] %vm1538, %v2208
      %2241 = vst.msk [vmem:[#allocation3 + $0xd0] sm:$0xff] %vm1538, %v2209
      %2242 = vst.msk [vmem:[#allocation3 + $0xd8] sm:$0xff] %vm1538, %v2210
      %2243 = vst.msk [vmem:[#allocation3 + $0xe0] sm:$0xff] %vm1538, %v2211
      %2244 = vst.msk [vmem:[#allocation3 + $0xe8] sm:$0xff] %vm1538, %v2212
      %2245 = vst.msk [vmem:[#allocation3 + $0xf0] sm:$0xff] %vm1538, %v2213
      %2246 = vst.msk [vmem:[#allocation3 + $0xf8] sm:$0xff] %vm1538, %v2214
      %v2247 = vld [vmem:[#allocation3] sm:$0xff]
      %v2248 = vld [vmem:[#allocation3 + $0x8] sm:$0xff]
      %v2249 = vld [vmem:[#allocation3 + $0x10] sm:$0xff]
      %v2250 = vld [vmem:[#allocation3 + $0x18] sm:$0xff]
      %v2251 = vld [vmem:[#allocation3 + $0x20] sm:$0xff]
      %v2252 = vld [vmem:[#allocation3 + $0x28] sm:$0xff]
      %v2253 = vld [vmem:[#allocation3 + $0x30] sm:$0xff]
      %v2254 = vld [vmem:[#allocation3 + $0x38] sm:$0xff]
      %v2255 = vld [vmem:[#allocation3 + $0x40] sm:$0xff]
      %v2256 = vld [vmem:[#allocation3 + $0x48] sm:$0xff]
      %v2257 = vld [vmem:[#allocation3 + $0x50] sm:$0xff]
      %v2258 = vld [vmem:[#allocation3 + $0x58] sm:$0xff]
      %v2259 = vld [vmem:[#allocation3 + $0x60] sm:$0xff]
      %v2260 = vld [vmem:[#allocation3 + $0x68] sm:$0xff]
      %v2261 = vld [vmem:[#allocation3 + $0x70] sm:$0xff]
      %v2262 = vld [vmem:[#allocation3 + $0x78] sm:$0xff]
      %v2263 = vld [vmem:[#allocation3 + $0x80] sm:$0xff]
      %v2264 = vld [vmem:[#allocation3 + $0x88] sm:$0xff]
      %v2265 = vld [vmem:[#allocation3 + $0x90] sm:$0xff]
      %v2266 = vld [vmem:[#allocation3 + $0x98] sm:$0xff]
      %v2267 = vld [vmem:[#allocation3 + $0xa0] sm:$0xff]
      %v2268 = vld [vmem:[#allocation3 + $0xa8] sm:$0xff]
      %v2269 = vld [vmem:[#allocation3 + $0xb0] sm:$0xff]
      %v2270 = vld [vmem:[#allocation3 + $0xb8] sm:$0xff]
      %v2271 = vld [vmem:[#allocation3 + $0xc0] sm:$0xff]
      %v2272 = vld [vmem:[#allocation3 + $0xc8] sm:$0xff]
      %v2273 = vld [vmem:[#allocation3 + $0xd0] sm:$0xff]
      %v2274 = vld [vmem:[#allocation3 + $0xd8] sm:$0xff]
      %v2275 = vld [vmem:[#allocation3 + $0xe0] sm:$0xff]
      %v2276 = vld [vmem:[#allocation3 + $0xe8] sm:$0xff]
      %v2277 = vld [vmem:[#allocation3 + $0xf0] sm:$0xff]
      %v2278 = vld [vmem:[#allocation3 + $0xf8] sm:$0xff]
      %v2279 = vld [vmem:[%s3] sm:$0x1]
      %v2281 = vlaneseq
      %v2282 = vshrl.u32 %v2281, 7
      %v2283 = vsub.s32 0, %v2282
      %v2284 = vrot.slane %v2279, %v2283
      %v2286 = vadd.f32 %v2247, %v2284
      %v2287 = vadd.f32 %v2248, %v2284
      %v2288 = vadd.f32 %v2249, %v2284
      %v2289 = vadd.f32 %v2250, %v2284
      %v2290 = vadd.f32 %v2251, %v2284
      %v2291 = vadd.f32 %v2252, %v2284
      %v2292 = vadd.f32 %v2253, %v2284
      %v2293 = vadd.f32 %v2254, %v2284
      %v2294 = vadd.f32 %v2255, %v2284
      %v2295 = vadd.f32 %v2256, %v2284
      %v2296 = vadd.f32 %v2257, %v2284
      %v2297 = vadd.f32 %v2258, %v2284
      %v2298 = vadd.f32 %v2259, %v2284
      %v2299 = vadd.f32 %v2260, %v2284
      %v2300 = vadd.f32 %v2261, %v2284
      %v2301 = vadd.f32 %v2262, %v2284
      %v2302 = vadd.f32 %v2263, %v2284
      %v2303 = vadd.f32 %v2264, %v2284
      %v2304 = vadd.f32 %v2265, %v2284
      %v2305 = vadd.f32 %v2266, %v2284
      %v2306 = vadd.f32 %v2267, %v2284
      %v2307 = vadd.f32 %v2268, %v2284
      %v2308 = vadd.f32 %v2269, %v2284
      %v2309 = vadd.f32 %v2270, %v2284
      %v2310 = vadd.f32 %v2271, %v2284
      %v2311 = vadd.f32 %v2272, %v2284
      %v2312 = vadd.f32 %v2273, %v2284
      %v2313 = vadd.f32 %v2274, %v2284
      %v2314 = vadd.f32 %v2275, %v2284
      %v2315 = vadd.f32 %v2276, %v2284
      %v2316 = vadd.f32 %v2277, %v2284
      %v2317 = vadd.f32 %v2278, %v2284
      %v2318 = vmax.f32 %v2286, 0.0
      %v2319 = vmax.f32 %v2287, 0.0
      %v2320 = vmax.f32 %v2288, 0.0
      %v2321 = vmax.f32 %v2289, 0.0
      %v2322 = vmax.f32 %v2290, 0.0
      %v2323 = vmax.f32 %v2291, 0.0
      %v2324 = vmax.f32 %v2292, 0.0
      %v2325 = vmax.f32 %v2293, 0.0
      %v2326 = vmax.f32 %v2294, 0.0
      %v2327 = vmax.f32 %v2295, 0.0
      %v2328 = vmax.f32 %v2296, 0.0
      %v2329 = vmax.f32 %v2297, 0.0
      %v2330 = vmax.f32 %v2298, 0.0
      %v2331 = vmax.f32 %v2299, 0.0
      %v2332 = vmax.f32 %v2300, 0.0
      %v2333 = vmax.f32 %v2301, 0.0
      %v2334 = vmax.f32 %v2302, 0.0
      %v2335 = vmax.f32 %v2303, 0.0
      %v2336 = vmax.f32 %v2304, 0.0
      %v2337 = vmax.f32 %v2305, 0.0
      %v2338 = vmax.f32 %v2306, 0.0
      %v2339 = vmax.f32 %v2307, 0.0
      %v2340 = vmax.f32 %v2308, 0.0
      %v2341 = vmax.f32 %v2309, 0.0
      %v2342 = vmax.f32 %v2310, 0.0
      %v2343 = vmax.f32 %v2311, 0.0
      %v2344 = vmax.f32 %v2312, 0.0
      %v2345 = vmax.f32 %v2313, 0.0
      %v2346 = vmax.f32 %v2314, 0.0
      %v2347 = vmax.f32 %v2315, 0.0
      %v2348 = vmax.f32 %v2316, 0.0
      %v2349 = vmax.f32 %v2317, 0.0
      %v2350 = vmax.f32 %v2318, %v2320
      %v2351 = vmax.f32 %v2319, %v2321
      %v2352 = vmax.f32 %v2322, %v2324
      %v2353 = vmax.f32 %v2323, %v2325
      %v2354 = vmax.f32 %v2326, %v2328
      %v2355 = vmax.f32 %v2327, %v2329
      %v2356 = vmax.f32 %v2330, %v2332
      %v2357 = vmax.f32 %v2331, %v2333
      %v2358 = vmax.f32 %v2334, %v2336
      %v2359 = vmax.f32 %v2335, %v2337
      %v2360 = vmax.f32 %v2338, %v2340
      %v2361 = vmax.f32 %v2339, %v2341
      %v2362 = vmax.f32 %v2342, %v2344
      %v2363 = vmax.f32 %v2343, %v2345
      %v2364 = vmax.f32 %v2346, %v2348
      %v2365 = vmax.f32 %v2347, %v2349
      %2366 = vst.msk [vmem:[#allocation3] sm:$0xff] %vm1538, %v2350
      %2367 = vst.msk [vmem:[#allocation3 + $0x8] sm:$0xff] %vm1538, %v2351
      %2368 = vst.msk [vmem:[#allocation3 + $0x10] sm:$0xff] %vm1538, %v2352
      %2369 = vst.msk [vmem:[#allocation3 + $0x18] sm:$0xff] %vm1538, %v2353
      %2370 = vst.msk [vmem:[#allocation3 + $0x20] sm:$0xff] %vm1538, %v2354
      %2371 = vst.msk [vmem:[#allocation3 + $0x28] sm:$0xff] %vm1538, %v2355
      %2372 = vst.msk [vmem:[#allocation3 + $0x30] sm:$0xff] %vm1538, %v2356
      %2373 = vst.msk [vmem:[#allocation3 + $0x38] sm:$0xff] %vm1538, %v2357
      %2374 = vst.msk [vmem:[#allocation3 + $0x40] sm:$0xff] %vm1538, %v2358
      %2375 = vst.msk [vmem:[#allocation3 + $0x48] sm:$0xff] %vm1538, %v2359
      %2376 = vst.msk [vmem:[#allocation3 + $0x50] sm:$0xff] %vm1538, %v2360
      %2377 = vst.msk [vmem:[#allocation3 + $0x58] sm:$0xff] %vm1538, %v2361
      %2378 = vst.msk [vmem:[#allocation3 + $0x60] sm:$0xff] %vm1538, %v2362
      %2379 = vst.msk [vmem:[#allocation3 + $0x68] sm:$0xff] %vm1538, %v2363
      %2380 = vst.msk [vmem:[#allocation3 + $0x70] sm:$0xff] %vm1538, %v2364
      %2381 = vst.msk [vmem:[#allocation3 + $0x78] sm:$0xff] %vm1538, %v2365
      %v2382 = vld [vmem:[#allocation3] ss:$2 sm:$0xff]
      %s2383 = scalar_lea.vmem [#allocation3], 16
      %v2384 = vld [vmem:[%s2383] ss:$2 sm:$0xff]
      %s2385 = scalar_lea.vmem [#allocation3], 32
      %v2386 = vld [vmem:[%s2385] ss:$2 sm:$0xff]
      %s2387 = scalar_lea.vmem [#allocation3], 48
      %v2388 = vld [vmem:[%s2387] ss:$2 sm:$0xff]
      %s2389 = scalar_lea.vmem [#allocation3], 64
      %v2390 = vld [vmem:[%s2389] ss:$2 sm:$0xff]
      %s2391 = scalar_lea.vmem [#allocation3], 80
      %v2392 = vld [vmem:[%s2391] ss:$2 sm:$0xff]
      %s2393 = scalar_lea.vmem [#allocation3], 96
      %v2394 = vld [vmem:[%s2393] ss:$2 sm:$0xff]
      %s2395 = scalar_lea.vmem [#allocation3], 112
      %v2396 = vld [vmem:[%s2395] ss:$2 sm:$0xff]
      %s2397 = scalar_lea.vmem [#allocation3], 1
      %v2398 = vld [vmem:[%s2397] ss:$2 sm:$0xff]
      %s2399 = scalar_lea.vmem [#allocation3], 17
      %v2400 = vld [vmem:[%s2399] ss:$2 sm:$0xff]
      %s2401 = scalar_lea.vmem [#allocation3], 33
      %v2402 = vld [vmem:[%s2401] ss:$2 sm:$0xff]
      %s2403 = scalar_lea.vmem [#allocation3], 49
      %v2404 = vld [vmem:[%s2403] ss:$2 sm:$0xff]
      %s2405 = scalar_lea.vmem [#allocation3], 65
      %v2406 = vld [vmem:[%s2405] ss:$2 sm:$0xff]
      %s2407 = scalar_lea.vmem [#allocation3], 81
      %v2408 = vld [vmem:[%s2407] ss:$2 sm:$0xff]
      %s2409 = scalar_lea.vmem [#allocation3], 97
      %v2410 = vld [vmem:[%s2409] ss:$2 sm:$0xff]
      %s2411 = scalar_lea.vmem [#allocation3], 113
      %v2412 = vld [vmem:[%s2411] ss:$2 sm:$0xff]
      %v2413 = vmax.f32 %v2382, %v2398
      %v2414 = vmax.f32 %v2384, %v2400
      %v2415 = vmax.f32 %v2386, %v2402
      %v2416 = vmax.f32 %v2388, %v2404
      %v2417 = vmax.f32 %v2390, %v2406
      %v2418 = vmax.f32 %v2392, %v2408
      %v2419 = vmax.f32 %v2394, %v2410
      %v2420 = vmax.f32 %v2396, %v2412
      %v2421 = vpack.c.bf16 %v2414, %v2413
      %v2422 = vpack.c.bf16 %v2416, %v2415
      %v2423 = vpack.c.bf16 %v2418, %v2417
      %v2424 = vpack.c.bf16 %v2420, %v2419
      %v2429 = vunpack.c.l.b16 %v2421
      %v2430 = vunpack.c.h.b16 %v2421
      %v2431 = vunpack.c.l.b16 %v2422
      %v2432 = vunpack.c.h.b16 %v2422
      %v2433 = vunpack.c.l.b16 %v2423
      %v2434 = vunpack.c.h.b16 %v2423
      %v2435 = vunpack.c.l.b16 %v2424
      %v2436 = vunpack.c.h.b16 %v2424
      %v2437 = vpack.c.b16 %v2429, %v2429
      %v2438 = vpack.c.b16 %v2430, %v2430
      %v2439 = vpack.c.b16 %v2431, %v2431
      %v2440 = vpack.c.b16 %v2432, %v2432
      %v2441 = vpack.c.b16 %v2433, %v2433
      %v2442 = vpack.c.b16 %v2434, %v2434
      %v2443 = vpack.c.b16 %v2435, %v2435
      %v2444 = vpack.c.b16 %v2436, %v2436
      %vm2453 = vcmask 125952
      %2454 = vst.msk [vmem:[%s316] sm:$0xf] %vm2453, %v2437
      %2455 = vst.msk [vmem:[%s316 + $0x4] sm:$0xf] %vm2453, %v2438
      %2456 = vst.msk [vmem:[%s316 + $0x8] sm:$0xf] %vm2453, %v2439
      %2457 = vst.msk [vmem:[%s316 + $0xc] sm:$0xf] %vm2453, %v2440
      %2458 = vst.msk [vmem:[%s316 + $0x10] sm:$0xf] %vm2453, %v2441
      %2459 = vst.msk [vmem:[%s316 + $0x14] sm:$0xf] %vm2453, %v2442
      %2460 = vst.msk [vmem:[%s316 + $0x18] sm:$0xf] %vm2453, %v2443
      %2461 = vst.msk [vmem:[%s316 + $0x1c] sm:$0xf] %vm2453, %v2444
      %p2462 = scmp.lt.s32.totalorder %s19, 1
      %s2463 = scalar_select %p2462, %s19, 1
      %p2464 = scmp.lt.s32.totalorder %s20, 0
      %s2465 = scalar_select %p2464, %s20, 0
      %s2466 = smul.addr %s2465, 8
      %s2467 = smul.addr %s2463, 8
      %s2468 = sadd.s32 %s2466, %s2467
      %s2469 = smul.addr %s2468, 4
      %s2470 = scalar_lea.vmem %s4, %s2469
      // Predicated region
      $region37: #{edge_detection_encoder.6} parent=35 // pred_check
        %p2471 = pneg %p149
      $region38: #{edge_detection_encoder.6} parent=35 // pred_check_branch
        %2473 = sbr.rel (%p2471) target = $region40
      $region39: #{edge_detection_encoder.6} parent=35 // pred_region
        _
      $region40: #{edge_detection_encoder.6} parent=35 // pred_fallthru
        _
    $region36: #{edge_detection_encoder.6} parent=5 // pred_fallthru
      _
    %p2474 = scmp.le.s32.totalorder 2, %s10
    // Predicated region
    $region41: #{edge_detection_encoder.6} parent=5 // pred_check
      %p2475 = pneg %p2474
    $region42: #{edge_detection_encoder.6} parent=5 // pred_check_branch
      %2477 = sbr.rel (%p2475) target = $region44
    $region43: #{edge_detection_encoder.6} parent=5 // pred_region
      %s2478 = ssub.s32 %s10, 2
      // Predicated region
      $region45: #{edge_detection_encoder.6} parent=43 // pred_check
        %p2479 = pneg %p155
      $region46: #{edge_detection_encoder.6} parent=43 // pred_check_branch
        %2481 = sbr.rel (%p2479) target = $region48
      $region47: #{edge_detection_encoder.6} parent=43 // pred_region
        %p2482 = scmp.lt.s32.totalorder %s21, 1
        %s2483 = scalar_select %p2482, %s21, 1
        %p2484 = scmp.lt.s32.totalorder %s22, 0
        %s2485 = scalar_select %p2484, %s22, 0
        %s2486 = smul.addr %s2485, 8
        %s2487 = smul.addr %s2483, 8
        %s2488 = sadd.s32 %s2486, %s2487
        %s2489 = smul.addr %s2488, 4
        %s2490 = scalar_lea.vmem %s4, %s2489
      $region48: #{edge_detection_encoder.6} parent=43 // pred_fallthru
        _
    $region44: #{edge_detection_encoder.6} parent=5 // pred_fallthru
      _
  $region6: #{edge_detection_encoder.6} parent=0 // loop_footer
    %s14 = sadd.s32 1, %s10
  $region7: #{edge_detection_encoder.6} parent=0 // loop_footer_branch
    %9 = sbr.rel target = $region3
  $region8: #{edge_detection_encoder.6} parent=0 // loop_exit
    _

// kernel: tile.18
$region0: #{tile.18}
  #allocation0 [shape = 's32[1]{0}', space=sflag, size = 0x4, scoped, tag = 'scoped memory for tile.18']
  %s0 = inlined_call_operand.vmem [shape: f32[16], index: 0, kind: input, shape index: {}]
  %s1 = inlined_call_operand.vmem [shape: f32[4,16], index: 1, kind: output, shape index: {}]
  // Predicated region
  $region2: #{tile.18} parent=0 // pred_check
    _
  $region3: #{tile.18} parent=0 // pred_check_branch
    %3 = sbr.rel (0) target = $region5
  $region4: #{tile.18} parent=0 // pred_region
    _
  $region5: #{tile.18} parent=0 // pred_fallthru
    _
  %v4 = vld [vmem:[%s0] ss:$0 sm:$0xff]
  %5 = vst [vmem:[%s1] sm:$0xf] %v4

// kernel: tile.19
$region0: #{tile.19}
  %s0 = inlined_call_operand.vmem [shape: f32[4,16], index: 0, kind: input, shape index: {}]
  %s1 = inlined_call_operand.vmem [shape: f32[1,64], index: 1, kind: output, shape index: {}]
  $region1: #{tile.19} parent=0
    #allocation0 [shape = 'u8[4096]{0}', space=vmem, size = 0x1000, scoped, tag = 'scoped mem for output reshape']
    #allocation1 [shape = 'u8[4096]{0}', space=vmem, size = 0x1000, scoped, tag = 'scoped mem for input reshape']
    %s3 = sshllo.u32 0, 4
    %v4 = vld [vmem:[%s0] sm:%s3]
    %5 = vst [vmem:[#allocation1] sm:%s3] %v4
    %v6 = vld [vmem:[#allocation1] sm:$0x1]
    %vm7 = vcmask 130048
    %8 = vst.msk [vmem:[#allocation0] sm:$0x1] %vm7, %v6
    %s9 = scalar_lea.vmem [#allocation1], 3
    %v10 = vld [vmem:[%s9] sm:$0x1]
    %11 = vrot.lane.b32.xlu0 %v10, 48
    %v12 = vpop.permute.xlu0 %11
    %vm13 = vcmask 523648
    %14 = vst.msk [vmem:[#allocation0] sm:$0x1] %vm13, %v12
    %s15 = scalar_lea.vmem [#allocation1], 2
    %v16 = vld [vmem:[%s15] sm:$0x1]
    %17 = vrot.lane.b32.xlu0 %v16, 32
    %v18 = vpop.permute.xlu0 %17
    %vm19 = vcmask 392448
    %20 = vst.msk [vmem:[#allocation0] sm:$0x1] %vm19, %v18
    %s21 = scalar_lea.vmem [#allocation1], 1
    %v22 = vld [vmem:[%s21] sm:$0x1]
    %23 = vrot.lane.b32.xlu0 %v22, 16
    %v24 = vpop.permute.xlu0 %23
    %vm25 = vcmask 261248
    %26 = vst.msk [vmem:[#allocation0] sm:$0x1] %vm25, %v24
    %s28 = sshllo.u32 0, 1
    %v30 = vld [vmem:[#allocation0] sm:%s28]
    %s31 = sshllo.u32 0, 1
    %32 = vst [vmem:[%s1] sm:%s31] %v30

// kernel: edge_detection_encoder.9
$region0: #{edge_detection_encoder.9}
  #allocation0 [shape = 'u32[]', space=smem, size = 0x4, offset = 0x4, fixed_abs, tag = 'smem constant byte address 0x4 - core index']
  #allocation1 [shape = 'u32[144,128]{1,0:T(1,128)}', space=vmem, size = 0x12000, scoped, tag = 'internal scratch']
  #allocation2 [shape = 'bf16[9,8,128]{2,1,0:T(8,128)(2,1)}', space=vmem, size = 0x4800, scoped, tag = 'scratch operand']
  #allocation3 [shape = 'f32[64,128]{1,0:T(8,128)}', space=vmem, size = 0x8000, scoped, tag = 'scratch operand']
  %s0 = inlined_call_operand.vmem [shape: bf16[2,16,16,64], index: 0, kind: input, shape index: {}, may-alias: {0,1}]
  %s1 = inlined_call_operand.vmem [shape: bf16[2,16,16,64], index: 1, kind: input, shape index: {}, may-alias: {0,1}]
  %s2 = inlined_call_operand.vmem [shape: bf16[2,128,128], index: 2, kind: input, shape index: {}]
  %s3 = inlined_call_operand.vmem [shape: f32[1,128], index: 3, kind: input, shape index: {}]
  %s4 = inlined_call_operand.vmem [shape: bf16[2,1,64,128], index: 4, kind: output, shape index: {}]
  %s5 = sld [smem:[#allocation0]]
  $region49: #{edge_detection_encoder.9} parent=0
    _
  %s7 = ssub.s32 1, %s5
  %s8 = scalar_select 0, %s7, %s5
  loop: start=0, step=1, limit=4
  $region2: #{edge_detection_encoder.9} parent=0 // loop_pre_header
    _
  $region3: #{edge_detection_encoder.9} parent=0 // loop_header
    %s10 = sphi 0, %s14
    %p11 = scmp.ge.s32.totalorder %s10, 4
    %s17 = sphi 0, %s29
    %s18 = sphi 0, %s25
    %s19 = sphi 0, %s17
    %s20 = sphi 0, %s18
    %s21 = sphi 0, %s19
    %s22 = sphi 0, %s20
    %s34 = sphi 0, %s36
    %s37 = sphi 0, %s34
    %s38 = sphi 0, %s37
    %s54 = sphi 0, %s38
    %s64 = sphi 0, %s66
    %s67 = sphi 0, %s64
    %s68 = sphi 0, %s67
    %s84 = sphi 0, %s68
    %s88 = sphi 0, %s88
    %s90 = sphi 0, %s88
    %s91 = sphi 0, %s90
    %s105 = sphi 0, %s91
    %s109 = sphi 0, %s109
    %s111 = sphi 0, %s109
    %s112 = sphi 0, %s111
    %s126 = sphi 0, %s112
    %s134 = sphi 0, %s136
    %s137 = sphi 0, %s134
    %s138 = sphi 0, %s137
    %s154 = sphi 0, %s138
  $region4: #{edge_detection_encoder.9} parent=0 // loop_header_branch
    %13 = sbr.rel (%p11) target = $region8
  $region5: #{edge_detection_encoder.9} parent=0 // loop_body
    %s15 = ssub.s32 %s10, 1
    %s16 = ssub.s32 %s10, 2
    %s23 = sadd.s32 1, %s18
    %p24 = scmp.ge.s32.totalorder %s23, 1
    %s25 = scalar_select %p24, 0, %s23
    %s26 = sadd.s32 1, %s17
    %s27 = scalar_select %p24, %s26, %s17
    %p28 = scmp.ge.s32.totalorder %s27, 2
    %s29 = scalar_select %p28, 0, %s27
    %s30 = ssub.s32 %s17, %s29
    %s31 = ssub.s32 %s18, %s25
    %s32 = sor.u32 %s30, %s31
    %p33 = scmp.eq.s32.totalorder %s32, 0
    %s35 = sadd.s32 %s34, 1
    %s36 = scalar_select %p33, %s34, %s35
    %p39 = pneg %p33
    %p40 = scmp.eq.s32.totalorder %s10, 1
    %p41 = por %p39, %p40
    %p42 = scmp.ne.s32.totalorder %s34, %s37
    %p43 = scmp.eq.s32.totalorder %s10, 0
    %p44 = por %p42, %p43
    %p45 = scmp.ne.s32.totalorder %s34, %s37
    %p46 = scmp.eq.s32.totalorder %s15, 1
    %p47 = por %p45, %p46
    %p48 = scmp.ne.s32.totalorder %s37, %s38
    %p49 = scmp.eq.s32.totalorder %s15, 0
    %p50 = por %p48, %p49
    %p51 = scmp.ne.s32.totalorder %s37, %s38
    %p52 = scmp.eq.s32.totalorder %s16, 1
    %p53 = por %p51, %p52
    %p55 = scmp.ne.s32.totalorder %s38, %s54
    %p56 = scmp.eq.s32.totalorder %s16, 0
    %p57 = por %p55, %p56
    %s58 = sadd.s32 %s18, 1
    %s59 = sadd.s32 %s25, 1
    %s60 = ssub.s32 %s17, %s29
    %s61 = ssub.s32 %s58, %s59
    %s62 = sor.u32 %s60, %s61
    %p63 = scmp.eq.s32.totalorder %s62, 0
    %s65 = sadd.s32 %s64, 1
    %s66 = scalar_select %p63, %s64, %s65
    %p69 = pneg %p63
    %p70 = scmp.eq.s32.totalorder %s10, 1
    %p71 = por %p69, %p70
    %p72 = scmp.ne.s32.totalorder %s64, %s67
    %p73 = scmp.eq.s32.totalorder %s10, 0
    %p74 = por %p72, %p73
    %p75 = scmp.ne.s32.totalorder %s64, %s67
    %p76 = scmp.eq.s32.totalorder %s15, 1
    %p77 = por %p75, %p76
    %p78 = scmp.ne.s32.totalorder %s67, %s68
    %p79 = scmp.eq.s32.totalorder %s15, 0
    %p80 = por %p78, %p79
    %p81 = scmp.ne.s32.totalorder %s67, %s68
    %p82 = scmp.eq.s32.totalorder %s16, 1
    %p83 = por %p81, %p82
    %p85 = scmp.ne.s32.totalorder %s68, %s84
    %p86 = scmp.eq.s32.totalorder %s16, 0
    %p87 = por %p85, %p86
    %s89 = sadd.s32 %s88, 1
    %p92 = scmp.eq.s32.totalorder %s10, 1
    %p93 = scmp.ne.s32.totalorder %s88, %s90
    %p94 = scmp.eq.s32.totalorder %s10, 0
    %p95 = por %p93, %p94
    %p96 = scmp.ne.s32.totalorder %s88, %s90
    %p97 = scmp.eq.s32.totalorder %s15, 1
    %p98 = por %p96, %p97
    %p99 = scmp.ne.s32.totalorder %s90, %s91
    %p100 = scmp.eq.s32.totalorder %s15, 0
    %p101 = por %p99, %p100
    %p102 = scmp.ne.s32.totalorder %s90, %s91
    %p103 = scmp.eq.s32.totalorder %s16, 1
    %p104 = por %p102, %p103
    %p106 = scmp.ne.s32.totalorder %s91, %s105
    %p107 = scmp.eq.s32.totalorder %s16, 0
    %p108 = por %p106, %p107
    %s110 = sadd.s32 %s109, 1
    %p113 = scmp.eq.s32.totalorder %s10, 1
    %p114 = scmp.ne.s32.totalorder %s109, %s111
    %p115 = scmp.eq.s32.totalorder %s10, 0
    %p116 = por %p114, %p115
    %p117 = scmp.ne.s32.totalorder %s109, %s111
    %p118 = scmp.eq.s32.totalorder %s15, 1
    %p119 = por %p117, %p118
    %p120 = scmp.ne.s32.totalorder %s111, %s112
    %p121 = scmp.eq.s32.totalorder %s15, 0
    %p122 = por %p120, %p121
    %p123 = scmp.ne.s32.totalorder %s111, %s112
    %p124 = scmp.eq.s32.totalorder %s16, 1
    %p125 = por %p123, %p124
    %p127 = scmp.ne.s32.totalorder %s112, %s126
    %p128 = scmp.eq.s32.totalorder %s16, 0
    %p129 = por %p127, %p128
    %s130 = ssub.s32 %s17, %s29
    %s131 = ssub.s32 %s18, %s25
    %s132 = sor.u32 %s130, %s131
    %p133 = scmp.eq.s32.totalorder %s132, 0
    %s135 = sadd.s32 %s134, 1
    %s136 = scalar_select %p133, %s134, %s135
    %p139 = pneg %p133
    %p140 = scmp.eq.s32.totalorder %s10, 1
    %p141 = por %p139, %p140
    %p142 = scmp.ne.s32.totalorder %s134, %s137
    %p143 = scmp.eq.s32.totalorder %s10, 0
    %p144 = por %p142, %p143
    %p145 = scmp.ne.s32.totalorder %s134, %s137
    %p146 = scmp.eq.s32.totalorder %s15, 1
    %p147 = por %p145, %p146
    %p148 = scmp.ne.s32.totalorder %s137, %s138
    %p149 = scmp.eq.s32.totalorder %s15, 0
    %p150 = por %p148, %p149
    %p151 = scmp.ne.s32.totalorder %s137, %s138
    %p152 = scmp.eq.s32.totalorder %s16, 1
    %p153 = por %p151, %p152
    %p155 = scmp.ne.s32.totalorder %s138, %s154
    %p156 = scmp.eq.s32.totalorder %s16, 0
    %p157 = por %p155, %p156
    %p158 = scmp.le.s32.totalorder 1, %s10
    %p159 = scmp.lt.s32.totalorder %s10, 3
    %p160 = pnand %p158, %p159
    %p161 = pneg %p160
    // Predicated region
    $region9: #{edge_detection_encoder.9} parent=5 // pred_check
      _
    $region10: #{edge_detection_encoder.9} parent=5 // pred_check_branch
      %163 = sbr.rel (%p160) target = $region12
    $region11: #{edge_detection_encoder.9} parent=5 // pred_region
      %s164 = ssub.s32 %s10, 1
      // Predicated region
      $region13: #{edge_detection_encoder.9} parent=11 // pred_check
        %p165 = pneg %p101
      $region14: #{edge_detection_encoder.9} parent=11 // pred_check_branch
        %167 = sbr.rel (%p165) target = $region16
      $region15: #{edge_detection_encoder.9} parent=11 // pred_region
        _
      $region16: #{edge_detection_encoder.9} parent=11 // pred_fallthru
        _
      // Predicated region
      $region17: #{edge_detection_encoder.9} parent=11 // pred_check
        %p168 = pneg %p122
      $region18: #{edge_detection_encoder.9} parent=11 // pred_check_branch
        %170 = sbr.rel (%p168) target = $region20
      $region19: #{edge_detection_encoder.9} parent=11 // pred_region
        _
      $region20: #{edge_detection_encoder.9} parent=11 // pred_fallthru
        _
    $region12: #{edge_detection_encoder.9} parent=5 // pred_fallthru
      _
    %p171 = scmp.lt.s32.totalorder %s10, 2
    // Predicated region
    $region21: #{edge_detection_encoder.9} parent=5 // pred_check
      %p172 = pneg %p171
    $region22: #{edge_detection_encoder.9} parent=5 // pred_check_branch
      %174 = sbr.rel (%p172) target = $region24
    $region23: #{edge_detection_encoder.9} parent=5 // pred_region
      // Predicated region
      $region25: #{edge_detection_encoder.9} parent=23 // pred_check
        %p175 = pneg %p44
      $region26: #{edge_detection_encoder.9} parent=23 // pred_check_branch
        %177 = sbr.rel (%p175) target = $region28
      $region27: #{edge_detection_encoder.9} parent=23 // pred_region
        %s178 = smul.u32 8, %s18
        %p179 = scmp.lt.s32.totalorder %s17, 1
        %s180 = scalar_select %p179, %s17, 1
        %p181 = scmp.lt.s32.totalorder %s178, 15
        %s182 = scalar_select %p181, %s178, 15
        %s183 = smul.addr %s182, 2
        %s184 = smul.addr %s180, 32
        %s185 = sadd.s32 %s183, %s184
        %s186 = smul.addr %s185, 4
        %s187 = scalar_lea.vmem %s0, %s186
        %s188 = smul.u32 8, %s18
      $region28: #{edge_detection_encoder.9} parent=23 // pred_fallthru
        _
      // Predicated region
      $region29: #{edge_detection_encoder.9} parent=23 // pred_check
        %p189 = pneg %p74
      $region30: #{edge_detection_encoder.9} parent=23 // pred_check_branch
        %191 = sbr.rel (%p189) target = $region32
      $region31: #{edge_detection_encoder.9} parent=23 // pred_region
        %s192 = sadd.s32 %s18, 1
        %s193 = smul.u32 8, %s192
        %p194 = scmp.lt.s32.totalorder %s17, 1
        %s195 = scalar_select %p194, %s17, 1
        %p196 = scmp.lt.s32.totalorder %s193, 15
        %s197 = scalar_select %p196, %s193, 15
        %s198 = smul.addr %s197, 2
        %s199 = smul.addr %s195, 32
        %s200 = sadd.s32 %s198, %s199
        %s201 = smul.addr %s200, 4
        %s202 = scalar_lea.vmem %s1, %s201
        %s203 = sadd.s32 %s18, 1
        %s204 = smul.u32 8, %s203
      $region32: #{edge_detection_encoder.9} parent=23 // pred_fallthru
        _
    $region24: #{edge_detection_encoder.9} parent=5 // pred_fallthru
      _
    %p205 = scmp.le.s32.totalorder 1, %s10
    %p206 = scmp.lt.s32.totalorder %s10, 3
    %p207 = pnand %p205, %p206
    %p208 = pneg %p207
    // Predicated region
    $region33: #{edge_detection_encoder.9} parent=5 // pred_check
      _
    $region34: #{edge_detection_encoder.9} parent=5 // pred_check_branch
      %210 = sbr.rel (%p207) target = $region36
    $region35: #{edge_detection_encoder.9} parent=5 // pred_region
      %s211 = ssub.s32 %s10, 1
      %s212 = smul.u32 8, %s20
      %p213 = scmp.lt.s32.totalorder %s19, 1
      %s214 = scalar_select %p213, %s19, 1
      %p215 = scmp.lt.s32.totalorder %s212, 15
      %s216 = scalar_select %p215, %s212, 15
      %s217 = smul.addr %s216, 2
      %s218 = smul.addr %s214, 32
      %s219 = sadd.s32 %s217, %s218
      %s220 = smul.addr %s219, 4
      %s221 = scalar_lea.vmem %s0, %s220
      %p222 = pneg %p50
      %p223 = pneg %p47
      %s224 = sadd.s32 %s20, 1
      %s225 = smul.u32 8, %s224
      %p226 = scmp.lt.s32.totalorder %s19, 1
      %s227 = scalar_select %p226, %s19, 1
      %p228 = scmp.lt.s32.totalorder %s225, 15
      %s229 = scalar_select %p228, %s225, 15
      %s230 = smul.addr %s229, 2
      %s231 = smul.addr %s227, 32
      %s232 = sadd.s32 %s230, %s231
      %s233 = smul.addr %s232, 4
      %s234 = scalar_lea.vmem %s1, %s233
      %p235 = pneg %p80
      %p236 = pneg %p77
      %p237 = pneg %p101
      %p238 = pneg %p98
      %p239 = pneg %p122
      %p240 = pneg %p119
      %p241 = pneg %p150
      %p242 = pneg %p147
      %p243 = scmp.lt.s32.totalorder %s19, 1
      %s244 = scalar_select %p243, %s19, 1
      %p245 = scmp.lt.s32.totalorder %s20, 0
      %s246 = scalar_select %p245, %s20, 0
      %s247 = smul.addr %s246, 8
      %s248 = smul.addr %s244, 8
      %s249 = sadd.s32 %s247, %s248
      %s250 = smul.addr %s249, 4
      %s251 = scalar_lea.vmem %s4, %s250
      %s252 = smul.u32 8, %s20
      %p253 = scmp.lt.s32.totalorder %s19, 1
      %s254 = scalar_select %p253, %s19, 1
      %p255 = scmp.lt.s32.totalorder %s252, 15
      %s256 = scalar_select %p255, %s252, 15
      %s257 = smul.addr %s256, 2
      %s258 = smul.addr %s254, 32
      %s259 = sadd.s32 %s257, %s258
      %s260 = smul.addr %s259, 4
      %s261 = scalar_lea.vmem %s0, %s260
      %s262 = smul.u32 8, %s20
      %s263 = sadd.s32 %s20, 1
      %s264 = smul.u32 8, %s263
      %p265 = scmp.lt.s32.totalorder %s19, 1
      %s266 = scalar_select %p265, %s19, 1
      %p267 = scmp.lt.s32.totalorder %s264, 15
      %s268 = scalar_select %p267, %s264, 15
      %s269 = smul.addr %s268, 2
      %s270 = smul.addr %s266, 32
      %s271 = sadd.s32 %s269, %s270
      %s272 = smul.addr %s271, 4
      %s273 = scalar_lea.vmem %s1, %s272
      %s274 = sadd.s32 %s20, 1
      %s275 = smul.u32 8, %s274
      %p276 = scmp.lt.s32.totalorder %s19, 1
      %s277 = scalar_select %p276, %s19, 1
      %p278 = scmp.lt.s32.totalorder %s20, 0
      %s279 = scalar_select %p278, %s20, 0
      %s280 = smul.addr %s279, 8
      %s281 = smul.addr %s277, 8
      %s282 = sadd.s32 %s280, %s281
      %s283 = smul.addr %s282, 4
      %s284 = scalar_lea.vmem %s4, %s283
      %v286 = vld [vmem:[%s261] sm:$0xf]
      %v287 = vld [vmem:[%s261 + $0x8] sm:$0xf]
      %v288 = vld [vmem:[%s261 + $0x10] sm:$0xf]
      %v289 = vld [vmem:[%s261 + $0x18] sm:$0xf]
      %v290 = vld [vmem:[%s261 + $0x20] sm:$0xf]
      %v291 = vld [vmem:[%s261 + $0x28] sm:$0xf]
      %v292 = vld [vmem:[%s261 + $0x30] sm:$0xf]
      %v293 = vld [vmem:[%s261 + $0x38] sm:$0xf]
      %vm294 = vcmask 519168
      %295 = vst.msk [vmem:[#allocation2] sm:$0xf] %vm294, %v286
      %296 = vst.msk [vmem:[#allocation2 + $0x4] sm:$0xf] %vm294, %v287
      %297 = vst.msk [vmem:[#allocation2 + $0x8] sm:$0xf] %vm294, %v288
      %298 = vst.msk [vmem:[#allocation2 + $0xc] sm:$0xf] %vm294, %v289
      %299 = vst.msk [vmem:[#allocation2 + $0x10] sm:$0xf] %vm294, %v290
      %300 = vst.msk [vmem:[#allocation2 + $0x14] sm:$0xf] %vm294, %v291
      %301 = vst.msk [vmem:[#allocation2 + $0x18] sm:$0xf] %vm294, %v292
      %302 = vst.msk [vmem:[#allocation2 + $0x1c] sm:$0xf] %vm294, %v293
      %v303 = vld [vmem:[%s273] sm:$0xf]
      %s304 = scalar_lea.vmem [#allocation2], 32
      %305 = vst.msk [vmem:[%s304] sm:$0xf] %vm294, %v303
      %v306 = vld [vmem:[%s261] sm:$0xf]
      %v307 = vld [vmem:[%s261 + $0x4] sm:$0x1]
      %v308 = vld [vmem:[%s261 + $0x8] sm:$0xf]
      %v309 = vld [vmem:[%s261 + $0xc] sm:$0x1]
      %v310 = vld [vmem:[%s261 + $0x10] sm:$0xf]
      %v311 = vld [vmem:[%s261 + $0x14] sm:$0x1]
      %v312 = vld [vmem:[%s261 + $0x18] sm:$0xf]
      %v313 = vld [vmem:[%s261 + $0x1c] sm:$0x1]
      %v314 = vld [vmem:[%s261 + $0x20] sm:$0xf]
      %v315 = vld [vmem:[%s261 + $0x24] sm:$0x1]
      %v316 = vld [vmem:[%s261 + $0x28] sm:$0xf]
      %v317 = vld [vmem:[%s261 + $0x2c] sm:$0x1]
      %v318 = vld [vmem:[%s261 + $0x30] sm:$0xf]
      %v319 = vld [vmem:[%s261 + $0x34] sm:$0x1]
      %v320 = vld [vmem:[%s261 + $0x38] sm:$0xf]
      %v321 = vld [vmem:[%s261 + $0x3c] sm:$0x1]
      %vm322 = vsmask.f32 3328
      %vm323 = vsmask.f32 7440
      %vm324 = vmor %vm322, %vm323
      %v326 = vshrl.u32 %v306, 16
      %v328 = vrot.slane %v326, 4
      %v329 = vshll.u32 %v306, 16
      %v331 = vrot.slane %v329, 5
      %v332 = vor.u32 %v328, %v331
      %v333 = vrot.slane %v332, 4
      %v335 = vshll.u32 %v307, 16
      %v337 = vrot.slane %v335, 5
      %v338 = vsel %vm324, %v333, %v337
      %v340 = vshrl.u32 %v308, 16
      %v342 = vrot.slane %v340, 4
      %v343 = vshll.u32 %v308, 16
      %v345 = vrot.slane %v343, 5
      %v346 = vor.u32 %v342, %v345
      %v347 = vrot.slane %v346, 4
      %v349 = vshll.u32 %v309, 16
      %v351 = vrot.slane %v349, 5
      %v352 = vsel %vm324, %v347, %v351
      %v354 = vshrl.u32 %v310, 16
      %v356 = vrot.slane %v354, 4
      %v357 = vshll.u32 %v310, 16
      %v359 = vrot.slane %v357, 5
      %v360 = vor.u32 %v356, %v359
      %v361 = vrot.slane %v360, 4
      %v363 = vshll.u32 %v311, 16
      %v365 = vrot.slane %v363, 5
      %v366 = vsel %vm324, %v361, %v365
      %v368 = vshrl.u32 %v312, 16
      %v370 = vrot.slane %v368, 4
      %v371 = vshll.u32 %v312, 16
      %v373 = vrot.slane %v371, 5
      %v374 = vor.u32 %v370, %v373
      %v375 = vrot.slane %v374, 4
      %v377 = vshll.u32 %v313, 16
      %v379 = vrot.slane %v377, 5
      %v380 = vsel %vm324, %v375, %v379
      %v382 = vshrl.u32 %v314, 16
      %v384 = vrot.slane %v382, 4
      %v385 = vshll.u32 %v314, 16
      %v387 = vrot.slane %v385, 5
      %v388 = vor.u32 %v384, %v387
      %v389 = vrot.slane %v388, 4
      %v391 = vshll.u32 %v315, 16
      %v393 = vrot.slane %v391, 5
      %v394 = vsel %vm324, %v389, %v393
      %v396 = vshrl.u32 %v316, 16
      %v398 = vrot.slane %v396, 4
      %v399 = vshll.u32 %v316, 16
      %v401 = vrot.slane %v399, 5
      %v402 = vor.u32 %v398, %v401
      %v403 = vrot.slane %v402, 4
      %v405 = vshll.u32 %v317, 16
      %v407 = vrot.slane %v405, 5
      %v408 = vsel %vm324, %v403, %v407
      %v410 = vshrl.u32 %v318, 16
      %v412 = vrot.slane %v410, 4
      %v413 = vshll.u32 %v318, 16
      %v415 = vrot.slane %v413, 5
      %v416 = vor.u32 %v412, %v415
      %v417 = vrot.slane %v416, 4
      %v419 = vshll.u32 %v319, 16
      %v421 = vrot.slane %v419, 5
      %v422 = vsel %vm324, %v417, %v421
      %v424 = vshrl.u32 %v320, 16
      %v426 = vrot.slane %v424, 4
      %v427 = vshll.u32 %v320, 16
      %v429 = vrot.slane %v427, 5
      %v430 = vor.u32 %v426, %v429
      %v431 = vrot.slane %v430, 4
      %v433 = vshll.u32 %v321, 16
      %v435 = vrot.slane %v433, 5
      %v436 = vsel %vm324, %v431, %v435
      %437 = vrot.lane.b32.xlu0 %v338, 64
      %v438 = vpop.permute.xlu0 %437
      %439 = vrot.lane.b32.xlu0 %v352, 64
      %v440 = vpop.permute.xlu0 %439
      %441 = vrot.lane.b32.xlu0 %v366, 64
      %v442 = vpop.permute.xlu0 %441
      %443 = vrot.lane.b32.xlu0 %v380, 64
      %v444 = vpop.permute.xlu0 %443
      %445 = vrot.lane.b32.xlu0 %v394, 64
      %v446 = vpop.permute.xlu0 %445
      %447 = vrot.lane.b32.xlu0 %v408, 64
      %v448 = vpop.permute.xlu0 %447
      %449 = vrot.lane.b32.xlu0 %v422, 64
      %v450 = vpop.permute.xlu0 %449
      %451 = vrot.lane.b32.xlu0 %v436, 64
      %v452 = vpop.permute.xlu0 %451
      %vm461 = vcmask 1043968
      %462 = vst.msk [vmem:[#allocation2] sm:$0xf] %vm461, %v438
      %463 = vst.msk [vmem:[#allocation2 + $0x4] sm:$0xf] %vm461, %v440
      %464 = vst.msk [vmem:[#allocation2 + $0x8] sm:$0xf] %vm461, %v442
      %465 = vst.msk [vmem:[#allocation2 + $0xc] sm:$0xf] %vm461, %v444
      %466 = vst.msk [vmem:[#allocation2 + $0x10] sm:$0xf] %vm461, %v446
      %467 = vst.msk [vmem:[#allocation2 + $0x14] sm:$0xf] %vm461, %v448
      %468 = vst.msk [vmem:[#allocation2 + $0x18] sm:$0xf] %vm461, %v450
      %469 = vst.msk [vmem:[#allocation2 + $0x1c] sm:$0xf] %vm461, %v452
      %v470 = vld [vmem:[%s273] sm:$0xf]
      %v471 = vld [vmem:[%s273 + $0x4] sm:$0x1]
      %v473 = vshrl.u32 %v470, 16
      %v475 = vrot.slane %v473, 4
      %v476 = vshll.u32 %v470, 16
      %v478 = vrot.slane %v476, 5
      %v479 = vor.u32 %v475, %v478
      %v480 = vrot.slane %v479, 4
      %v482 = vshll.u32 %v471, 16
      %v484 = vrot.slane %v482, 5
      %v485 = vsel %vm324, %v480, %v484
      %486 = vrot.lane.b32.xlu0 %v485, 64
      %v487 = vpop.permute.xlu0 %486
      %489 = vst.msk [vmem:[%s304] sm:$0xf] %vm461, %v487
      %v490 = vld [vmem:[#allocation2] sm:$0xf]
      %v491 = vld [vmem:[#allocation2 + $0x4] sm:$0xf]
      %v492 = vld [vmem:[#allocation2 + $0x8] sm:$0xf]
      %v493 = vld [vmem:[#allocation2 + $0xc] sm:$0xf]
      %v494 = vld [vmem:[#allocation2 + $0x10] sm:$0xf]
      %v495 = vld [vmem:[#allocation2 + $0x14] sm:$0xf]
      %v496 = vld [vmem:[#allocation2 + $0x18] sm:$0xf]
      %v497 = vld [vmem:[#allocation2 + $0x1c] sm:$0xf]
      %v498 = vld [vmem:[%s2] sm:$0xf]
      %v499 = vld [vmem:[%s2 + $0x4] sm:$0xf]
      %v500 = vld [vmem:[%s2 + $0x8] sm:$0xf]
      %v501 = vld [vmem:[%s2 + $0xc] sm:$0xf]
      %v502 = vld [vmem:[%s2 + $0x10] sm:$0xf]
      %v503 = vld [vmem:[%s2 + $0x14] sm:$0xf]
      %v504 = vld [vmem:[%s2 + $0x18] sm:$0xf]
      %v505 = vld [vmem:[%s2 + $0x1c] sm:$0xf]
      %v506 = vld [vmem:[%s2 + $0x20] sm:$0xf]
      %v507 = vld [vmem:[%s2 + $0x24] sm:$0xf]
      %v508 = vld [vmem:[%s2 + $0x28] sm:$0xf]
      %v509 = vld [vmem:[%s2 + $0x2c] sm:$0xf]
      %v510 = vld [vmem:[%s2 + $0x30] sm:$0xf]
      %v511 = vld [vmem:[%s2 + $0x34] sm:$0xf]
      %v512 = vld [vmem:[%s2 + $0x38] sm:$0xf]
      %v513 = vld [vmem:[%s2 + $0x3c] sm:$0xf]
      %v522 = vunpack.c.l.b16 %v490
      %v523 = vunpack.c.l.b16 %v491
      %v524 = vunpack.c.l.b16 %v492
      %v525 = vunpack.c.l.b16 %v493
      %v526 = vunpack.c.l.b16 %v494
      %v527 = vunpack.c.l.b16 %v495
      %v528 = vunpack.c.l.b16 %v496
      %v529 = vunpack.c.l.b16 %v497
      %v530 = vpack.c.b16 %v523, %v522
      %v531 = vpack.c.b16 %v525, %v524
      %v532 = vpack.c.b16 %v527, %v526
      %v533 = vpack.c.b16 %v529, %v528
      %v554 = vunpack.c.l.b16 %v498
      %v555 = vunpack.c.l.b16 %v499
      %v556 = vunpack.c.l.b16 %v500
      %v557 = vunpack.c.l.b16 %v501
      %v558 = vunpack.c.l.b16 %v502
      %v559 = vunpack.c.l.b16 %v503
      %v560 = vunpack.c.l.b16 %v504
      %v561 = vunpack.c.l.b16 %v505
      %v562 = vunpack.c.l.b16 %v506
      %v563 = vunpack.c.l.b16 %v507
      %v564 = vunpack.c.l.b16 %v508
      %v565 = vunpack.c.l.b16 %v509
      %v566 = vunpack.c.l.b16 %v510
      %v567 = vunpack.c.l.b16 %v511
      %v568 = vunpack.c.l.b16 %v512
      %v569 = vunpack.c.l.b16 %v513
      %v570 = vpack.c.b16 %v555, %v554
      %v571 = vpack.c.b16 %v557, %v556
      %v572 = vpack.c.b16 %v559, %v558
      %v573 = vpack.c.b16 %v561, %v560
      %v574 = vpack.c.b16 %v563, %v562
      %v575 = vpack.c.b16 %v565, %v564
      %v576 = vpack.c.b16 %v567, %v566
      %v577 = vpack.c.b16 %v569, %v568
      %586 = vmatprep.subr.bf16.mxu0 0
      %587 = vmatpush1.bf16.msra.mxu0 %v570
      %588 = vmatprep.subr.bf16.mxu0 0
      %589 = vmatpush1.bf16.msra.mxu0 %v571
      %590 = vmatprep.subr.bf16.mxu0 0
      %591 = vmatpush1.bf16.msra.mxu0 %v572
      %592 = vmatprep.subr.bf16.mxu0 0
      %593 = vmatpush1.bf16.msra.mxu0 %v573
      %594 = vmatprep.subr.bf16.mxu0 0
      %595 = vmatpush1.bf16.msra.mxu0 %v574
      %596 = vmatprep.subr.bf16.mxu0 0
      %597 = vmatpush1.bf16.msra.mxu0 %v575
      %598 = vmatprep.subr.bf16.mxu0 0
      %599 = vmatpush1.bf16.msra.mxu0 %v576
      %600 = vmatprep.subr.bf16.mxu0 0
      %601 = vmatpush1.bf16.msra.mxu0 %v577
      %602 = vmatprep.subr.bf16.mxu0 0
      %603 = vmatpush1.bf16.msra.mxu0 0
      %604 = vmatprep.subr.bf16.mxu0 0
      %605 = vmatpush1.bf16.msra.mxu0 0
      %606 = vmatprep.subr.bf16.mxu0 0
      %607 = vmatpush1.bf16.msra.mxu0 0
      %608 = vmatprep.subr.bf16.mxu0 0
      %609 = vmatpush1.bf16.msra.mxu0 0
      %610 = vmatprep.subr.bf16.mxu0 0
      %611 = vmatpush1.bf16.msra.mxu0 0
      %612 = vmatprep.subr.bf16.mxu0 0
      %613 = vmatpush1.bf16.msra.mxu0 0
      %614 = vmatprep.subr.bf16.mxu0 0
      %615 = vmatpush1.bf16.msra.mxu0 0
      %616 = vmatprep.subr.bf16.mxu0 0
      %617 = vmatpush1.bf16.msra.mxu0 0
      %618 = vmatprep.mubr.bf16.mxu0 0
      %619 = vmatmul.mubr.bf16.gmra.mrb[0].mxu0 %v530
      %v620 = vpop.f32.mrb[0].mxu0
      %v621 = vadd.f32 0.0, %v620
      %v622 = vpop.f32.mrb[0].mxu0
      %v623 = vpop.f32.mrb[0].mxu0
      %v624 = vadd.f32 0.0, %v623
      %v625 = vpop.f32.mrb[0].mxu0
      %626 = vmatprep.mubr.bf16.mxu0 0
      %627 = vmatmul.mubr.bf16.gmra.mrb[0].mxu0 %v531
      %v628 = vpop.f32.mrb[0].mxu0
      %v629 = vadd.f32 0.0, %v628
      %v630 = vpop.f32.mrb[0].mxu0
      %v631 = vpop.f32.mrb[0].mxu0
      %v632 = vadd.f32 0.0, %v631
      %v633 = vpop.f32.mrb[0].mxu0
      %634 = vmatprep.mubr.bf16.mxu0 0
      %635 = vmatmul.mubr.bf16.gmra.mrb[0].mxu0 %v532
      %v636 = vpop.f32.mrb[0].mxu0
      %v637 = vadd.f32 0.0, %v636
      %v638 = vpop.f32.mrb[0].mxu0
      %v639 = vpop.f32.mrb[0].mxu0
      %v640 = vadd.f32 0.0, %v639
      %v641 = vpop.f32.mrb[0].mxu0
      %642 = vmatprep.mubr.bf16.mxu0 0
      %643 = vmatmul.mubr.bf16.gmra.mrb[0].mxu0 %v533
      %v644 = vpop.f32.mrb[0].mxu0
      %v645 = vadd.f32 0.0, %v644
      %v646 = vpop.f32.mrb[0].mxu0
      %v647 = vpop.f32.mrb[0].mxu0
      %v648 = vadd.f32 0.0, %v647
      %v649 = vpop.f32.mrb[0].mxu0
      %650 = vdwg.mxu0
      %651 = vst [vmem:[#allocation3] sm:$0xff] %v621
      %652 = vst [vmem:[#allocation3 + $0x8] sm:$0xff] %v624
      %653 = vst [vmem:[#allocation3 + $0x10] sm:$0xff] %v629
      %654 = vst [vmem:[#allocation3 + $0x18] sm:$0xff] %v632
      %655 = vst [vmem:[#allocation3 + $0x20] sm:$0xff] %v637
      %656 = vst [vmem:[#allocation3 + $0x28] sm:$0xff] %v640
      %657 = vst [vmem:[#allocation3 + $0x30] sm:$0xff] %v645
      %658 = vst [vmem:[#allocation3 + $0x38] sm:$0xff] %v648
      %s659 = scalar_lea.vmem [#allocation2], 4
      %v660 = vld [vmem:[%s659] sm:$0xf]
      %v661 = vld [vmem:[%s659 + $0x4] sm:$0xf]
      %v662 = vld [vmem:[%s659 + $0x8] sm:$0xf]
      %v663 = vld [vmem:[%s659 + $0xc] sm:$0xf]
      %v664 = vld [vmem:[%s659 + $0x10] sm:$0xf]
      %v665 = vld [vmem:[%s659 + $0x14] sm:$0xf]
      %v666 = vld [vmem:[%s659 + $0x18] sm:$0xf]
      %v667 = vld [vmem:[%s659 + $0x1c] sm:$0xf]
      %s668 = scalar_lea.vmem %s2, 64
      %v669 = vld [vmem:[%s668] sm:$0xf]
      %v670 = vld [vmem:[%s668 + $0x4] sm:$0xf]
      %v671 = vld [vmem:[%s668 + $0x8] sm:$0xf]
      %v672 = vld [vmem:[%s668 + $0xc] sm:$0xf]
      %v673 = vld [vmem:[%s668 + $0x10] sm:$0xf]
      %v674 = vld [vmem:[%s668 + $0x14] sm:$0xf]
      %v675 = vld [vmem:[%s668 + $0x18] sm:$0xf]
      %v676 = vld [vmem:[%s668 + $0x1c] sm:$0xf]
      %v677 = vld [vmem:[%s668 + $0x20] sm:$0xf]
      %v678 = vld [vmem:[%s668 + $0x24] sm:$0xf]
      %v679 = vld [vmem:[%s668 + $0x28] sm:$0xf]
      %v680 = vld [vmem:[%s668 + $0x2c] sm:$0xf]
      %v681 = vld [vmem:[%s668 + $0x30] sm:$0xf]
      %v682 = vld [vmem:[%s668 + $0x34] sm:$0xf]
      %v683 = vld [vmem:[%s668 + $0x38] sm:$0xf]
      %v684 = vld [vmem:[%s668 + $0x3c] sm:$0xf]
      %v693 = vunpack.c.l.b16 %v660
      %v694 = vunpack.c.l.b16 %v661
      %v695 = vunpack.c.l.b16 %v662
      %v696 = vunpack.c.l.b16 %v663
      %v697 = vunpack.c.l.b16 %v664
      %v698 = vunpack.c.l.b16 %v665
      %v699 = vunpack.c.l.b16 %v666
      %v700 = vunpack.c.l.b16 %v667
      %v701 = vpack.c.b16 %v694, %v693
      %v702 = vpack.c.b16 %v696, %v695
      %v703 = vpack.c.b16 %v698, %v697
      %v704 = vpack.c.b16 %v700, %v699
      %v725 = vunpack.c.l.b16 %v669
      %v726 = vunpack.c.l.b16 %v670
      %v727 = vunpack.c.l.b16 %v671
      %v728 = vunpack.c.l.b16 %v672
      %v729 = vunpack.c.l.b16 %v673
      %v730 = vunpack.c.l.b16 %v674
      %v731 = vunpack.c.l.b16 %v675
      %v732 = vunpack.c.l.b16 %v676
      %v733 = vunpack.c.l.b16 %v677
      %v734 = vunpack.c.l.b16 %v678
      %v735 = vunpack.c.l.b16 %v679
      %v736 = vunpack.c.l.b16 %v680
      %v737 = vunpack.c.l.b16 %v681
      %v738 = vunpack.c.l.b16 %v682
      %v739 = vunpack.c.l.b16 %v683
      %v740 = vunpack.c.l.b16 %v684
      %v741 = vpack.c.b16 %v726, %v725
      %v742 = vpack.c.b16 %v728, %v727
      %v743 = vpack.c.b16 %v730, %v729
      %v744 = vpack.c.b16 %v732, %v731
      %v745 = vpack.c.b16 %v734, %v733
      %v746 = vpack.c.b16 %v736, %v735
      %v747 = vpack.c.b16 %v738, %v737
      %v748 = vpack.c.b16 %v740, %v739
      %757 = vmatprep.subr.bf16.mxu0 0
      %758 = vmatpush1.bf16.msra.mxu0 %v741
      %759 = vmatprep.subr.bf16.mxu0 0
      %760 = vmatpush1.bf16.msra.mxu0 %v742
      %761 = vmatprep.subr.bf16.mxu0 0
      %762 = vmatpush1.bf16.msra.mxu0 %v743
      %763 = vmatprep.subr.bf16.mxu0 0
      %764 = vmatpush1.bf16.msra.mxu0 %v744
      %765 = vmatprep.subr.bf16.mxu0 0
      %766 = vmatpush1.bf16.msra.mxu0 %v745
      %767 = vmatprep.subr.bf16.mxu0 0
      %768 = vmatpush1.bf16.msra.mxu0 %v746
      %769 = vmatprep.subr.bf16.mxu0 0
      %770 = vmatpush1.bf16.msra.mxu0 %v747
      %771 = vmatprep.subr.bf16.mxu0 0
      %772 = vmatpush1.bf16.msra.mxu0 %v748
      %773 = vmatprep.subr.bf16.mxu0 0
      %774 = vmatpush1.bf16.msra.mxu0 0
      %775 = vmatprep.subr.bf16.mxu0 0
      %776 = vmatpush1.bf16.msra.mxu0 0
      %777 = vmatprep.subr.bf16.mxu0 0
      %778 = vmatpush1.bf16.msra.mxu0 0
      %779 = vmatprep.subr.bf16.mxu0 0
      %780 = vmatpush1.bf16.msra.mxu0 0
      %781 = vmatprep.subr.bf16.mxu0 0
      %782 = vmatpush1.bf16.msra.mxu0 0
      %783 = vmatprep.subr.bf16.mxu0 0
      %784 = vmatpush1.bf16.msra.mxu0 0
      %785 = vmatprep.subr.bf16.mxu0 0
      %786 = vmatpush1.bf16.msra.mxu0 0
      %787 = vmatprep.subr.bf16.mxu0 0
      %788 = vmatpush1.bf16.msra.mxu0 0
      %789 = vmatprep.mubr.bf16.mxu0 0
      %790 = vmatmul.mubr.bf16.gmra.mrb[0].mxu0 %v701
      %v791 = vpop.f32.mrb[0].mxu0
      %v792 = vadd.f32 0.0, %v791
      %v793 = vpop.f32.mrb[0].mxu0
      %v794 = vpop.f32.mrb[0].mxu0
      %v795 = vadd.f32 0.0, %v794
      %v796 = vpop.f32.mrb[0].mxu0
      %797 = vmatprep.mubr.bf16.mxu0 0
      %798 = vmatmul.mubr.bf16.gmra.mrb[0].mxu0 %v702
      %v799 = vpop.f32.mrb[0].mxu0
      %v800 = vadd.f32 0.0, %v799
      %v801 = vpop.f32.mrb[0].mxu0
      %v802 = vpop.f32.mrb[0].mxu0
      %v803 = vadd.f32 0.0, %v802
      %v804 = vpop.f32.mrb[0].mxu0
      %805 = vmatprep.mubr.bf16.mxu0 0
      %806 = vmatmul.mubr.bf16.gmra.mrb[0].mxu0 %v703
      %v807 = vpop.f32.mrb[0].mxu0
      %v808 = vadd.f32 0.0, %v807
      %v809 = vpop.f32.mrb[0].mxu0
      %v810 = vpop.f32.mrb[0].mxu0
      %v811 = vadd.f32 0.0, %v810
      %v812 = vpop.f32.mrb[0].mxu0
      %813 = vmatprep.mubr.bf16.mxu0 0
      %814 = vmatmul.mubr.bf16.gmra.mrb[0].mxu0 %v704
      %v815 = vpop.f32.mrb[0].mxu0
      %v816 = vadd.f32 0.0, %v815
      %v817 = vpop.f32.mrb[0].mxu0
      %v818 = vpop.f32.mrb[0].mxu0
      %v819 = vadd.f32 0.0, %v818
      %v820 = vpop.f32.mrb[0].mxu0
      %821 = vdwg.mxu0
      %v822 = vld [vmem:[#allocation3] sm:$0xff]
      %v823 = vld [vmem:[#allocation3 + $0x8] sm:$0xff]
      %v824 = vld [vmem:[#allocation3 + $0x10] sm:$0xff]
      %v825 = vld [vmem:[#allocation3 + $0x18] sm:$0xff]
      %v826 = vld [vmem:[#allocation3 + $0x20] sm:$0xff]
      %v827 = vld [vmem:[#allocation3 + $0x28] sm:$0xff]
      %v828 = vld [vmem:[#allocation3 + $0x30] sm:$0xff]
      %v829 = vld [vmem:[#allocation3 + $0x38] sm:$0xff]
      %v830 = vadd.f32 %v822, %v792
      %v831 = vadd.f32 %v823, %v795
      %v832 = vadd.f32 %v824, %v800
      %v833 = vadd.f32 %v825, %v803
      %v834 = vadd.f32 %v826, %v808
      %v835 = vadd.f32 %v827, %v811
      %v836 = vadd.f32 %v828, %v816
      %v837 = vadd.f32 %v829, %v819
      %838 = vst [vmem:[#allocation3] sm:$0xff] %v830
      %839 = vst [vmem:[#allocation3 + $0x8] sm:$0xff] %v831
      %840 = vst [vmem:[#allocation3 + $0x10] sm:$0xff] %v832
      %841 = vst [vmem:[#allocation3 + $0x18] sm:$0xff] %v833
      %842 = vst [vmem:[#allocation3 + $0x20] sm:$0xff] %v834
      %843 = vst [vmem:[#allocation3 + $0x28] sm:$0xff] %v835
      %844 = vst [vmem:[#allocation3 + $0x30] sm:$0xff] %v836
      %845 = vst [vmem:[#allocation3 + $0x38] sm:$0xff] %v837
      %v846 = vld [vmem:[#allocation3] sm:$0xff]
      %v847 = vld [vmem:[#allocation3 + $0x8] sm:$0xff]
      %v848 = vld [vmem:[#allocation3 + $0x10] sm:$0xff]
      %v849 = vld [vmem:[#allocation3 + $0x18] sm:$0xff]
      %v850 = vld [vmem:[#allocation3 + $0x20] sm:$0xff]
      %v851 = vld [vmem:[#allocation3 + $0x28] sm:$0xff]
      %v852 = vld [vmem:[#allocation3 + $0x30] sm:$0xff]
      %v853 = vld [vmem:[#allocation3 + $0x38] sm:$0xff]
      %v854 = vld [vmem:[%s3] sm:$0x1]
      %v856 = vlaneseq
      %v857 = vshrl.u32 %v856, 7
      %v858 = vsub.s32 0, %v857
      %v859 = vrot.slane %v854, %v858
      %v861 = vadd.f32 %v846, %v859
      %v862 = vadd.f32 %v847, %v859
      %v863 = vadd.f32 %v848, %v859
      %v864 = vadd.f32 %v849, %v859
      %v865 = vadd.f32 %v850, %v859
      %v866 = vadd.f32 %v851, %v859
      %v867 = vadd.f32 %v852, %v859
      %v868 = vadd.f32 %v853, %v859
      %v869 = vmax.f32 %v861, 0.0
      %v870 = vmax.f32 %v862, 0.0
      %v871 = vmax.f32 %v863, 0.0
      %v872 = vmax.f32 %v864, 0.0
      %v873 = vmax.f32 %v865, 0.0
      %v874 = vmax.f32 %v866, 0.0
      %v875 = vmax.f32 %v867, 0.0
      %v876 = vmax.f32 %v868, 0.0
      %v877 = vpack.c.bf16 %v870, %v869
      %v878 = vpack.c.bf16 %v872, %v871
      %v879 = vpack.c.bf16 %v874, %v873
      %v880 = vpack.c.bf16 %v876, %v875
      %v885 = vunpack.c.l.b16 %v877
      %v886 = vunpack.c.h.b16 %v877
      %v887 = vunpack.c.l.b16 %v878
      %v888 = vunpack.c.h.b16 %v878
      %v889 = vunpack.c.l.b16 %v879
      %v890 = vunpack.c.h.b16 %v879
      %v891 = vunpack.c.l.b16 %v880
      %v892 = vunpack.c.h.b16 %v880
      %v893 = vpack.c.b16 %v885, %v885
      %v894 = vpack.c.b16 %v886, %v886
      %v895 = vpack.c.b16 %v887, %v887
      %v896 = vpack.c.b16 %v888, %v888
      %v897 = vpack.c.b16 %v889, %v889
      %v898 = vpack.c.b16 %v890, %v890
      %v899 = vpack.c.b16 %v891, %v891
      %v900 = vpack.c.b16 %v892, %v892
      %909 = vst [vmem:[%s284] sm:$0xf] %v893
      %910 = vst [vmem:[%s284 + $0x4] sm:$0xf] %v894
      %911 = vst [vmem:[%s284 + $0x8] sm:$0xf] %v895
      %912 = vst [vmem:[%s284 + $0xc] sm:$0xf] %v896
      %913 = vst [vmem:[%s284 + $0x10] sm:$0xf] %v897
      %914 = vst [vmem:[%s284 + $0x14] sm:$0xf] %v898
      %915 = vst [vmem:[%s284 + $0x18] sm:$0xf] %v899
      %916 = vst [vmem:[%s284 + $0x1c] sm:$0xf] %v900
      %p917 = scmp.lt.s32.totalorder %s19, 1
      %s918 = scalar_select %p917, %s19, 1
      %p919 = scmp.lt.s32.totalorder %s20, 0
      %s920 = scalar_select %p919, %s20, 0
      %s921 = smul.addr %s920, 8
      %s922 = smul.addr %s918, 8
      %s923 = sadd.s32 %s921, %s922
      %s924 = smul.addr %s923, 4
      %s925 = scalar_lea.vmem %s4, %s924
      // Predicated region
      $region37: #{edge_detection_encoder.9} parent=35 // pred_check
        %p926 = pneg %p147
      $region38: #{edge_detection_encoder.9} parent=35 // pred_check_branch
        %928 = sbr.rel (%p926) target = $region40
      $region39: #{edge_detection_encoder.9} parent=35 // pred_region
        _
      $region40: #{edge_detection_encoder.9} parent=35 // pred_fallthru
        _
    $region36: #{edge_detection_encoder.9} parent=5 // pred_fallthru
      _
    %p929 = scmp.le.s32.totalorder 2, %s10
    // Predicated region
    $region41: #{edge_detection_encoder.9} parent=5 // pred_check
      %p930 = pneg %p929
    $region42: #{edge_detection_encoder.9} parent=5 // pred_check_branch
      %932 = sbr.rel (%p930) target = $region44
    $region43: #{edge_detection_encoder.9} parent=5 // pred_region
      %s933 = ssub.s32 %s10, 2
      // Predicated region
      $region45: #{edge_detection_encoder.9} parent=43 // pred_check
        %p934 = pneg %p153
      $region46: #{edge_detection_encoder.9} parent=43 // pred_check_branch
        %936 = sbr.rel (%p934) target = $region48
      $region47: #{edge_detection_encoder.9} parent=43 // pred_region
        %p937 = scmp.lt.s32.totalorder %s21, 1
        %s938 = scalar_select %p937, %s21, 1
        %p939 = scmp.lt.s32.totalorder %s22, 0
        %s940 = scalar_select %p939, %s22, 0
        %s941 = smul.addr %s940, 8
        %s942 = smul.addr %s938, 8
        %s943 = sadd.s32 %s941, %s942
        %s944 = smul.addr %s943, 4
        %s945 = scalar_lea.vmem %s4, %s944
      $region48: #{edge_detection_encoder.9} parent=43 // pred_fallthru
        _
    $region44: #{edge_detection_encoder.9} parent=5 // pred_fallthru
      _
  $region6: #{edge_detection_encoder.9} parent=0 // loop_footer
    %s14 = sadd.s32 1, %s10
  $region7: #{edge_detection_encoder.9} parent=0 // loop_footer_branch
    %9 = sbr.rel target = $region3
  $region8: #{edge_detection_encoder.9} parent=0 // loop_exit
    _

// kernel: edge_detection_encoder.10
$region0: #{edge_detection_encoder.10}
  #allocation0 [shape = 'u32[]', space=smem, size = 0x4, offset = 0x4, fixed_abs, tag = 'smem constant byte address 0x4 - core index']
  #allocation1 [shape = 'u32[144,128]{1,0:T(1,128)}', space=vmem, size = 0x12000, scoped, tag = 'internal scratch']
  #allocation2 [shape = 'bf16[9,8,64]{2,1,0:T(8,128)(2,1)}', space=vmem, size = 0x4800, scoped, tag = 'scratch operand']
  #allocation3 [shape = 'f32[64,64]{1,0:T(8,128)}', space=vmem, size = 0x8000, scoped, tag = 'scratch operand']
  %s0 = inlined_call_operand.vmem [shape: bf16[2,16,16,32], index: 0, kind: input, shape index: {}, may-alias: {0,1}]
  %s1 = inlined_call_operand.vmem [shape: bf16[2,16,16,32], index: 1, kind: input, shape index: {}, may-alias: {0,1}]
  %s2 = inlined_call_operand.vmem [shape: bf16[2,64,64], index: 2, kind: input, shape index: {}]
  %s3 = inlined_call_operand.vmem [shape: f32[1,64], index: 3, kind: input, shape index: {}]
  %s4 = inlined_call_operand.vmem [shape: bf16[2,1,64,64], index: 4, kind: output, shape index: {}]
  %s5 = sld [smem:[#allocation0]]
  $region49: #{edge_detection_encoder.10} parent=0
    _
  %s7 = ssub.s32 1, %s5
  %s8 = scalar_select 0, %s7, %s5
  loop: start=0, step=1, limit=4
  $region2: #{edge_detection_encoder.10} parent=0 // loop_pre_header
    _
  $region3: #{edge_detection_encoder.10} parent=0 // loop_header
    %s10 = sphi 0, %s14
    %p11 = scmp.ge.s32.totalorder %s10, 4
    %s17 = sphi 0, %s29
    %s18 = sphi 0, %s25
    %s19 = sphi 0, %s17
    %s20 = sphi 0, %s18
    %s21 = sphi 0, %s19
    %s22 = sphi 0, %s20
    %s34 = sphi 0, %s36
    %s37 = sphi 0, %s34
    %s38 = sphi 0, %s37
    %s54 = sphi 0, %s38
    %s64 = sphi 0, %s66
    %s67 = sphi 0, %s64
    %s68 = sphi 0, %s67
    %s84 = sphi 0, %s68
    %s88 = sphi 0, %s88
    %s90 = sphi 0, %s88
    %s91 = sphi 0, %s90
    %s105 = sphi 0, %s91
    %s109 = sphi 0, %s109
    %s111 = sphi 0, %s109
    %s112 = sphi 0, %s111
    %s126 = sphi 0, %s112
    %s134 = sphi 0, %s136
    %s137 = sphi 0, %s134
    %s138 = sphi 0, %s137
    %s154 = sphi 0, %s138
  $region4: #{edge_detection_encoder.10} parent=0 // loop_header_branch
    %13 = sbr.rel (%p11) target = $region8
  $region5: #{edge_detection_encoder.10} parent=0 // loop_body
    %s15 = ssub.s32 %s10, 1
    %s16 = ssub.s32 %s10, 2
    %s23 = sadd.s32 1, %s18
    %p24 = scmp.ge.s32.totalorder %s23, 1
    %s25 = scalar_select %p24, 0, %s23
    %s26 = sadd.s32 1, %s17
    %s27 = scalar_select %p24, %s26, %s17
    %p28 = scmp.ge.s32.totalorder %s27, 2
    %s29 = scalar_select %p28, 0, %s27
    %s30 = ssub.s32 %s17, %s29
    %s31 = ssub.s32 %s18, %s25
    %s32 = sor.u32 %s30, %s31
    %p33 = scmp.eq.s32.totalorder %s32, 0
    %s35 = sadd.s32 %s34, 1
    %s36 = scalar_select %p33, %s34, %s35
    %p39 = pneg %p33
    %p40 = scmp.eq.s32.totalorder %s10, 1
    %p41 = por %p39, %p40
    %p42 = scmp.ne.s32.totalorder %s34, %s37
    %p43 = scmp.eq.s32.totalorder %s10, 0
    %p44 = por %p42, %p43
    %p45 = scmp.ne.s32.totalorder %s34, %s37
    %p46 = scmp.eq.s32.totalorder %s15, 1
    %p47 = por %p45, %p46
    %p48 = scmp.ne.s32.totalorder %s37, %s38
    %p49 = scmp.eq.s32.totalorder %s15, 0
    %p50 = por %p48, %p49
    %p51 = scmp.ne.s32.totalorder %s37, %s38
    %p52 = scmp.eq.s32.totalorder %s16, 1
    %p53 = por %p51, %p52
    %p55 = scmp.ne.s32.totalorder %s38, %s54
    %p56 = scmp.eq.s32.totalorder %s16, 0
    %p57 = por %p55, %p56
    %s58 = sadd.s32 %s18, 1
    %s59 = sadd.s32 %s25, 1
    %s60 = ssub.s32 %s17, %s29
    %s61 = ssub.s32 %s58, %s59
    %s62 = sor.u32 %s60, %s61
    %p63 = scmp.eq.s32.totalorder %s62, 0
    %s65 = sadd.s32 %s64, 1
    %s66 = scalar_select %p63, %s64, %s65
    %p69 = pneg %p63
    %p70 = scmp.eq.s32.totalorder %s10, 1
    %p71 = por %p69, %p70
    %p72 = scmp.ne.s32.totalorder %s64, %s67
    %p73 = scmp.eq.s32.totalorder %s10, 0
    %p74 = por %p72, %p73
    %p75 = scmp.ne.s32.totalorder %s64, %s67
    %p76 = scmp.eq.s32.totalorder %s15, 1
    %p77 = por %p75, %p76
    %p78 = scmp.ne.s32.totalorder %s67, %s68
    %p79 = scmp.eq.s32.totalorder %s15, 0
    %p80 = por %p78, %p79
    %p81 = scmp.ne.s32.totalorder %s67, %s68
    %p82 = scmp.eq.s32.totalorder %s16, 1
    %p83 = por %p81, %p82
    %p85 = scmp.ne.s32.totalorder %s68, %s84
    %p86 = scmp.eq.s32.totalorder %s16, 0
    %p87 = por %p85, %p86
    %s89 = sadd.s32 %s88, 1
    %p92 = scmp.eq.s32.totalorder %s10, 1
    %p93 = scmp.ne.s32.totalorder %s88, %s90
    %p94 = scmp.eq.s32.totalorder %s10, 0
    %p95 = por %p93, %p94
    %p96 = scmp.ne.s32.totalorder %s88, %s90
    %p97 = scmp.eq.s32.totalorder %s15, 1
    %p98 = por %p96, %p97
    %p99 = scmp.ne.s32.totalorder %s90, %s91
    %p100 = scmp.eq.s32.totalorder %s15, 0
    %p101 = por %p99, %p100
    %p102 = scmp.ne.s32.totalorder %s90, %s91
    %p103 = scmp.eq.s32.totalorder %s16, 1
    %p104 = por %p102, %p103
    %p106 = scmp.ne.s32.totalorder %s91, %s105
    %p107 = scmp.eq.s32.totalorder %s16, 0
    %p108 = por %p106, %p107
    %s110 = sadd.s32 %s109, 1
    %p113 = scmp.eq.s32.totalorder %s10, 1
    %p114 = scmp.ne.s32.totalorder %s109, %s111
    %p115 = scmp.eq.s32.totalorder %s10, 0
    %p116 = por %p114, %p115
    %p117 = scmp.ne.s32.totalorder %s109, %s111
    %p118 = scmp.eq.s32.totalorder %s15, 1
    %p119 = por %p117, %p118
    %p120 = scmp.ne.s32.totalorder %s111, %s112
    %p121 = scmp.eq.s32.totalorder %s15, 0
    %p122 = por %p120, %p121
    %p123 = scmp.ne.s32.totalorder %s111, %s112
    %p124 = scmp.eq.s32.totalorder %s16, 1
    %p125 = por %p123, %p124
    %p127 = scmp.ne.s32.totalorder %s112, %s126
    %p128 = scmp.eq.s32.totalorder %s16, 0
    %p129 = por %p127, %p128
    %s130 = ssub.s32 %s17, %s29
    %s131 = ssub.s32 %s18, %s25
    %s132 = sor.u32 %s130, %s131
    %p133 = scmp.eq.s32.totalorder %s132, 0
    %s135 = sadd.s32 %s134, 1
    %s136 = scalar_select %p133, %s134, %s135
    %p139 = pneg %p133
    %p140 = scmp.eq.s32.totalorder %s10, 1
    %p141 = por %p139, %p140
    %p142 = scmp.ne.s32.totalorder %s134, %s137
    %p143 = scmp.eq.s32.totalorder %s10, 0
    %p144 = por %p142, %p143
    %p145 = scmp.ne.s32.totalorder %s134, %s137
    %p146 = scmp.eq.s32.totalorder %s15, 1
    %p147 = por %p145, %p146
    %p148 = scmp.ne.s32.totalorder %s137, %s138
    %p149 = scmp.eq.s32.totalorder %s15, 0
    %p150 = por %p148, %p149
    %p151 = scmp.ne.s32.totalorder %s137, %s138
    %p152 = scmp.eq.s32.totalorder %s16, 1
    %p153 = por %p151, %p152
    %p155 = scmp.ne.s32.totalorder %s138, %s154
    %p156 = scmp.eq.s32.totalorder %s16, 0
    %p157 = por %p155, %p156
    %p158 = scmp.le.s32.totalorder 1, %s10
    %p159 = scmp.lt.s32.totalorder %s10, 3
    %p160 = pnand %p158, %p159
    %p161 = pneg %p160
    // Predicated region
    $region9: #{edge_detection_encoder.10} parent=5 // pred_check
      _
    $region10: #{edge_detection_encoder.10} parent=5 // pred_check_branch
      %163 = sbr.rel (%p160) target = $region12
    $region11: #{edge_detection_encoder.10} parent=5 // pred_region
      %s164 = ssub.s32 %s10, 1
      // Predicated region
      $region13: #{edge_detection_encoder.10} parent=11 // pred_check
        %p165 = pneg %p101
      $region14: #{edge_detection_encoder.10} parent=11 // pred_check_branch
        %167 = sbr.rel (%p165) target = $region16
      $region15: #{edge_detection_encoder.10} parent=11 // pred_region
        _
      $region16: #{edge_detection_encoder.10} parent=11 // pred_fallthru
        _
      // Predicated region
      $region17: #{edge_detection_encoder.10} parent=11 // pred_check
        %p168 = pneg %p122
      $region18: #{edge_detection_encoder.10} parent=11 // pred_check_branch
        %170 = sbr.rel (%p168) target = $region20
      $region19: #{edge_detection_encoder.10} parent=11 // pred_region
        _
      $region20: #{edge_detection_encoder.10} parent=11 // pred_fallthru
        _
    $region12: #{edge_detection_encoder.10} parent=5 // pred_fallthru
      _
    %p171 = scmp.lt.s32.totalorder %s10, 2
    // Predicated region
    $region21: #{edge_detection_encoder.10} parent=5 // pred_check
      %p172 = pneg %p171
    $region22: #{edge_detection_encoder.10} parent=5 // pred_check_branch
      %174 = sbr.rel (%p172) target = $region24
    $region23: #{edge_detection_encoder.10} parent=5 // pred_region
      // Predicated region
      $region25: #{edge_detection_encoder.10} parent=23 // pred_check
        %p175 = pneg %p44
      $region26: #{edge_detection_encoder.10} parent=23 // pred_check_branch
        %177 = sbr.rel (%p175) target = $region28
      $region27: #{edge_detection_encoder.10} parent=23 // pred_region
        %s178 = smul.u32 8, %s18
        %p179 = scmp.lt.s32.totalorder %s17, 1
        %s180 = scalar_select %p179, %s17, 1
        %p181 = scmp.lt.s32.totalorder %s178, 15
        %s182 = scalar_select %p181, %s178, 15
        %s183 = smul.addr %s182, 2
        %s184 = smul.addr %s180, 32
        %s185 = sadd.s32 %s183, %s184
        %s186 = smul.addr %s185, 4
        %s187 = scalar_lea.vmem %s0, %s186
        %s188 = smul.u32 8, %s18
      $region28: #{edge_detection_encoder.10} parent=23 // pred_fallthru
        _
      // Predicated region
      $region29: #{edge_detection_encoder.10} parent=23 // pred_check
        %p189 = pneg %p74
      $region30: #{edge_detection_encoder.10} parent=23 // pred_check_branch
        %191 = sbr.rel (%p189) target = $region32
      $region31: #{edge_detection_encoder.10} parent=23 // pred_region
        %s192 = sadd.s32 %s18, 1
        %s193 = smul.u32 8, %s192
        %p194 = scmp.lt.s32.totalorder %s17, 1
        %s195 = scalar_select %p194, %s17, 1
        %p196 = scmp.lt.s32.totalorder %s193, 15
        %s197 = scalar_select %p196, %s193, 15
        %s198 = smul.addr %s197, 2
        %s199 = smul.addr %s195, 32
        %s200 = sadd.s32 %s198, %s199
        %s201 = smul.addr %s200, 4
        %s202 = scalar_lea.vmem %s1, %s201
        %s203 = sadd.s32 %s18, 1
        %s204 = smul.u32 8, %s203
      $region32: #{edge_detection_encoder.10} parent=23 // pred_fallthru
        _
    $region24: #{edge_detection_encoder.10} parent=5 // pred_fallthru
      _
    %p205 = scmp.le.s32.totalorder 1, %s10
    %p206 = scmp.lt.s32.totalorder %s10, 3
    %p207 = pnand %p205, %p206
    %p208 = pneg %p207
    // Predicated region
    $region33: #{edge_detection_encoder.10} parent=5 // pred_check
      _
    $region34: #{edge_detection_encoder.10} parent=5 // pred_check_branch
      %210 = sbr.rel (%p207) target = $region36
    $region35: #{edge_detection_encoder.10} parent=5 // pred_region
      %s211 = ssub.s32 %s10, 1
      %s212 = smul.u32 8, %s20
      %p213 = scmp.lt.s32.totalorder %s19, 1
      %s214 = scalar_select %p213, %s19, 1
      %p215 = scmp.lt.s32.totalorder %s212, 15
      %s216 = scalar_select %p215, %s212, 15
      %s217 = smul.addr %s216, 2
      %s218 = smul.addr %s214, 32
      %s219 = sadd.s32 %s217, %s218
      %s220 = smul.addr %s219, 4
      %s221 = scalar_lea.vmem %s0, %s220
      %p222 = pneg %p50
      %p223 = pneg %p47
      %s224 = sadd.s32 %s20, 1
      %s225 = smul.u32 8, %s224
      %p226 = scmp.lt.s32.totalorder %s19, 1
      %s227 = scalar_select %p226, %s19, 1
      %p228 = scmp.lt.s32.totalorder %s225, 15
      %s229 = scalar_select %p228, %s225, 15
      %s230 = smul.addr %s229, 2
      %s231 = smul.addr %s227, 32
      %s232 = sadd.s32 %s230, %s231
      %s233 = smul.addr %s232, 4
      %s234 = scalar_lea.vmem %s1, %s233
      %p235 = pneg %p80
      %p236 = pneg %p77
      %p237 = pneg %p101
      %p238 = pneg %p98
      %p239 = pneg %p122
      %p240 = pneg %p119
      %p241 = pneg %p150
      %p242 = pneg %p147
      %p243 = scmp.lt.s32.totalorder %s19, 1
      %s244 = scalar_select %p243, %s19, 1
      %p245 = scmp.lt.s32.totalorder %s20, 0
      %s246 = scalar_select %p245, %s20, 0
      %s247 = smul.addr %s246, 8
      %s248 = smul.addr %s244, 8
      %s249 = sadd.s32 %s247, %s248
      %s250 = smul.addr %s249, 4
      %s251 = scalar_lea.vmem %s4, %s250
      %s252 = smul.u32 8, %s20
      %p253 = scmp.lt.s32.totalorder %s19, 1
      %s254 = scalar_select %p253, %s19, 1
      %p255 = scmp.lt.s32.totalorder %s252, 15
      %s256 = scalar_select %p255, %s252, 15
      %s257 = smul.addr %s256, 2
      %s258 = smul.addr %s254, 32
      %s259 = sadd.s32 %s257, %s258
      %s260 = smul.addr %s259, 4
      %s261 = scalar_lea.vmem %s0, %s260
      %s262 = smul.u32 8, %s20
      %s263 = sadd.s32 %s20, 1
      %s264 = smul.u32 8, %s263
      %p265 = scmp.lt.s32.totalorder %s19, 1
      %s266 = scalar_select %p265, %s19, 1
      %p267 = scmp.lt.s32.totalorder %s264, 15
      %s268 = scalar_select %p267, %s264, 15
      %s269 = smul.addr %s268, 2
      %s270 = smul.addr %s266, 32
      %s271 = sadd.s32 %s269, %s270
      %s272 = smul.addr %s271, 4
      %s273 = scalar_lea.vmem %s1, %s272
      %s274 = sadd.s32 %s20, 1
      %s275 = smul.u32 8, %s274
      %p276 = scmp.lt.s32.totalorder %s19, 1
      %s277 = scalar_select %p276, %s19, 1
      %p278 = scmp.lt.s32.totalorder %s20, 0
      %s279 = scalar_select %p278, %s20, 0
      %s280 = smul.addr %s279, 8
      %s281 = smul.addr %s277, 8
      %s282 = sadd.s32 %s280, %s281
      %s283 = smul.addr %s282, 4
      %s284 = scalar_lea.vmem %s4, %s283
      %v286 = vld [vmem:[%s261] sm:$0xf]
      %v287 = vld [vmem:[%s261 + $0x8] sm:$0xf]
      %v288 = vld [vmem:[%s261 + $0x10] sm:$0xf]
      %v289 = vld [vmem:[%s261 + $0x18] sm:$0xf]
      %v290 = vld [vmem:[%s261 + $0x20] sm:$0xf]
      %v291 = vld [vmem:[%s261 + $0x28] sm:$0xf]
      %v292 = vld [vmem:[%s261 + $0x30] sm:$0xf]
      %v293 = vld [vmem:[%s261 + $0x38] sm:$0xf]
      %vm294 = vcmask 257024
      %295 = vst.msk [vmem:[#allocation2] sm:$0xf] %vm294, %v286
      %296 = vst.msk [vmem:[#allocation2 + $0x4] sm:$0xf] %vm294, %v287
      %297 = vst.msk [vmem:[#allocation2 + $0x8] sm:$0xf] %vm294, %v288
      %298 = vst.msk [vmem:[#allocation2 + $0xc] sm:$0xf] %vm294, %v289
      %299 = vst.msk [vmem:[#allocation2 + $0x10] sm:$0xf] %vm294, %v290
      %300 = vst.msk [vmem:[#allocation2 + $0x14] sm:$0xf] %vm294, %v291
      %301 = vst.msk [vmem:[#allocation2 + $0x18] sm:$0xf] %vm294, %v292
      %302 = vst.msk [vmem:[#allocation2 + $0x1c] sm:$0xf] %vm294, %v293
      %v303 = vld [vmem:[%s273] sm:$0xf]
      %s304 = scalar_lea.vmem [#allocation2], 32
      %305 = vst.msk [vmem:[%s304] sm:$0xf] %vm294, %v303
      %v306 = vld [vmem:[%s261] sm:$0xf]
      %v307 = vld [vmem:[%s261 + $0x4] sm:$0x1]
      %v308 = vld [vmem:[%s261 + $0x8] sm:$0xf]
      %v309 = vld [vmem:[%s261 + $0xc] sm:$0x1]
      %v310 = vld [vmem:[%s261 + $0x10] sm:$0xf]
      %v311 = vld [vmem:[%s261 + $0x14] sm:$0x1]
      %v312 = vld [vmem:[%s261 + $0x18] sm:$0xf]
      %v313 = vld [vmem:[%s261 + $0x1c] sm:$0x1]
      %v314 = vld [vmem:[%s261 + $0x20] sm:$0xf]
      %v315 = vld [vmem:[%s261 + $0x24] sm:$0x1]
      %v316 = vld [vmem:[%s261 + $0x28] sm:$0xf]
      %v317 = vld [vmem:[%s261 + $0x2c] sm:$0x1]
      %v318 = vld [vmem:[%s261 + $0x30] sm:$0xf]
      %v319 = vld [vmem:[%s261 + $0x34] sm:$0x1]
      %v320 = vld [vmem:[%s261 + $0x38] sm:$0xf]
      %v321 = vld [vmem:[%s261 + $0x3c] sm:$0x1]
      %vm322 = vsmask.f32 3328
      %vm323 = vsmask.f32 7440
      %vm324 = vmor %vm322, %vm323
      %v326 = vshrl.u32 %v306, 16
      %v328 = vrot.slane %v326, 4
      %v329 = vshll.u32 %v306, 16
      %v331 = vrot.slane %v329, 5
      %v332 = vor.u32 %v328, %v331
      %v333 = vrot.slane %v332, 4
      %v335 = vshll.u32 %v307, 16
      %v337 = vrot.slane %v335, 5
      %v338 = vsel %vm324, %v333, %v337
      %v340 = vshrl.u32 %v308, 16
      %v342 = vrot.slane %v340, 4
      %v343 = vshll.u32 %v308, 16
      %v345 = vrot.slane %v343, 5
      %v346 = vor.u32 %v342, %v345
      %v347 = vrot.slane %v346, 4
      %v349 = vshll.u32 %v309, 16
      %v351 = vrot.slane %v349, 5
      %v352 = vsel %vm324, %v347, %v351
      %v354 = vshrl.u32 %v310, 16
      %v356 = vrot.slane %v354, 4
      %v357 = vshll.u32 %v310, 16
      %v359 = vrot.slane %v357, 5
      %v360 = vor.u32 %v356, %v359
      %v361 = vrot.slane %v360, 4
      %v363 = vshll.u32 %v311, 16
      %v365 = vrot.slane %v363, 5
      %v366 = vsel %vm324, %v361, %v365
      %v368 = vshrl.u32 %v312, 16
      %v370 = vrot.slane %v368, 4
      %v371 = vshll.u32 %v312, 16
      %v373 = vrot.slane %v371, 5
      %v374 = vor.u32 %v370, %v373
      %v375 = vrot.slane %v374, 4
      %v377 = vshll.u32 %v313, 16
      %v379 = vrot.slane %v377, 5
      %v380 = vsel %vm324, %v375, %v379
      %v382 = vshrl.u32 %v314, 16
      %v384 = vrot.slane %v382, 4
      %v385 = vshll.u32 %v314, 16
      %v387 = vrot.slane %v385, 5
      %v388 = vor.u32 %v384, %v387
      %v389 = vrot.slane %v388, 4
      %v391 = vshll.u32 %v315, 16
      %v393 = vrot.slane %v391, 5
      %v394 = vsel %vm324, %v389, %v393
      %v396 = vshrl.u32 %v316, 16
      %v398 = vrot.slane %v396, 4
      %v399 = vshll.u32 %v316, 16
      %v401 = vrot.slane %v399, 5
      %v402 = vor.u32 %v398, %v401
      %v403 = vrot.slane %v402, 4
      %v405 = vshll.u32 %v317, 16
      %v407 = vrot.slane %v405, 5
      %v408 = vsel %vm324, %v403, %v407
      %v410 = vshrl.u32 %v318, 16
      %v412 = vrot.slane %v410, 4
      %v413 = vshll.u32 %v318, 16
      %v415 = vrot.slane %v413, 5
      %v416 = vor.u32 %v412, %v415
      %v417 = vrot.slane %v416, 4
      %v419 = vshll.u32 %v319, 16
      %v421 = vrot.slane %v419, 5
      %v422 = vsel %vm324, %v417, %v421
      %v424 = vshrl.u32 %v320, 16
      %v426 = vrot.slane %v424, 4
      %v427 = vshll.u32 %v320, 16
      %v429 = vrot.slane %v427, 5
      %v430 = vor.u32 %v426, %v429
      %v431 = vrot.slane %v430, 4
      %v433 = vshll.u32 %v321, 16
      %v435 = vrot.slane %v433, 5
      %v436 = vsel %vm324, %v431, %v435
      %437 = vrot.lane.b32.xlu0 %v338, 32
      %v438 = vpop.permute.xlu0 %437
      %439 = vrot.lane.b32.xlu0 %v352, 32
      %v440 = vpop.permute.xlu0 %439
      %441 = vrot.lane.b32.xlu0 %v366, 32
      %v442 = vpop.permute.xlu0 %441
      %443 = vrot.lane.b32.xlu0 %v380, 32
      %v444 = vpop.permute.xlu0 %443
      %445 = vrot.lane.b32.xlu0 %v394, 32
      %v446 = vpop.permute.xlu0 %445
      %447 = vrot.lane.b32.xlu0 %v408, 32
      %v448 = vpop.permute.xlu0 %447
      %449 = vrot.lane.b32.xlu0 %v422, 32
      %v450 = vpop.permute.xlu0 %449
      %451 = vrot.lane.b32.xlu0 %v436, 32
      %v452 = vpop.permute.xlu0 %451
      %vm461 = vcmask 519424
      %462 = vst.msk [vmem:[#allocation2] sm:$0xf] %vm461, %v438
      %463 = vst.msk [vmem:[#allocation2 + $0x4] sm:$0xf] %vm461, %v440
      %464 = vst.msk [vmem:[#allocation2 + $0x8] sm:$0xf] %vm461, %v442
      %465 = vst.msk [vmem:[#allocation2 + $0xc] sm:$0xf] %vm461, %v444
      %466 = vst.msk [vmem:[#allocation2 + $0x10] sm:$0xf] %vm461, %v446
      %467 = vst.msk [vmem:[#allocation2 + $0x14] sm:$0xf] %vm461, %v448
      %468 = vst.msk [vmem:[#allocation2 + $0x18] sm:$0xf] %vm461, %v450
      %469 = vst.msk [vmem:[#allocation2 + $0x1c] sm:$0xf] %vm461, %v452
      %v470 = vld [vmem:[%s273] sm:$0xf]
      %v471 = vld [vmem:[%s273 + $0x4] sm:$0x1]
      %v473 = vshrl.u32 %v470, 16
      %v475 = vrot.slane %v473, 4
      %v476 = vshll.u32 %v470, 16
      %v478 = vrot.slane %v476, 5
      %v479 = vor.u32 %v475, %v478
      %v480 = vrot.slane %v479, 4
      %v482 = vshll.u32 %v471, 16
      %v484 = vrot.slane %v482, 5
      %v485 = vsel %vm324, %v480, %v484
      %486 = vrot.lane.b32.xlu0 %v485, 32
      %v487 = vpop.permute.xlu0 %486
      %489 = vst.msk [vmem:[%s304] sm:$0xf] %vm461, %v487
      %v490 = vld [vmem:[#allocation2] sm:$0xf]
      %v491 = vld [vmem:[#allocation2 + $0x4] sm:$0xf]
      %v492 = vld [vmem:[#allocation2 + $0x8] sm:$0xf]
      %v493 = vld [vmem:[#allocation2 + $0xc] sm:$0xf]
      %v494 = vld [vmem:[#allocation2 + $0x10] sm:$0xf]
      %v495 = vld [vmem:[#allocation2 + $0x14] sm:$0xf]
      %v496 = vld [vmem:[#allocation2 + $0x18] sm:$0xf]
      %v497 = vld [vmem:[#allocation2 + $0x1c] sm:$0xf]
      %v498 = vld [vmem:[%s2] sm:$0xf]
      %v499 = vld [vmem:[%s2 + $0x4] sm:$0xf]
      %v500 = vld [vmem:[%s2 + $0x8] sm:$0xf]
      %v501 = vld [vmem:[%s2 + $0xc] sm:$0xf]
      %v502 = vld [vmem:[%s2 + $0x10] sm:$0xf]
      %v503 = vld [vmem:[%s2 + $0x14] sm:$0xf]
      %v504 = vld [vmem:[%s2 + $0x18] sm:$0xf]
      %v505 = vld [vmem:[%s2 + $0x1c] sm:$0xf]
      %v514 = vunpack.c.l.b16 %v490
      %v515 = vunpack.c.l.b16 %v491
      %v516 = vunpack.c.l.b16 %v492
      %v517 = vunpack.c.l.b16 %v493
      %v518 = vunpack.c.l.b16 %v494
      %v519 = vunpack.c.l.b16 %v495
      %v520 = vunpack.c.l.b16 %v496
      %v521 = vunpack.c.l.b16 %v497
      %v522 = vpack.c.b16 %v515, %v514
      %v523 = vpack.c.b16 %v517, %v516
      %v524 = vpack.c.b16 %v519, %v518
      %v525 = vpack.c.b16 %v521, %v520
      %v534 = vunpack.c.l.b16 %v498
      %v535 = vunpack.c.l.b16 %v499
      %v536 = vunpack.c.l.b16 %v500
      %v537 = vunpack.c.l.b16 %v501
      %v538 = vunpack.c.l.b16 %v502
      %v539 = vunpack.c.l.b16 %v503
      %v540 = vunpack.c.l.b16 %v504
      %v541 = vunpack.c.l.b16 %v505
      %v542 = vpack.c.b16 %v535, %v534
      %v543 = vpack.c.b16 %v537, %v536
      %v544 = vpack.c.b16 %v539, %v538
      %v545 = vpack.c.b16 %v541, %v540
      %vm550 = vcmask 523264
      %v552 = vsel %vm550, %v522, 0
      %v555 = vsel %vm550, %v523, 0
      %v558 = vsel %vm550, %v524, 0
      %v561 = vsel %vm550, %v525, 0
      %563 = vmatprep.subr.bf16.mxu0 0
      %564 = vmatpush1.bf16.msra.mxu0 %v542
      %565 = vmatprep.subr.bf16.mxu0 0
      %566 = vmatpush1.bf16.msra.mxu0 %v543
      %567 = vmatprep.subr.bf16.mxu0 0
      %568 = vmatpush1.bf16.msra.mxu0 %v544
      %569 = vmatprep.subr.bf16.mxu0 0
      %570 = vmatpush1.bf16.msra.mxu0 %v545
      %571 = vmatprep.subr.bf16.mxu0 0
      %572 = vmatpush1.bf16.msra.mxu0 0
      %573 = vmatprep.subr.bf16.mxu0 0
      %574 = vmatpush1.bf16.msra.mxu0 0
      %575 = vmatprep.subr.bf16.mxu0 0
      %576 = vmatpush1.bf16.msra.mxu0 0
      %577 = vmatprep.subr.bf16.mxu0 0
      %578 = vmatpush1.bf16.msra.mxu0 0
      %579 = vmatprep.subr.bf16.mxu0 0
      %580 = vmatpush1.bf16.msra.mxu0 0
      %581 = vmatprep.subr.bf16.mxu0 0
      %582 = vmatpush1.bf16.msra.mxu0 0
      %583 = vmatprep.subr.bf16.mxu0 0
      %584 = vmatpush1.bf16.msra.mxu0 0
      %585 = vmatprep.subr.bf16.mxu0 0
      %586 = vmatpush1.bf16.msra.mxu0 0
      %587 = vmatprep.subr.bf16.mxu0 0
      %588 = vmatpush1.bf16.msra.mxu0 0
      %589 = vmatprep.subr.bf16.mxu0 0
      %590 = vmatpush1.bf16.msra.mxu0 0
      %591 = vmatprep.subr.bf16.mxu0 0
      %592 = vmatpush1.bf16.msra.mxu0 0
      %593 = vmatprep.subr.bf16.mxu0 0
      %594 = vmatpush1.bf16.msra.mxu0 0
      %595 = vmatprep.mubr.bf16.mxu0 0
      %596 = vmatmul.mubr.bf16.gmra.mrb[0].mxu0 %v552
      %v597 = vpop.f32.mrb[0].mxu0
      %v598 = vadd.f32 0.0, %v597
      %v599 = vpop.f32.mrb[0].mxu0
      %v600 = vpop.f32.mrb[0].mxu0
      %v601 = vadd.f32 0.0, %v600
      %v602 = vpop.f32.mrb[0].mxu0
      %603 = vmatprep.mubr.bf16.mxu0 0
      %604 = vmatmul.mubr.bf16.gmra.mrb[0].mxu0 %v555
      %v605 = vpop.f32.mrb[0].mxu0
      %v606 = vadd.f32 0.0, %v605
      %v607 = vpop.f32.mrb[0].mxu0
      %v608 = vpop.f32.mrb[0].mxu0
      %v609 = vadd.f32 0.0, %v608
      %v610 = vpop.f32.mrb[0].mxu0
      %611 = vmatprep.mubr.bf16.mxu0 0
      %612 = vmatmul.mubr.bf16.gmra.mrb[0].mxu0 %v558
      %v613 = vpop.f32.mrb[0].mxu0
      %v614 = vadd.f32 0.0, %v613
      %v615 = vpop.f32.mrb[0].mxu0
      %v616 = vpop.f32.mrb[0].mxu0
      %v617 = vadd.f32 0.0, %v616
      %v618 = vpop.f32.mrb[0].mxu0
      %619 = vmatprep.mubr.bf16.mxu0 0
      %620 = vmatmul.mubr.bf16.gmra.mrb[0].mxu0 %v561
      %v621 = vpop.f32.mrb[0].mxu0
      %v622 = vadd.f32 0.0, %v621
      %v623 = vpop.f32.mrb[0].mxu0
      %v624 = vpop.f32.mrb[0].mxu0
      %v625 = vadd.f32 0.0, %v624
      %v626 = vpop.f32.mrb[0].mxu0
      %627 = vdwg.mxu0
      %628 = vst.msk [vmem:[#allocation3] sm:$0xff] %vm550, %v598
      %629 = vst.msk [vmem:[#allocation3 + $0x8] sm:$0xff] %vm550, %v601
      %630 = vst.msk [vmem:[#allocation3 + $0x10] sm:$0xff] %vm550, %v606
      %631 = vst.msk [vmem:[#allocation3 + $0x18] sm:$0xff] %vm550, %v609
      %632 = vst.msk [vmem:[#allocation3 + $0x20] sm:$0xff] %vm550, %v614
      %633 = vst.msk [vmem:[#allocation3 + $0x28] sm:$0xff] %vm550, %v617
      %634 = vst.msk [vmem:[#allocation3 + $0x30] sm:$0xff] %vm550, %v622
      %635 = vst.msk [vmem:[#allocation3 + $0x38] sm:$0xff] %vm550, %v625
      %s636 = scalar_lea.vmem [#allocation2], 4
      %v637 = vld [vmem:[%s636] sm:$0xf]
      %v638 = vld [vmem:[%s636 + $0x4] sm:$0xf]
      %v639 = vld [vmem:[%s636 + $0x8] sm:$0xf]
      %v640 = vld [vmem:[%s636 + $0xc] sm:$0xf]
      %v641 = vld [vmem:[%s636 + $0x10] sm:$0xf]
      %v642 = vld [vmem:[%s636 + $0x14] sm:$0xf]
      %v643 = vld [vmem:[%s636 + $0x18] sm:$0xf]
      %v644 = vld [vmem:[%s636 + $0x1c] sm:$0xf]
      %s645 = scalar_lea.vmem %s2, 32
      %v646 = vld [vmem:[%s645] sm:$0xf]
      %v647 = vld [vmem:[%s645 + $0x4] sm:$0xf]
      %v648 = vld [vmem:[%s645 + $0x8] sm:$0xf]
      %v649 = vld [vmem:[%s645 + $0xc] sm:$0xf]
      %v650 = vld [vmem:[%s645 + $0x10] sm:$0xf]
      %v651 = vld [vmem:[%s645 + $0x14] sm:$0xf]
      %v652 = vld [vmem:[%s645 + $0x18] sm:$0xf]
      %v653 = vld [vmem:[%s645 + $0x1c] sm:$0xf]
      %v662 = vunpack.c.l.b16 %v637
      %v663 = vunpack.c.l.b16 %v638
      %v664 = vunpack.c.l.b16 %v639
      %v665 = vunpack.c.l.b16 %v640
      %v666 = vunpack.c.l.b16 %v641
      %v667 = vunpack.c.l.b16 %v642
      %v668 = vunpack.c.l.b16 %v643
      %v669 = vunpack.c.l.b16 %v644
      %v670 = vpack.c.b16 %v663, %v662
      %v671 = vpack.c.b16 %v665, %v664
      %v672 = vpack.c.b16 %v667, %v666
      %v673 = vpack.c.b16 %v669, %v668
      %v682 = vunpack.c.l.b16 %v646
      %v683 = vunpack.c.l.b16 %v647
      %v684 = vunpack.c.l.b16 %v648
      %v685 = vunpack.c.l.b16 %v649
      %v686 = vunpack.c.l.b16 %v650
      %v687 = vunpack.c.l.b16 %v651
      %v688 = vunpack.c.l.b16 %v652
      %v689 = vunpack.c.l.b16 %v653
      %v690 = vpack.c.b16 %v683, %v682
      %v691 = vpack.c.b16 %v685, %v684
      %v692 = vpack.c.b16 %v687, %v686
      %v693 = vpack.c.b16 %v689, %v688
      %v699 = vsel %vm550, %v670, 0
      %v702 = vsel %vm550, %v671, 0
      %v705 = vsel %vm550, %v672, 0
      %v708 = vsel %vm550, %v673, 0
      %710 = vmatprep.subr.bf16.mxu0 0
      %711 = vmatpush1.bf16.msra.mxu0 %v690
      %712 = vmatprep.subr.bf16.mxu0 0
      %713 = vmatpush1.bf16.msra.mxu0 %v691
      %714 = vmatprep.subr.bf16.mxu0 0
      %715 = vmatpush1.bf16.msra.mxu0 %v692
      %716 = vmatprep.subr.bf16.mxu0 0
      %717 = vmatpush1.bf16.msra.mxu0 %v693
      %718 = vmatprep.subr.bf16.mxu0 0
      %719 = vmatpush1.bf16.msra.mxu0 0
      %720 = vmatprep.subr.bf16.mxu0 0
      %721 = vmatpush1.bf16.msra.mxu0 0
      %722 = vmatprep.subr.bf16.mxu0 0
      %723 = vmatpush1.bf16.msra.mxu0 0
      %724 = vmatprep.subr.bf16.mxu0 0
      %725 = vmatpush1.bf16.msra.mxu0 0
      %726 = vmatprep.subr.bf16.mxu0 0
      %727 = vmatpush1.bf16.msra.mxu0 0
      %728 = vmatprep.subr.bf16.mxu0 0
      %729 = vmatpush1.bf16.msra.mxu0 0
      %730 = vmatprep.subr.bf16.mxu0 0
      %731 = vmatpush1.bf16.msra.mxu0 0
      %732 = vmatprep.subr.bf16.mxu0 0
      %733 = vmatpush1.bf16.msra.mxu0 0
      %734 = vmatprep.subr.bf16.mxu0 0
      %735 = vmatpush1.bf16.msra.mxu0 0
      %736 = vmatprep.subr.bf16.mxu0 0
      %737 = vmatpush1.bf16.msra.mxu0 0
      %738 = vmatprep.subr.bf16.mxu0 0
      %739 = vmatpush1.bf16.msra.mxu0 0
      %740 = vmatprep.subr.bf16.mxu0 0
      %741 = vmatpush1.bf16.msra.mxu0 0
      %742 = vmatprep.mubr.bf16.mxu0 0
      %743 = vmatmul.mubr.bf16.gmra.mrb[0].mxu0 %v699
      %v744 = vpop.f32.mrb[0].mxu0
      %v745 = vadd.f32 0.0, %v744
      %v746 = vpop.f32.mrb[0].mxu0
      %v747 = vpop.f32.mrb[0].mxu0
      %v748 = vadd.f32 0.0, %v747
      %v749 = vpop.f32.mrb[0].mxu0
      %750 = vmatprep.mubr.bf16.mxu0 0
      %751 = vmatmul.mubr.bf16.gmra.mrb[0].mxu0 %v702
      %v752 = vpop.f32.mrb[0].mxu0
      %v753 = vadd.f32 0.0, %v752
      %v754 = vpop.f32.mrb[0].mxu0
      %v755 = vpop.f32.mrb[0].mxu0
      %v756 = vadd.f32 0.0, %v755
      %v757 = vpop.f32.mrb[0].mxu0
      %758 = vmatprep.mubr.bf16.mxu0 0
      %759 = vmatmul.mubr.bf16.gmra.mrb[0].mxu0 %v705
      %v760 = vpop.f32.mrb[0].mxu0
      %v761 = vadd.f32 0.0, %v760
      %v762 = vpop.f32.mrb[0].mxu0
      %v763 = vpop.f32.mrb[0].mxu0
      %v764 = vadd.f32 0.0, %v763
      %v765 = vpop.f32.mrb[0].mxu0
      %766 = vmatprep.mubr.bf16.mxu0 0
      %767 = vmatmul.mubr.bf16.gmra.mrb[0].mxu0 %v708
      %v768 = vpop.f32.mrb[0].mxu0
      %v769 = vadd.f32 0.0, %v768
      %v770 = vpop.f32.mrb[0].mxu0
      %v771 = vpop.f32.mrb[0].mxu0
      %v772 = vadd.f32 0.0, %v771
      %v773 = vpop.f32.mrb[0].mxu0
      %774 = vdwg.mxu0
      %v775 = vld [vmem:[#allocation3] sm:$0xff]
      %v776 = vld [vmem:[#allocation3 + $0x8] sm:$0xff]
      %v777 = vld [vmem:[#allocation3 + $0x10] sm:$0xff]
      %v778 = vld [vmem:[#allocation3 + $0x18] sm:$0xff]
      %v779 = vld [vmem:[#allocation3 + $0x20] sm:$0xff]
      %v780 = vld [vmem:[#allocation3 + $0x28] sm:$0xff]
      %v781 = vld [vmem:[#allocation3 + $0x30] sm:$0xff]
      %v782 = vld [vmem:[#allocation3 + $0x38] sm:$0xff]
      %v783 = vadd.f32 %v775, %v745
      %v784 = vadd.f32 %v776, %v748
      %v785 = vadd.f32 %v777, %v753
      %v786 = vadd.f32 %v778, %v756
      %v787 = vadd.f32 %v779, %v761
      %v788 = vadd.f32 %v780, %v764
      %v789 = vadd.f32 %v781, %v769
      %v790 = vadd.f32 %v782, %v772
      %791 = vst.msk [vmem:[#allocation3] sm:$0xff] %vm550, %v783
      %792 = vst.msk [vmem:[#allocation3 + $0x8] sm:$0xff] %vm550, %v784
      %793 = vst.msk [vmem:[#allocation3 + $0x10] sm:$0xff] %vm550, %v785
      %794 = vst.msk [vmem:[#allocation3 + $0x18] sm:$0xff] %vm550, %v786
      %795 = vst.msk [vmem:[#allocation3 + $0x20] sm:$0xff] %vm550, %v787
      %796 = vst.msk [vmem:[#allocation3 + $0x28] sm:$0xff] %vm550, %v788
      %797 = vst.msk [vmem:[#allocation3 + $0x30] sm:$0xff] %vm550, %v789
      %798 = vst.msk [vmem:[#allocation3 + $0x38] sm:$0xff] %vm550, %v790
      %v799 = vld [vmem:[#allocation3] sm:$0xff]
      %v800 = vld [vmem:[#allocation3 + $0x8] sm:$0xff]
      %v801 = vld [vmem:[#allocation3 + $0x10] sm:$0xff]
      %v802 = vld [vmem:[#allocation3 + $0x18] sm:$0xff]
      %v803 = vld [vmem:[#allocation3 + $0x20] sm:$0xff]
      %v804 = vld [vmem:[#allocation3 + $0x28] sm:$0xff]
      %v805 = vld [vmem:[#allocation3 + $0x30] sm:$0xff]
      %v806 = vld [vmem:[#allocation3 + $0x38] sm:$0xff]
      %v807 = vld [vmem:[%s3] sm:$0x1]
      %v809 = vlaneseq
      %v810 = vshrl.u32 %v809, 7
      %v811 = vsub.s32 0, %v810
      %v812 = vrot.slane %v807, %v811
      %v814 = vadd.f32 %v799, %v812
      %v815 = vadd.f32 %v800, %v812
      %v816 = vadd.f32 %v801, %v812
      %v817 = vadd.f32 %v802, %v812
      %v818 = vadd.f32 %v803, %v812
      %v819 = vadd.f32 %v804, %v812
      %v820 = vadd.f32 %v805, %v812
      %v821 = vadd.f32 %v806, %v812
      %v822 = vmax.f32 %v814, 0.0
      %v823 = vmax.f32 %v815, 0.0
      %v824 = vmax.f32 %v816, 0.0
      %v825 = vmax.f32 %v817, 0.0
      %v826 = vmax.f32 %v818, 0.0
      %v827 = vmax.f32 %v819, 0.0
      %v828 = vmax.f32 %v820, 0.0
      %v829 = vmax.f32 %v821, 0.0
      %v830 = vpack.c.bf16 %v823, %v822
      %v831 = vpack.c.bf16 %v825, %v824
      %v832 = vpack.c.bf16 %v827, %v826
      %v833 = vpack.c.bf16 %v829, %v828
      %v838 = vunpack.c.l.b16 %v830
      %v839 = vunpack.c.h.b16 %v830
      %v840 = vunpack.c.l.b16 %v831
      %v841 = vunpack.c.h.b16 %v831
      %v842 = vunpack.c.l.b16 %v832
      %v843 = vunpack.c.h.b16 %v832
      %v844 = vunpack.c.l.b16 %v833
      %v845 = vunpack.c.h.b16 %v833
      %v846 = vpack.c.b16 %v838, %v838
      %v847 = vpack.c.b16 %v839, %v839
      %v848 = vpack.c.b16 %v840, %v840
      %v849 = vpack.c.b16 %v841, %v841
      %v850 = vpack.c.b16 %v842, %v842
      %v851 = vpack.c.b16 %v843, %v843
      %v852 = vpack.c.b16 %v844, %v844
      %v853 = vpack.c.b16 %v845, %v845
      %vm862 = vcmask 519168
      %863 = vst.msk [vmem:[%s284] sm:$0xf] %vm862, %v846
      %864 = vst.msk [vmem:[%s284 + $0x4] sm:$0xf] %vm862, %v847
      %865 = vst.msk [vmem:[%s284 + $0x8] sm:$0xf] %vm862, %v848
      %866 = vst.msk [vmem:[%s284 + $0xc] sm:$0xf] %vm862, %v849
      %867 = vst.msk [vmem:[%s284 + $0x10] sm:$0xf] %vm862, %v850
      %868 = vst.msk [vmem:[%s284 + $0x14] sm:$0xf] %vm862, %v851
      %869 = vst.msk [vmem:[%s284 + $0x18] sm:$0xf] %vm862, %v852
      %870 = vst.msk [vmem:[%s284 + $0x1c] sm:$0xf] %vm862, %v853
      %p871 = scmp.lt.s32.totalorder %s19, 1
      %s872 = scalar_select %p871, %s19, 1
      %p873 = scmp.lt.s32.totalorder %s20, 0
      %s874 = scalar_select %p873, %s20, 0
      %s875 = smul.addr %s874, 8
      %s876 = smul.addr %s872, 8
      %s877 = sadd.s32 %s875, %s876
      %s878 = smul.addr %s877, 4
      %s879 = scalar_lea.vmem %s4, %s878
      // Predicated region
      $region37: #{edge_detection_encoder.10} parent=35 // pred_check
        %p880 = pneg %p147
      $region38: #{edge_detection_encoder.10} parent=35 // pred_check_branch
        %882 = sbr.rel (%p880) target = $region40
      $region39: #{edge_detection_encoder.10} parent=35 // pred_region
        _
      $region40: #{edge_detection_encoder.10} parent=35 // pred_fallthru
        _
    $region36: #{edge_detection_encoder.10} parent=5 // pred_fallthru
      _
    %p883 = scmp.le.s32.totalorder 2, %s10
    // Predicated region
    $region41: #{edge_detection_encoder.10} parent=5 // pred_check
      %p884 = pneg %p883
    $region42: #{edge_detection_encoder.10} parent=5 // pred_check_branch
      %886 = sbr.rel (%p884) target = $region44
    $region43: #{edge_detection_encoder.10} parent=5 // pred_region
      %s887 = ssub.s32 %s10, 2
      // Predicated region
      $region45: #{edge_detection_encoder.10} parent=43 // pred_check
        %p888 = pneg %p153
      $region46: #{edge_detection_encoder.10} parent=43 // pred_check_branch
        %890 = sbr.rel (%p888) target = $region48
      $region47: #{edge_detection_encoder.10} parent=43 // pred_region
        %p891 = scmp.lt.s32.totalorder %s21, 1
        %s892 = scalar_select %p891, %s21, 1
        %p893 = scmp.lt.s32.totalorder %s22, 0
        %s894 = scalar_select %p893, %s22, 0
        %s895 = smul.addr %s894, 8
        %s896 = smul.addr %s892, 8
        %s897 = sadd.s32 %s895, %s896
        %s898 = smul.addr %s897, 4
        %s899 = scalar_lea.vmem %s4, %s898
      $region48: #{edge_detection_encoder.10} parent=43 // pred_fallthru
        _
    $region44: #{edge_detection_encoder.10} parent=5 // pred_fallthru
      _
  $region6: #{edge_detection_encoder.10} parent=0 // loop_footer
    %s14 = sadd.s32 1, %s10
  $region7: #{edge_detection_encoder.10} parent=0 // loop_footer_branch
    %9 = sbr.rel target = $region3
  $region8: #{edge_detection_encoder.10} parent=0 // loop_exit
    _

// kernel: edge_detection_encoder.11
$region0: #{edge_detection_encoder.11}
  #allocation0 [shape = 'u32[]', space=smem, size = 0x4, offset = 0x4, fixed_abs, tag = 'smem constant byte address 0x4 - core index']
  #allocation1 [shape = 'u32[144,128]{1,0:T(1,128)}', space=vmem, size = 0x12000, scoped, tag = 'internal scratch']
  #allocation2 [shape = 'bf16[10,8,48]{2,1,0:T(8,128)(2,1)}', space=vmem, size = 0x5000, scoped, tag = 'scratch operand']
  #allocation3 [shape = 'f32[64,8]{1,0:T(8,128)}', space=vmem, size = 0x8000, scoped, tag = 'scratch operand']
  %s0 = inlined_call_operand.vmem [shape: bf16[2,16,16,16], index: 0, kind: input, shape index: {}, may-alias: {0,1}]
  %s1 = inlined_call_operand.vmem [shape: bf16[2,16,16,16], index: 1, kind: input, shape index: {}, may-alias: {0,1}]
  %s2 = inlined_call_operand.vmem [shape: bf16[3,48,8], index: 2, kind: input, shape index: {}]
  %s3 = inlined_call_operand.vmem [shape: f32[1,8], index: 3, kind: input, shape index: {}]
  %s4 = inlined_call_operand.vmem [shape: f32[2,1,64,8], index: 4, kind: output, shape index: {}]
  %s5 = sld [smem:[#allocation0]]
  $region49: #{edge_detection_encoder.11} parent=0
    _
  %s7 = ssub.s32 1, %s5
  %s8 = scalar_select 0, %s7, %s5
  loop: start=0, step=1, limit=4
  $region2: #{edge_detection_encoder.11} parent=0 // loop_pre_header
    _
  $region3: #{edge_detection_encoder.11} parent=0 // loop_header
    %s10 = sphi 0, %s14
    %p11 = scmp.ge.s32.totalorder %s10, 4
    %s17 = sphi 0, %s29
    %s18 = sphi 0, %s25
    %s19 = sphi 0, %s17
    %s20 = sphi 0, %s18
    %s21 = sphi 0, %s19
    %s22 = sphi 0, %s20
    %s34 = sphi 0, %s36
    %s37 = sphi 0, %s34
    %s38 = sphi 0, %s37
    %s54 = sphi 0, %s38
    %s64 = sphi 0, %s66
    %s67 = sphi 0, %s64
    %s68 = sphi 0, %s67
    %s84 = sphi 0, %s68
    %s88 = sphi 0, %s88
    %s90 = sphi 0, %s88
    %s91 = sphi 0, %s90
    %s105 = sphi 0, %s91
    %s109 = sphi 0, %s109
    %s111 = sphi 0, %s109
    %s112 = sphi 0, %s111
    %s126 = sphi 0, %s112
    %s134 = sphi 0, %s136
    %s137 = sphi 0, %s134
    %s138 = sphi 0, %s137
    %s154 = sphi 0, %s138
  $region4: #{edge_detection_encoder.11} parent=0 // loop_header_branch
    %13 = sbr.rel (%p11) target = $region8
  $region5: #{edge_detection_encoder.11} parent=0 // loop_body
    %s15 = ssub.s32 %s10, 1
    %s16 = ssub.s32 %s10, 2
    %s23 = sadd.s32 1, %s18
    %p24 = scmp.ge.s32.totalorder %s23, 1
    %s25 = scalar_select %p24, 0, %s23
    %s26 = sadd.s32 1, %s17
    %s27 = scalar_select %p24, %s26, %s17
    %p28 = scmp.ge.s32.totalorder %s27, 2
    %s29 = scalar_select %p28, 0, %s27
    %s30 = ssub.s32 %s17, %s29
    %s31 = ssub.s32 %s18, %s25
    %s32 = sor.u32 %s30, %s31
    %p33 = scmp.eq.s32.totalorder %s32, 0
    %s35 = sadd.s32 %s34, 1
    %s36 = scalar_select %p33, %s34, %s35
    %p39 = pneg %p33
    %p40 = scmp.eq.s32.totalorder %s10, 1
    %p41 = por %p39, %p40
    %p42 = scmp.ne.s32.totalorder %s34, %s37
    %p43 = scmp.eq.s32.totalorder %s10, 0
    %p44 = por %p42, %p43
    %p45 = scmp.ne.s32.totalorder %s34, %s37
    %p46 = scmp.eq.s32.totalorder %s15, 1
    %p47 = por %p45, %p46
    %p48 = scmp.ne.s32.totalorder %s37, %s38
    %p49 = scmp.eq.s32.totalorder %s15, 0
    %p50 = por %p48, %p49
    %p51 = scmp.ne.s32.totalorder %s37, %s38
    %p52 = scmp.eq.s32.totalorder %s16, 1
    %p53 = por %p51, %p52
    %p55 = scmp.ne.s32.totalorder %s38, %s54
    %p56 = scmp.eq.s32.totalorder %s16, 0
    %p57 = por %p55, %p56
    %s58 = sadd.s32 %s18, 1
    %s59 = sadd.s32 %s25, 1
    %s60 = ssub.s32 %s17, %s29
    %s61 = ssub.s32 %s58, %s59
    %s62 = sor.u32 %s60, %s61
    %p63 = scmp.eq.s32.totalorder %s62, 0
    %s65 = sadd.s32 %s64, 1
    %s66 = scalar_select %p63, %s64, %s65
    %p69 = pneg %p63
    %p70 = scmp.eq.s32.totalorder %s10, 1
    %p71 = por %p69, %p70
    %p72 = scmp.ne.s32.totalorder %s64, %s67
    %p73 = scmp.eq.s32.totalorder %s10, 0
    %p74 = por %p72, %p73
    %p75 = scmp.ne.s32.totalorder %s64, %s67
    %p76 = scmp.eq.s32.totalorder %s15, 1
    %p77 = por %p75, %p76
    %p78 = scmp.ne.s32.totalorder %s67, %s68
    %p79 = scmp.eq.s32.totalorder %s15, 0
    %p80 = por %p78, %p79
    %p81 = scmp.ne.s32.totalorder %s67, %s68
    %p82 = scmp.eq.s32.totalorder %s16, 1
    %p83 = por %p81, %p82
    %p85 = scmp.ne.s32.totalorder %s68, %s84
    %p86 = scmp.eq.s32.totalorder %s16, 0
    %p87 = por %p85, %p86
    %s89 = sadd.s32 %s88, 1
    %p92 = scmp.eq.s32.totalorder %s10, 1
    %p93 = scmp.ne.s32.totalorder %s88, %s90
    %p94 = scmp.eq.s32.totalorder %s10, 0
    %p95 = por %p93, %p94
    %p96 = scmp.ne.s32.totalorder %s88, %s90
    %p97 = scmp.eq.s32.totalorder %s15, 1
    %p98 = por %p96, %p97
    %p99 = scmp.ne.s32.totalorder %s90, %s91
    %p100 = scmp.eq.s32.totalorder %s15, 0
    %p101 = por %p99, %p100
    %p102 = scmp.ne.s32.totalorder %s90, %s91
    %p103 = scmp.eq.s32.totalorder %s16, 1
    %p104 = por %p102, %p103
    %p106 = scmp.ne.s32.totalorder %s91, %s105
    %p107 = scmp.eq.s32.totalorder %s16, 0
    %p108 = por %p106, %p107
    %s110 = sadd.s32 %s109, 1
    %p113 = scmp.eq.s32.totalorder %s10, 1
    %p114 = scmp.ne.s32.totalorder %s109, %s111
    %p115 = scmp.eq.s32.totalorder %s10, 0
    %p116 = por %p114, %p115
    %p117 = scmp.ne.s32.totalorder %s109, %s111
    %p118 = scmp.eq.s32.totalorder %s15, 1
    %p119 = por %p117, %p118
    %p120 = scmp.ne.s32.totalorder %s111, %s112
    %p121 = scmp.eq.s32.totalorder %s15, 0
    %p122 = por %p120, %p121
    %p123 = scmp.ne.s32.totalorder %s111, %s112
    %p124 = scmp.eq.s32.totalorder %s16, 1
    %p125 = por %p123, %p124
    %p127 = scmp.ne.s32.totalorder %s112, %s126
    %p128 = scmp.eq.s32.totalorder %s16, 0
    %p129 = por %p127, %p128
    %s130 = ssub.s32 %s17, %s29
    %s131 = ssub.s32 %s18, %s25
    %s132 = sor.u32 %s130, %s131
    %p133 = scmp.eq.s32.totalorder %s132, 0
    %s135 = sadd.s32 %s134, 1
    %s136 = scalar_select %p133, %s134, %s135
    %p139 = pneg %p133
    %p140 = scmp.eq.s32.totalorder %s10, 1
    %p141 = por %p139, %p140
    %p142 = scmp.ne.s32.totalorder %s134, %s137
    %p143 = scmp.eq.s32.totalorder %s10, 0
    %p144 = por %p142, %p143
    %p145 = scmp.ne.s32.totalorder %s134, %s137
    %p146 = scmp.eq.s32.totalorder %s15, 1
    %p147 = por %p145, %p146
    %p148 = scmp.ne.s32.totalorder %s137, %s138
    %p149 = scmp.eq.s32.totalorder %s15, 0
    %p150 = por %p148, %p149
    %p151 = scmp.ne.s32.totalorder %s137, %s138
    %p152 = scmp.eq.s32.totalorder %s16, 1
    %p153 = por %p151, %p152
    %p155 = scmp.ne.s32.totalorder %s138, %s154
    %p156 = scmp.eq.s32.totalorder %s16, 0
    %p157 = por %p155, %p156
    %p158 = scmp.le.s32.totalorder 1, %s10
    %p159 = scmp.lt.s32.totalorder %s10, 3
    %p160 = pnand %p158, %p159
    %p161 = pneg %p160
    // Predicated region
    $region9: #{edge_detection_encoder.11} parent=5 // pred_check
      _
    $region10: #{edge_detection_encoder.11} parent=5 // pred_check_branch
      %163 = sbr.rel (%p160) target = $region12
    $region11: #{edge_detection_encoder.11} parent=5 // pred_region
      %s164 = ssub.s32 %s10, 1
      // Predicated region
      $region13: #{edge_detection_encoder.11} parent=11 // pred_check
        %p165 = pneg %p101
      $region14: #{edge_detection_encoder.11} parent=11 // pred_check_branch
        %167 = sbr.rel (%p165) target = $region16
      $region15: #{edge_detection_encoder.11} parent=11 // pred_region
        _
      $region16: #{edge_detection_encoder.11} parent=11 // pred_fallthru
        _
      // Predicated region
      $region17: #{edge_detection_encoder.11} parent=11 // pred_check
        %p168 = pneg %p122
      $region18: #{edge_detection_encoder.11} parent=11 // pred_check_branch
        %170 = sbr.rel (%p168) target = $region20
      $region19: #{edge_detection_encoder.11} parent=11 // pred_region
        _
      $region20: #{edge_detection_encoder.11} parent=11 // pred_fallthru
        _
    $region12: #{edge_detection_encoder.11} parent=5 // pred_fallthru
      _
    %p171 = scmp.lt.s32.totalorder %s10, 2
    // Predicated region
    $region21: #{edge_detection_encoder.11} parent=5 // pred_check
      %p172 = pneg %p171
    $region22: #{edge_detection_encoder.11} parent=5 // pred_check_branch
      %174 = sbr.rel (%p172) target = $region24
    $region23: #{edge_detection_encoder.11} parent=5 // pred_region
      // Predicated region
      $region25: #{edge_detection_encoder.11} parent=23 // pred_check
        %p175 = pneg %p44
      $region26: #{edge_detection_encoder.11} parent=23 // pred_check_branch
        %177 = sbr.rel (%p175) target = $region28
      $region27: #{edge_detection_encoder.11} parent=23 // pred_region
        %s178 = smul.u32 8, %s18
        %p179 = scmp.lt.s32.totalorder %s17, 1
        %s180 = scalar_select %p179, %s17, 1
        %p181 = scmp.lt.s32.totalorder %s178, 15
        %s182 = scalar_select %p181, %s178, 15
        %s183 = smul.addr %s182, 2
        %s184 = smul.addr %s180, 32
        %s185 = sadd.s32 %s183, %s184
        %s186 = smul.addr %s185, 4
        %s187 = scalar_lea.vmem %s0, %s186
        %s188 = smul.u32 8, %s18
      $region28: #{edge_detection_encoder.11} parent=23 // pred_fallthru
        _
      // Predicated region
      $region29: #{edge_detection_encoder.11} parent=23 // pred_check
        %p189 = pneg %p74
      $region30: #{edge_detection_encoder.11} parent=23 // pred_check_branch
        %191 = sbr.rel (%p189) target = $region32
      $region31: #{edge_detection_encoder.11} parent=23 // pred_region
        %s192 = sadd.s32 %s18, 1
        %s193 = smul.u32 8, %s192
        %p194 = scmp.lt.s32.totalorder %s17, 1
        %s195 = scalar_select %p194, %s17, 1
        %p196 = scmp.lt.s32.totalorder %s193, 15
        %s197 = scalar_select %p196, %s193, 15
        %s198 = smul.addr %s197, 2
        %s199 = smul.addr %s195, 32
        %s200 = sadd.s32 %s198, %s199
        %s201 = smul.addr %s200, 4
        %s202 = scalar_lea.vmem %s1, %s201
        %s203 = sadd.s32 %s18, 1
        %s204 = smul.u32 8, %s203
      $region32: #{edge_detection_encoder.11} parent=23 // pred_fallthru
        _
    $region24: #{edge_detection_encoder.11} parent=5 // pred_fallthru
      _
    %p205 = scmp.le.s32.totalorder 1, %s10
    %p206 = scmp.lt.s32.totalorder %s10, 3
    %p207 = pnand %p205, %p206
    %p208 = pneg %p207
    // Predicated region
    $region33: #{edge_detection_encoder.11} parent=5 // pred_check
      _
    $region34: #{edge_detection_encoder.11} parent=5 // pred_check_branch
      %210 = sbr.rel (%p207) target = $region36
    $region35: #{edge_detection_encoder.11} parent=5 // pred_region
      %s211 = ssub.s32 %s10, 1
      %s212 = smul.u32 8, %s20
      %p213 = scmp.lt.s32.totalorder %s19, 1
      %s214 = scalar_select %p213, %s19, 1
      %p215 = scmp.lt.s32.totalorder %s212, 15
      %s216 = scalar_select %p215, %s212, 15
      %s217 = smul.addr %s216, 2
      %s218 = smul.addr %s214, 32
      %s219 = sadd.s32 %s217, %s218
      %s220 = smul.addr %s219, 4
      %s221 = scalar_lea.vmem %s0, %s220
      %p222 = pneg %p50
      %p223 = pneg %p47
      %s224 = sadd.s32 %s20, 1
      %s225 = smul.u32 8, %s224
      %p226 = scmp.lt.s32.totalorder %s19, 1
      %s227 = scalar_select %p226, %s19, 1
      %p228 = scmp.lt.s32.totalorder %s225, 15
      %s229 = scalar_select %p228, %s225, 15
      %s230 = smul.addr %s229, 2
      %s231 = smul.addr %s227, 32
      %s232 = sadd.s32 %s230, %s231
      %s233 = smul.addr %s232, 4
      %s234 = scalar_lea.vmem %s1, %s233
      %p235 = pneg %p80
      %p236 = pneg %p77
      %p237 = pneg %p101
      %p238 = pneg %p98
      %p239 = pneg %p122
      %p240 = pneg %p119
      %p241 = pneg %p150
      %p242 = pneg %p147
      %p243 = scmp.lt.s32.totalorder %s19, 1
      %s244 = scalar_select %p243, %s19, 1
      %p245 = scmp.lt.s32.totalorder %s20, 0
      %s246 = scalar_select %p245, %s20, 0
      %s247 = smul.addr %s246, 8
      %s248 = smul.addr %s244, 8
      %s249 = sadd.s32 %s247, %s248
      %s250 = smul.addr %s249, 8
      %s251 = scalar_lea.vmem %s4, %s250
      %s252 = smul.u32 8, %s20
      %p253 = scmp.lt.s32.totalorder %s19, 1
      %s254 = scalar_select %p253, %s19, 1
      %p255 = scmp.lt.s32.totalorder %s252, 15
      %s256 = scalar_select %p255, %s252, 15
      %s257 = smul.addr %s256, 2
      %s258 = smul.addr %s254, 32
      %s259 = sadd.s32 %s257, %s258
      %s260 = smul.addr %s259, 4
      %s261 = scalar_lea.vmem %s0, %s260
      %s262 = smul.u32 8, %s20
      %s263 = sadd.s32 %s20, 1
      %s264 = smul.u32 8, %s263
      %p265 = scmp.lt.s32.totalorder %s19, 1
      %s266 = scalar_select %p265, %s19, 1
      %p267 = scmp.lt.s32.totalorder %s264, 15
      %s268 = scalar_select %p267, %s264, 15
      %s269 = smul.addr %s268, 2
      %s270 = smul.addr %s266, 32
      %s271 = sadd.s32 %s269, %s270
      %s272 = smul.addr %s271, 4
      %s273 = scalar_lea.vmem %s1, %s272
      %s274 = sadd.s32 %s20, 1
      %s275 = smul.u32 8, %s274
      %p276 = scmp.lt.s32.totalorder %s19, 1
      %s277 = scalar_select %p276, %s19, 1
      %p278 = scmp.lt.s32.totalorder %s20, 0
      %s279 = scalar_select %p278, %s20, 0
      %s280 = smul.addr %s279, 8
      %s281 = smul.addr %s277, 8
      %s282 = sadd.s32 %s280, %s281
      %s283 = smul.addr %s282, 8
      %s284 = scalar_lea.vmem %s4, %s283
      %v286 = vld [vmem:[%s261] sm:$0xf]
      %v287 = vld [vmem:[%s261 + $0x8] sm:$0xf]
      %v288 = vld [vmem:[%s261 + $0x10] sm:$0xf]
      %v289 = vld [vmem:[%s261 + $0x18] sm:$0xf]
      %v290 = vld [vmem:[%s261 + $0x20] sm:$0xf]
      %v291 = vld [vmem:[%s261 + $0x28] sm:$0xf]
      %v292 = vld [vmem:[%s261 + $0x30] sm:$0xf]
      %v293 = vld [vmem:[%s261 + $0x38] sm:$0xf]
      %vm294 = vcmask 125952
      %295 = vst.msk [vmem:[#allocation2] sm:$0xf] %vm294, %v286
      %296 = vst.msk [vmem:[#allocation2 + $0x4] sm:$0xf] %vm294, %v287
      %297 = vst.msk [vmem:[#allocation2 + $0x8] sm:$0xf] %vm294, %v288
      %298 = vst.msk [vmem:[#allocation2 + $0xc] sm:$0xf] %vm294, %v289
      %299 = vst.msk [vmem:[#allocation2 + $0x10] sm:$0xf] %vm294, %v290
      %300 = vst.msk [vmem:[#allocation2 + $0x14] sm:$0xf] %vm294, %v291
      %301 = vst.msk [vmem:[#allocation2 + $0x18] sm:$0xf] %vm294, %v292
      %302 = vst.msk [vmem:[#allocation2 + $0x1c] sm:$0xf] %vm294, %v293
      %v303 = vld [vmem:[%s273] sm:$0xf]
      %v304 = vld [vmem:[%s273 + $0x8] sm:$0xf]
      %s305 = scalar_lea.vmem [#allocation2], 32
      %306 = vst.msk [vmem:[%s305] sm:$0xf] %vm294, %v303
      %307 = vst.msk [vmem:[%s305 + $0x4] sm:$0xf] %vm294, %v304
      %v308 = vld [vmem:[%s261] sm:$0xf]
      %v309 = vld [vmem:[%s261 + $0x4] sm:$0x1]
      %v310 = vld [vmem:[%s261 + $0x8] sm:$0xf]
      %v311 = vld [vmem:[%s261 + $0xc] sm:$0x1]
      %v312 = vld [vmem:[%s261 + $0x10] sm:$0xf]
      %v313 = vld [vmem:[%s261 + $0x14] sm:$0x1]
      %v314 = vld [vmem:[%s261 + $0x18] sm:$0xf]
      %v315 = vld [vmem:[%s261 + $0x1c] sm:$0x1]
      %v316 = vld [vmem:[%s261 + $0x20] sm:$0xf]
      %v317 = vld [vmem:[%s261 + $0x24] sm:$0x1]
      %v318 = vld [vmem:[%s261 + $0x28] sm:$0xf]
      %v319 = vld [vmem:[%s261 + $0x2c] sm:$0x1]
      %v320 = vld [vmem:[%s261 + $0x30] sm:$0xf]
      %v321 = vld [vmem:[%s261 + $0x34] sm:$0x1]
      %v322 = vld [vmem:[%s261 + $0x38] sm:$0xf]
      %v323 = vld [vmem:[%s261 + $0x3c] sm:$0x1]
      %vm324 = vsmask.f32 3328
      %vm325 = vsmask.f32 7440
      %vm326 = vmor %vm324, %vm325
      %v328 = vshrl.u32 %v308, 16
      %v330 = vrot.slane %v328, 4
      %v331 = vshll.u32 %v308, 16
      %v333 = vrot.slane %v331, 5
      %v334 = vor.u32 %v330, %v333
      %v335 = vrot.slane %v334, 4
      %v337 = vshll.u32 %v309, 16
      %v339 = vrot.slane %v337, 5
      %v340 = vsel %vm326, %v335, %v339
      %v342 = vshrl.u32 %v310, 16
      %v344 = vrot.slane %v342, 4
      %v345 = vshll.u32 %v310, 16
      %v347 = vrot.slane %v345, 5
      %v348 = vor.u32 %v344, %v347
      %v349 = vrot.slane %v348, 4
      %v351 = vshll.u32 %v311, 16
      %v353 = vrot.slane %v351, 5
      %v354 = vsel %vm326, %v349, %v353
      %v356 = vshrl.u32 %v312, 16
      %v358 = vrot.slane %v356, 4
      %v359 = vshll.u32 %v312, 16
      %v361 = vrot.slane %v359, 5
      %v362 = vor.u32 %v358, %v361
      %v363 = vrot.slane %v362, 4
      %v365 = vshll.u32 %v313, 16
      %v367 = vrot.slane %v365, 5
      %v368 = vsel %vm326, %v363, %v367
      %v370 = vshrl.u32 %v314, 16
      %v372 = vrot.slane %v370, 4
      %v373 = vshll.u32 %v314, 16
      %v375 = vrot.slane %v373, 5
      %v376 = vor.u32 %v372, %v375
      %v377 = vrot.slane %v376, 4
      %v379 = vshll.u32 %v315, 16
      %v381 = vrot.slane %v379, 5
      %v382 = vsel %vm326, %v377, %v381
      %v384 = vshrl.u32 %v316, 16
      %v386 = vrot.slane %v384, 4
      %v387 = vshll.u32 %v316, 16
      %v389 = vrot.slane %v387, 5
      %v390 = vor.u32 %v386, %v389
      %v391 = vrot.slane %v390, 4
      %v393 = vshll.u32 %v317, 16
      %v395 = vrot.slane %v393, 5
      %v396 = vsel %vm326, %v391, %v395
      %v398 = vshrl.u32 %v318, 16
      %v400 = vrot.slane %v398, 4
      %v401 = vshll.u32 %v318, 16
      %v403 = vrot.slane %v401, 5
      %v404 = vor.u32 %v400, %v403
      %v405 = vrot.slane %v404, 4
      %v407 = vshll.u32 %v319, 16
      %v409 = vrot.slane %v407, 5
      %v410 = vsel %vm326, %v405, %v409
      %v412 = vshrl.u32 %v320, 16
      %v414 = vrot.slane %v412, 4
      %v415 = vshll.u32 %v320, 16
      %v417 = vrot.slane %v415, 5
      %v418 = vor.u32 %v414, %v417
      %v419 = vrot.slane %v418, 4
      %v421 = vshll.u32 %v321, 16
      %v423 = vrot.slane %v421, 5
      %v424 = vsel %vm326, %v419, %v423
      %v426 = vshrl.u32 %v322, 16
      %v428 = vrot.slane %v426, 4
      %v429 = vshll.u32 %v322, 16
      %v431 = vrot.slane %v429, 5
      %v432 = vor.u32 %v428, %v431
      %v433 = vrot.slane %v432, 4
      %v435 = vshll.u32 %v323, 16
      %v437 = vrot.slane %v435, 5
      %v438 = vsel %vm326, %v433, %v437
      %439 = vrot.lane.b32.xlu0 %v340, 16
      %v440 = vpop.permute.xlu0 %439
      %441 = vrot.lane.b32.xlu0 %v354, 16
      %v442 = vpop.permute.xlu0 %441
      %443 = vrot.lane.b32.xlu0 %v368, 16
      %v444 = vpop.permute.xlu0 %443
      %445 = vrot.lane.b32.xlu0 %v382, 16
      %v446 = vpop.permute.xlu0 %445
      %447 = vrot.lane.b32.xlu0 %v396, 16
      %v448 = vpop.permute.xlu0 %447
      %449 = vrot.lane.b32.xlu0 %v410, 16
      %v450 = vpop.permute.xlu0 %449
      %451 = vrot.lane.b32.xlu0 %v424, 16
      %v452 = vpop.permute.xlu0 %451
      %453 = vrot.lane.b32.xlu0 %v438, 16
      %v454 = vpop.permute.xlu0 %453
      %vm463 = vcmask 257152
      %464 = vst.msk [vmem:[#allocation2] sm:$0xf] %vm463, %v440
      %465 = vst.msk [vmem:[#allocation2 + $0x4] sm:$0xf] %vm463, %v442
      %466 = vst.msk [vmem:[#allocation2 + $0x8] sm:$0xf] %vm463, %v444
      %467 = vst.msk [vmem:[#allocation2 + $0xc] sm:$0xf] %vm463, %v446
      %468 = vst.msk [vmem:[#allocation2 + $0x10] sm:$0xf] %vm463, %v448
      %469 = vst.msk [vmem:[#allocation2 + $0x14] sm:$0xf] %vm463, %v450
      %470 = vst.msk [vmem:[#allocation2 + $0x18] sm:$0xf] %vm463, %v452
      %471 = vst.msk [vmem:[#allocation2 + $0x1c] sm:$0xf] %vm463, %v454
      %v472 = vld [vmem:[%s273] sm:$0xf]
      %v473 = vld [vmem:[%s273 + $0x4] sm:$0x1]
      %v474 = vld [vmem:[%s273 + $0x8] sm:$0xf]
      %v475 = vld [vmem:[%s273 + $0xc] sm:$0x1]
      %v477 = vshrl.u32 %v472, 16
      %v479 = vrot.slane %v477, 4
      %v480 = vshll.u32 %v472, 16
      %v482 = vrot.slane %v480, 5
      %v483 = vor.u32 %v479, %v482
      %v484 = vrot.slane %v483, 4
      %v486 = vshll.u32 %v473, 16
      %v488 = vrot.slane %v486, 5
      %v489 = vsel %vm326, %v484, %v488
      %v491 = vshrl.u32 %v474, 16
      %v493 = vrot.slane %v491, 4
      %v494 = vshll.u32 %v474, 16
      %v496 = vrot.slane %v494, 5
      %v497 = vor.u32 %v493, %v496
      %v498 = vrot.slane %v497, 4
      %v500 = vshll.u32 %v475, 16
      %v502 = vrot.slane %v500, 5
      %v503 = vsel %vm326, %v498, %v502
      %504 = vrot.lane.b32.xlu0 %v489, 16
      %v505 = vpop.permute.xlu0 %504
      %506 = vrot.lane.b32.xlu0 %v503, 16
      %v507 = vpop.permute.xlu0 %506
      %510 = vst.msk [vmem:[%s305] sm:$0xf] %vm463, %v505
      %511 = vst.msk [vmem:[%s305 + $0x4] sm:$0xf] %vm463, %v507
      %v512 = vld [vmem:[%s261] sm:$0xe]
      %v513 = vld [vmem:[%s261 + $0x4] sm:$0x1]
      %v514 = vld [vmem:[%s261 + $0x8] sm:$0xe]
      %v515 = vld [vmem:[%s261 + $0xc] sm:$0x1]
      %v516 = vld [vmem:[%s261 + $0x10] sm:$0xe]
      %v517 = vld [vmem:[%s261 + $0x14] sm:$0x1]
      %v518 = vld [vmem:[%s261 + $0x18] sm:$0xe]
      %v519 = vld [vmem:[%s261 + $0x1c] sm:$0x1]
      %v520 = vld [vmem:[%s261 + $0x20] sm:$0xe]
      %v521 = vld [vmem:[%s261 + $0x24] sm:$0x1]
      %v522 = vld [vmem:[%s261 + $0x28] sm:$0xe]
      %v523 = vld [vmem:[%s261 + $0x2c] sm:$0x1]
      %v524 = vld [vmem:[%s261 + $0x30] sm:$0xe]
      %v525 = vld [vmem:[%s261 + $0x34] sm:$0x1]
      %v526 = vld [vmem:[%s261 + $0x38] sm:$0xe]
      %v527 = vld [vmem:[%s261 + $0x3c] sm:$0x1]
      %vm544 = vcmask 1042432
      %vm545 = vcmask 1046532
      %vm546 = vmor %vm544, %vm545
      %v547 = vrot.slane %v512, 5
      %v548 = vrot.slane %v547, 4
      %v549 = vrot.slane %v513, 5
      %v550 = vsel %vm546, %v548, %v549
      %v551 = vrot.slane %v514, 5
      %v552 = vrot.slane %v551, 4
      %v553 = vrot.slane %v515, 5
      %v554 = vsel %vm546, %v552, %v553
      %v555 = vrot.slane %v516, 5
      %v556 = vrot.slane %v555, 4
      %v557 = vrot.slane %v517, 5
      %v558 = vsel %vm546, %v556, %v557
      %v559 = vrot.slane %v518, 5
      %v560 = vrot.slane %v559, 4
      %v561 = vrot.slane %v519, 5
      %v562 = vsel %vm546, %v560, %v561
      %v563 = vrot.slane %v520, 5
      %v564 = vrot.slane %v563, 4
      %v565 = vrot.slane %v521, 5
      %v566 = vsel %vm546, %v564, %v565
      %v567 = vrot.slane %v522, 5
      %v568 = vrot.slane %v567, 4
      %v569 = vrot.slane %v523, 5
      %v570 = vsel %vm546, %v568, %v569
      %v571 = vrot.slane %v524, 5
      %v572 = vrot.slane %v571, 4
      %v573 = vrot.slane %v525, 5
      %v574 = vsel %vm546, %v572, %v573
      %v575 = vrot.slane %v526, 5
      %v576 = vrot.slane %v575, 4
      %v577 = vrot.slane %v527, 5
      %v578 = vsel %vm546, %v576, %v577
      %579 = vrot.lane.b32.xlu0 %v550, 32
      %v580 = vpop.permute.xlu0 %579
      %581 = vrot.lane.b32.xlu0 %v554, 32
      %v582 = vpop.permute.xlu0 %581
      %583 = vrot.lane.b32.xlu0 %v558, 32
      %v584 = vpop.permute.xlu0 %583
      %585 = vrot.lane.b32.xlu0 %v562, 32
      %v586 = vpop.permute.xlu0 %585
      %587 = vrot.lane.b32.xlu0 %v566, 32
      %v588 = vpop.permute.xlu0 %587
      %589 = vrot.lane.b32.xlu0 %v570, 32
      %v590 = vpop.permute.xlu0 %589
      %591 = vrot.lane.b32.xlu0 %v574, 32
      %v592 = vpop.permute.xlu0 %591
      %593 = vrot.lane.b32.xlu0 %v578, 32
      %v594 = vpop.permute.xlu0 %593
      %vm603 = vcmask 388352
      %604 = vst.msk [vmem:[#allocation2] sm:$0xf] %vm603, %v580
      %605 = vst.msk [vmem:[#allocation2 + $0x4] sm:$0xf] %vm603, %v582
      %606 = vst.msk [vmem:[#allocation2 + $0x8] sm:$0xf] %vm603, %v584
      %607 = vst.msk [vmem:[#allocation2 + $0xc] sm:$0xf] %vm603, %v586
      %608 = vst.msk [vmem:[#allocation2 + $0x10] sm:$0xf] %vm603, %v588
      %609 = vst.msk [vmem:[#allocation2 + $0x14] sm:$0xf] %vm603, %v590
      %610 = vst.msk [vmem:[#allocation2 + $0x18] sm:$0xf] %vm603, %v592
      %611 = vst.msk [vmem:[#allocation2 + $0x1c] sm:$0xf] %vm603, %v594
      %v612 = vld [vmem:[%s273] sm:$0xe]
      %v613 = vld [vmem:[%s273 + $0x4] sm:$0x1]
      %v614 = vld [vmem:[%s273 + $0x8] sm:$0xe]
      %v615 = vld [vmem:[%s273 + $0xc] sm:$0x1]
      %v620 = vrot.slane %v612, 5
      %v621 = vrot.slane %v620, 4
      %v622 = vrot.slane %v613, 5
      %v623 = vsel %vm546, %v621, %v622
      %v624 = vrot.slane %v614, 5
      %v625 = vrot.slane %v624, 4
      %v626 = vrot.slane %v615, 5
      %v627 = vsel %vm546, %v625, %v626
      %628 = vrot.lane.b32.xlu0 %v623, 32
      %v629 = vpop.permute.xlu0 %628
      %630 = vrot.lane.b32.xlu0 %v627, 32
      %v631 = vpop.permute.xlu0 %630
      %634 = vst.msk [vmem:[%s305] sm:$0xf] %vm603, %v629
      %635 = vst.msk [vmem:[%s305 + $0x4] sm:$0xf] %vm603, %v631
      %v636 = vld [vmem:[#allocation2] sm:$0xf]
      %v637 = vld [vmem:[#allocation2 + $0x4] sm:$0xf]
      %v638 = vld [vmem:[#allocation2 + $0x8] sm:$0xf]
      %v639 = vld [vmem:[#allocation2 + $0xc] sm:$0xf]
      %v640 = vld [vmem:[#allocation2 + $0x10] sm:$0xf]
      %v641 = vld [vmem:[#allocation2 + $0x14] sm:$0xf]
      %v642 = vld [vmem:[#allocation2 + $0x18] sm:$0xf]
      %v643 = vld [vmem:[#allocation2 + $0x1c] sm:$0xf]
      %v644 = vld [vmem:[%s2] sm:$0xf]
      %v645 = vld [vmem:[%s2 + $0x4] sm:$0xf]
      %v646 = vld [vmem:[%s2 + $0x8] sm:$0xf]
      %v647 = vld [vmem:[%s2 + $0xc] sm:$0xf]
      %v648 = vld [vmem:[%s2 + $0x10] sm:$0xf]
      %v649 = vld [vmem:[%s2 + $0x14] sm:$0xf]
      %v658 = vunpack.c.l.b16 %v636
      %v659 = vunpack.c.l.b16 %v637
      %v660 = vunpack.c.l.b16 %v638
      %v661 = vunpack.c.l.b16 %v639
      %v662 = vunpack.c.l.b16 %v640
      %v663 = vunpack.c.l.b16 %v641
      %v664 = vunpack.c.l.b16 %v642
      %v665 = vunpack.c.l.b16 %v643
      %v666 = vpack.c.b16 %v659, %v658
      %v667 = vpack.c.b16 %v661, %v660
      %v668 = vpack.c.b16 %v663, %v662
      %v669 = vpack.c.b16 %v665, %v664
      %v676 = vunpack.c.l.b16 %v644
      %v677 = vunpack.c.l.b16 %v645
      %v678 = vunpack.c.l.b16 %v646
      %v679 = vunpack.c.l.b16 %v647
      %v680 = vunpack.c.l.b16 %v648
      %v681 = vunpack.c.l.b16 %v649
      %v682 = vpack.c.b16 %v677, %v676
      %v683 = vpack.c.b16 %v679, %v678
      %v684 = vpack.c.b16 %v681, %v680
      %vm688 = vcmask 392192
      %v690 = vsel %vm688, %v666, 0
      %v693 = vsel %vm688, %v667, 0
      %v696 = vsel %vm688, %v668, 0
      %v699 = vsel %vm688, %v669, 0
      %701 = vmatprep.subr.bf16.mxu0 0
      %702 = vmatpush1.bf16.msra.mxu0 %v682
      %703 = vmatprep.subr.bf16.mxu0 0
      %704 = vmatpush1.bf16.msra.mxu0 %v683
      %705 = vmatprep.subr.bf16.mxu0 0
      %706 = vmatpush1.bf16.msra.mxu0 %v684
      %707 = vmatprep.subr.bf16.mxu0 0
      %708 = vmatpush1.bf16.msra.mxu0 0
      %709 = vmatprep.subr.bf16.mxu0 0
      %710 = vmatpush1.bf16.msra.mxu0 0
      %711 = vmatprep.subr.bf16.mxu0 0
      %712 = vmatpush1.bf16.msra.mxu0 0
      %713 = vmatprep.subr.bf16.mxu0 0
      %714 = vmatpush1.bf16.msra.mxu0 0
      %715 = vmatprep.subr.bf16.mxu0 0
      %716 = vmatpush1.bf16.msra.mxu0 0
      %717 = vmatprep.subr.bf16.mxu0 0
      %718 = vmatpush1.bf16.msra.mxu0 0
      %719 = vmatprep.subr.bf16.mxu0 0
      %720 = vmatpush1.bf16.msra.mxu0 0
      %721 = vmatprep.subr.bf16.mxu0 0
      %722 = vmatpush1.bf16.msra.mxu0 0
      %723 = vmatprep.subr.bf16.mxu0 0
      %724 = vmatpush1.bf16.msra.mxu0 0
      %725 = vmatprep.subr.bf16.mxu0 0
      %726 = vmatpush1.bf16.msra.mxu0 0
      %727 = vmatprep.subr.bf16.mxu0 0
      %728 = vmatpush1.bf16.msra.mxu0 0
      %729 = vmatprep.subr.bf16.mxu0 0
      %730 = vmatpush1.bf16.msra.mxu0 0
      %731 = vmatprep.subr.bf16.mxu0 0
      %732 = vmatpush1.bf16.msra.mxu0 0
      %733 = vmatprep.mubr.bf16.mxu0 0
      %734 = vmatmul.mubr.bf16.gmra.mrb[0].mxu0 %v690
      %v735 = vpop.f32.mrb[0].mxu0
      %v736 = vadd.f32 0.0, %v735
      %v737 = vpop.f32.mrb[0].mxu0
      %v738 = vpop.f32.mrb[0].mxu0
      %v739 = vadd.f32 0.0, %v738
      %v740 = vpop.f32.mrb[0].mxu0
      %741 = vmatprep.mubr.bf16.mxu0 0
      %742 = vmatmul.mubr.bf16.gmra.mrb[0].mxu0 %v693
      %v743 = vpop.f32.mrb[0].mxu0
      %v744 = vadd.f32 0.0, %v743
      %v745 = vpop.f32.mrb[0].mxu0
      %v746 = vpop.f32.mrb[0].mxu0
      %v747 = vadd.f32 0.0, %v746
      %v748 = vpop.f32.mrb[0].mxu0
      %749 = vmatprep.mubr.bf16.mxu0 0
      %750 = vmatmul.mubr.bf16.gmra.mrb[0].mxu0 %v696
      %v751 = vpop.f32.mrb[0].mxu0
      %v752 = vadd.f32 0.0, %v751
      %v753 = vpop.f32.mrb[0].mxu0
      %v754 = vpop.f32.mrb[0].mxu0
      %v755 = vadd.f32 0.0, %v754
      %v756 = vpop.f32.mrb[0].mxu0
      %757 = vmatprep.mubr.bf16.mxu0 0
      %758 = vmatmul.mubr.bf16.gmra.mrb[0].mxu0 %v699
      %v759 = vpop.f32.mrb[0].mxu0
      %v760 = vadd.f32 0.0, %v759
      %v761 = vpop.f32.mrb[0].mxu0
      %v762 = vpop.f32.mrb[0].mxu0
      %v763 = vadd.f32 0.0, %v762
      %v764 = vpop.f32.mrb[0].mxu0
      %765 = vdwg.mxu0
      %vm766 = vcmask 64512
      %767 = vst.msk [vmem:[#allocation3] sm:$0xff] %vm766, %v736
      %768 = vst.msk [vmem:[#allocation3 + $0x8] sm:$0xff] %vm766, %v739
      %769 = vst.msk [vmem:[#allocation3 + $0x10] sm:$0xff] %vm766, %v744
      %770 = vst.msk [vmem:[#allocation3 + $0x18] sm:$0xff] %vm766, %v747
      %771 = vst.msk [vmem:[#allocation3 + $0x20] sm:$0xff] %vm766, %v752
      %772 = vst.msk [vmem:[#allocation3 + $0x28] sm:$0xff] %vm766, %v755
      %773 = vst.msk [vmem:[#allocation3 + $0x30] sm:$0xff] %vm766, %v760
      %774 = vst.msk [vmem:[#allocation3 + $0x38] sm:$0xff] %vm766, %v763
      %s775 = scalar_lea.vmem [#allocation2], 4
      %v776 = vld [vmem:[%s775] sm:$0xf]
      %v777 = vld [vmem:[%s775 + $0x4] sm:$0xf]
      %v778 = vld [vmem:[%s775 + $0x8] sm:$0xf]
      %v779 = vld [vmem:[%s775 + $0xc] sm:$0xf]
      %v780 = vld [vmem:[%s775 + $0x10] sm:$0xf]
      %v781 = vld [vmem:[%s775 + $0x14] sm:$0xf]
      %v782 = vld [vmem:[%s775 + $0x18] sm:$0xf]
      %v783 = vld [vmem:[%s775 + $0x1c] sm:$0xf]
      %s784 = scalar_lea.vmem %s2, 24
      %v785 = vld [vmem:[%s784] sm:$0xf]
      %v786 = vld [vmem:[%s784 + $0x4] sm:$0xf]
      %v787 = vld [vmem:[%s784 + $0x8] sm:$0xf]
      %v788 = vld [vmem:[%s784 + $0xc] sm:$0xf]
      %v789 = vld [vmem:[%s784 + $0x10] sm:$0xf]
      %v790 = vld [vmem:[%s784 + $0x14] sm:$0xf]
      %v799 = vunpack.c.l.b16 %v776
      %v800 = vunpack.c.l.b16 %v777
      %v801 = vunpack.c.l.b16 %v778
      %v802 = vunpack.c.l.b16 %v779
      %v803 = vunpack.c.l.b16 %v780
      %v804 = vunpack.c.l.b16 %v781
      %v805 = vunpack.c.l.b16 %v782
      %v806 = vunpack.c.l.b16 %v783
      %v807 = vpack.c.b16 %v800, %v799
      %v808 = vpack.c.b16 %v802, %v801
      %v809 = vpack.c.b16 %v804, %v803
      %v810 = vpack.c.b16 %v806, %v805
      %v817 = vunpack.c.l.b16 %v785
      %v818 = vunpack.c.l.b16 %v786
      %v819 = vunpack.c.l.b16 %v787
      %v820 = vunpack.c.l.b16 %v788
      %v821 = vunpack.c.l.b16 %v789
      %v822 = vunpack.c.l.b16 %v790
      %v823 = vpack.c.b16 %v818, %v817
      %v824 = vpack.c.b16 %v820, %v819
      %v825 = vpack.c.b16 %v822, %v821
      %v830 = vsel %vm688, %v807, 0
      %v833 = vsel %vm688, %v808, 0
      %v836 = vsel %vm688, %v809, 0
      %v839 = vsel %vm688, %v810, 0
      %841 = vmatprep.subr.bf16.mxu0 0
      %842 = vmatpush1.bf16.msra.mxu0 %v823
      %843 = vmatprep.subr.bf16.mxu0 0
      %844 = vmatpush1.bf16.msra.mxu0 %v824
      %845 = vmatprep.subr.bf16.mxu0 0
      %846 = vmatpush1.bf16.msra.mxu0 %v825
      %847 = vmatprep.subr.bf16.mxu0 0
      %848 = vmatpush1.bf16.msra.mxu0 0
      %849 = vmatprep.subr.bf16.mxu0 0
      %850 = vmatpush1.bf16.msra.mxu0 0
      %851 = vmatprep.subr.bf16.mxu0 0
      %852 = vmatpush1.bf16.msra.mxu0 0
      %853 = vmatprep.subr.bf16.mxu0 0
      %854 = vmatpush1.bf16.msra.mxu0 0
      %855 = vmatprep.subr.bf16.mxu0 0
      %856 = vmatpush1.bf16.msra.mxu0 0
      %857 = vmatprep.subr.bf16.mxu0 0
      %858 = vmatpush1.bf16.msra.mxu0 0
      %859 = vmatprep.subr.bf16.mxu0 0
      %860 = vmatpush1.bf16.msra.mxu0 0
      %861 = vmatprep.subr.bf16.mxu0 0
      %862 = vmatpush1.bf16.msra.mxu0 0
      %863 = vmatprep.subr.bf16.mxu0 0
      %864 = vmatpush1.bf16.msra.mxu0 0
      %865 = vmatprep.subr.bf16.mxu0 0
      %866 = vmatpush1.bf16.msra.mxu0 0
      %867 = vmatprep.subr.bf16.mxu0 0
      %868 = vmatpush1.bf16.msra.mxu0 0
      %869 = vmatprep.subr.bf16.mxu0 0
      %870 = vmatpush1.bf16.msra.mxu0 0
      %871 = vmatprep.subr.bf16.mxu0 0
      %872 = vmatpush1.bf16.msra.mxu0 0
      %873 = vmatprep.mubr.bf16.mxu0 0
      %874 = vmatmul.mubr.bf16.gmra.mrb[0].mxu0 %v830
      %v875 = vpop.f32.mrb[0].mxu0
      %v876 = vadd.f32 0.0, %v875
      %v877 = vpop.f32.mrb[0].mxu0
      %v878 = vpop.f32.mrb[0].mxu0
      %v879 = vadd.f32 0.0, %v878
      %v880 = vpop.f32.mrb[0].mxu0
      %881 = vmatprep.mubr.bf16.mxu0 0
      %882 = vmatmul.mubr.bf16.gmra.mrb[0].mxu0 %v833
      %v883 = vpop.f32.mrb[0].mxu0
      %v884 = vadd.f32 0.0, %v883
      %v885 = vpop.f32.mrb[0].mxu0
      %v886 = vpop.f32.mrb[0].mxu0
      %v887 = vadd.f32 0.0, %v886
      %v888 = vpop.f32.mrb[0].mxu0
      %889 = vmatprep.mubr.bf16.mxu0 0
      %890 = vmatmul.mubr.bf16.gmra.mrb[0].mxu0 %v836
      %v891 = vpop.f32.mrb[0].mxu0
      %v892 = vadd.f32 0.0, %v891
      %v893 = vpop.f32.mrb[0].mxu0
      %v894 = vpop.f32.mrb[0].mxu0
      %v895 = vadd.f32 0.0, %v894
      %v896 = vpop.f32.mrb[0].mxu0
      %897 = vmatprep.mubr.bf16.mxu0 0
      %898 = vmatmul.mubr.bf16.gmra.mrb[0].mxu0 %v839
      %v899 = vpop.f32.mrb[0].mxu0
      %v900 = vadd.f32 0.0, %v899
      %v901 = vpop.f32.mrb[0].mxu0
      %v902 = vpop.f32.mrb[0].mxu0
      %v903 = vadd.f32 0.0, %v902
      %v904 = vpop.f32.mrb[0].mxu0
      %905 = vdwg.mxu0
      %v906 = vld [vmem:[#allocation3] sm:$0xff]
      %v907 = vld [vmem:[#allocation3 + $0x8] sm:$0xff]
      %v908 = vld [vmem:[#allocation3 + $0x10] sm:$0xff]
      %v909 = vld [vmem:[#allocation3 + $0x18] sm:$0xff]
      %v910 = vld [vmem:[#allocation3 + $0x20] sm:$0xff]
      %v911 = vld [vmem:[#allocation3 + $0x28] sm:$0xff]
      %v912 = vld [vmem:[#allocation3 + $0x30] sm:$0xff]
      %v913 = vld [vmem:[#allocation3 + $0x38] sm:$0xff]
      %v914 = vadd.f32 %v906, %v876
      %v915 = vadd.f32 %v907, %v879
      %v916 = vadd.f32 %v908, %v884
      %v917 = vadd.f32 %v909, %v887
      %v918 = vadd.f32 %v910, %v892
      %v919 = vadd.f32 %v911, %v895
      %v920 = vadd.f32 %v912, %v900
      %v921 = vadd.f32 %v913, %v903
      %922 = vst.msk [vmem:[#allocation3] sm:$0xff] %vm766, %v914
      %923 = vst.msk [vmem:[#allocation3 + $0x8] sm:$0xff] %vm766, %v915
      %924 = vst.msk [vmem:[#allocation3 + $0x10] sm:$0xff] %vm766, %v916
      %925 = vst.msk [vmem:[#allocation3 + $0x18] sm:$0xff] %vm766, %v917
      %926 = vst.msk [vmem:[#allocation3 + $0x20] sm:$0xff] %vm766, %v918
      %927 = vst.msk [vmem:[#allocation3 + $0x28] sm:$0xff] %vm766, %v919
      %928 = vst.msk [vmem:[#allocation3 + $0x30] sm:$0xff] %vm766, %v920
      %929 = vst.msk [vmem:[#allocation3 + $0x38] sm:$0xff] %vm766, %v921
      %s930 = scalar_lea.vmem [#allocation2], 8
      %v931 = vld [vmem:[%s930] sm:$0xf]
      %v932 = vld [vmem:[%s930 + $0x4] sm:$0xf]
      %v933 = vld [vmem:[%s930 + $0x8] sm:$0xf]
      %v934 = vld [vmem:[%s930 + $0xc] sm:$0xf]
      %v935 = vld [vmem:[%s930 + $0x10] sm:$0xf]
      %v936 = vld [vmem:[%s930 + $0x14] sm:$0xf]
      %v937 = vld [vmem:[%s930 + $0x18] sm:$0xf]
      %v938 = vld [vmem:[%s930 + $0x1c] sm:$0xf]
      %s939 = scalar_lea.vmem %s2, 48
      %v940 = vld [vmem:[%s939] sm:$0xf]
      %v941 = vld [vmem:[%s939 + $0x4] sm:$0xf]
      %v942 = vld [vmem:[%s939 + $0x8] sm:$0xf]
      %v943 = vld [vmem:[%s939 + $0xc] sm:$0xf]
      %v944 = vld [vmem:[%s939 + $0x10] sm:$0xf]
      %v945 = vld [vmem:[%s939 + $0x14] sm:$0xf]
      %v954 = vunpack.c.l.b16 %v931
      %v955 = vunpack.c.l.b16 %v932
      %v956 = vunpack.c.l.b16 %v933
      %v957 = vunpack.c.l.b16 %v934
      %v958 = vunpack.c.l.b16 %v935
      %v959 = vunpack.c.l.b16 %v936
      %v960 = vunpack.c.l.b16 %v937
      %v961 = vunpack.c.l.b16 %v938
      %v962 = vpack.c.b16 %v955, %v954
      %v963 = vpack.c.b16 %v957, %v956
      %v964 = vpack.c.b16 %v959, %v958
      %v965 = vpack.c.b16 %v961, %v960
      %v972 = vunpack.c.l.b16 %v940
      %v973 = vunpack.c.l.b16 %v941
      %v974 = vunpack.c.l.b16 %v942
      %v975 = vunpack.c.l.b16 %v943
      %v976 = vunpack.c.l.b16 %v944
      %v977 = vunpack.c.l.b16 %v945
      %v978 = vpack.c.b16 %v973, %v972
      %v979 = vpack.c.b16 %v975, %v974
      %v980 = vpack.c.b16 %v977, %v976
      %v985 = vsel %vm688, %v962, 0
      %v988 = vsel %vm688, %v963, 0
      %v991 = vsel %vm688, %v964, 0
      %v994 = vsel %vm688, %v965, 0
      %996 = vmatprep.subr.bf16.mxu0 0
      %997 = vmatpush1.bf16.msra.mxu0 %v978
      %998 = vmatprep.subr.bf16.mxu0 0
      %999 = vmatpush1.bf16.msra.mxu0 %v979
      %1000 = vmatprep.subr.bf16.mxu0 0
      %1001 = vmatpush1.bf16.msra.mxu0 %v980
      %1002 = vmatprep.subr.bf16.mxu0 0
      %1003 = vmatpush1.bf16.msra.mxu0 0
      %1004 = vmatprep.subr.bf16.mxu0 0
      %1005 = vmatpush1.bf16.msra.mxu0 0
      %1006 = vmatprep.subr.bf16.mxu0 0
      %1007 = vmatpush1.bf16.msra.mxu0 0
      %1008 = vmatprep.subr.bf16.mxu0 0
      %1009 = vmatpush1.bf16.msra.mxu0 0
      %1010 = vmatprep.subr.bf16.mxu0 0
      %1011 = vmatpush1.bf16.msra.mxu0 0
      %1012 = vmatprep.subr.bf16.mxu0 0
      %1013 = vmatpush1.bf16.msra.mxu0 0
      %1014 = vmatprep.subr.bf16.mxu0 0
      %1015 = vmatpush1.bf16.msra.mxu0 0
      %1016 = vmatprep.subr.bf16.mxu0 0
      %1017 = vmatpush1.bf16.msra.mxu0 0
      %1018 = vmatprep.subr.bf16.mxu0 0
      %1019 = vmatpush1.bf16.msra.mxu0 0
      %1020 = vmatprep.subr.bf16.mxu0 0
      %1021 = vmatpush1.bf16.msra.mxu0 0
      %1022 = vmatprep.subr.bf16.mxu0 0
      %1023 = vmatpush1.bf16.msra.mxu0 0
      %1024 = vmatprep.subr.bf16.mxu0 0
      %1025 = vmatpush1.bf16.msra.mxu0 0
      %1026 = vmatprep.subr.bf16.mxu0 0
      %1027 = vmatpush1.bf16.msra.mxu0 0
      %1028 = vmatprep.mubr.bf16.mxu0 0
      %1029 = vmatmul.mubr.bf16.gmra.mrb[0].mxu0 %v985
      %v1030 = vpop.f32.mrb[0].mxu0
      %v1031 = vadd.f32 0.0, %v1030
      %v1032 = vpop.f32.mrb[0].mxu0
      %v1033 = vpop.f32.mrb[0].mxu0
      %v1034 = vadd.f32 0.0, %v1033
      %v1035 = vpop.f32.mrb[0].mxu0
      %1036 = vmatprep.mubr.bf16.mxu0 0
      %1037 = vmatmul.mubr.bf16.gmra.mrb[0].mxu0 %v988
      %v1038 = vpop.f32.mrb[0].mxu0
      %v1039 = vadd.f32 0.0, %v1038
      %v1040 = vpop.f32.mrb[0].mxu0
      %v1041 = vpop.f32.mrb[0].mxu0
      %v1042 = vadd.f32 0.0, %v1041
      %v1043 = vpop.f32.mrb[0].mxu0
      %1044 = vmatprep.mubr.bf16.mxu0 0
      %1045 = vmatmul.mubr.bf16.gmra.mrb[0].mxu0 %v991
      %v1046 = vpop.f32.mrb[0].mxu0
      %v1047 = vadd.f32 0.0, %v1046
      %v1048 = vpop.f32.mrb[0].mxu0
      %v1049 = vpop.f32.mrb[0].mxu0
      %v1050 = vadd.f32 0.0, %v1049
      %v1051 = vpop.f32.mrb[0].mxu0
      %1052 = vmatprep.mubr.bf16.mxu0 0
      %1053 = vmatmul.mubr.bf16.gmra.mrb[0].mxu0 %v994
      %v1054 = vpop.f32.mrb[0].mxu0
      %v1055 = vadd.f32 0.0, %v1054
      %v1056 = vpop.f32.mrb[0].mxu0
      %v1057 = vpop.f32.mrb[0].mxu0
      %v1058 = vadd.f32 0.0, %v1057
      %v1059 = vpop.f32.mrb[0].mxu0
      %1060 = vdwg.mxu0
      %v1061 = vld [vmem:[#allocation3] sm:$0xff]
      %v1062 = vld [vmem:[#allocation3 + $0x8] sm:$0xff]
      %v1063 = vld [vmem:[#allocation3 + $0x10] sm:$0xff]
      %v1064 = vld [vmem:[#allocation3 + $0x18] sm:$0xff]
      %v1065 = vld [vmem:[#allocation3 + $0x20] sm:$0xff]
      %v1066 = vld [vmem:[#allocation3 + $0x28] sm:$0xff]
      %v1067 = vld [vmem:[#allocation3 + $0x30] sm:$0xff]
      %v1068 = vld [vmem:[#allocation3 + $0x38] sm:$0xff]
      %v1069 = vadd.f32 %v1061, %v1031
      %v1070 = vadd.f32 %v1062, %v1034
      %v1071 = vadd.f32 %v1063, %v1039
      %v1072 = vadd.f32 %v1064, %v1042
      %v1073 = vadd.f32 %v1065, %v1047
      %v1074 = vadd.f32 %v1066, %v1050
      %v1075 = vadd.f32 %v1067, %v1055
      %v1076 = vadd.f32 %v1068, %v1058
      %1077 = vst.msk [vmem:[#allocation3] sm:$0xff] %vm766, %v1069
      %1078 = vst.msk [vmem:[#allocation3 + $0x8] sm:$0xff] %vm766, %v1070
      %1079 = vst.msk [vmem:[#allocation3 + $0x10] sm:$0xff] %vm766, %v1071
      %1080 = vst.msk [vmem:[#allocation3 + $0x18] sm:$0xff] %vm766, %v1072
      %1081 = vst.msk [vmem:[#allocation3 + $0x20] sm:$0xff] %vm766, %v1073
      %1082 = vst.msk [vmem:[#allocation3 + $0x28] sm:$0xff] %vm766, %v1074
      %1083 = vst.msk [vmem:[#allocation3 + $0x30] sm:$0xff] %vm766, %v1075
      %1084 = vst.msk [vmem:[#allocation3 + $0x38] sm:$0xff] %vm766, %v1076
      %v1085 = vld [vmem:[#allocation3] sm:$0xff]
      %v1086 = vld [vmem:[#allocation3 + $0x8] sm:$0xff]
      %v1087 = vld [vmem:[#allocation3 + $0x10] sm:$0xff]
      %v1088 = vld [vmem:[#allocation3 + $0x18] sm:$0xff]
      %v1089 = vld [vmem:[#allocation3 + $0x20] sm:$0xff]
      %v1090 = vld [vmem:[#allocation3 + $0x28] sm:$0xff]
      %v1091 = vld [vmem:[#allocation3 + $0x30] sm:$0xff]
      %v1092 = vld [vmem:[#allocation3 + $0x38] sm:$0xff]
      %v1093 = vld [vmem:[%s3] sm:$0x1]
      %v1095 = vlaneseq
      %v1096 = vshrl.u32 %v1095, 7
      %v1097 = vsub.s32 0, %v1096
      %v1098 = vrot.slane %v1093, %v1097
      %v1100 = vadd.f32 %v1085, %v1098
      %v1101 = vadd.f32 %v1086, %v1098
      %v1102 = vadd.f32 %v1087, %v1098
      %v1103 = vadd.f32 %v1088, %v1098
      %v1104 = vadd.f32 %v1089, %v1098
      %v1105 = vadd.f32 %v1090, %v1098
      %v1106 = vadd.f32 %v1091, %v1098
      %v1107 = vadd.f32 %v1092, %v1098
      %v1108 = vsub.f32 0.0, %v1100
      %v1109 = vsub.f32 0.0, %v1101
      %v1110 = vsub.f32 0.0, %v1102
      %v1111 = vsub.f32 0.0, %v1103
      %v1112 = vsub.f32 0.0, %v1104
      %v1113 = vsub.f32 0.0, %v1105
      %v1114 = vsub.f32 0.0, %v1106
      %v1115 = vsub.f32 0.0, %v1107
      %v1116 = vmul.f32 %v1108, 1.442695
      %v1117 = vpow.pop %v1116
      %v1118 = vmul.f32 %v1109, 1.442695
      %v1119 = vpow.pop %v1118
      %v1120 = vmul.f32 %v1110, 1.442695
      %v1121 = vpow.pop %v1120
      %v1122 = vmul.f32 %v1111, 1.442695
      %v1123 = vpow.pop %v1122
      %v1124 = vmul.f32 %v1112, 1.442695
      %v1125 = vpow.pop %v1124
      %v1126 = vmul.f32 %v1113, 1.442695
      %v1127 = vpow.pop %v1126
      %v1128 = vmul.f32 %v1114, 1.442695
      %v1129 = vpow.pop %v1128
      %v1130 = vmul.f32 %v1115, 1.442695
      %v1131 = vpow.pop %v1130
      %v1132 = vadd.f32 %v1117, 1.0
      %v1133 = vadd.f32 %v1119, 1.0
      %v1134 = vadd.f32 %v1121, 1.0
      %v1135 = vadd.f32 %v1123, 1.0
      %v1136 = vadd.f32 %v1125, 1.0
      %v1137 = vadd.f32 %v1127, 1.0
      %v1138 = vadd.f32 %v1129, 1.0
      %v1139 = vadd.f32 %v1131, 1.0
      %v1140 = vrcp.pop %v1132
      %v1141 = vmul.f32 1.0, %v1140
      %v1142 = vrcp.pop %v1133
      %v1143 = vmul.f32 1.0, %v1142
      %v1144 = vrcp.pop %v1134
      %v1145 = vmul.f32 1.0, %v1144
      %v1146 = vrcp.pop %v1135
      %v1147 = vmul.f32 1.0, %v1146
      %v1148 = vrcp.pop %v1136
      %v1149 = vmul.f32 1.0, %v1148
      %v1150 = vrcp.pop %v1137
      %v1151 = vmul.f32 1.0, %v1150
      %v1152 = vrcp.pop %v1138
      %v1153 = vmul.f32 1.0, %v1152
      %v1154 = vrcp.pop %v1139
      %v1155 = vmul.f32 1.0, %v1154
      %1156 = vst.msk [vmem:[%s284] sm:$0xff] %vm766, %v1141
      %1157 = vst.msk [vmem:[%s284 + $0x8] sm:$0xff] %vm766, %v1143
      %1158 = vst.msk [vmem:[%s284 + $0x10] sm:$0xff] %vm766, %v1145
      %1159 = vst.msk [vmem:[%s284 + $0x18] sm:$0xff] %vm766, %v1147
      %1160 = vst.msk [vmem:[%s284 + $0x20] sm:$0xff] %vm766, %v1149
      %1161 = vst.msk [vmem:[%s284 + $0x28] sm:$0xff] %vm766, %v1151
      %1162 = vst.msk [vmem:[%s284 + $0x30] sm:$0xff] %vm766, %v1153
      %1163 = vst.msk [vmem:[%s284 + $0x38] sm:$0xff] %vm766, %v1155
      %p1164 = scmp.lt.s32.totalorder %s19, 1
      %s1165 = scalar_select %p1164, %s19, 1
      %p1166 = scmp.lt.s32.totalorder %s20, 0
      %s1167 = scalar_select %p1166, %s20, 0
      %s1168 = smul.addr %s1167, 8
      %s1169 = smul.addr %s1165, 8
      %s1170 = sadd.s32 %s1168, %s1169
      %s1171 = smul.addr %s1170, 8
      %s1172 = scalar_lea.vmem %s4, %s1171
      // Predicated region
      $region37: #{edge_detection_encoder.11} parent=35 // pred_check
        %p1173 = pneg %p147
      $region38: #{edge_detection_encoder.11} parent=35 // pred_check_branch
        %1175 = sbr.rel (%p1173) target = $region40
      $region39: #{edge_detection_encoder.11} parent=35 // pred_region
        _
      $region40: #{edge_detection_encoder.11} parent=35 // pred_fallthru
        _
    $region36: #{edge_detection_encoder.11} parent=5 // pred_fallthru
      _
    %p1176 = scmp.le.s32.totalorder 2, %s10
    // Predicated region
    $region41: #{edge_detection_encoder.11} parent=5 // pred_check
      %p1177 = pneg %p1176
    $region42: #{edge_detection_encoder.11} parent=5 // pred_check_branch
      %1179 = sbr.rel (%p1177) target = $region44
    $region43: #{edge_detection_encoder.11} parent=5 // pred_region
      %s1180 = ssub.s32 %s10, 2
      // Predicated region
      $region45: #{edge_detection_encoder.11} parent=43 // pred_check
        %p1181 = pneg %p153
      $region46: #{edge_detection_encoder.11} parent=43 // pred_check_branch
        %1183 = sbr.rel (%p1181) target = $region48
      $region47: #{edge_detection_encoder.11} parent=43 // pred_region
        %p1184 = scmp.lt.s32.totalorder %s21, 1
        %s1185 = scalar_select %p1184, %s21, 1
        %p1186 = scmp.lt.s32.totalorder %s22, 0
        %s1187 = scalar_select %p1186, %s22, 0
        %s1188 = smul.addr %s1187, 8
        %s1189 = smul.addr %s1185, 8
        %s1190 = sadd.s32 %s1188, %s1189
        %s1191 = smul.addr %s1190, 8
        %s1192 = scalar_lea.vmem %s4, %s1191
      $region48: #{edge_detection_encoder.11} parent=43 // pred_fallthru
        _
    $region44: #{edge_detection_encoder.11} parent=5 // pred_fallthru
      _
  $region6: #{edge_detection_encoder.11} parent=0 // loop_footer
    %s14 = sadd.s32 1, %s10
  $region7: #{edge_detection_encoder.11} parent=0 // loop_footer_branch
    %9 = sbr.rel target = $region3
  $region8: #{edge_detection_encoder.11} parent=0 // loop_exit
    _

</llo_original>
